<compile_context>
chip_gen: v7x
topology: tpu7x:2x2x1
jax: 0.10.0
libtpu: 0.0.40
codegen_flags: <defaults>
</compile_context>

<pallas_src>
import numpy as np
import jax
import jax.numpy as jnp
from jax.experimental import pallas as pl
from jax.experimental.pallas import tpu as pltpu

F32 = jnp.float32
BF16 = jnp.bfloat16

# ---- PhysicsEngine default hyper-parameters ----
HIDDEN = 128          # hidden_size
PTYPE_DIM = 16        # particle_type_dim
NUM_TYPES = 9         # num_particle_types
DIM = 3
WINDOW = 5            # window_size
POS_FEAT = DIM * (WINDOW + 2)   # 21 position features per particle
FNO_IN = 3            # fno_in_channels
FNO_HID = 32          # fno_hidden_channels
FNO_LIFT = 32         # fno_lifting_channels
FNO_PROJ = 32         # fno_projection_channels
FNO_LAYERS = 2
FNO_MODES = 24        # n_modes[0] along H ; n_modes[1] collapses to 1 since W==1
LN_EPS = 1e-5


def _gelu(x):
    # exact (erf-based) GELU, matching torch.nn.functional.gelu default
    return 0.5 * x * (1.0 + jax.lax.erf(x / jnp.sqrt(jnp.asarray(2.0, x.dtype))))


# ----------------------------------------------------------------------------
# Pallas kernels
# ----------------------------------------------------------------------------
def encoder_lift_kernel(types_ref, pos_ref,
                        ew_ref, wp_ref, b1_ref, w2_ref, b2_ref, w3_ref, b3_ref,
                        g_ref, beta_ref, wl_ref, bl_ref, lw2_ref, lb2_ref,
                        o_ref):
    """embed_type + node_in MLP (Linear/ReLU x3 + LayerNorm) + downsample
    (folded host-side into the FNO lifting first layer) + lifting MLP.

    Channels-first (C, T): weights are pre-transposed, elementwise work and the
    output store are lane-dense, the embedding lookup is a one-hot matmul
    against the pre-folded (embed @ W1_emb) table (no gather / concat)."""
    t = types_ref[...]                                             # (1, T) int32
    onehot = jnp.where(
        jax.lax.broadcasted_iota(jnp.int32, (NUM_TYPES, t.shape[1]), 0) == t,
        1.0, 0.0).astype(F32)                                      # (9, T)

    h = (jnp.dot(ew_ref[...], onehot, preferred_element_type=F32)
         + jnp.dot(wp_ref[...], pos_ref[...], preferred_element_type=F32)
         + b1_ref[...])                                            # (128, T)
    h = jnp.maximum(h, 0.0)
    h = jnp.dot(w2_ref[...], h.astype(BF16),
                preferred_element_type=F32) + b2_ref[...]
    h = jnp.maximum(h, 0.0)
    h = jnp.dot(w3_ref[...], h.astype(BF16),
                preferred_element_type=F32) + b3_ref[...]

    # LayerNorm over channels (axis 0), kept entirely in f32 (v5e-safe).
    mu = jnp.mean(h, axis=0, keepdims=True)
    var = jnp.mean((h - mu) ** 2, axis=0, keepdims=True)
    h = (h - mu) * jax.lax.rsqrt(var + LN_EPS) * g_ref[...] + beta_ref[...]

    # downsample Linear folded into the first lifting layer (host-side fold).
    lift = _gelu(jnp.dot(wl_ref[...], h.astype(BF16),
                         preferred_element_type=F32) + bl_ref[...])      # (32, T)
    o_ref[...] = (jnp.dot(lw2_ref[...], lift.astype(BF16),
                          preferred_element_type=F32) + lb2_ref[...])    # (32, T)


def fno_chain_kernel(v_ref, fft_ref, idft_ref,
                     wcat_ref, ws_ref, gw_ref,
                     m1w_ref, m1b_ref, m2w_ref, m2b_ref,
                     pw1_ref, pb1_ref, pw2_ref, pb2_ref,
                     o_ref):
    """Both preactivated FNO blocks + projection MLP fused, channels-first.

    Per block: gelu -> {linear fno-skip (fused into the IDFT matmul),
    soft-gating mlp-skip} -> tanh stabilizer -> spectral conv
    (one forward-DFT matmul against the widened (N, 8m) operator, per-mode
    complex channel mixing on the VPU with host-prestacked weights, one
    inverse-DFT matmul that also carries the fno-skip) -> [gelu if not last]
    -> block channel-MLP -> + mlp-skip."""
    v = v_ref[...]                     # (C, N) lifted latent, resident in VMEM
    fft_cat = fft_ref[...]             # (N, 8m) widened forward DFT operator
    idft_cat = idft_ref[...]           # (8m, N) duplicated inverse DFT operator

    for i in range(FNO_LAYERS):
        x = _gelu(v)                                               # preactivation
        skip_mlp = gw_ref[i] * x                                   # soft-gating skip
        xs = jnp.tanh(x)                                           # stabilizer='tanh'

        # forward truncated DFT (half-swap pre-absorbed into fft_cat):
        z_cat = jnp.dot(xs, fft_cat, preferred_element_type=F32)   # (C, 8m)
        # per-mode complex channel mixing on the VPU (modes stay on lanes,
        # no mode-batched micro-matmuls on the MXU):
        y_cat = jnp.sum(z_cat[None, :, :] * wcat_ref[i], axis=1)   # (C, 8m)

        # fused truncated inverse DFT + linear fno-skip (K = 8m + C):
        lhs = jnp.concatenate([y_cat, ws_ref[i]], axis=1)          # (C, 8m + C)
        rhs = jnp.concatenate([idft_cat, x], axis=0)               # (8m + C, N)
        h = jnp.dot(lhs, rhs, preferred_element_type=F32)          # (C, N)

        if i < FNO_LAYERS - 1:
            h = _gelu(h)
        hm = _gelu(jnp.dot(m1w_ref[i], h.astype(BF16),
                           preferred_element_type=F32) + m1b_ref[i])
        hm = jnp.dot(m2w_ref[i], hm.astype(BF16),
                     preferred_element_type=F32) + m2b_ref[i]
        v = hm + skip_mlp

    # FNO projection channel-MLP -> (3, N), lane-dense store.
    pout = _gelu(jnp.dot(pw1_ref[...], v.astype(BF16),
                         preferred_element_type=F32) + pb1_ref[...])
    o_ref[...] = jnp.dot(pw2_ref[...], pout,
                         preferred_element_type=F32) + pb2_ref[...]


# ----------------------------------------------------------------------------
# pallas_call wrappers
# ----------------------------------------------------------------------------
def _wspec(a):
    nd = a.ndim
    return pl.BlockSpec(a.shape, lambda i, _nd=nd: (0,) * _nd)


def _pick_tile(n):
    """Largest particle tile (up to 1024) that keeps the grid >= 2 tiles so
    both v7x TensorCores stay busy; falls back to a single full tile."""
    for t in (1024, 512, 256, 128):
        if n % t == 0 and n // t >= 2:
            return t
    return n


def _encoder_call(typesT, posT, weights, n, tile_n):
    assert n % tile_n == 0
    return pl.pallas_call(
        encoder_lift_kernel,
        out_shape=jax.ShapeDtypeStruct((FNO_HID, n), F32),
        grid=(n // tile_n,),
        in_specs=[pl.BlockSpec((1, tile_n), lambda i: (0, i)),
                  pl.BlockSpec((POS_FEAT, tile_n), lambda i: (0, i))]
                 + [_wspec(w) for w in weights],
        out_specs=pl.BlockSpec((FNO_HID, tile_n), lambda i: (0, i)),
        compiler_params=pltpu.CompilerParams(
            dimension_semantics=("parallel",)),
    )(typesT, posT, *weights)


def _single_block_call(kernel, out_struct, *arrays):
    """Whole arrays as single VMEM blocks (the spectral conv needs the full
    particle axis resident for the DFT).  VMEM budget derived from the actual
    operand footprint (double-buffered) instead of a hard-coded limit."""
    def spec(shape):
        nd = len(shape)
        return pl.BlockSpec(shape, lambda i, _nd=nd: (0,) * _nd)

    io_bytes = sum(int(np.prod(a.shape)) * a.dtype.itemsize for a in arrays)
    io_bytes += int(np.prod(out_struct.shape)) * np.dtype(out_struct.dtype).itemsize
    vmem_limit = int(min(max(2 * io_bytes + (16 << 20), 32 << 20), 48 << 20))

    return pl.pallas_call(
        kernel,
        out_shape=out_struct,
        grid=(1,),
        in_specs=[spec(a.shape) for a in arrays],
        out_specs=spec(out_struct.shape),
        compiler_params=pltpu.CompilerParams(
            dimension_semantics=("arbitrary",),
            vmem_limit_bytes=vmem_limit),
    )(*arrays)


# ----------------------------------------------------------------------------
# deterministic parameter construction (synthetic; no checkpoint load)
# ----------------------------------------------------------------------------
def init_params(key):
    keys = iter(jax.random.split(key, 64))

    def nrm(shape, scale=0.1):
        return scale * jax.random.normal(next(keys), shape, dtype=F32)

    p = {}
    p['embed'] = nrm((NUM_TYPES, PTYPE_DIM), 0.3)

    f_in = PTYPE_DIM + POS_FEAT                    # 16 + 21 = 37
    p['node'] = dict(
        w1=nrm((f_in, HIDDEN)), b1=nrm((1, HIDDEN)),
        w2=nrm((HIDDEN, HIDDEN)), b2=nrm((1, HIDDEN)),
        w3=nrm((HIDDEN, HIDDEN)), b3=nrm((1, HIDDEN)),
        g=1.0 + nrm((1, HIDDEN)), beta=nrm((1, HIDDEN)),
        wd=nrm((HIDDEN, FNO_IN)), bd=nrm((1, FNO_IN)),
    )
    # NOTE: edge_in parameters/kernel omitted -- edge_in(data.edge_attr) is dead
    # code in PhysicsEngine.forward (its result is never used or returned).

    p['lift'] = dict(w1=nrm((FNO_IN, FNO_LIFT)), b1=nrm((1, FNO_LIFT)),
                     w2=nrm((FNO_LIFT, FNO_HID)), b2=nrm((1, FNO_HID)))
    p['proj'] = dict(w1=nrm((FNO_HID, FNO_PROJ)), b1=nrm((1, FNO_PROJ)),
                     w2=nrm((FNO_PROJ, DIM)), b2=nrm((1, DIM)))

    mexp = FNO_HID // 2                            # mlp expansion 0.5
    spec_scale = 1.0 / (FNO_HID * FNO_HID)
    blocks = []
    for _ in range(FNO_LAYERS):
        blocks.append(dict(
            w1r=nrm((FNO_HID, FNO_HID, FNO_MODES), spec_scale),
            w1i=nrm((FNO_HID, FNO_HID, FNO_MODES), spec_scale),
            w2r=nrm((FNO_HID, FNO_HID, FNO_MODES), spec_scale),
            w2i=nrm((FNO_HID, FNO_HID, FNO_MODES), spec_scale),
            ws=nrm((FNO_HID, FNO_HID)),            # linear fno skip (no bias)
            gw=1.0 + nrm((1, FNO_HID)),            # soft-gating (no bias)
            m1w=nrm((FNO_HID, mexp)), m1b=nrm((1, mexp)),
            m2w=nrm((mexp, FNO_HID)), m2b=nrm((1, FNO_HID)),
        ))
    p['blocks'] = blocks
    return p


def build_spectral_operators(n, m):
    """Exact truncated DFT operators for kept bins [0..m-1] U [n-m..n-1].
      fft_cat  (n, 8m): [Re | Im | Im | Re]-ordered columns such that
                        xs @ fft_cat == [z | zs] with zs the half-swapped
                        spectrum (the swap is absorbed here, host-side).
      idft_cat (8m, n): inverse-DFT rows (real part, scaled 1/n), duplicated
                        so that y_cat @ idft_cat sums the [z|zs] contributions.
    """
    kk = np.arange(n)
    kept = np.concatenate([np.arange(m), np.arange(n - m, n)])
    ang = 2.0 * np.pi * np.outer(kk, kept) / n                     # (n, 2m)
    fftT = np.concatenate([np.cos(ang), -np.sin(ang)], axis=1)     # exp(-i ang)
    # half-period roll along the mode axis swaps the [Re | Im] halves, i.e.
    # (xs @ rolled)[:, k] == (xs @ fftT)[:, (k + 2m) % 4m]  == zs
    fft_cat = np.concatenate([fftT, np.roll(fftT, 2 * m, axis=1)], axis=1)
    iang = 2.0 * np.pi * np.outer(kept, kk) / n                    # (2m, n)
    idft = np.concatenate([np.cos(iang) / n, -np.sin(iang) / n], axis=0)
    idft_cat = np.concatenate([idft, idft], axis=0)                # (8m, n)
    return jnp.asarray(fft_cat, F32), jnp.asarray(idft_cat, F32)


def stack_block_weights(blocks, m):
    """Per-mode complex mixing weights, truncated to the retained modes and
    pre-stacked channels-first so the kernel's single VPU contraction
    y_cat[d,k] = sum_c z_cat[c,k] * wcat[d,c,k] directly yields the [Yr;Yi]
    spectrum (wa = [Wr;Wr] pairs [Xr;Xi], wb = [-Wi;Wi] pairs [Xi;Xr])."""
    wcat, wsT, gw, m1w, m1b, m2w, m2b = ([] for _ in range(7))
    for bp in blocks:
        w1r = jnp.transpose(bp['w1r'][:, :, :m], (2, 0, 1))        # (m, Cin, Cout) +modes
        w1i = jnp.transpose(bp['w1i'][:, :, :m], (2, 0, 1))
        w2r = jnp.transpose(bp['w2r'][:, :, :m], (2, 0, 1))        # (m, Cin, Cout) -modes
        w2i = jnp.transpose(bp['w2i'][:, :, :m], (2, 0, 1))
        wr = jnp.concatenate([w1r, w2r], axis=0)                   # (2m, Cin, Cout)
        wi = jnp.concatenate([w1i, w2i], axis=0)
        wa = jnp.concatenate([wr, wr], axis=0)                     # (4m, ...) pairs z
        wb = jnp.concatenate([-wi, wi], axis=0)                    # (4m, ...) pairs zs
        wc = jnp.concatenate([wa, wb], axis=0)                     # (8m, Cin, Cout)
        wcat.append(jnp.transpose(wc, (2, 1, 0)))                  # (Cout, Cin, 8m)
        wsT.append(bp['ws'].T)                                     # fno-skip, fused in IDFT
        gw.append(bp['gw'].T)                                      # (C, 1)
        m1w.append(bp['m1w'].T.astype(BF16)); m1b.append(bp['m1b'].T)
        m2w.append(bp['m2w'].T.astype(BF16)); m2b.append(bp['m2b'].T)
    st = lambda xs: jnp.stack(xs, axis=0)
    return (st(wcat), st(wsT), st(gw), st(m1w), st(m1b), st(m2w), st(m2b))


def build_inference_params(params, n):
    """Host-side folding / transposition / bf16 casting of all weights."""
    m = min(FNO_MODES, n // 2)
    fft_cat, idft_cat = build_spectral_operators(n, m)

    nd = params['node']; lp = params['lift']; pp = params['proj']
    w1 = nd['w1']
    # fold: embedding lookup -> one-hot matmul against (embed @ W1_emb)
    ewT = (params['embed'] @ w1[:PTYPE_DIM]).T                     # (128, 9) f32
    wpT = w1[PTYPE_DIM:].T                                         # (128, 21) f32
    # fold: downsample Linear into the first FNO lifting layer
    wliftT = (nd['wd'] @ lp['w1']).T.astype(BF16)                  # (32, 128)
    blift = (nd['bd'] @ lp['w1'] + lp['b1']).T                     # (32, 1) f32

    enc = (ewT, wpT, nd['b1'].T,
           nd['w2'].T.astype(BF16), nd['b2'].T,
           nd['w3'].T.astype(BF16), nd['b3'].T,
           nd['g'].T, nd['beta'].T,
           wliftT, blift,
           lp['w2'].T.astype(BF16), lp['b2'].T)

    blocks = stack_block_weights(params['blocks'], m)
    proj = (pp['w1'].T.astype(BF16), pp['b1'].T,
            pp['w2'].T, pp['b2'].T)                                # pw2 kept f32 (M=3)
    return dict(enc=enc, fft=fft_cat, idft=idft_cat, blocks=blocks, proj=proj)


# ----------------------------------------------------------------------------
# PhysicsEngine.forward
# ----------------------------------------------------------------------------
def physics_engine_forward(ip, x_types, pos):
    n = pos.shape[0]

    # glue: channels-first views of the inputs (no gather/concat -- the type
    # embedding is done in-kernel as a one-hot matmul).
    typesT = x_types.astype(jnp.int32).reshape(1, n)                 # (1, N)
    posT = jnp.transpose(pos.astype(F32))                            # (21, N)

    # --- call 1: fused embed + node encoder + downsample + lifting ---------
    tile_n = _pick_tile(n)
    vT = _encoder_call(typesT, posT, ip['enc'], n, tile_n)           # (32, N)

    # --- call 2: fused FNO blocks + projection (full N resident for DFT) ---
    ops = (vT, ip['fft'], ip['idft']) + ip['blocks'] + ip['proj']
    out_cf = _single_block_call(
        fno_chain_kernel, jax.ShapeDtypeStruct((DIM, n), F32), *ops)  # (3, N)

    # (N, 3) == torch output after the squeeze/permute chain
    return jnp.transpose(out_cf)


if __name__ == "__main__":
    key = jax.random.PRNGKey(0)
    kp, kx, kpos = jax.random.split(key, 3)

    params = init_params(kp)

    N_PARTICLES = 256   # latent grid H; multiple of 128 so the encoder is really tiled
    infer_params = build_inference_params(params, N_PARTICLES)

    x_types = jax.random.randint(kx, (N_PARTICLES,), 0, NUM_TYPES)              # data.x
    pos = jax.random.normal(kpos, (N_PARTICLES, POS_FEAT), dtype=F32)           # data.pos

    fwd = jax.jit(physics_engine_forward)
    latent = fwd(infer_params, x_types, pos)
    jax.block_until_ready(latent)

    assert latent.shape == (N_PARTICLES, DIM)
    assert bool(jnp.all(jnp.isfinite(latent)))
    print("KERNEL_OK")
</pallas_src>

<mosaic_0001>
module attributes {stable_mosaic.version = 11 : i64} {
  func.func @encoder_lift_kernel(%arg0: i32, %arg1: memref<1x128xi32, #tpu.memory_space<vmem>>, %arg2: memref<21x128xf32, #tpu.memory_space<vmem>>, %arg3: memref<128x9xf32, #tpu.memory_space<vmem>>, %arg4: memref<128x21xf32, #tpu.memory_space<vmem>>, %arg5: memref<128x1xf32, #tpu.memory_space<vmem>>, %arg6: memref<128x128xbf16, #tpu.memory_space<vmem>>, %arg7: memref<128x1xf32, #tpu.memory_space<vmem>>, %arg8: memref<128x128xbf16, #tpu.memory_space<vmem>>, %arg9: memref<128x1xf32, #tpu.memory_space<vmem>>, %arg10: memref<128x1xf32, #tpu.memory_space<vmem>>, %arg11: memref<128x1xf32, #tpu.memory_space<vmem>>, %arg12: memref<32x128xbf16, #tpu.memory_space<vmem>>, %arg13: memref<32x1xf32, #tpu.memory_space<vmem>>, %arg14: memref<32x32xbf16, #tpu.memory_space<vmem>>, %arg15: memref<32x1xf32, #tpu.memory_space<vmem>>, %arg16: memref<32x128xf32, #tpu.memory_space<vmem>>) attributes {dimension_semantics = [#tpu.dimension_semantics<parallel>], iteration_bounds = array<i64: 2>, scalar_prefetch = 0 : i64, scratch_operands = 0 : i64, tpu.core_type = #tpu.core_type<tc>, window_params = [{transform_indices = @transform_0, window_bounds = array<i64: 1, 128>}, {transform_indices = @transform_1, window_bounds = array<i64: 21, 128>}, {pipeline_mode = #tpu.pipeline_mode<synchronous>, transform_indices = @transform_2, window_bounds = array<i64: 128, 9>}, {pipeline_mode = #tpu.pipeline_mode<synchronous>, transform_indices = @transform_3, window_bounds = array<i64: 128, 21>}, {pipeline_mode = #tpu.pipeline_mode<synchronous>, transform_indices = @transform_4, window_bounds = array<i64: 128, 1>}, {pipeline_mode = #tpu.pipeline_mode<synchronous>, transform_indices = @transform_5, window_bounds = array<i64: 128, 128>}, {pipeline_mode = #tpu.pipeline_mode<synchronous>, transform_indices = @transform_6, window_bounds = array<i64: 128, 1>}, {pipeline_mode = #tpu.pipeline_mode<synchronous>, transform_indices = @transform_7, window_bounds = array<i64: 128, 128>}, {pipeline_mode = #tpu.pipeline_mode<synchronous>, transform_indices = @transform_8, window_bounds = array<i64: 128, 1>}, {pipeline_mode = #tpu.pipeline_mode<synchronous>, transform_indices = @transform_9, window_bounds = array<i64: 128, 1>}, {pipeline_mode = #tpu.pipeline_mode<synchronous>, transform_indices = @transform_10, window_bounds = array<i64: 128, 1>}, {pipeline_mode = #tpu.pipeline_mode<synchronous>, transform_indices = @transform_11, window_bounds = array<i64: 32, 128>}, {pipeline_mode = #tpu.pipeline_mode<synchronous>, transform_indices = @transform_12, window_bounds = array<i64: 32, 1>}, {pipeline_mode = #tpu.pipeline_mode<synchronous>, transform_indices = @transform_13, window_bounds = array<i64: 32, 32>}, {pipeline_mode = #tpu.pipeline_mode<synchronous>, transform_indices = @transform_14, window_bounds = array<i64: 32, 1>}, {transform_indices = @transform_15, window_bounds = array<i64: 32, 128>}]} {
    %c0 = arith.constant 0 : index
    %c0_0 = arith.constant 0 : index
    %0 = vector.load %arg1[%c0, %c0_0] : memref<1x128xi32, #tpu.memory_space<vmem>>, vector<1x128xi32>
    %1 = tpu.iota {dimensions = array<i32: 0>} : vector<9x128xi32>
    %2 = vector.broadcast %0 : vector<1x128xi32> to vector<9x128xi32>
    %3 = arith.cmpi eq, %1, %2 : vector<9x128xi32>
    %cst = arith.constant 1.000000e+00 : f32
    %cst_1 = arith.constant 0.000000e+00 : f32
    %4 = vector.broadcast %cst : f32 to vector<9x128xf32>
    %5 = vector.broadcast %cst_1 : f32 to vector<9x128xf32>
    %6 = arith.select %3, %4, %5 : vector<9x128xi1>, vector<9x128xf32>
    %c0_2 = arith.constant 0 : index
    %c0_3 = arith.constant 0 : index
    %7 = vector.load %arg3[%c0_2, %c0_3] : memref<128x9xf32, #tpu.memory_space<vmem>>, vector<128x9xf32>
    %cst_4 = arith.constant dense<0.000000e+00> : vector<128x128xf32>
    %8 = tpu.matmul %7, %6, %cst_4 {dimension_numbers = #tpu.dot_dimension_numbers<[1], [0], [0], [1], [0, 0, 1, 1], [], []>} : vector<128x9xf32>, vector<9x128xf32>, vector<128x128xf32> -> vector<128x128xf32>
    %c0_5 = arith.constant 0 : index
    %c0_6 = arith.constant 0 : index
    %9 = vector.load %arg4[%c0_5, %c0_6] : memref<128x21xf32, #tpu.memory_space<vmem>>, vector<128x21xf32>
    %c0_7 = arith.constant 0 : index
    %c0_8 = arith.constant 0 : index
    %10 = vector.load %arg2[%c0_7, %c0_8] : memref<21x128xf32, #tpu.memory_space<vmem>>, vector<21x128xf32>
    %cst_9 = arith.constant dense<0.000000e+00> : vector<128x128xf32>
    %11 = tpu.matmul %9, %10, %cst_9 {dimension_numbers = #tpu.dot_dimension_numbers<[1], [0], [0], [1], [0, 0, 1, 1], [], []>} : vector<128x21xf32>, vector<21x128xf32>, vector<128x128xf32> -> vector<128x128xf32>
    %12 = arith.addf %8, %11 : vector<128x128xf32>
    %c0_10 = arith.constant 0 : index
    %c0_11 = arith.constant 0 : index
    %13 = vector.load %arg5[%c0_10, %c0_11] : memref<128x1xf32, #tpu.memory_space<vmem>>, vector<128x1xf32>
    %14 = vector.broadcast %13 : vector<128x1xf32> to vector<128x128xf32>
    %15 = arith.addf %12, %14 : vector<128x128xf32>
    %cst_12 = arith.constant 0.000000e+00 : f32
    %16 = vector.broadcast %cst_12 : f32 to vector<128x128xf32>
    %17 = arith.maximumf %15, %16 : vector<128x128xf32>
    %c0_13 = arith.constant 0 : index
    %c0_14 = arith.constant 0 : index
    %18 = vector.load %arg6[%c0_13, %c0_14] : memref<128x128xbf16, #tpu.memory_space<vmem>>, vector<128x128xbf16>
    %19 = arith.truncf %17 : vector<128x128xf32> to vector<128x128xbf16>
    %cst_15 = arith.constant dense<0.000000e+00> : vector<128x128xf32>
    %20 = tpu.matmul %18, %19, %cst_15 {dimension_numbers = #tpu.dot_dimension_numbers<[1], [0], [0], [1], [0, 0, 1, 1], [], []>} : vector<128x128xbf16>, vector<128x128xbf16>, vector<128x128xf32> -> vector<128x128xf32>
    %c0_16 = arith.constant 0 : index
    %c0_17 = arith.constant 0 : index
    %21 = vector.load %arg7[%c0_16, %c0_17] : memref<128x1xf32, #tpu.memory_space<vmem>>, vector<128x1xf32>
    %22 = vector.broadcast %21 : vector<128x1xf32> to vector<128x128xf32>
    %23 = arith.addf %20, %22 : vector<128x128xf32>
    %cst_18 = arith.constant 0.000000e+00 : f32
    %24 = vector.broadcast %cst_18 : f32 to vector<128x128xf32>
    %25 = arith.maximumf %23, %24 : vector<128x128xf32>
    %c0_19 = arith.constant 0 : index
    %c0_20 = arith.constant 0 : index
    %26 = vector.load %arg8[%c0_19, %c0_20] : memref<128x128xbf16, #tpu.memory_space<vmem>>, vector<128x128xbf16>
    %27 = arith.truncf %25 : vector<128x128xf32> to vector<128x128xbf16>
    %cst_21 = arith.constant dense<0.000000e+00> : vector<128x128xf32>
    %28 = tpu.matmul %26, %27, %cst_21 {dimension_numbers = #tpu.dot_dimension_numbers<[1], [0], [0], [1], [0, 0, 1, 1], [], []>} : vector<128x128xbf16>, vector<128x128xbf16>, vector<128x128xf32> -> vector<128x128xf32>
    %c0_22 = arith.constant 0 : index
    %c0_23 = arith.constant 0 : index
    %29 = vector.load %arg9[%c0_22, %c0_23] : memref<128x1xf32, #tpu.memory_space<vmem>>, vector<128x1xf32>
    %30 = vector.broadcast %29 : vector<128x1xf32> to vector<128x128xf32>
    %31 = arith.addf %28, %30 : vector<128x128xf32>
    %cst_24 = arith.constant dense<0.000000e+00> : vector<128xf32>
    %32 = vector.multi_reduction <add>, %31, %cst_24 [0] : vector<128x128xf32> to vector<128xf32>
    %33 = vector.shape_cast %32 : vector<128xf32> to vector<1x128xf32>
    %cst_25 = arith.constant 1.280000e+02 : f32
    %34 = vector.broadcast %cst_25 : f32 to vector<1x128xf32>
    %35 = arith.divf %33, %34 : vector<1x128xf32>
    %36 = vector.broadcast %35 : vector<1x128xf32> to vector<128x128xf32>
    %37 = arith.subf %31, %36 : vector<128x128xf32>
    %38 = arith.mulf %37, %37 : vector<128x128xf32>
    %cst_26 = arith.constant dense<0.000000e+00> : vector<128xf32>
    %39 = vector.multi_reduction <add>, %38, %cst_26 [0] : vector<128x128xf32> to vector<128xf32>
    %40 = vector.shape_cast %39 : vector<128xf32> to vector<1x128xf32>
    %cst_27 = arith.constant 1.280000e+02 : f32
    %41 = vector.broadcast %cst_27 : f32 to vector<1x128xf32>
    %42 = arith.divf %40, %41 : vector<1x128xf32>
    %43 = vector.broadcast %35 : vector<1x128xf32> to vector<128x128xf32>
    %44 = arith.subf %31, %43 : vector<128x128xf32>
    %cst_28 = arith.constant 9.99999974E-6 : f32
    %45 = vector.broadcast %cst_28 : f32 to vector<1x128xf32>
    %46 = arith.addf %42, %45 : vector<1x128xf32>
    %47 = math.rsqrt %46 : vector<1x128xf32>
    %48 = vector.broadcast %47 : vector<1x128xf32> to vector<128x128xf32>
    %49 = arith.mulf %44, %48 : vector<128x128xf32>
    %c0_29 = arith.constant 0 : index
    %c0_30 = arith.constant 0 : index
    %50 = vector.load %arg10[%c0_29, %c0_30] : memref<128x1xf32, #tpu.memory_space<vmem>>, vector<128x1xf32>
    %51 = vector.broadcast %50 : vector<128x1xf32> to vector<128x128xf32>
    %52 = arith.mulf %49, %51 : vector<128x128xf32>
    %c0_31 = arith.constant 0 : index
    %c0_32 = arith.constant 0 : index
    %53 = vector.load %arg11[%c0_31, %c0_32] : memref<128x1xf32, #tpu.memory_space<vmem>>, vector<128x1xf32>
    %54 = vector.broadcast %53 : vector<128x1xf32> to vector<128x128xf32>
    %55 = arith.addf %52, %54 : vector<128x128xf32>
    %c0_33 = arith.constant 0 : index
    %c0_34 = arith.constant 0 : index
    %56 = vector.load %arg12[%c0_33, %c0_34] : memref<32x128xbf16, #tpu.memory_space<vmem>>, vector<32x128xbf16>
    %57 = arith.truncf %55 : vector<128x128xf32> to vector<128x128xbf16>
    %cst_35 = arith.constant dense<0.000000e+00> : vector<32x128xf32>
    %58 = tpu.matmul %56, %57, %cst_35 {dimension_numbers = #tpu.dot_dimension_numbers<[1], [0], [0], [1], [0, 0, 1, 1], [], []>} : vector<32x128xbf16>, vector<128x128xbf16>, vector<32x128xf32> -> vector<32x128xf32>
    %c0_36 = arith.constant 0 : index
    %c0_37 = arith.constant 0 : index
    %59 = vector.load %arg13[%c0_36, %c0_37] : memref<32x1xf32, #tpu.memory_space<vmem>>, vector<32x1xf32>
    %60 = vector.broadcast %59 : vector<32x1xf32> to vector<32x128xf32>
    %61 = arith.addf %58, %60 : vector<32x128xf32>
    %cst_38 = arith.constant 5.000000e-01 : f32
    %62 = vector.broadcast %cst_38 : f32 to vector<32x128xf32>
    %63 = arith.mulf %62, %61 : vector<32x128xf32>
    %cst_39 = arith.constant 2.000000e+00 : f32
    %64 = math.sqrt %cst_39 : f32
    %65 = vector.broadcast %64 : f32 to vector<32x128xf32>
    %66 = arith.divf %61, %65 : vector<32x128xf32>
    %67 = math.erf %66 : vector<32x128xf32>
    %cst_40 = arith.constant 1.000000e+00 : f32
    %68 = vector.broadcast %cst_40 : f32 to vector<32x128xf32>
    %69 = arith.addf %68, %67 : vector<32x128xf32>
    %70 = arith.mulf %63, %69 : vector<32x128xf32>
    %c0_41 = arith.constant 0 : index
    %c0_42 = arith.constant 0 : index
    %71 = vector.load %arg14[%c0_41, %c0_42] : memref<32x32xbf16, #tpu.memory_space<vmem>>, vector<32x32xbf16>
    %72 = arith.truncf %70 : vector<32x128xf32> to vector<32x128xbf16>
    %cst_43 = arith.constant dense<0.000000e+00> : vector<32x128xf32>
    %73 = tpu.matmul %71, %72, %cst_43 {dimension_numbers = #tpu.dot_dimension_numbers<[1], [0], [0], [1], [0, 0, 1, 1], [], []>} : vector<32x32xbf16>, vector<32x128xbf16>, vector<32x128xf32> -> vector<32x128xf32>
    %c0_44 = arith.constant 0 : index
    %c0_45 = arith.constant 0 : index
    %74 = vector.load %arg15[%c0_44, %c0_45] : memref<32x1xf32, #tpu.memory_space<vmem>>, vector<32x1xf32>
    %75 = vector.broadcast %74 : vector<32x1xf32> to vector<32x128xf32>
    %76 = arith.addf %73, %75 : vector<32x128xf32>
    %c0_46 = arith.constant 0 : index
    %c0_47 = arith.constant 0 : index
    %77 = vector.load %arg16[%c0_46, %c0_47] : memref<32x128xf32, #tpu.memory_space<vmem>>, vector<32x128xf32>
    tpu.vector_store %arg16[%c0_46, %c0_47], %76 {strides = array<i32>} : memref<32x128xf32, #tpu.memory_space<vmem>>, vector<32x128xf32>,
    return
  }
  func.func @transform_0(%arg0: i32) -> (i32, i32) {
    %c0_i32 = arith.constant 0 : i32
    %c0_i32_0 = arith.constant 0 : i32
    return %c0_i32, %arg0 : i32, i32
  }
  func.func @transform_1(%arg0: i32) -> (i32, i32) {
    %c0_i32 = arith.constant 0 : i32
    %c0_i32_0 = arith.constant 0 : i32
    return %c0_i32, %arg0 : i32, i32
  }
  func.func @transform_2(%arg0: i32) -> (i32, i32) {
    %c0_i32 = arith.constant 0 : i32
    %c0_i32_0 = arith.constant 0 : i32
    %c0_i32_1 = arith.constant 0 : i32
    return %c0_i32, %c0_i32_0 : i32, i32
  }
  func.func @transform_3(%arg0: i32) -> (i32, i32) {
    %c0_i32 = arith.constant 0 : i32
    %c0_i32_0 = arith.constant 0 : i32
    %c0_i32_1 = arith.constant 0 : i32
    return %c0_i32, %c0_i32_0 : i32, i32
  }
  func.func @transform_4(%arg0: i32) -> (i32, i32) {
    %c0_i32 = arith.constant 0 : i32
    %c0_i32_0 = arith.constant 0 : i32
    %c0_i32_1 = arith.constant 0 : i32
    return %c0_i32, %c0_i32_0 : i32, i32
  }
  func.func @transform_5(%arg0: i32) -> (i32, i32) {
    %c0_i32 = arith.constant 0 : i32
    %c0_i32_0 = arith.constant 0 : i32
    %c0_i32_1 = arith.constant 0 : i32
    return %c0_i32, %c0_i32_0 : i32, i32
  }
  func.func @transform_6(%arg0: i32) -> (i32, i32) {
    %c0_i32 = arith.constant 0 : i32
    %c0_i32_0 = arith.constant 0 : i32
    %c0_i32_1 = arith.constant 0 : i32
    return %c0_i32, %c0_i32_0 : i32, i32
  }
  func.func @transform_7(%arg0: i32) -> (i32, i32) {
    %c0_i32 = arith.constant 0 : i32
    %c0_i32_0 = arith.constant 0 : i32
    %c0_i32_1 = arith.constant 0 : i32
    return %c0_i32, %c0_i32_0 : i32, i32
  }
  func.func @transform_8(%arg0: i32) -> (i32, i32) {
    %c0_i32 = arith.constant 0 : i32
    %c0_i32_0 = arith.constant 0 : i32
    %c0_i32_1 = arith.constant 0 : i32
    return %c0_i32, %c0_i32_0 : i32, i32
  }
  func.func @transform_9(%arg0: i32) -> (i32, i32) {
    %c0_i32 = arith.constant 0 : i32
    %c0_i32_0 = arith.constant 0 : i32
    %c0_i32_1 = arith.constant 0 : i32
    return %c0_i32, %c0_i32_0 : i32, i32
  }
  func.func @transform_10(%arg0: i32) -> (i32, i32) {
    %c0_i32 = arith.constant 0 : i32
    %c0_i32_0 = arith.constant 0 : i32
    %c0_i32_1 = arith.constant 0 : i32
    return %c0_i32, %c0_i32_0 : i32, i32
  }
  func.func @transform_11(%arg0: i32) -> (i32, i32) {
    %c0_i32 = arith.constant 0 : i32
    %c0_i32_0 = arith.constant 0 : i32
    %c0_i32_1 = arith.constant 0 : i32
    return %c0_i32, %c0_i32_0 : i32, i32
  }
  func.func @transform_12(%arg0: i32) -> (i32, i32) {
    %c0_i32 = arith.constant 0 : i32
    %c0_i32_0 = arith.constant 0 : i32
    %c0_i32_1 = arith.constant 0 : i32
    return %c0_i32, %c0_i32_0 : i32, i32
  }
  func.func @transform_13(%arg0: i32) -> (i32, i32) {
    %c0_i32 = arith.constant 0 : i32
    %c0_i32_0 = arith.constant 0 : i32
    %c0_i32_1 = arith.constant 0 : i32
    return %c0_i32, %c0_i32_0 : i32, i32
  }
  func.func @transform_14(%arg0: i32) -> (i32, i32) {
    %c0_i32 = arith.constant 0 : i32
    %c0_i32_0 = arith.constant 0 : i32
    %c0_i32_1 = arith.constant 0 : i32
    return %c0_i32, %c0_i32_0 : i32, i32
  }
  func.func @transform_15(%arg0: i32) -> (i32, i32) {
    %c0_i32 = arith.constant 0 : i32
    %c0_i32_0 = arith.constant 0 : i32
    return %c0_i32, %arg0 : i32, i32
  }
}

module attributes {stable_mosaic.version = 11 : i64} {
  func.func @fno_chain_kernel(%arg0: i32, %arg1: memref<32x256xf32, #tpu.memory_space<vmem>>, %arg2: memref<256x192xf32, #tpu.memory_space<vmem>>, %arg3: memref<192x256xf32, #tpu.memory_space<vmem>>, %arg4: memref<2x32x32x192xf32, #tpu.memory_space<vmem>>, %arg5: memref<2x32x32xf32, #tpu.memory_space<vmem>>, %arg6: memref<2x32x1xf32, #tpu.memory_space<vmem>>, %arg7: memref<2x16x32xbf16, #tpu.memory_space<vmem>>, %arg8: memref<2x16x1xf32, #tpu.memory_space<vmem>>, %arg9: memref<2x32x16xbf16, #tpu.memory_space<vmem>>, %arg10: memref<2x32x1xf32, #tpu.memory_space<vmem>>, %arg11: memref<32x32xbf16, #tpu.memory_space<vmem>>, %arg12: memref<32x1xf32, #tpu.memory_space<vmem>>, %arg13: memref<3x32xf32, #tpu.memory_space<vmem>>, %arg14: memref<3x1xf32, #tpu.memory_space<vmem>>, %arg15: memref<3x256xf32, #tpu.memory_space<vmem>>) attributes {dimension_semantics = [#tpu.dimension_semantics<arbitrary>], iteration_bounds = array<i64: 1>, scalar_prefetch = 0 : i64, scratch_operands = 0 : i64, tpu.core_type = #tpu.core_type<tc>, window_params = [{pipeline_mode = #tpu.pipeline_mode<synchronous>, transform_indices = @transform_0, window_bounds = array<i64: 32, 256>}, {pipeline_mode = #tpu.pipeline_mode<synchronous>, transform_indices = @transform_1, window_bounds = array<i64: 256, 192>}, {pipeline_mode = #tpu.pipeline_mode<synchronous>, transform_indices = @transform_2, window_bounds = array<i64: 192, 256>}, {pipeline_mode = #tpu.pipeline_mode<synchronous>, transform_indices = @transform_3, window_bounds = array<i64: 2, 32, 32, 192>}, {pipeline_mode = #tpu.pipeline_mode<synchronous>, transform_indices = @transform_4, window_bounds = array<i64: 2, 32, 32>}, {pipeline_mode = #tpu.pipeline_mode<synchronous>, transform_indices = @transform_5, window_bounds = array<i64: 2, 32, 1>}, {pipeline_mode = #tpu.pipeline_mode<synchronous>, transform_indices = @transform_6, window_bounds = array<i64: 2, 16, 32>}, {pipeline_mode = #tpu.pipeline_mode<synchronous>, transform_indices = @transform_7, window_bounds = array<i64: 2, 16, 1>}, {pipeline_mode = #tpu.pipeline_mode<synchronous>, transform_indices = @transform_8, window_bounds = array<i64: 2, 32, 16>}, {pipeline_mode = #tpu.pipeline_mode<synchronous>, transform_indices = @transform_9, window_bounds = array<i64: 2, 32, 1>}, {pipeline_mode = #tpu.pipeline_mode<synchronous>, transform_indices = @transform_10, window_bounds = array<i64: 32, 32>}, {pipeline_mode = #tpu.pipeline_mode<synchronous>, transform_indices = @transform_11, window_bounds = array<i64: 32, 1>}, {pipeline_mode = #tpu.pipeline_mode<synchronous>, transform_indices = @transform_12, window_bounds = array<i64: 3, 32>}, {pipeline_mode = #tpu.pipeline_mode<synchronous>, transform_indices = @transform_13, window_bounds = array<i64: 3, 1>}, {pipeline_mode = #tpu.pipeline_mode<synchronous>, transform_indices = @transform_14, window_bounds = array<i64: 3, 256>}]} {
    %c0 = arith.constant 0 : index
    %c0_0 = arith.constant 0 : index
    %0 = vector.load %arg1[%c0, %c0_0] : memref<32x256xf32, #tpu.memory_space<vmem>>, vector<32x256xf32>
    %c0_1 = arith.constant 0 : index
    %c0_2 = arith.constant 0 : index
    %1 = vector.load %arg2[%c0_1, %c0_2] : memref<256x192xf32, #tpu.memory_space<vmem>>, vector<256x192xf32>
    %c0_3 = arith.constant 0 : index
    %c0_4 = arith.constant 0 : index
    %2 = vector.load %arg3[%c0_3, %c0_4] : memref<192x256xf32, #tpu.memory_space<vmem>>, vector<192x256xf32>
    %cst = arith.constant 5.000000e-01 : f32
    %3 = vector.broadcast %cst : f32 to vector<32x256xf32>
    %4 = arith.mulf %3, %0 : vector<32x256xf32>
    %cst_5 = arith.constant 2.000000e+00 : f32
    %5 = math.sqrt %cst_5 : f32
    %6 = vector.broadcast %5 : f32 to vector<32x256xf32>
    %7 = arith.divf %0, %6 : vector<32x256xf32>
    %8 = math.erf %7 : vector<32x256xf32>
    %cst_6 = arith.constant 1.000000e+00 : f32
    %9 = vector.broadcast %cst_6 : f32 to vector<32x256xf32>
    %10 = arith.addf %9, %8 : vector<32x256xf32>
    %11 = arith.mulf %4, %10 : vector<32x256xf32>
    %c0_7 = arith.constant 0 : index
    %c0_8 = arith.constant 0 : index
    %c0_9 = arith.constant 0 : index
    %12 = vector.load %arg6[%c0_7, %c0_8, %c0_9] : memref<2x32x1xf32, #tpu.memory_space<vmem>>, vector<1x32x1xf32>
    %13 = vector.shape_cast %12 : vector<1x32x1xf32> to vector<32x1xf32>
    %14 = vector.broadcast %13 : vector<32x1xf32> to vector<32x256xf32>
    %15 = arith.mulf %14, %11 : vector<32x256xf32>
    %16 = math.tanh %11 : vector<32x256xf32>
    %cst_10 = arith.constant dense<0.000000e+00> : vector<32x192xf32>
    %17 = tpu.matmul %16, %1, %cst_10 {dimension_numbers = #tpu.dot_dimension_numbers<[1], [0], [0], [1], [0, 0, 1, 1], [], []>} : vector<32x256xf32>, vector<256x192xf32>, vector<32x192xf32> -> vector<32x192xf32>
    %18 = vector.shape_cast %17 : vector<32x192xf32> to vector<1x32x192xf32>
    %c0_11 = arith.constant 0 : index
    %c0_12 = arith.constant 0 : index
    %c0_13 = arith.constant 0 : index
    %c0_14 = arith.constant 0 : index
    %19 = vector.load %arg4[%c0_11, %c0_12, %c0_13, %c0_14] : memref<2x32x32x192xf32, #tpu.memory_space<vmem>>, vector<1x32x32x192xf32>
    %20 = vector.shape_cast %19 : vector<1x32x32x192xf32> to vector<32x32x192xf32>
    %21 = vector.broadcast %18 : vector<1x32x192xf32> to vector<32x32x192xf32>
    %22 = arith.mulf %21, %20 : vector<32x32x192xf32>
    %cst_15 = arith.constant dense<0.000000e+00> : vector<32x192xf32>
    %23 = vector.multi_reduction <add>, %22, %cst_15 [1] : vector<32x32x192xf32> to vector<32x192xf32>
    %c0_16 = arith.constant 0 : index
    %c0_17 = arith.constant 0 : index
    %c0_18 = arith.constant 0 : index
    %24 = vector.load %arg5[%c0_16, %c0_17, %c0_18] : memref<2x32x32xf32, #tpu.memory_space<vmem>>, vector<1x32x32xf32>
    %25 = vector.shape_cast %24 : vector<1x32x32xf32> to vector<32x32xf32>
    %26 = tpu.concatenate %23, %25 in 1 : vector<32x192xf32>, vector<32x32xf32> -> vector<32x224xf32>
    %27 = tpu.concatenate %2, %11 in 0 : vector<192x256xf32>, vector<32x256xf32> -> vector<224x256xf32>
    %cst_19 = arith.constant dense<0.000000e+00> : vector<32x256xf32>
    %28 = tpu.matmul %26, %27, %cst_19 {dimension_numbers = #tpu.dot_dimension_numbers<[1], [0], [0], [1], [0, 0, 1, 1], [], []>} : vector<32x224xf32>, vector<224x256xf32>, vector<32x256xf32> -> vector<32x256xf32>
    %cst_20 = arith.constant 5.000000e-01 : f32
    %29 = vector.broadcast %cst_20 : f32 to vector<32x256xf32>
    %30 = arith.mulf %29, %28 : vector<32x256xf32>
    %cst_21 = arith.constant 2.000000e+00 : f32
    %31 = math.sqrt %cst_21 : f32
    %32 = vector.broadcast %31 : f32 to vector<32x256xf32>
    %33 = arith.divf %28, %32 : vector<32x256xf32>
    %34 = math.erf %33 : vector<32x256xf32>
    %cst_22 = arith.constant 1.000000e+00 : f32
    %35 = vector.broadcast %cst_22 : f32 to vector<32x256xf32>
    %36 = arith.addf %35, %34 : vector<32x256xf32>
    %37 = arith.mulf %30, %36 : vector<32x256xf32>
    %c0_23 = arith.constant 0 : index
    %c0_24 = arith.constant 0 : index
    %c0_25 = arith.constant 0 : index
    %38 = vector.load %arg7[%c0_23, %c0_24, %c0_25] : memref<2x16x32xbf16, #tpu.memory_space<vmem>>, vector<1x16x32xbf16>
    %39 = vector.shape_cast %38 : vector<1x16x32xbf16> to vector<16x32xbf16>
    %40 = arith.truncf %37 : vector<32x256xf32> to vector<32x256xbf16>
    %cst_26 = arith.constant dense<0.000000e+00> : vector<16x256xf32>
    %41 = tpu.matmul %39, %40, %cst_26 {dimension_numbers = #tpu.dot_dimension_numbers<[1], [0], [0], [1], [0, 0, 1, 1], [], []>} : vector<16x32xbf16>, vector<32x256xbf16>, vector<16x256xf32> -> vector<16x256xf32>
    %c0_27 = arith.constant 0 : index
    %c0_28 = arith.constant 0 : index
    %c0_29 = arith.constant 0 : index
    %42 = vector.load %arg8[%c0_27, %c0_28, %c0_29] : memref<2x16x1xf32, #tpu.memory_space<vmem>>, vector<1x16x1xf32>
    %43 = vector.shape_cast %42 : vector<1x16x1xf32> to vector<16x1xf32>
    %44 = vector.broadcast %43 : vector<16x1xf32> to vector<16x256xf32>
    %45 = arith.addf %41, %44 : vector<16x256xf32>
    %cst_30 = arith.constant 5.000000e-01 : f32
    %46 = vector.broadcast %cst_30 : f32 to vector<16x256xf32>
    %47 = arith.mulf %46, %45 : vector<16x256xf32>
    %cst_31 = arith.constant 2.000000e+00 : f32
    %48 = math.sqrt %cst_31 : f32
    %49 = vector.broadcast %48 : f32 to vector<16x256xf32>
    %50 = arith.divf %45, %49 : vector<16x256xf32>
    %51 = math.erf %50 : vector<16x256xf32>
    %cst_32 = arith.constant 1.000000e+00 : f32
    %52 = vector.broadcast %cst_32 : f32 to vector<16x256xf32>
    %53 = arith.addf %52, %51 : vector<16x256xf32>
    %54 = arith.mulf %47, %53 : vector<16x256xf32>
    %c0_33 = arith.constant 0 : index
    %c0_34 = arith.constant 0 : index
    %c0_35 = arith.constant 0 : index
    %55 = vector.load %arg9[%c0_33, %c0_34, %c0_35] : memref<2x32x16xbf16, #tpu.memory_space<vmem>>, vector<1x32x16xbf16>
    %56 = vector.shape_cast %55 : vector<1x32x16xbf16> to vector<32x16xbf16>
    %57 = arith.truncf %54 : vector<16x256xf32> to vector<16x256xbf16>
    %cst_36 = arith.constant dense<0.000000e+00> : vector<32x256xf32>
    %58 = tpu.matmul %56, %57, %cst_36 {dimension_numbers = #tpu.dot_dimension_numbers<[1], [0], [0], [1], [0, 0, 1, 1], [], []>} : vector<32x16xbf16>, vector<16x256xbf16>, vector<32x256xf32> -> vector<32x256xf32>
    %c0_37 = arith.constant 0 : index
    %c0_38 = arith.constant 0 : index
    %c0_39 = arith.constant 0 : index
    %59 = vector.load %arg10[%c0_37, %c0_38, %c0_39] : memref<2x32x1xf32, #tpu.memory_space<vmem>>, vector<1x32x1xf32>
    %60 = vector.shape_cast %59 : vector<1x32x1xf32> to vector<32x1xf32>
    %61 = vector.broadcast %60 : vector<32x1xf32> to vector<32x256xf32>
    %62 = arith.addf %58, %61 : vector<32x256xf32>
    %63 = arith.addf %62, %15 : vector<32x256xf32>
    %cst_40 = arith.constant 5.000000e-01 : f32
    %64 = vector.broadcast %cst_40 : f32 to vector<32x256xf32>
    %65 = arith.mulf %64, %63 : vector<32x256xf32>
    %cst_41 = arith.constant 2.000000e+00 : f32
    %66 = math.sqrt %cst_41 : f32
    %67 = vector.broadcast %66 : f32 to vector<32x256xf32>
    %68 = arith.divf %63, %67 : vector<32x256xf32>
    %69 = math.erf %68 : vector<32x256xf32>
    %cst_42 = arith.constant 1.000000e+00 : f32
    %70 = vector.broadcast %cst_42 : f32 to vector<32x256xf32>
    %71 = arith.addf %70, %69 : vector<32x256xf32>
    %72 = arith.mulf %65, %71 : vector<32x256xf32>
    %c1 = arith.constant 1 : index
    %c0_43 = arith.constant 0 : index
    %c0_44 = arith.constant 0 : index
    %73 = vector.load %arg6[%c1, %c0_43, %c0_44] : memref<2x32x1xf32, #tpu.memory_space<vmem>>, vector<1x32x1xf32>
    %74 = vector.shape_cast %73 : vector<1x32x1xf32> to vector<32x1xf32>
    %75 = vector.broadcast %74 : vector<32x1xf32> to vector<32x256xf32>
    %76 = arith.mulf %75, %72 : vector<32x256xf32>
    %77 = math.tanh %72 : vector<32x256xf32>
    %cst_45 = arith.constant dense<0.000000e+00> : vector<32x192xf32>
    %78 = tpu.matmul %77, %1, %cst_45 {dimension_numbers = #tpu.dot_dimension_numbers<[1], [0], [0], [1], [0, 0, 1, 1], [], []>} : vector<32x256xf32>, vector<256x192xf32>, vector<32x192xf32> -> vector<32x192xf32>
    %79 = vector.shape_cast %78 : vector<32x192xf32> to vector<1x32x192xf32>
    %c1_46 = arith.constant 1 : index
    %c0_47 = arith.constant 0 : index
    %c0_48 = arith.constant 0 : index
    %c0_49 = arith.constant 0 : index
    %80 = vector.load %arg4[%c1_46, %c0_47, %c0_48, %c0_49] : memref<2x32x32x192xf32, #tpu.memory_space<vmem>>, vector<1x32x32x192xf32>
    %81 = vector.shape_cast %80 : vector<1x32x32x192xf32> to vector<32x32x192xf32>
    %82 = vector.broadcast %79 : vector<1x32x192xf32> to vector<32x32x192xf32>
    %83 = arith.mulf %82, %81 : vector<32x32x192xf32>
    %cst_50 = arith.constant dense<0.000000e+00> : vector<32x192xf32>
    %84 = vector.multi_reduction <add>, %83, %cst_50 [1] : vector<32x32x192xf32> to vector<32x192xf32>
    %c1_51 = arith.constant 1 : index
    %c0_52 = arith.constant 0 : index
    %c0_53 = arith.constant 0 : index
    %85 = vector.load %arg5[%c1_51, %c0_52, %c0_53] : memref<2x32x32xf32, #tpu.memory_space<vmem>>, vector<1x32x32xf32>
    %86 = vector.shape_cast %85 : vector<1x32x32xf32> to vector<32x32xf32>
    %87 = tpu.concatenate %84, %86 in 1 : vector<32x192xf32>, vector<32x32xf32> -> vector<32x224xf32>
    %88 = tpu.concatenate %2, %72 in 0 : vector<192x256xf32>, vector<32x256xf32> -> vector<224x256xf32>
    %cst_54 = arith.constant dense<0.000000e+00> : vector<32x256xf32>
    %89 = tpu.matmul %87, %88, %cst_54 {dimension_numbers = #tpu.dot_dimension_numbers<[1], [0], [0], [1], [0, 0, 1, 1], [], []>} : vector<32x224xf32>, vector<224x256xf32>, vector<32x256xf32> -> vector<32x256xf32>
    %c1_55 = arith.constant 1 : index
    %c0_56 = arith.constant 0 : index
    %c0_57 = arith.constant 0 : index
    %90 = vector.load %arg7[%c1_55, %c0_56, %c0_57] : memref<2x16x32xbf16, #tpu.memory_space<vmem>>, vector<1x16x32xbf16>
    %91 = vector.shape_cast %90 : vector<1x16x32xbf16> to vector<16x32xbf16>
    %92 = arith.truncf %89 : vector<32x256xf32> to vector<32x256xbf16>
    %cst_58 = arith.constant dense<0.000000e+00> : vector<16x256xf32>
    %93 = tpu.matmul %91, %92, %cst_58 {dimension_numbers = #tpu.dot_dimension_numbers<[1], [0], [0], [1], [0, 0, 1, 1], [], []>} : vector<16x32xbf16>, vector<32x256xbf16>, vector<16x256xf32> -> vector<16x256xf32>
    %c1_59 = arith.constant 1 : index
    %c0_60 = arith.constant 0 : index
    %c0_61 = arith.constant 0 : index
    %94 = vector.load %arg8[%c1_59, %c0_60, %c0_61] : memref<2x16x1xf32, #tpu.memory_space<vmem>>, vector<1x16x1xf32>
    %95 = vector.shape_cast %94 : vector<1x16x1xf32> to vector<16x1xf32>
    %96 = vector.broadcast %95 : vector<16x1xf32> to vector<16x256xf32>
    %97 = arith.addf %93, %96 : vector<16x256xf32>
    %cst_62 = arith.constant 5.000000e-01 : f32
    %98 = vector.broadcast %cst_62 : f32 to vector<16x256xf32>
    %99 = arith.mulf %98, %97 : vector<16x256xf32>
    %cst_63 = arith.constant 2.000000e+00 : f32
    %100 = math.sqrt %cst_63 : f32
    %101 = vector.broadcast %100 : f32 to vector<16x256xf32>
    %102 = arith.divf %97, %101 : vector<16x256xf32>
    %103 = math.erf %102 : vector<16x256xf32>
    %cst_64 = arith.constant 1.000000e+00 : f32
    %104 = vector.broadcast %cst_64 : f32 to vector<16x256xf32>
    %105 = arith.addf %104, %103 : vector<16x256xf32>
    %106 = arith.mulf %99, %105 : vector<16x256xf32>
    %c1_65 = arith.constant 1 : index
    %c0_66 = arith.constant 0 : index
    %c0_67 = arith.constant 0 : index
    %107 = vector.load %arg9[%c1_65, %c0_66, %c0_67] : memref<2x32x16xbf16, #tpu.memory_space<vmem>>, vector<1x32x16xbf16>
    %108 = vector.shape_cast %107 : vector<1x32x16xbf16> to vector<32x16xbf16>
    %109 = arith.truncf %106 : vector<16x256xf32> to vector<16x256xbf16>
    %cst_68 = arith.constant dense<0.000000e+00> : vector<32x256xf32>
    %110 = tpu.matmul %108, %109, %cst_68 {dimension_numbers = #tpu.dot_dimension_numbers<[1], [0], [0], [1], [0, 0, 1, 1], [], []>} : vector<32x16xbf16>, vector<16x256xbf16>, vector<32x256xf32> -> vector<32x256xf32>
    %c1_69 = arith.constant 1 : index
    %c0_70 = arith.constant 0 : index
    %c0_71 = arith.constant 0 : index
    %111 = vector.load %arg10[%c1_69, %c0_70, %c0_71] : memref<2x32x1xf32, #tpu.memory_space<vmem>>, vector<1x32x1xf32>
    %112 = vector.shape_cast %111 : vector<1x32x1xf32> to vector<32x1xf32>
    %113 = vector.broadcast %112 : vector<32x1xf32> to vector<32x256xf32>
    %114 = arith.addf %110, %113 : vector<32x256xf32>
    %115 = arith.addf %114, %76 : vector<32x256xf32>
    %c0_72 = arith.constant 0 : index
    %c0_73 = arith.constant 0 : index
    %116 = vector.load %arg11[%c0_72, %c0_73] : memref<32x32xbf16, #tpu.memory_space<vmem>>, vector<32x32xbf16>
    %117 = arith.truncf %115 : vector<32x256xf32> to vector<32x256xbf16>
    %cst_74 = arith.constant dense<0.000000e+00> : vector<32x256xf32>
    %118 = tpu.matmul %116, %117, %cst_74 {dimension_numbers = #tpu.dot_dimension_numbers<[1], [0], [0], [1], [0, 0, 1, 1], [], []>} : vector<32x32xbf16>, vector<32x256xbf16>, vector<32x256xf32> -> vector<32x256xf32>
    %c0_75 = arith.constant 0 : index
    %c0_76 = arith.constant 0 : index
    %119 = vector.load %arg12[%c0_75, %c0_76] : memref<32x1xf32, #tpu.memory_space<vmem>>, vector<32x1xf32>
    %120 = vector.broadcast %119 : vector<32x1xf32> to vector<32x256xf32>
    %121 = arith.addf %118, %120 : vector<32x256xf32>
    %cst_77 = arith.constant 5.000000e-01 : f32
    %122 = vector.broadcast %cst_77 : f32 to vector<32x256xf32>
    %123 = arith.mulf %122, %121 : vector<32x256xf32>
    %cst_78 = arith.constant 2.000000e+00 : f32
    %124 = math.sqrt %cst_78 : f32
    %125 = vector.broadcast %124 : f32 to vector<32x256xf32>
    %126 = arith.divf %121, %125 : vector<32x256xf32>
    %127 = math.erf %126 : vector<32x256xf32>
    %cst_79 = arith.constant 1.000000e+00 : f32
    %128 = vector.broadcast %cst_79 : f32 to vector<32x256xf32>
    %129 = arith.addf %128, %127 : vector<32x256xf32>
    %130 = arith.mulf %123, %129 : vector<32x256xf32>
    %c0_80 = arith.constant 0 : index
    %c0_81 = arith.constant 0 : index
    %131 = vector.load %arg13[%c0_80, %c0_81] : memref<3x32xf32, #tpu.memory_space<vmem>>, vector<3x32xf32>
    %cst_82 = arith.constant dense<0.000000e+00> : vector<3x256xf32>
    %132 = tpu.matmul %131, %130, %cst_82 {dimension_numbers = #tpu.dot_dimension_numbers<[1], [0], [0], [1], [0, 0, 1, 1], [], []>} : vector<3x32xf32>, vector<32x256xf32>, vector<3x256xf32> -> vector<3x256xf32>
    %c0_83 = arith.constant 0 : index
    %c0_84 = arith.constant 0 : index
    %133 = vector.load %arg14[%c0_83, %c0_84] : memref<3x1xf32, #tpu.memory_space<vmem>>, vector<3x1xf32>
    %134 = vector.broadcast %133 : vector<3x1xf32> to vector<3x256xf32>
    %135 = arith.addf %132, %134 : vector<3x256xf32>
    %c0_85 = arith.constant 0 : index
    %c0_86 = arith.constant 0 : index
    %136 = vector.load %arg15[%c0_85, %c0_86] : memref<3x256xf32, #tpu.memory_space<vmem>>, vector<3x256xf32>
    tpu.vector_store %arg15[%c0_85, %c0_86], %135 {strides = array<i32>} : memref<3x256xf32, #tpu.memory_space<vmem>>, vector<3x256xf32>,
    return
  }
  func.func @transform_0(%arg0: i32) -> (i32, i32) {
    %c0_i32 = arith.constant 0 : i32
    %c0_i32_0 = arith.constant 0 : i32
    %c0_i32_1 = arith.constant 0 : i32
    return %c0_i32, %c0_i32_0 : i32, i32
  }
  func.func @transform_1(%arg0: i32) -> (i32, i32) {
    %c0_i32 = arith.constant 0 : i32
    %c0_i32_0 = arith.constant 0 : i32
    %c0_i32_1 = arith.constant 0 : i32
    return %c0_i32, %c0_i32_0 : i32, i32
  }
  func.func @transform_2(%arg0: i32) -> (i32, i32) {
    %c0_i32 = arith.constant 0 : i32
    %c0_i32_0 = arith.constant 0 : i32
    %c0_i32_1 = arith.constant 0 : i32
    return %c0_i32, %c0_i32_0 : i32, i32
  }
  func.func @transform_3(%arg0: i32) -> (i32, i32, i32, i32) {
    %c0_i32 = arith.constant 0 : i32
    %c0_i32_0 = arith.constant 0 : i32
    %c0_i32_1 = arith.constant 0 : i32
    %c0_i32_2 = arith.constant 0 : i32
    %c0_i32_3 = arith.constant 0 : i32
    return %c0_i32, %c0_i32_0, %c0_i32_1, %c0_i32_2 : i32, i32, i32, i32
  }
  func.func @transform_4(%arg0: i32) -> (i32, i32, i32) {
    %c0_i32 = arith.constant 0 : i32
    %c0_i32_0 = arith.constant 0 : i32
    %c0_i32_1 = arith.constant 0 : i32
    %c0_i32_2 = arith.constant 0 : i32
    return %c0_i32, %c0_i32_0, %c0_i32_1 : i32, i32, i32
  }
  func.func @transform_5(%arg0: i32) -> (i32, i32, i32) {
    %c0_i32 = arith.constant 0 : i32
    %c0_i32_0 = arith.constant 0 : i32
    %c0_i32_1 = arith.constant 0 : i32
    %c0_i32_2 = arith.constant 0 : i32
    return %c0_i32, %c0_i32_0, %c0_i32_1 : i32, i32, i32
  }
  func.func @transform_6(%arg0: i32) -> (i32, i32, i32) {
    %c0_i32 = arith.constant 0 : i32
    %c0_i32_0 = arith.constant 0 : i32
    %c0_i32_1 = arith.constant 0 : i32
    %c0_i32_2 = arith.constant 0 : i32
    return %c0_i32, %c0_i32_0, %c0_i32_1 : i32, i32, i32
  }
  func.func @transform_7(%arg0: i32) -> (i32, i32, i32) {
    %c0_i32 = arith.constant 0 : i32
    %c0_i32_0 = arith.constant 0 : i32
    %c0_i32_1 = arith.constant 0 : i32
    %c0_i32_2 = arith.constant 0 : i32
    return %c0_i32, %c0_i32_0, %c0_i32_1 : i32, i32, i32
  }
  func.func @transform_8(%arg0: i32) -> (i32, i32, i32) {
    %c0_i32 = arith.constant 0 : i32
    %c0_i32_0 = arith.constant 0 : i32
    %c0_i32_1 = arith.constant 0 : i32
    %c0_i32_2 = arith.constant 0 : i32
    return %c0_i32, %c0_i32_0, %c0_i32_1 : i32, i32, i32
  }
  func.func @transform_9(%arg0: i32) -> (i32, i32, i32) {
    %c0_i32 = arith.constant 0 : i32
    %c0_i32_0 = arith.constant 0 : i32
    %c0_i32_1 = arith.constant 0 : i32
    %c0_i32_2 = arith.constant 0 : i32
    return %c0_i32, %c0_i32_0, %c0_i32_1 : i32, i32, i32
  }
  func.func @transform_10(%arg0: i32) -> (i32, i32) {
    %c0_i32 = arith.constant 0 : i32
    %c0_i32_0 = arith.constant 0 : i32
    %c0_i32_1 = arith.constant 0 : i32
    return %c0_i32, %c0_i32_0 : i32, i32
  }
  func.func @transform_11(%arg0: i32) -> (i32, i32) {
    %c0_i32 = arith.constant 0 : i32
    %c0_i32_0 = arith.constant 0 : i32
    %c0_i32_1 = arith.constant 0 : i32
    return %c0_i32, %c0_i32_0 : i32, i32
  }
  func.func @transform_12(%arg0: i32) -> (i32, i32) {
    %c0_i32 = arith.constant 0 : i32
    %c0_i32_0 = arith.constant 0 : i32
    %c0_i32_1 = arith.constant 0 : i32
    return %c0_i32, %c0_i32_0 : i32, i32
  }
  func.func @transform_13(%arg0: i32) -> (i32, i32) {
    %c0_i32 = arith.constant 0 : i32
    %c0_i32_0 = arith.constant 0 : i32
    %c0_i32_1 = arith.constant 0 : i32
    return %c0_i32, %c0_i32_0 : i32, i32
  }
  func.func @transform_14(%arg0: i32) -> (i32, i32) {
    %c0_i32 = arith.constant 0 : i32
    %c0_i32_0 = arith.constant 0 : i32
    %c0_i32_1 = arith.constant 0 : i32
    return %c0_i32, %c0_i32_0 : i32, i32
  }
}

</mosaic_0001>

<llo_original>
// kernel: physics_engine_forward.2
$region0: #{physics_engine_forward.2}
  #allocation0 [shape = 'u32[]', space=smem, size = 0x4, offset = 0x4, fixed_abs, tag = 'smem constant byte address 0x4 - core index']
  #allocation1 [shape = 'u32[144,128]{1,0:T(1,128)}', space=vmem, size = 0x12000, scoped, tag = 'internal scratch']
  %s0 = inlined_call_operand.hbm [shape: s32[1,256], index: 0, kind: input, shape index: {}]
  %s1 = inlined_call_operand.hbm [shape: f32[21,256], index: 1, kind: input, shape index: {}]
  %s2 = inlined_call_operand.vmem [shape: f32[128,9], index: 2, kind: input, shape index: {}]
  %s3 = inlined_call_operand.vmem [shape: f32[128,21], index: 3, kind: input, shape index: {}]
  %s4 = inlined_call_operand.vmem [shape: f32[128,1], index: 4, kind: input, shape index: {}]
  %s5 = inlined_call_operand.hbm [shape: bf16[128,128], index: 5, kind: input, shape index: {}]
  %s6 = inlined_call_operand.vmem [shape: f32[128,1], index: 6, kind: input, shape index: {}]
  %s7 = inlined_call_operand.hbm [shape: bf16[128,128], index: 7, kind: input, shape index: {}]
  %s8 = inlined_call_operand.vmem [shape: f32[128,1], index: 8, kind: input, shape index: {}]
  %s9 = inlined_call_operand.vmem [shape: f32[128,1], index: 9, kind: input, shape index: {}]
  %s10 = inlined_call_operand.vmem [shape: f32[128,1], index: 10, kind: input, shape index: {}]
  %s11 = inlined_call_operand.hbm [shape: bf16[32,128], index: 11, kind: input, shape index: {}]
  %s12 = inlined_call_operand.vmem [shape: f32[32,1], index: 12, kind: input, shape index: {}]
  %s13 = inlined_call_operand.hbm [shape: bf16[32,32], index: 13, kind: input, shape index: {}]
  %s14 = inlined_call_operand.vmem [shape: f32[32,1], index: 14, kind: input, shape index: {}]
  %s15 = inlined_call_operand.vmem [shape: f32[32,256], index: 15, kind: output, shape index: {}]
  %s16 = sld [smem:[#allocation0]]
  $region151: #{physics_engine_forward.2} parent=0
    _
  %s18 = ssub.s32 1, %s16
  %s19 = scalar_select 0, %s18, %s16
  $region1: #{physics_engine_forward.2} parent=0
    #allocation2 [shape = 'u8[1024]{0}', space=vmem, size = 0x400, scoped, tag = 'input window, operand 0']
    #allocation3 [shape = 's32[2]{0}', space=sflag, size = 0x8, scoped, tag = 'scoped memory for physics_engine_forward.2']
    #allocation4 [shape = 'u8[24576]{0}', space=vmem, size = 0x6000, scoped, tag = 'input window, operand 1']
    #allocation5 [shape = 's32[2]{0}', space=sflag, size = 0x8, scoped, tag = 'scoped memory for physics_engine_forward.2']
    #allocation6 [shape = 'u8[32768]{0}', space=vmem, size = 0x8000, scoped, tag = 'input window, operand 5, single buffered']
    #allocation7 [shape = 'u8[32768]{0}', space=vmem, size = 0x8000, scoped, tag = 'input window, operand 7, single buffered']
    #allocation8 [shape = 's32[1]{0}', space=sflag, size = 0x4, scoped, tag = 'scoped memory for physics_engine_forward.2']
    #allocation9 [shape = 'u8[8192]{0}', space=vmem, size = 0x2000, scoped, tag = 'input window, operand 11, single buffered']
    #allocation10 [shape = 'u8[8192]{0}', space=vmem, size = 0x2000, scoped, tag = 'input window, operand 13, single buffered']
    #allocation11 [shape = 's32[1]{0}', space=sflag, size = 0x4, scoped, tag = 'scoped memory for physics_engine_forward.2']
    #allocation12 [shape = 'u8[32768]{0}', space=vmem, size = 0x8000, scoped, tag = 'output window, operand 0']
    %20 = vsyncpa [#allocation3], 0
    %s21 = scalar_lea.sflag [#allocation3], 1
    %22 = vsyncpa %s21, 0
    %23 = vsyncpa [#allocation5], 0
    %s24 = scalar_lea.sflag [#allocation5], 1
    %25 = vsyncpa %s24, 0
    %26 = vsyncpa [#allocation8], 0
    %27 = vsyncpa [#allocation11], 0
    loop: start=0, step=1, limit=4
    $region2: #{physics_engine_forward.2} parent=1 // loop_pre_header
      _
    $region3: #{physics_engine_forward.2} parent=1 // loop_header
      %s29 = sphi 0, %s33
      %p30 = scmp.ge.s32.totalorder %s29, 4
      %s39 = sphi 0, %s41
      %s42 = sphi 0, %s39
      %s43 = sphi 0, %s42
      %s59 = sphi 0, %s43
      %s65 = sphi 0, %s67
      %s68 = sphi 0, %s65
      %s69 = sphi 0, %s68
      %s85 = sphi 0, %s69
      %s89 = sphi 0, %s89
      %s91 = sphi 0, %s89
      %s92 = sphi 0, %s91
      %s106 = sphi 0, %s92
      %s110 = sphi 0, %s110
      %s112 = sphi 0, %s110
      %s113 = sphi 0, %s112
      %s127 = sphi 0, %s113
      %s131 = sphi 0, %s131
      %s133 = sphi 0, %s131
      %s134 = sphi 0, %s133
      %s148 = sphi 0, %s134
      %s152 = sphi 0, %s152
      %s154 = sphi 0, %s152
      %s155 = sphi 0, %s154
      %s169 = sphi 0, %s155
      %s173 = sphi 0, %s173
      %s175 = sphi 0, %s173
      %s176 = sphi 0, %s175
      %s190 = sphi 0, %s176
      %s194 = sphi 0, %s194
      %s196 = sphi 0, %s194
      %s197 = sphi 0, %s196
      %s211 = sphi 0, %s197
      %s215 = sphi 0, %s215
      %s217 = sphi 0, %s215
      %s218 = sphi 0, %s217
      %s232 = sphi 0, %s218
      %s236 = sphi 0, %s236
      %s238 = sphi 0, %s236
      %s239 = sphi 0, %s238
      %s253 = sphi 0, %s239
      %s257 = sphi 0, %s257
      %s259 = sphi 0, %s257
      %s260 = sphi 0, %s259
      %s274 = sphi 0, %s260
      %s278 = sphi 0, %s278
      %s280 = sphi 0, %s278
      %s281 = sphi 0, %s280
      %s295 = sphi 0, %s281
      %s299 = sphi 0, %s299
      %s301 = sphi 0, %s299
      %s302 = sphi 0, %s301
      %s316 = sphi 0, %s302
      %s320 = sphi 0, %s320
      %s322 = sphi 0, %s320
      %s323 = sphi 0, %s322
      %s337 = sphi 0, %s323
      %s341 = sphi 0, %s341
      %s343 = sphi 0, %s341
      %s344 = sphi 0, %s343
      %s358 = sphi 0, %s344
      %s364 = sphi 0, %s366
      %s367 = sphi 0, %s364
      %s368 = sphi 0, %s367
      %s384 = sphi 0, %s368
    $region4: #{physics_engine_forward.2} parent=1 // loop_header_branch
      %32 = sbr.rel (%p30) target = $region8
    $region5: #{physics_engine_forward.2} parent=1 // loop_body
      %s34 = ssub.s32 %s29, 1
      %s35 = ssub.s32 %s29, 2
      %s36 = sadd.s32 %s29, 1
      %s37 = ssub.s32 %s29, %s36
      %p38 = scmp.eq.s32.totalorder %s37, 0
      %s40 = sadd.s32 %s39, 1
      %s41 = scalar_select %p38, %s39, %s40
      %p44 = pneg %p38
      %p45 = scmp.eq.s32.totalorder %s29, 1
      %p46 = por %p44, %p45
      %p47 = scmp.ne.s32.totalorder %s39, %s42
      %p48 = scmp.eq.s32.totalorder %s29, 0
      %p49 = por %p47, %p48
      %p50 = scmp.ne.s32.totalorder %s39, %s42
      %p51 = scmp.eq.s32.totalorder %s34, 1
      %p52 = por %p50, %p51
      %p53 = scmp.ne.s32.totalorder %s42, %s43
      %p54 = scmp.eq.s32.totalorder %s34, 0
      %p55 = por %p53, %p54
      %p56 = scmp.ne.s32.totalorder %s42, %s43
      %p57 = scmp.eq.s32.totalorder %s35, 1
      %p58 = por %p56, %p57
      %p60 = scmp.ne.s32.totalorder %s43, %s59
      %p61 = scmp.eq.s32.totalorder %s35, 0
      %p62 = por %p60, %p61
      %s63 = ssub.s32 %s29, %s36
      %p64 = scmp.eq.s32.totalorder %s63, 0
      %s66 = sadd.s32 %s65, 1
      %s67 = scalar_select %p64, %s65, %s66
      %p70 = pneg %p64
      %p71 = scmp.eq.s32.totalorder %s29, 1
      %p72 = por %p70, %p71
      %p73 = scmp.ne.s32.totalorder %s65, %s68
      %p74 = scmp.eq.s32.totalorder %s29, 0
      %p75 = por %p73, %p74
      %p76 = scmp.ne.s32.totalorder %s65, %s68
      %p77 = scmp.eq.s32.totalorder %s34, 1
      %p78 = por %p76, %p77
      %p79 = scmp.ne.s32.totalorder %s68, %s69
      %p80 = scmp.eq.s32.totalorder %s34, 0
      %p81 = por %p79, %p80
      %p82 = scmp.ne.s32.totalorder %s68, %s69
      %p83 = scmp.eq.s32.totalorder %s35, 1
      %p84 = por %p82, %p83
      %p86 = scmp.ne.s32.totalorder %s69, %s85
      %p87 = scmp.eq.s32.totalorder %s35, 0
      %p88 = por %p86, %p87
      %s90 = sadd.s32 %s89, 1
      %p93 = scmp.eq.s32.totalorder %s29, 1
      %p94 = scmp.ne.s32.totalorder %s89, %s91
      %p95 = scmp.eq.s32.totalorder %s29, 0
      %p96 = por %p94, %p95
      %p97 = scmp.ne.s32.totalorder %s89, %s91
      %p98 = scmp.eq.s32.totalorder %s34, 1
      %p99 = por %p97, %p98
      %p100 = scmp.ne.s32.totalorder %s91, %s92
      %p101 = scmp.eq.s32.totalorder %s34, 0
      %p102 = por %p100, %p101
      %p103 = scmp.ne.s32.totalorder %s91, %s92
      %p104 = scmp.eq.s32.totalorder %s35, 1
      %p105 = por %p103, %p104
      %p107 = scmp.ne.s32.totalorder %s92, %s106
      %p108 = scmp.eq.s32.totalorder %s35, 0
      %p109 = por %p107, %p108
      %s111 = sadd.s32 %s110, 1
      %p114 = scmp.eq.s32.totalorder %s29, 1
      %p115 = scmp.ne.s32.totalorder %s110, %s112
      %p116 = scmp.eq.s32.totalorder %s29, 0
      %p117 = por %p115, %p116
      %p118 = scmp.ne.s32.totalorder %s110, %s112
      %p119 = scmp.eq.s32.totalorder %s34, 1
      %p120 = por %p118, %p119
      %p121 = scmp.ne.s32.totalorder %s112, %s113
      %p122 = scmp.eq.s32.totalorder %s34, 0
      %p123 = por %p121, %p122
      %p124 = scmp.ne.s32.totalorder %s112, %s113
      %p125 = scmp.eq.s32.totalorder %s35, 1
      %p126 = por %p124, %p125
      %p128 = scmp.ne.s32.totalorder %s113, %s127
      %p129 = scmp.eq.s32.totalorder %s35, 0
      %p130 = por %p128, %p129
      %s132 = sadd.s32 %s131, 1
      %p135 = scmp.eq.s32.totalorder %s29, 1
      %p136 = scmp.ne.s32.totalorder %s131, %s133
      %p137 = scmp.eq.s32.totalorder %s29, 0
      %p138 = por %p136, %p137
      %p139 = scmp.ne.s32.totalorder %s131, %s133
      %p140 = scmp.eq.s32.totalorder %s34, 1
      %p141 = por %p139, %p140
      %p142 = scmp.ne.s32.totalorder %s133, %s134
      %p143 = scmp.eq.s32.totalorder %s34, 0
      %p144 = por %p142, %p143
      %p145 = scmp.ne.s32.totalorder %s133, %s134
      %p146 = scmp.eq.s32.totalorder %s35, 1
      %p147 = por %p145, %p146
      %p149 = scmp.ne.s32.totalorder %s134, %s148
      %p150 = scmp.eq.s32.totalorder %s35, 0
      %p151 = por %p149, %p150
      %s153 = sadd.s32 %s152, 1
      %p156 = scmp.eq.s32.totalorder %s29, 1
      %p157 = scmp.ne.s32.totalorder %s152, %s154
      %p158 = scmp.eq.s32.totalorder %s29, 0
      %p159 = por %p157, %p158
      %p160 = scmp.ne.s32.totalorder %s152, %s154
      %p161 = scmp.eq.s32.totalorder %s34, 1
      %p162 = por %p160, %p161
      %p163 = scmp.ne.s32.totalorder %s154, %s155
      %p164 = scmp.eq.s32.totalorder %s34, 0
      %p165 = por %p163, %p164
      %p166 = scmp.ne.s32.totalorder %s154, %s155
      %p167 = scmp.eq.s32.totalorder %s35, 1
      %p168 = por %p166, %p167
      %p170 = scmp.ne.s32.totalorder %s155, %s169
      %p171 = scmp.eq.s32.totalorder %s35, 0
      %p172 = por %p170, %p171
      %s174 = sadd.s32 %s173, 1
      %p177 = scmp.eq.s32.totalorder %s29, 1
      %p178 = scmp.ne.s32.totalorder %s173, %s175
      %p179 = scmp.eq.s32.totalorder %s29, 0
      %p180 = por %p178, %p179
      %p181 = scmp.ne.s32.totalorder %s173, %s175
      %p182 = scmp.eq.s32.totalorder %s34, 1
      %p183 = por %p181, %p182
      %p184 = scmp.ne.s32.totalorder %s175, %s176
      %p185 = scmp.eq.s32.totalorder %s34, 0
      %p186 = por %p184, %p185
      %p187 = scmp.ne.s32.totalorder %s175, %s176
      %p188 = scmp.eq.s32.totalorder %s35, 1
      %p189 = por %p187, %p188
      %p191 = scmp.ne.s32.totalorder %s176, %s190
      %p192 = scmp.eq.s32.totalorder %s35, 0
      %p193 = por %p191, %p192
      %s195 = sadd.s32 %s194, 1
      %p198 = scmp.eq.s32.totalorder %s29, 1
      %p199 = scmp.ne.s32.totalorder %s194, %s196
      %p200 = scmp.eq.s32.totalorder %s29, 0
      %p201 = por %p199, %p200
      %p202 = scmp.ne.s32.totalorder %s194, %s196
      %p203 = scmp.eq.s32.totalorder %s34, 1
      %p204 = por %p202, %p203
      %p205 = scmp.ne.s32.totalorder %s196, %s197
      %p206 = scmp.eq.s32.totalorder %s34, 0
      %p207 = por %p205, %p206
      %p208 = scmp.ne.s32.totalorder %s196, %s197
      %p209 = scmp.eq.s32.totalorder %s35, 1
      %p210 = por %p208, %p209
      %p212 = scmp.ne.s32.totalorder %s197, %s211
      %p213 = scmp.eq.s32.totalorder %s35, 0
      %p214 = por %p212, %p213
      %s216 = sadd.s32 %s215, 1
      %p219 = scmp.eq.s32.totalorder %s29, 1
      %p220 = scmp.ne.s32.totalorder %s215, %s217
      %p221 = scmp.eq.s32.totalorder %s29, 0
      %p222 = por %p220, %p221
      %p223 = scmp.ne.s32.totalorder %s215, %s217
      %p224 = scmp.eq.s32.totalorder %s34, 1
      %p225 = por %p223, %p224
      %p226 = scmp.ne.s32.totalorder %s217, %s218
      %p227 = scmp.eq.s32.totalorder %s34, 0
      %p228 = por %p226, %p227
      %p229 = scmp.ne.s32.totalorder %s217, %s218
      %p230 = scmp.eq.s32.totalorder %s35, 1
      %p231 = por %p229, %p230
      %p233 = scmp.ne.s32.totalorder %s218, %s232
      %p234 = scmp.eq.s32.totalorder %s35, 0
      %p235 = por %p233, %p234
      %s237 = sadd.s32 %s236, 1
      %p240 = scmp.eq.s32.totalorder %s29, 1
      %p241 = scmp.ne.s32.totalorder %s236, %s238
      %p242 = scmp.eq.s32.totalorder %s29, 0
      %p243 = por %p241, %p242
      %p244 = scmp.ne.s32.totalorder %s236, %s238
      %p245 = scmp.eq.s32.totalorder %s34, 1
      %p246 = por %p244, %p245
      %p247 = scmp.ne.s32.totalorder %s238, %s239
      %p248 = scmp.eq.s32.totalorder %s34, 0
      %p249 = por %p247, %p248
      %p250 = scmp.ne.s32.totalorder %s238, %s239
      %p251 = scmp.eq.s32.totalorder %s35, 1
      %p252 = por %p250, %p251
      %p254 = scmp.ne.s32.totalorder %s239, %s253
      %p255 = scmp.eq.s32.totalorder %s35, 0
      %p256 = por %p254, %p255
      %s258 = sadd.s32 %s257, 1
      %p261 = scmp.eq.s32.totalorder %s29, 1
      %p262 = scmp.ne.s32.totalorder %s257, %s259
      %p263 = scmp.eq.s32.totalorder %s29, 0
      %p264 = por %p262, %p263
      %p265 = scmp.ne.s32.totalorder %s257, %s259
      %p266 = scmp.eq.s32.totalorder %s34, 1
      %p267 = por %p265, %p266
      %p268 = scmp.ne.s32.totalorder %s259, %s260
      %p269 = scmp.eq.s32.totalorder %s34, 0
      %p270 = por %p268, %p269
      %p271 = scmp.ne.s32.totalorder %s259, %s260
      %p272 = scmp.eq.s32.totalorder %s35, 1
      %p273 = por %p271, %p272
      %p275 = scmp.ne.s32.totalorder %s260, %s274
      %p276 = scmp.eq.s32.totalorder %s35, 0
      %p277 = por %p275, %p276
      %s279 = sadd.s32 %s278, 1
      %p282 = scmp.eq.s32.totalorder %s29, 1
      %p283 = scmp.ne.s32.totalorder %s278, %s280
      %p284 = scmp.eq.s32.totalorder %s29, 0
      %p285 = por %p283, %p284
      %p286 = scmp.ne.s32.totalorder %s278, %s280
      %p287 = scmp.eq.s32.totalorder %s34, 1
      %p288 = por %p286, %p287
      %p289 = scmp.ne.s32.totalorder %s280, %s281
      %p290 = scmp.eq.s32.totalorder %s34, 0
      %p291 = por %p289, %p290
      %p292 = scmp.ne.s32.totalorder %s280, %s281
      %p293 = scmp.eq.s32.totalorder %s35, 1
      %p294 = por %p292, %p293
      %p296 = scmp.ne.s32.totalorder %s281, %s295
      %p297 = scmp.eq.s32.totalorder %s35, 0
      %p298 = por %p296, %p297
      %s300 = sadd.s32 %s299, 1
      %p303 = scmp.eq.s32.totalorder %s29, 1
      %p304 = scmp.ne.s32.totalorder %s299, %s301
      %p305 = scmp.eq.s32.totalorder %s29, 0
      %p306 = por %p304, %p305
      %p307 = scmp.ne.s32.totalorder %s299, %s301
      %p308 = scmp.eq.s32.totalorder %s34, 1
      %p309 = por %p307, %p308
      %p310 = scmp.ne.s32.totalorder %s301, %s302
      %p311 = scmp.eq.s32.totalorder %s34, 0
      %p312 = por %p310, %p311
      %p313 = scmp.ne.s32.totalorder %s301, %s302
      %p314 = scmp.eq.s32.totalorder %s35, 1
      %p315 = por %p313, %p314
      %p317 = scmp.ne.s32.totalorder %s302, %s316
      %p318 = scmp.eq.s32.totalorder %s35, 0
      %p319 = por %p317, %p318
      %s321 = sadd.s32 %s320, 1
      %p324 = scmp.eq.s32.totalorder %s29, 1
      %p325 = scmp.ne.s32.totalorder %s320, %s322
      %p326 = scmp.eq.s32.totalorder %s29, 0
      %p327 = por %p325, %p326
      %p328 = scmp.ne.s32.totalorder %s320, %s322
      %p329 = scmp.eq.s32.totalorder %s34, 1
      %p330 = por %p328, %p329
      %p331 = scmp.ne.s32.totalorder %s322, %s323
      %p332 = scmp.eq.s32.totalorder %s34, 0
      %p333 = por %p331, %p332
      %p334 = scmp.ne.s32.totalorder %s322, %s323
      %p335 = scmp.eq.s32.totalorder %s35, 1
      %p336 = por %p334, %p335
      %p338 = scmp.ne.s32.totalorder %s323, %s337
      %p339 = scmp.eq.s32.totalorder %s35, 0
      %p340 = por %p338, %p339
      %s342 = sadd.s32 %s341, 1
      %p345 = scmp.eq.s32.totalorder %s29, 1
      %p346 = scmp.ne.s32.totalorder %s341, %s343
      %p347 = scmp.eq.s32.totalorder %s29, 0
      %p348 = por %p346, %p347
      %p349 = scmp.ne.s32.totalorder %s341, %s343
      %p350 = scmp.eq.s32.totalorder %s34, 1
      %p351 = por %p349, %p350
      %p352 = scmp.ne.s32.totalorder %s343, %s344
      %p353 = scmp.eq.s32.totalorder %s34, 0
      %p354 = por %p352, %p353
      %p355 = scmp.ne.s32.totalorder %s343, %s344
      %p356 = scmp.eq.s32.totalorder %s35, 1
      %p357 = por %p355, %p356
      %p359 = scmp.ne.s32.totalorder %s344, %s358
      %p360 = scmp.eq.s32.totalorder %s35, 0
      %p361 = por %p359, %p360
      %s362 = ssub.s32 %s29, %s36
      %p363 = scmp.eq.s32.totalorder %s362, 0
      %s365 = sadd.s32 %s364, 1
      %s366 = scalar_select %p363, %s364, %s365
      %p369 = pneg %p363
      %p370 = scmp.eq.s32.totalorder %s29, 1
      %p371 = por %p369, %p370
      %p372 = scmp.ne.s32.totalorder %s364, %s367
      %p373 = scmp.eq.s32.totalorder %s29, 0
      %p374 = por %p372, %p373
      %p375 = scmp.ne.s32.totalorder %s364, %s367
      %p376 = scmp.eq.s32.totalorder %s34, 1
      %p377 = por %p375, %p376
      %p378 = scmp.ne.s32.totalorder %s367, %s368
      %p379 = scmp.eq.s32.totalorder %s34, 0
      %p380 = por %p378, %p379
      %p381 = scmp.ne.s32.totalorder %s367, %s368
      %p382 = scmp.eq.s32.totalorder %s35, 1
      %p383 = por %p381, %p382
      %p385 = scmp.ne.s32.totalorder %s368, %s384
      %p386 = scmp.eq.s32.totalorder %s35, 0
      %p387 = por %p385, %p386
      %p388 = scmp.le.s32.totalorder 1, %s29
      %p389 = scmp.lt.s32.totalorder %s29, 3
      %p390 = pnand %p388, %p389
      %p391 = pneg %p390
      // Predicated region
      $region9: #{physics_engine_forward.2} parent=5 // pred_check
        _
      $region10: #{physics_engine_forward.2} parent=5 // pred_check_branch
        %393 = sbr.rel (%p390) target = $region12
      $region11: #{physics_engine_forward.2} parent=5 // pred_region
        %s394 = ssub.s32 %s29, 1
        // Predicated region
        $region13: #{physics_engine_forward.2} parent=11 // pred_check
          %p395 = pneg %p102
        $region14: #{physics_engine_forward.2} parent=11 // pred_check_branch
          %397 = sbr.rel (%p395) target = $region16
        $region15: #{physics_engine_forward.2} parent=11 // pred_region
          _
        $region16: #{physics_engine_forward.2} parent=11 // pred_fallthru
          _
        // Predicated region
        $region17: #{physics_engine_forward.2} parent=11 // pred_check
          %p398 = pneg %p123
        $region18: #{physics_engine_forward.2} parent=11 // pred_check_branch
          %400 = sbr.rel (%p398) target = $region20
        $region19: #{physics_engine_forward.2} parent=11 // pred_region
          _
        $region20: #{physics_engine_forward.2} parent=11 // pred_fallthru
          _
        // Predicated region
        $region21: #{physics_engine_forward.2} parent=11 // pred_check
          %p401 = pneg %p144
        $region22: #{physics_engine_forward.2} parent=11 // pred_check_branch
          %403 = sbr.rel (%p401) target = $region24
        $region23: #{physics_engine_forward.2} parent=11 // pred_region
          _
        $region24: #{physics_engine_forward.2} parent=11 // pred_fallthru
          _
        // Predicated region
        $region25: #{physics_engine_forward.2} parent=11 // pred_check
          %p404 = pneg %p165
        $region26: #{physics_engine_forward.2} parent=11 // pred_check_branch
          %406 = sbr.rel (%p404) target = $region28
        $region27: #{physics_engine_forward.2} parent=11 // pred_region
          %s408 = ssub.s32 1024, 1024
          %409 = vsyncadd [#allocation5], %s408
          %s410 = sshll.u32 [#allocation6], 4
          %s411 = int_to_ptr.vmem [resolvable:$true] %s410
          %416 = dma.hbm_to_vmem [thread:$0]  %s5, 1024, %s411, [#allocation5], 64, 64, 4
        $region28: #{physics_engine_forward.2} parent=11 // pred_fallthru
          _
        // Predicated region
        $region29: #{physics_engine_forward.2} parent=11 // pred_check
          %p417 = pneg %p186
        $region30: #{physics_engine_forward.2} parent=11 // pred_check_branch
          %419 = sbr.rel (%p417) target = $region32
        $region31: #{physics_engine_forward.2} parent=11 // pred_region
          _
        $region32: #{physics_engine_forward.2} parent=11 // pred_fallthru
          _
        // Predicated region
        $region33: #{physics_engine_forward.2} parent=11 // pred_check
          %p420 = pneg %p207
        $region34: #{physics_engine_forward.2} parent=11 // pred_check_branch
          %422 = sbr.rel (%p420) target = $region36
        $region35: #{physics_engine_forward.2} parent=11 // pred_region
          %s424 = ssub.s32 1024, 1024
          %425 = vsyncadd [#allocation8], %s424
          %s426 = sshll.u32 [#allocation7], 4
          %s427 = int_to_ptr.vmem [resolvable:$true] %s426
          %432 = dma.hbm_to_vmem [thread:$0]  %s7, 1024, %s427, [#allocation8], 64, 64, 4
        $region36: #{physics_engine_forward.2} parent=11 // pred_fallthru
          _
        // Predicated region
        $region37: #{physics_engine_forward.2} parent=11 // pred_check
          %p433 = pneg %p228
        $region38: #{physics_engine_forward.2} parent=11 // pred_check_branch
          %435 = sbr.rel (%p433) target = $region40
        $region39: #{physics_engine_forward.2} parent=11 // pred_region
          _
        $region40: #{physics_engine_forward.2} parent=11 // pred_fallthru
          _
        // Predicated region
        $region41: #{physics_engine_forward.2} parent=11 // pred_check
          %p436 = pneg %p249
        $region42: #{physics_engine_forward.2} parent=11 // pred_check_branch
          %438 = sbr.rel (%p436) target = $region44
        $region43: #{physics_engine_forward.2} parent=11 // pred_region
          _
        $region44: #{physics_engine_forward.2} parent=11 // pred_fallthru
          _
        // Predicated region
        $region45: #{physics_engine_forward.2} parent=11 // pred_check
          %p439 = pneg %p270
        $region46: #{physics_engine_forward.2} parent=11 // pred_check_branch
          %441 = sbr.rel (%p439) target = $region48
        $region47: #{physics_engine_forward.2} parent=11 // pred_region
          _
        $region48: #{physics_engine_forward.2} parent=11 // pred_fallthru
          _
        // Predicated region
        $region49: #{physics_engine_forward.2} parent=11 // pred_check
          %p442 = pneg %p291
        $region50: #{physics_engine_forward.2} parent=11 // pred_check_branch
          %444 = sbr.rel (%p442) target = $region52
        $region51: #{physics_engine_forward.2} parent=11 // pred_region
          %s446 = ssub.s32 256, 256
          %447 = vsyncadd [#allocation8], %s446
          %s448 = sshll.u32 [#allocation9], 4
          %s449 = int_to_ptr.vmem [resolvable:$true] %s448
          %454 = dma.hbm_to_vmem [thread:$0]  %s11, 256, %s449, [#allocation8], 64, 64, 4
        $region52: #{physics_engine_forward.2} parent=11 // pred_fallthru
          _
        // Predicated region
        $region53: #{physics_engine_forward.2} parent=11 // pred_check
          %p455 = pneg %p312
        $region54: #{physics_engine_forward.2} parent=11 // pred_check_branch
          %457 = sbr.rel (%p455) target = $region56
        $region55: #{physics_engine_forward.2} parent=11 // pred_region
          _
        $region56: #{physics_engine_forward.2} parent=11 // pred_fallthru
          _
        // Predicated region
        $region57: #{physics_engine_forward.2} parent=11 // pred_check
          %p458 = pneg %p333
        $region58: #{physics_engine_forward.2} parent=11 // pred_check_branch
          %460 = sbr.rel (%p458) target = $region60
        $region59: #{physics_engine_forward.2} parent=11 // pred_region
          %s462 = ssub.s32 256, 256
          %463 = vsyncadd [#allocation11], %s462
          %s464 = sshll.u32 [#allocation10], 4
          %s465 = int_to_ptr.vmem [resolvable:$true] %s464
          %470 = dma.hbm_to_vmem [thread:$0]  %s13, 256, %s465, [#allocation11], 64, 64, 4
        $region60: #{physics_engine_forward.2} parent=11 // pred_fallthru
          _
        // Predicated region
        $region61: #{physics_engine_forward.2} parent=11 // pred_check
          %p471 = pneg %p354
        $region62: #{physics_engine_forward.2} parent=11 // pred_check_branch
          %473 = sbr.rel (%p471) target = $region64
        $region63: #{physics_engine_forward.2} parent=11 // pred_region
          _
        $region64: #{physics_engine_forward.2} parent=11 // pred_fallthru
          _
      $region12: #{physics_engine_forward.2} parent=5 // pred_fallthru
        _
      %p474 = scmp.lt.s32.totalorder %s29, 2
      // Predicated region
      $region65: #{physics_engine_forward.2} parent=5 // pred_check
        %p475 = pneg %p474
      $region66: #{physics_engine_forward.2} parent=5 // pred_check_branch
        %477 = sbr.rel (%p475) target = $region68
      $region67: #{physics_engine_forward.2} parent=5 // pred_region
        // Predicated region
        $region69: #{physics_engine_forward.2} parent=67 // pred_check
          %p478 = pneg %p49
        $region70: #{physics_engine_forward.2} parent=67 // pred_check_branch
          %480 = sbr.rel (%p478) target = $region72
        $region71: #{physics_engine_forward.2} parent=67 // pred_region
          %s481 = sand.u32 %s39, 1
          %s482 = scalar_lea.sflag [#allocation3], %s481
          %s483 = sand.u32 %s39, 1
          %s484 = scalar_lea.vmem [#allocation2], %s483
          %s486 = ssub.s32 16, 16
          %487 = vsyncadd %s482, %s486
          %s488 = smul.addr %s29, 16
          %s489 = scalar_lea.hbm %s0, %s488
          %s491 = sshll.u32 %s484, 4
          %s492 = int_to_ptr.vmem [resolvable:$true] %s491
          %494 = dma.hbm_to_vmem [thread:$0]  %s489, 16, %s492, %s482
        $region72: #{physics_engine_forward.2} parent=67 // pred_fallthru
          _
        // Predicated region
        $region73: #{physics_engine_forward.2} parent=67 // pred_check
          %p495 = pneg %p75
        $region74: #{physics_engine_forward.2} parent=67 // pred_check_branch
          %497 = sbr.rel (%p495) target = $region76
        $region75: #{physics_engine_forward.2} parent=67 // pred_region
          %s498 = sand.u32 %s29, 1
          %s499 = scalar_lea.sflag [#allocation5], %s498
          %s500 = sand.u32 %s65, 1
          %s501 = smul.addr %s500, 24
          %s502 = scalar_lea.vmem [#allocation4], %s501
          %s504 = ssub.s32 384, 384
          %505 = vsyncadd %s499, %s504
          %s506 = smul.addr %s29, 128
          %s507 = scalar_lea.hbm %s1, %s506
          %s508 = sshll.u32 %s502, 4
          %s509 = int_to_ptr.vmem [resolvable:$true] %s508
          %514 = dma.hbm_to_vmem [thread:$0]  %s507, 384, %s509, %s499, 256, 128, 8
        $region76: #{physics_engine_forward.2} parent=67 // pred_fallthru
          _
      $region68: #{physics_engine_forward.2} parent=5 // pred_fallthru
        _
      %p515 = scmp.le.s32.totalorder 1, %s29
      %p516 = scmp.lt.s32.totalorder %s29, 3
      %p517 = pnand %p515, %p516
      %p518 = pneg %p517
      // Predicated region
      $region77: #{physics_engine_forward.2} parent=5 // pred_check
        _
      $region78: #{physics_engine_forward.2} parent=5 // pred_check_branch
        %520 = sbr.rel (%p517) target = $region80
      $region79: #{physics_engine_forward.2} parent=5 // pred_region
        %s521 = ssub.s32 %s29, 1
        %s522 = sand.u32 %s42, 1
        %s523 = scalar_lea.sflag [#allocation3], %s522
        %s524 = sand.u32 %s42, 1
        %s525 = scalar_lea.vmem [#allocation2], %s524
        // Predicated region
        $region81: #{physics_engine_forward.2} parent=79 // pred_check
          %p526 = pneg %p55
        $region82: #{physics_engine_forward.2} parent=79 // pred_check_branch
          %528 = sbr.rel (%p526) target = $region84
        $region83: #{physics_engine_forward.2} parent=79 // pred_region
          %529 = dma.done %s523, 16
        $region84: #{physics_engine_forward.2} parent=79 // pred_fallthru
          _
        %s530 = sand.u32 %s34, 1
        %s531 = scalar_lea.sflag [#allocation5], %s530
        %s532 = sand.u32 %s68, 1
        %s533 = smul.addr %s532, 24
        %s534 = scalar_lea.vmem [#allocation4], %s533
        // Predicated region
        $region85: #{physics_engine_forward.2} parent=79 // pred_check
          %p535 = pneg %p81
        $region86: #{physics_engine_forward.2} parent=79 // pred_check_branch
          %537 = sbr.rel (%p535) target = $region88
        $region87: #{physics_engine_forward.2} parent=79 // pred_region
          %538 = dma.done %s531, 384
        $region88: #{physics_engine_forward.2} parent=79 // pred_fallthru
          _
        // Predicated region
        $region89: #{physics_engine_forward.2} parent=79 // pred_check
          %p539 = pneg %p165
        $region90: #{physics_engine_forward.2} parent=79 // pred_check_branch
          %541 = sbr.rel (%p539) target = $region92
        $region91: #{physics_engine_forward.2} parent=79 // pred_region
          %542 = dma.done [#allocation5], 1024
        $region92: #{physics_engine_forward.2} parent=79 // pred_fallthru
          _
        // Predicated region
        $region93: #{physics_engine_forward.2} parent=79 // pred_check
          %p543 = pneg %p207
        $region94: #{physics_engine_forward.2} parent=79 // pred_check_branch
          %545 = sbr.rel (%p543) target = $region96
        $region95: #{physics_engine_forward.2} parent=79 // pred_region
          %546 = dma.done [#allocation8], 1024
        $region96: #{physics_engine_forward.2} parent=79 // pred_fallthru
          _
        // Predicated region
        $region97: #{physics_engine_forward.2} parent=79 // pred_check
          %p547 = pneg %p291
        $region98: #{physics_engine_forward.2} parent=79 // pred_check_branch
          %549 = sbr.rel (%p547) target = $region100
        $region99: #{physics_engine_forward.2} parent=79 // pred_region
          %550 = dma.done [#allocation8], 256
        $region100: #{physics_engine_forward.2} parent=79 // pred_fallthru
          _
        // Predicated region
        $region101: #{physics_engine_forward.2} parent=79 // pred_check
          %p551 = pneg %p333
        $region102: #{physics_engine_forward.2} parent=79 // pred_check_branch
          %553 = sbr.rel (%p551) target = $region104
        $region103: #{physics_engine_forward.2} parent=79 // pred_region
          %554 = dma.done [#allocation11], 256
        $region104: #{physics_engine_forward.2} parent=79 // pred_fallthru
          _
        %s555 = sand.u32 %s42, 1
        %s556 = scalar_lea.sflag [#allocation3], %s555
        %s557 = sand.u32 %s42, 1
        %s558 = scalar_lea.vmem [#allocation2], %s557
        %p559 = pneg %p55
        %p560 = pneg %p52
        %s561 = sand.u32 %s34, 1
        %s562 = scalar_lea.sflag [#allocation5], %s561
        %s563 = sand.u32 %s68, 1
        %s564 = smul.addr %s563, 24
        %s565 = scalar_lea.vmem [#allocation4], %s564
        %p566 = pneg %p81
        %p567 = pneg %p78
        %p568 = pneg %p102
        %p569 = pneg %p99
        %p570 = pneg %p123
        %p571 = pneg %p120
        %p572 = pneg %p144
        %p573 = pneg %p141
        %p574 = pneg %p165
        %p575 = pneg %p162
        %p576 = pneg %p186
        %p577 = pneg %p183
        %p578 = pneg %p207
        %p579 = pneg %p204
        %p580 = pneg %p228
        %p581 = pneg %p225
        %p582 = pneg %p249
        %p583 = pneg %p246
        %p584 = pneg %p270
        %p585 = pneg %p267
        %p586 = pneg %p291
        %p587 = pneg %p288
        %p588 = pneg %p312
        %p589 = pneg %p309
        %p590 = pneg %p333
        %p591 = pneg %p330
        %p592 = pneg %p354
        %p593 = pneg %p351
        %p594 = pneg %p380
        %p595 = pneg %p377
        %s596 = sand.u32 %s367, 1
        %s597 = sand.u32 %s367, 1
        %s598 = smul.addr %s597, 32
        %s599 = scalar_lea.vmem [#allocation12], %s598
        %v601 = vld [vmem:[%s525] sm:$0x1]
        %v602 = vlaneseq
        %v603 = vshrl.u32 %v602, 7
        %v604 = vadd.s32 %v603, 8
        %v605 = vlaneseq
        %v606 = vshrl.u32 %v605, 7
        %v607 = vsub.s32 0, %v606
        %v608 = vrot.slane %v601, %v607
        %vm609 = vcmp.eq.s32.totalorder %v603, %v608
        %vm610 = vcmp.eq.s32.totalorder %v604, %v608
        %v611 = vsel %vm609, 1.0, 0.0
        %v612 = vsel %vm610, 1.0, 0.0
        %v613 = vld [vmem:[%s2] sm:$0xff]
        %v614 = vld [vmem:[%s2 + $0x8] sm:$0xff]
        %v615 = vld [vmem:[%s2 + $0x10] sm:$0xff]
        %v616 = vld [vmem:[%s2 + $0x18] sm:$0xff]
        %v617 = vld [vmem:[%s2 + $0x20] sm:$0xff]
        %v618 = vld [vmem:[%s2 + $0x28] sm:$0xff]
        %v619 = vld [vmem:[%s2 + $0x30] sm:$0xff]
        %v620 = vld [vmem:[%s2 + $0x38] sm:$0xff]
        %v621 = vld [vmem:[%s2 + $0x40] sm:$0xff]
        %v622 = vld [vmem:[%s2 + $0x48] sm:$0xff]
        %v623 = vld [vmem:[%s2 + $0x50] sm:$0xff]
        %v624 = vld [vmem:[%s2 + $0x58] sm:$0xff]
        %v625 = vld [vmem:[%s2 + $0x60] sm:$0xff]
        %v626 = vld [vmem:[%s2 + $0x68] sm:$0xff]
        %v627 = vld [vmem:[%s2 + $0x70] sm:$0xff]
        %v628 = vld [vmem:[%s2 + $0x78] sm:$0xff]
        %v629 = vld [vmem:[%s3] sm:$0xff]
        %v630 = vld [vmem:[%s3 + $0x8] sm:$0xff]
        %v631 = vld [vmem:[%s3 + $0x10] sm:$0xff]
        %v632 = vld [vmem:[%s3 + $0x18] sm:$0xff]
        %v633 = vld [vmem:[%s3 + $0x20] sm:$0xff]
        %v634 = vld [vmem:[%s3 + $0x28] sm:$0xff]
        %v635 = vld [vmem:[%s3 + $0x30] sm:$0xff]
        %v636 = vld [vmem:[%s3 + $0x38] sm:$0xff]
        %v637 = vld [vmem:[%s3 + $0x40] sm:$0xff]
        %v638 = vld [vmem:[%s3 + $0x48] sm:$0xff]
        %v639 = vld [vmem:[%s3 + $0x50] sm:$0xff]
        %v640 = vld [vmem:[%s3 + $0x58] sm:$0xff]
        %v641 = vld [vmem:[%s3 + $0x60] sm:$0xff]
        %v642 = vld [vmem:[%s3 + $0x68] sm:$0xff]
        %v643 = vld [vmem:[%s3 + $0x70] sm:$0xff]
        %v644 = vld [vmem:[%s3 + $0x78] sm:$0xff]
        %v645 = vld [vmem:[%s534] sm:$0xff]
        %v646 = vld [vmem:[%s534 + $0x8] sm:$0xff]
        %v647 = vld [vmem:[%s534 + $0x10] sm:$0x1f]
        %vm648 = vcmask 171008
        %v650 = vsel %vm648, %v629, 0
        %v653 = vsel %vm648, %v630, 0
        %v656 = vsel %vm648, %v631, 0
        %v659 = vsel %vm648, %v632, 0
        %v662 = vsel %vm648, %v633, 0
        %v665 = vsel %vm648, %v634, 0
        %v668 = vsel %vm648, %v635, 0
        %v671 = vsel %vm648, %v636, 0
        %v674 = vsel %vm648, %v637, 0
        %v677 = vsel %vm648, %v638, 0
        %v680 = vsel %vm648, %v639, 0
        %v683 = vsel %vm648, %v640, 0
        %v686 = vsel %vm648, %v641, 0
        %v689 = vsel %vm648, %v642, 0
        %v692 = vsel %vm648, %v643, 0
        %v695 = vsel %vm648, %v644, 0
        %vm697 = vcmask 1044480
        %v699 = vsel %vm697, %v647, 0
        %701 = vmatprep.subr.mxu0 0.0
        %702 = vmatpush1.msra.mxu0 %v645
        %703 = vmatprep.subr.mxu0 0.0
        %704 = vmatpush1.msra.mxu0 %v646
        %705 = vmatprep.subr.mxu0 0.0
        %706 = vmatpush1.msra.mxu0 %v699
        %707 = vmatprep.subr.mxu0 0.0
        %708 = vmatpush1.msra.mxu0 0.0
        %709 = vmatprep.subr.mxu0 0.0
        %710 = vmatpush1.msra.mxu0 0.0
        %711 = vmatprep.subr.mxu0 0.0
        %712 = vmatpush1.msra.mxu0 0.0
        %713 = vmatprep.subr.mxu0 0.0
        %714 = vmatpush1.msra.mxu0 0.0
        %715 = vmatprep.subr.mxu0 0.0
        %716 = vmatpush1.msra.mxu0 0.0
        %717 = vmatprep.subr.mxu0 0.0
        %718 = vmatpush1.msra.mxu0 0.0
        %719 = vmatprep.subr.mxu0 0.0
        %720 = vmatpush1.msra.mxu0 0.0
        %721 = vmatprep.subr.mxu0 0.0
        %722 = vmatpush1.msra.mxu0 0.0
        %723 = vmatprep.subr.mxu0 0.0
        %724 = vmatpush1.msra.mxu0 0.0
        %725 = vmatprep.subr.mxu0 0.0
        %726 = vmatpush1.msra.mxu0 0.0
        %727 = vmatprep.subr.mxu0 0.0
        %728 = vmatpush1.msra.mxu0 0.0
        %729 = vmatprep.subr.mxu0 0.0
        %730 = vmatpush1.msra.mxu0 0.0
        %731 = vmatprep.subr.mxu0 0.0
        %732 = vmatpush1.msra.mxu0 0.0
        %733 = vmatprep.subr.mxu0 0.0
        %734 = vmatpush1.msra.mxu0 0.0
        %735 = vmatprep.subr.mxu0 0.0
        %736 = vmatpush1.msra.mxu0 0.0
        %737 = vmatprep.subr.mxu0 0.0
        %738 = vmatpush1.msra.mxu0 0.0
        %739 = vmatprep.subr.mxu0 0.0
        %740 = vmatpush1.msra.mxu0 0.0
        %741 = vmatprep.subr.mxu0 0.0
        %742 = vmatpush1.msra.mxu0 0.0
        %743 = vmatprep.subr.mxu0 0.0
        %744 = vmatpush1.msra.mxu0 0.0
        %745 = vmatprep.subr.mxu0 0.0
        %746 = vmatpush1.msra.mxu0 0.0
        %747 = vmatprep.subr.mxu0 0.0
        %748 = vmatpush1.msra.mxu0 0.0
        %749 = vmatprep.subr.mxu0 0.0
        %750 = vmatpush1.msra.mxu0 0.0
        %751 = vmatprep.subr.mxu0 0.0
        %752 = vmatpush1.msra.mxu0 0.0
        %753 = vmatprep.subr.mxu0 0.0
        %754 = vmatpush1.msra.mxu0 0.0
        %755 = vmatprep.subr.mxu0 0.0
        %756 = vmatpush1.msra.mxu0 0.0
        %757 = vmatprep.subr.mxu0 0.0
        %758 = vmatpush1.msra.mxu0 0.0
        %759 = vmatprep.subr.mxu0 0.0
        %760 = vmatpush1.msra.mxu0 0.0
        %761 = vmatprep.subr.mxu0 0.0
        %762 = vmatpush1.msra.mxu0 0.0
        %763 = vmatprep.subr.mxu0 0.0
        %764 = vmatpush1.msra.mxu0 0.0
        %765 = vmatprep.mubr.f32.mxu0 0.0
        %766 = vmatmul.mubr.f32.gmra.mrb[0].mxu0 %v650
        %v767 = vpop.f32.mrb[0].mxu0
        %v768 = vadd.f32 0.0, %v767
        %v769 = vpop.f32.mrb[0].mxu0
        %770 = vmatprep.mubr.f32.mxu0 0.0
        %771 = vmatmul.mubr.f32.gmra.mrb[0].mxu0 %v653
        %v772 = vpop.f32.mrb[0].mxu0
        %v773 = vadd.f32 0.0, %v772
        %v774 = vpop.f32.mrb[0].mxu0
        %775 = vmatprep.mubr.f32.mxu0 0.0
        %776 = vmatmul.mubr.f32.gmra.mrb[0].mxu0 %v656
        %v777 = vpop.f32.mrb[0].mxu0
        %v778 = vadd.f32 0.0, %v777
        %v779 = vpop.f32.mrb[0].mxu0
        %780 = vmatprep.mubr.f32.mxu0 0.0
        %781 = vmatmul.mubr.f32.gmra.mrb[0].mxu0 %v659
        %v782 = vpop.f32.mrb[0].mxu0
        %v783 = vadd.f32 0.0, %v782
        %v784 = vpop.f32.mrb[0].mxu0
        %785 = vmatprep.mubr.f32.mxu0 0.0
        %786 = vmatmul.mubr.f32.gmra.mrb[0].mxu0 %v662
        %v787 = vpop.f32.mrb[0].mxu0
        %v788 = vadd.f32 0.0, %v787
        %v789 = vpop.f32.mrb[0].mxu0
        %790 = vmatprep.mubr.f32.mxu0 0.0
        %791 = vmatmul.mubr.f32.gmra.mrb[0].mxu0 %v665
        %v792 = vpop.f32.mrb[0].mxu0
        %v793 = vadd.f32 0.0, %v792
        %v794 = vpop.f32.mrb[0].mxu0
        %795 = vmatprep.mubr.f32.mxu0 0.0
        %796 = vmatmul.mubr.f32.gmra.mrb[0].mxu0 %v668
        %v797 = vpop.f32.mrb[0].mxu0
        %v798 = vadd.f32 0.0, %v797
        %v799 = vpop.f32.mrb[0].mxu0
        %800 = vmatprep.mubr.f32.mxu0 0.0
        %801 = vmatmul.mubr.f32.gmra.mrb[0].mxu0 %v671
        %v802 = vpop.f32.mrb[0].mxu0
        %v803 = vadd.f32 0.0, %v802
        %v804 = vpop.f32.mrb[0].mxu0
        %805 = vmatprep.mubr.f32.mxu0 0.0
        %806 = vmatmul.mubr.f32.gmra.mrb[0].mxu0 %v674
        %v807 = vpop.f32.mrb[0].mxu0
        %v808 = vadd.f32 0.0, %v807
        %v809 = vpop.f32.mrb[0].mxu0
        %810 = vmatprep.mubr.f32.mxu0 0.0
        %811 = vmatmul.mubr.f32.gmra.mrb[0].mxu0 %v677
        %v812 = vpop.f32.mrb[0].mxu0
        %v813 = vadd.f32 0.0, %v812
        %v814 = vpop.f32.mrb[0].mxu0
        %815 = vmatprep.mubr.f32.mxu0 0.0
        %816 = vmatmul.mubr.f32.gmra.mrb[0].mxu0 %v680
        %v817 = vpop.f32.mrb[0].mxu0
        %v818 = vadd.f32 0.0, %v817
        %v819 = vpop.f32.mrb[0].mxu0
        %820 = vmatprep.mubr.f32.mxu0 0.0
        %821 = vmatmul.mubr.f32.gmra.mrb[0].mxu0 %v683
        %v822 = vpop.f32.mrb[0].mxu0
        %v823 = vadd.f32 0.0, %v822
        %v824 = vpop.f32.mrb[0].mxu0
        %825 = vmatprep.mubr.f32.mxu0 0.0
        %826 = vmatmul.mubr.f32.gmra.mrb[0].mxu0 %v686
        %v827 = vpop.f32.mrb[0].mxu0
        %v828 = vadd.f32 0.0, %v827
        %v829 = vpop.f32.mrb[0].mxu0
        %830 = vmatprep.mubr.f32.mxu0 0.0
        %831 = vmatmul.mubr.f32.gmra.mrb[0].mxu0 %v689
        %v832 = vpop.f32.mrb[0].mxu0
        %v833 = vadd.f32 0.0, %v832
        %v834 = vpop.f32.mrb[0].mxu0
        %835 = vmatprep.mubr.f32.mxu0 0.0
        %836 = vmatmul.mubr.f32.gmra.mrb[0].mxu0 %v692
        %v837 = vpop.f32.mrb[0].mxu0
        %v838 = vadd.f32 0.0, %v837
        %v839 = vpop.f32.mrb[0].mxu0
        %840 = vmatprep.mubr.f32.mxu0 0.0
        %841 = vmatmul.mubr.f32.gmra.mrb[0].mxu0 %v695
        %v842 = vpop.f32.mrb[0].mxu0
        %v843 = vadd.f32 0.0, %v842
        %v844 = vpop.f32.mrb[0].mxu0
        %845 = vdwg.mxu0
        %vm846 = vcmask 72704
        %v848 = vsel %vm846, %v613, 0
        %v851 = vsel %vm846, %v614, 0
        %v854 = vsel %vm846, %v615, 0
        %v857 = vsel %vm846, %v616, 0
        %v860 = vsel %vm846, %v617, 0
        %v863 = vsel %vm846, %v618, 0
        %v866 = vsel %vm846, %v619, 0
        %v869 = vsel %vm846, %v620, 0
        %v872 = vsel %vm846, %v621, 0
        %v875 = vsel %vm846, %v622, 0
        %v878 = vsel %vm846, %v623, 0
        %v881 = vsel %vm846, %v624, 0
        %v884 = vsel %vm846, %v625, 0
        %v887 = vsel %vm846, %v626, 0
        %v890 = vsel %vm846, %v627, 0
        %v893 = vsel %vm846, %v628, 0
        %vm895 = vcmask 1040384
        %v897 = vsel %vm895, %v612, 0
        %899 = vmatprep.subr.mxu0 0.0
        %900 = vmatpush1.msra.mxu0 %v611
        %901 = vmatprep.subr.mxu0 0.0
        %902 = vmatpush1.msra.mxu0 %v897
        %903 = vmatprep.subr.mxu0 0.0
        %904 = vmatpush1.msra.mxu0 0.0
        %905 = vmatprep.subr.mxu0 0.0
        %906 = vmatpush1.msra.mxu0 0.0
        %907 = vmatprep.subr.mxu0 0.0
        %908 = vmatpush1.msra.mxu0 0.0
        %909 = vmatprep.subr.mxu0 0.0
        %910 = vmatpush1.msra.mxu0 0.0
        %911 = vmatprep.subr.mxu0 0.0
        %912 = vmatpush1.msra.mxu0 0.0
        %913 = vmatprep.subr.mxu0 0.0
        %914 = vmatpush1.msra.mxu0 0.0
        %915 = vmatprep.subr.mxu0 0.0
        %916 = vmatpush1.msra.mxu0 0.0
        %917 = vmatprep.subr.mxu0 0.0
        %918 = vmatpush1.msra.mxu0 0.0
        %919 = vmatprep.subr.mxu0 0.0
        %920 = vmatpush1.msra.mxu0 0.0
        %921 = vmatprep.subr.mxu0 0.0
        %922 = vmatpush1.msra.mxu0 0.0
        %923 = vmatprep.subr.mxu0 0.0
        %924 = vmatpush1.msra.mxu0 0.0
        %925 = vmatprep.subr.mxu0 0.0
        %926 = vmatpush1.msra.mxu0 0.0
        %927 = vmatprep.subr.mxu0 0.0
        %928 = vmatpush1.msra.mxu0 0.0
        %929 = vmatprep.subr.mxu0 0.0
        %930 = vmatpush1.msra.mxu0 0.0
        %931 = vmatprep.subr.mxu0 0.0
        %932 = vmatpush1.msra.mxu0 0.0
        %933 = vmatprep.subr.mxu0 0.0
        %934 = vmatpush1.msra.mxu0 0.0
        %935 = vmatprep.subr.mxu0 0.0
        %936 = vmatpush1.msra.mxu0 0.0
        %937 = vmatprep.subr.mxu0 0.0
        %938 = vmatpush1.msra.mxu0 0.0
        %939 = vmatprep.subr.mxu0 0.0
        %940 = vmatpush1.msra.mxu0 0.0
        %941 = vmatprep.subr.mxu0 0.0
        %942 = vmatpush1.msra.mxu0 0.0
        %943 = vmatprep.subr.mxu0 0.0
        %944 = vmatpush1.msra.mxu0 0.0
        %945 = vmatprep.subr.mxu0 0.0
        %946 = vmatpush1.msra.mxu0 0.0
        %947 = vmatprep.subr.mxu0 0.0
        %948 = vmatpush1.msra.mxu0 0.0
        %949 = vmatprep.subr.mxu0 0.0
        %950 = vmatpush1.msra.mxu0 0.0
        %951 = vmatprep.subr.mxu0 0.0
        %952 = vmatpush1.msra.mxu0 0.0
        %953 = vmatprep.subr.mxu0 0.0
        %954 = vmatpush1.msra.mxu0 0.0
        %955 = vmatprep.subr.mxu0 0.0
        %956 = vmatpush1.msra.mxu0 0.0
        %957 = vmatprep.subr.mxu0 0.0
        %958 = vmatpush1.msra.mxu0 0.0
        %959 = vmatprep.subr.mxu0 0.0
        %960 = vmatpush1.msra.mxu0 0.0
        %961 = vmatprep.subr.mxu0 0.0
        %962 = vmatpush1.msra.mxu0 0.0
        %963 = vmatprep.mubr.f32.mxu0 0.0
        %964 = vmatmul.mubr.f32.gmra.mrb[0].mxu0 %v848
        %v965 = vpop.f32.mrb[0].mxu0
        %v966 = vadd.f32 %v768, %v965
        %v967 = vpop.f32.mrb[0].mxu0
        %968 = vmatprep.mubr.f32.mxu0 0.0
        %969 = vmatmul.mubr.f32.gmra.mrb[0].mxu0 %v851
        %v970 = vpop.f32.mrb[0].mxu0
        %v971 = vadd.f32 %v773, %v970
        %v972 = vpop.f32.mrb[0].mxu0
        %973 = vmatprep.mubr.f32.mxu0 0.0
        %974 = vmatmul.mubr.f32.gmra.mrb[0].mxu0 %v854
        %v975 = vpop.f32.mrb[0].mxu0
        %v976 = vadd.f32 %v778, %v975
        %v977 = vpop.f32.mrb[0].mxu0
        %978 = vmatprep.mubr.f32.mxu0 0.0
        %979 = vmatmul.mubr.f32.gmra.mrb[0].mxu0 %v857
        %v980 = vpop.f32.mrb[0].mxu0
        %v981 = vadd.f32 %v783, %v980
        %v982 = vpop.f32.mrb[0].mxu0
        %983 = vmatprep.mubr.f32.mxu0 0.0
        %984 = vmatmul.mubr.f32.gmra.mrb[0].mxu0 %v860
        %v985 = vpop.f32.mrb[0].mxu0
        %v986 = vadd.f32 %v788, %v985
        %v987 = vpop.f32.mrb[0].mxu0
        %988 = vmatprep.mubr.f32.mxu0 0.0
        %989 = vmatmul.mubr.f32.gmra.mrb[0].mxu0 %v863
        %v990 = vpop.f32.mrb[0].mxu0
        %v991 = vadd.f32 %v793, %v990
        %v992 = vpop.f32.mrb[0].mxu0
        %993 = vmatprep.mubr.f32.mxu0 0.0
        %994 = vmatmul.mubr.f32.gmra.mrb[0].mxu0 %v866
        %v995 = vpop.f32.mrb[0].mxu0
        %v996 = vadd.f32 %v798, %v995
        %v997 = vpop.f32.mrb[0].mxu0
        %998 = vmatprep.mubr.f32.mxu0 0.0
        %999 = vmatmul.mubr.f32.gmra.mrb[0].mxu0 %v869
        %v1000 = vpop.f32.mrb[0].mxu0
        %v1001 = vadd.f32 %v803, %v1000
        %v1002 = vpop.f32.mrb[0].mxu0
        %1003 = vmatprep.mubr.f32.mxu0 0.0
        %1004 = vmatmul.mubr.f32.gmra.mrb[0].mxu0 %v872
        %v1005 = vpop.f32.mrb[0].mxu0
        %v1006 = vadd.f32 %v808, %v1005
        %v1007 = vpop.f32.mrb[0].mxu0
        %1008 = vmatprep.mubr.f32.mxu0 0.0
        %1009 = vmatmul.mubr.f32.gmra.mrb[0].mxu0 %v875
        %v1010 = vpop.f32.mrb[0].mxu0
        %v1011 = vadd.f32 %v813, %v1010
        %v1012 = vpop.f32.mrb[0].mxu0
        %1013 = vmatprep.mubr.f32.mxu0 0.0
        %1014 = vmatmul.mubr.f32.gmra.mrb[0].mxu0 %v878
        %v1015 = vpop.f32.mrb[0].mxu0
        %v1016 = vadd.f32 %v818, %v1015
        %v1017 = vpop.f32.mrb[0].mxu0
        %1018 = vmatprep.mubr.f32.mxu0 0.0
        %1019 = vmatmul.mubr.f32.gmra.mrb[0].mxu0 %v881
        %v1020 = vpop.f32.mrb[0].mxu0
        %v1021 = vadd.f32 %v823, %v1020
        %v1022 = vpop.f32.mrb[0].mxu0
        %1023 = vmatprep.mubr.f32.mxu0 0.0
        %1024 = vmatmul.mubr.f32.gmra.mrb[0].mxu0 %v884
        %v1025 = vpop.f32.mrb[0].mxu0
        %v1026 = vadd.f32 %v828, %v1025
        %v1027 = vpop.f32.mrb[0].mxu0
        %1028 = vmatprep.mubr.f32.mxu0 0.0
        %1029 = vmatmul.mubr.f32.gmra.mrb[0].mxu0 %v887
        %v1030 = vpop.f32.mrb[0].mxu0
        %v1031 = vadd.f32 %v833, %v1030
        %v1032 = vpop.f32.mrb[0].mxu0
        %1033 = vmatprep.mubr.f32.mxu0 0.0
        %1034 = vmatmul.mubr.f32.gmra.mrb[0].mxu0 %v890
        %v1035 = vpop.f32.mrb[0].mxu0
        %v1036 = vadd.f32 %v838, %v1035
        %v1037 = vpop.f32.mrb[0].mxu0
        %1038 = vmatprep.mubr.f32.mxu0 0.0
        %1039 = vmatmul.mubr.f32.gmra.mrb[0].mxu0 %v893
        %v1040 = vpop.f32.mrb[0].mxu0
        %v1041 = vadd.f32 %v843, %v1040
        %v1042 = vpop.f32.mrb[0].mxu0
        %1043 = vdwg.mxu0
        %v1044 = vld [vmem:[%s4] sm:$0xff]
        %v1045 = vld [vmem:[%s4 + $0x8] sm:$0xff]
        %v1046 = vld [vmem:[%s4 + $0x10] sm:$0xff]
        %v1047 = vld [vmem:[%s4 + $0x18] sm:$0xff]
        %v1048 = vld [vmem:[%s4 + $0x20] sm:$0xff]
        %v1049 = vld [vmem:[%s4 + $0x28] sm:$0xff]
        %v1050 = vld [vmem:[%s4 + $0x30] sm:$0xff]
        %v1051 = vld [vmem:[%s4 + $0x38] sm:$0xff]
        %v1052 = vld [vmem:[%s4 + $0x40] sm:$0xff]
        %v1053 = vld [vmem:[%s4 + $0x48] sm:$0xff]
        %v1054 = vld [vmem:[%s4 + $0x50] sm:$0xff]
        %v1055 = vld [vmem:[%s4 + $0x58] sm:$0xff]
        %v1056 = vld [vmem:[%s4 + $0x60] sm:$0xff]
        %v1057 = vld [vmem:[%s4 + $0x68] sm:$0xff]
        %v1058 = vld [vmem:[%s4 + $0x70] sm:$0xff]
        %v1059 = vld [vmem:[%s4 + $0x78] sm:$0xff]
        %1061 = vset.pattern.permute.xlu0 0
        %1062 = vperm.xlu0 %1061, %v1044
        %v1063 = vpop.permute.xlu0 %1062
        %1066 = vset.pattern.permute.xlu0 0
        %1067 = vperm.xlu0 %1066, %v1045
        %v1068 = vpop.permute.xlu0 %1067
        %1071 = vset.pattern.permute.xlu0 0
        %1072 = vperm.xlu0 %1071, %v1046
        %v1073 = vpop.permute.xlu0 %1072
        %1076 = vset.pattern.permute.xlu0 0
        %1077 = vperm.xlu0 %1076, %v1047
        %v1078 = vpop.permute.xlu0 %1077
        %1081 = vset.pattern.permute.xlu0 0
        %1082 = vperm.xlu0 %1081, %v1048
        %v1083 = vpop.permute.xlu0 %1082
        %1086 = vset.pattern.permute.xlu0 0
        %1087 = vperm.xlu0 %1086, %v1049
        %v1088 = vpop.permute.xlu0 %1087
        %1091 = vset.pattern.permute.xlu0 0
        %1092 = vperm.xlu0 %1091, %v1050
        %v1093 = vpop.permute.xlu0 %1092
        %1096 = vset.pattern.permute.xlu0 0
        %1097 = vperm.xlu0 %1096, %v1051
        %v1098 = vpop.permute.xlu0 %1097
        %1101 = vset.pattern.permute.xlu0 0
        %1102 = vperm.xlu0 %1101, %v1052
        %v1103 = vpop.permute.xlu0 %1102
        %1106 = vset.pattern.permute.xlu0 0
        %1107 = vperm.xlu0 %1106, %v1053
        %v1108 = vpop.permute.xlu0 %1107
        %1111 = vset.pattern.permute.xlu0 0
        %1112 = vperm.xlu0 %1111, %v1054
        %v1113 = vpop.permute.xlu0 %1112
        %1116 = vset.pattern.permute.xlu0 0
        %1117 = vperm.xlu0 %1116, %v1055
        %v1118 = vpop.permute.xlu0 %1117
        %1121 = vset.pattern.permute.xlu0 0
        %1122 = vperm.xlu0 %1121, %v1056
        %v1123 = vpop.permute.xlu0 %1122
        %1126 = vset.pattern.permute.xlu0 0
        %1127 = vperm.xlu0 %1126, %v1057
        %v1128 = vpop.permute.xlu0 %1127
        %1131 = vset.pattern.permute.xlu0 0
        %1132 = vperm.xlu0 %1131, %v1058
        %v1133 = vpop.permute.xlu0 %1132
        %1136 = vset.pattern.permute.xlu0 0
        %1137 = vperm.xlu0 %1136, %v1059
        %v1138 = vpop.permute.xlu0 %1137
        %v1140 = vadd.f32 %v966, %v1063
        %v1141 = vadd.f32 %v971, %v1068
        %v1142 = vadd.f32 %v976, %v1073
        %v1143 = vadd.f32 %v981, %v1078
        %v1144 = vadd.f32 %v986, %v1083
        %v1145 = vadd.f32 %v991, %v1088
        %v1146 = vadd.f32 %v996, %v1093
        %v1147 = vadd.f32 %v1001, %v1098
        %v1148 = vadd.f32 %v1006, %v1103
        %v1149 = vadd.f32 %v1011, %v1108
        %v1150 = vadd.f32 %v1016, %v1113
        %v1151 = vadd.f32 %v1021, %v1118
        %v1152 = vadd.f32 %v1026, %v1123
        %v1153 = vadd.f32 %v1031, %v1128
        %v1154 = vadd.f32 %v1036, %v1133
        %v1155 = vadd.f32 %v1041, %v1138
        %v1156 = vmax.f32 %v1140, 0.0
        %v1157 = vmax.f32 %v1141, 0.0
        %v1158 = vmax.f32 %v1142, 0.0
        %v1159 = vmax.f32 %v1143, 0.0
        %v1160 = vmax.f32 %v1144, 0.0
        %v1161 = vmax.f32 %v1145, 0.0
        %v1162 = vmax.f32 %v1146, 0.0
        %v1163 = vmax.f32 %v1147, 0.0
        %v1164 = vmax.f32 %v1148, 0.0
        %v1165 = vmax.f32 %v1149, 0.0
        %v1166 = vmax.f32 %v1150, 0.0
        %v1167 = vmax.f32 %v1151, 0.0
        %v1168 = vmax.f32 %v1152, 0.0
        %v1169 = vmax.f32 %v1153, 0.0
        %v1170 = vmax.f32 %v1154, 0.0
        %v1171 = vmax.f32 %v1155, 0.0
        %v1172 = vld [vmem:[#allocation6] sm:$0xf]
        %v1173 = vld [vmem:[#allocation6 + $0x4] sm:$0xf]
        %v1174 = vld [vmem:[#allocation6 + $0x8] sm:$0xf]
        %v1175 = vld [vmem:[#allocation6 + $0xc] sm:$0xf]
        %v1176 = vld [vmem:[#allocation6 + $0x10] sm:$0xf]
        %v1177 = vld [vmem:[#allocation6 + $0x14] sm:$0xf]
        %v1178 = vld [vmem:[#allocation6 + $0x18] sm:$0xf]
        %v1179 = vld [vmem:[#allocation6 + $0x1c] sm:$0xf]
        %v1180 = vld [vmem:[#allocation6 + $0x20] sm:$0xf]
        %v1181 = vld [vmem:[#allocation6 + $0x24] sm:$0xf]
        %v1182 = vld [vmem:[#allocation6 + $0x28] sm:$0xf]
        %v1183 = vld [vmem:[#allocation6 + $0x2c] sm:$0xf]
        %v1184 = vld [vmem:[#allocation6 + $0x30] sm:$0xf]
        %v1185 = vld [vmem:[#allocation6 + $0x34] sm:$0xf]
        %v1186 = vld [vmem:[#allocation6 + $0x38] sm:$0xf]
        %v1187 = vld [vmem:[#allocation6 + $0x3c] sm:$0xf]
        %v1188 = vpack.c.bf16 %v1157, %v1156
        %v1189 = vpack.c.bf16 %v1159, %v1158
        %v1190 = vpack.c.bf16 %v1161, %v1160
        %v1191 = vpack.c.bf16 %v1163, %v1162
        %v1192 = vpack.c.bf16 %v1165, %v1164
        %v1193 = vpack.c.bf16 %v1167, %v1166
        %v1194 = vpack.c.bf16 %v1169, %v1168
        %v1195 = vpack.c.bf16 %v1171, %v1170
        %v1196 = vld [vmem:[%s6] sm:$0xff]
        %v1197 = vld [vmem:[%s6 + $0x8] sm:$0xff]
        %v1198 = vld [vmem:[%s6 + $0x10] sm:$0xff]
        %v1199 = vld [vmem:[%s6 + $0x18] sm:$0xff]
        %v1200 = vld [vmem:[%s6 + $0x20] sm:$0xff]
        %v1201 = vld [vmem:[%s6 + $0x28] sm:$0xff]
        %v1202 = vld [vmem:[%s6 + $0x30] sm:$0xff]
        %v1203 = vld [vmem:[%s6 + $0x38] sm:$0xff]
        %v1204 = vld [vmem:[%s6 + $0x40] sm:$0xff]
        %v1205 = vld [vmem:[%s6 + $0x48] sm:$0xff]
        %v1206 = vld [vmem:[%s6 + $0x50] sm:$0xff]
        %v1207 = vld [vmem:[%s6 + $0x58] sm:$0xff]
        %v1208 = vld [vmem:[%s6 + $0x60] sm:$0xff]
        %v1209 = vld [vmem:[%s6 + $0x68] sm:$0xff]
        %v1210 = vld [vmem:[%s6 + $0x70] sm:$0xff]
        %v1211 = vld [vmem:[%s6 + $0x78] sm:$0xff]
        %1213 = vset.pattern.permute.xlu0 0
        %1214 = vperm.xlu0 %1213, %v1196
        %v1215 = vpop.permute.xlu0 %1214
        %1218 = vset.pattern.permute.xlu0 0
        %1219 = vperm.xlu0 %1218, %v1197
        %v1220 = vpop.permute.xlu0 %1219
        %1223 = vset.pattern.permute.xlu0 0
        %1224 = vperm.xlu0 %1223, %v1198
        %v1225 = vpop.permute.xlu0 %1224
        %1228 = vset.pattern.permute.xlu0 0
        %1229 = vperm.xlu0 %1228, %v1199
        %v1230 = vpop.permute.xlu0 %1229
        %1233 = vset.pattern.permute.xlu0 0
        %1234 = vperm.xlu0 %1233, %v1200
        %v1235 = vpop.permute.xlu0 %1234
        %1238 = vset.pattern.permute.xlu0 0
        %1239 = vperm.xlu0 %1238, %v1201
        %v1240 = vpop.permute.xlu0 %1239
        %1243 = vset.pattern.permute.xlu0 0
        %1244 = vperm.xlu0 %1243, %v1202
        %v1245 = vpop.permute.xlu0 %1244
        %1248 = vset.pattern.permute.xlu0 0
        %1249 = vperm.xlu0 %1248, %v1203
        %v1250 = vpop.permute.xlu0 %1249
        %1253 = vset.pattern.permute.xlu0 0
        %1254 = vperm.xlu0 %1253, %v1204
        %v1255 = vpop.permute.xlu0 %1254
        %1258 = vset.pattern.permute.xlu0 0
        %1259 = vperm.xlu0 %1258, %v1205
        %v1260 = vpop.permute.xlu0 %1259
        %1263 = vset.pattern.permute.xlu0 0
        %1264 = vperm.xlu0 %1263, %v1206
        %v1265 = vpop.permute.xlu0 %1264
        %1268 = vset.pattern.permute.xlu0 0
        %1269 = vperm.xlu0 %1268, %v1207
        %v1270 = vpop.permute.xlu0 %1269
        %1273 = vset.pattern.permute.xlu0 0
        %1274 = vperm.xlu0 %1273, %v1208
        %v1275 = vpop.permute.xlu0 %1274
        %1278 = vset.pattern.permute.xlu0 0
        %1279 = vperm.xlu0 %1278, %v1209
        %v1280 = vpop.permute.xlu0 %1279
        %1283 = vset.pattern.permute.xlu0 0
        %1284 = vperm.xlu0 %1283, %v1210
        %v1285 = vpop.permute.xlu0 %1284
        %1288 = vset.pattern.permute.xlu0 0
        %1289 = vperm.xlu0 %1288, %v1211
        %v1290 = vpop.permute.xlu0 %1289
        %v1308 = vunpack.c.l.b16 %v1172
        %v1309 = vunpack.c.l.b16 %v1173
        %v1310 = vunpack.c.l.b16 %v1174
        %v1311 = vunpack.c.l.b16 %v1175
        %v1312 = vunpack.c.l.b16 %v1176
        %v1313 = vunpack.c.l.b16 %v1177
        %v1314 = vunpack.c.l.b16 %v1178
        %v1315 = vunpack.c.l.b16 %v1179
        %v1316 = vunpack.c.l.b16 %v1180
        %v1317 = vunpack.c.l.b16 %v1181
        %v1318 = vunpack.c.l.b16 %v1182
        %v1319 = vunpack.c.l.b16 %v1183
        %v1320 = vunpack.c.l.b16 %v1184
        %v1321 = vunpack.c.l.b16 %v1185
        %v1322 = vunpack.c.l.b16 %v1186
        %v1323 = vunpack.c.l.b16 %v1187
        %v1324 = vpack.c.b16 %v1309, %v1308
        %v1325 = vpack.c.b16 %v1311, %v1310
        %v1326 = vpack.c.b16 %v1313, %v1312
        %v1327 = vpack.c.b16 %v1315, %v1314
        %v1328 = vpack.c.b16 %v1317, %v1316
        %v1329 = vpack.c.b16 %v1319, %v1318
        %v1330 = vpack.c.b16 %v1321, %v1320
        %v1331 = vpack.c.b16 %v1323, %v1322
        %1340 = vmatprep.subr.bf16.mxu0 0
        %1341 = vmatpush1.bf16.msra.mxu0 %v1188
        %1342 = vmatprep.subr.bf16.mxu0 0
        %1343 = vmatpush1.bf16.msra.mxu0 %v1189
        %1344 = vmatprep.subr.bf16.mxu0 0
        %1345 = vmatpush1.bf16.msra.mxu0 %v1190
        %1346 = vmatprep.subr.bf16.mxu0 0
        %1347 = vmatpush1.bf16.msra.mxu0 %v1191
        %1348 = vmatprep.subr.bf16.mxu0 0
        %1349 = vmatpush1.bf16.msra.mxu0 %v1192
        %1350 = vmatprep.subr.bf16.mxu0 0
        %1351 = vmatpush1.bf16.msra.mxu0 %v1193
        %1352 = vmatprep.subr.bf16.mxu0 0
        %1353 = vmatpush1.bf16.msra.mxu0 %v1194
        %1354 = vmatprep.subr.bf16.mxu0 0
        %1355 = vmatpush1.bf16.msra.mxu0 %v1195
        %1356 = vmatprep.subr.bf16.mxu0 0
        %1357 = vmatpush1.bf16.msra.mxu0 0
        %1358 = vmatprep.subr.bf16.mxu0 0
        %1359 = vmatpush1.bf16.msra.mxu0 0
        %1360 = vmatprep.subr.bf16.mxu0 0
        %1361 = vmatpush1.bf16.msra.mxu0 0
        %1362 = vmatprep.subr.bf16.mxu0 0
        %1363 = vmatpush1.bf16.msra.mxu0 0
        %1364 = vmatprep.subr.bf16.mxu0 0
        %1365 = vmatpush1.bf16.msra.mxu0 0
        %1366 = vmatprep.subr.bf16.mxu0 0
        %1367 = vmatpush1.bf16.msra.mxu0 0
        %1368 = vmatprep.subr.bf16.mxu0 0
        %1369 = vmatpush1.bf16.msra.mxu0 0
        %1370 = vmatprep.subr.bf16.mxu0 0
        %1371 = vmatpush1.bf16.msra.mxu0 0
        %1372 = vmatprep.mubr.bf16.mxu0 0
        %1373 = vmatmul.mubr.bf16.gmra.mrb[0].mxu0 %v1324
        %v1374 = vpop.f32.mrb[0].mxu0
        %v1375 = vadd.f32 %v1215, %v1374
        %v1376 = vpop.f32.mrb[0].mxu0
        %v1377 = vpop.f32.mrb[0].mxu0
        %v1378 = vadd.f32 %v1220, %v1377
        %v1379 = vpop.f32.mrb[0].mxu0
        %1380 = vmatprep.mubr.bf16.mxu0 0
        %1381 = vmatmul.mubr.bf16.gmra.mrb[0].mxu0 %v1325
        %v1382 = vpop.f32.mrb[0].mxu0
        %v1383 = vadd.f32 %v1225, %v1382
        %v1384 = vpop.f32.mrb[0].mxu0
        %v1385 = vpop.f32.mrb[0].mxu0
        %v1386 = vadd.f32 %v1230, %v1385
        %v1387 = vpop.f32.mrb[0].mxu0
        %1388 = vmatprep.mubr.bf16.mxu0 0
        %1389 = vmatmul.mubr.bf16.gmra.mrb[0].mxu0 %v1326
        %v1390 = vpop.f32.mrb[0].mxu0
        %v1391 = vadd.f32 %v1235, %v1390
        %v1392 = vpop.f32.mrb[0].mxu0
        %v1393 = vpop.f32.mrb[0].mxu0
        %v1394 = vadd.f32 %v1240, %v1393
        %v1395 = vpop.f32.mrb[0].mxu0
        %1396 = vmatprep.mubr.bf16.mxu0 0
        %1397 = vmatmul.mubr.bf16.gmra.mrb[0].mxu0 %v1327
        %v1398 = vpop.f32.mrb[0].mxu0
        %v1399 = vadd.f32 %v1245, %v1398
        %v1400 = vpop.f32.mrb[0].mxu0
        %v1401 = vpop.f32.mrb[0].mxu0
        %v1402 = vadd.f32 %v1250, %v1401
        %v1403 = vpop.f32.mrb[0].mxu0
        %1404 = vmatprep.mubr.bf16.mxu0 0
        %1405 = vmatmul.mubr.bf16.gmra.mrb[0].mxu0 %v1328
        %v1406 = vpop.f32.mrb[0].mxu0
        %v1407 = vadd.f32 %v1255, %v1406
        %v1408 = vpop.f32.mrb[0].mxu0
        %v1409 = vpop.f32.mrb[0].mxu0
        %v1410 = vadd.f32 %v1260, %v1409
        %v1411 = vpop.f32.mrb[0].mxu0
        %1412 = vmatprep.mubr.bf16.mxu0 0
        %1413 = vmatmul.mubr.bf16.gmra.mrb[0].mxu0 %v1329
        %v1414 = vpop.f32.mrb[0].mxu0
        %v1415 = vadd.f32 %v1265, %v1414
        %v1416 = vpop.f32.mrb[0].mxu0
        %v1417 = vpop.f32.mrb[0].mxu0
        %v1418 = vadd.f32 %v1270, %v1417
        %v1419 = vpop.f32.mrb[0].mxu0
        %1420 = vmatprep.mubr.bf16.mxu0 0
        %1421 = vmatmul.mubr.bf16.gmra.mrb[0].mxu0 %v1330
        %v1422 = vpop.f32.mrb[0].mxu0
        %v1423 = vadd.f32 %v1275, %v1422
        %v1424 = vpop.f32.mrb[0].mxu0
        %v1425 = vpop.f32.mrb[0].mxu0
        %v1426 = vadd.f32 %v1280, %v1425
        %v1427 = vpop.f32.mrb[0].mxu0
        %1428 = vmatprep.mubr.bf16.mxu0 0
        %1429 = vmatmul.mubr.bf16.gmra.mrb[0].mxu0 %v1331
        %v1430 = vpop.f32.mrb[0].mxu0
        %v1431 = vadd.f32 %v1285, %v1430
        %v1432 = vpop.f32.mrb[0].mxu0
        %v1433 = vpop.f32.mrb[0].mxu0
        %v1434 = vadd.f32 %v1290, %v1433
        %v1435 = vpop.f32.mrb[0].mxu0
        %1436 = vdwg.mxu0
        %v1437 = vmax.f32 %v1375, 0.0
        %v1438 = vmax.f32 %v1378, 0.0
        %v1439 = vmax.f32 %v1383, 0.0
        %v1440 = vmax.f32 %v1386, 0.0
        %v1441 = vmax.f32 %v1391, 0.0
        %v1442 = vmax.f32 %v1394, 0.0
        %v1443 = vmax.f32 %v1399, 0.0
        %v1444 = vmax.f32 %v1402, 0.0
        %v1445 = vmax.f32 %v1407, 0.0
        %v1446 = vmax.f32 %v1410, 0.0
        %v1447 = vmax.f32 %v1415, 0.0
        %v1448 = vmax.f32 %v1418, 0.0
        %v1449 = vmax.f32 %v1423, 0.0
        %v1450 = vmax.f32 %v1426, 0.0
        %v1451 = vmax.f32 %v1431, 0.0
        %v1452 = vmax.f32 %v1434, 0.0
        %v1453 = vld [vmem:[#allocation7] sm:$0xf]
        %v1454 = vld [vmem:[#allocation7 + $0x4] sm:$0xf]
        %v1455 = vld [vmem:[#allocation7 + $0x8] sm:$0xf]
        %v1456 = vld [vmem:[#allocation7 + $0xc] sm:$0xf]
        %v1457 = vld [vmem:[#allocation7 + $0x10] sm:$0xf]
        %v1458 = vld [vmem:[#allocation7 + $0x14] sm:$0xf]
        %v1459 = vld [vmem:[#allocation7 + $0x18] sm:$0xf]
        %v1460 = vld [vmem:[#allocation7 + $0x1c] sm:$0xf]
        %v1461 = vld [vmem:[#allocation7 + $0x20] sm:$0xf]
        %v1462 = vld [vmem:[#allocation7 + $0x24] sm:$0xf]
        %v1463 = vld [vmem:[#allocation7 + $0x28] sm:$0xf]
        %v1464 = vld [vmem:[#allocation7 + $0x2c] sm:$0xf]
        %v1465 = vld [vmem:[#allocation7 + $0x30] sm:$0xf]
        %v1466 = vld [vmem:[#allocation7 + $0x34] sm:$0xf]
        %v1467 = vld [vmem:[#allocation7 + $0x38] sm:$0xf]
        %v1468 = vld [vmem:[#allocation7 + $0x3c] sm:$0xf]
        %v1469 = vpack.c.bf16 %v1438, %v1437
        %v1470 = vpack.c.bf16 %v1440, %v1439
        %v1471 = vpack.c.bf16 %v1442, %v1441
        %v1472 = vpack.c.bf16 %v1444, %v1443
        %v1473 = vpack.c.bf16 %v1446, %v1445
        %v1474 = vpack.c.bf16 %v1448, %v1447
        %v1475 = vpack.c.bf16 %v1450, %v1449
        %v1476 = vpack.c.bf16 %v1452, %v1451
        %v1477 = vld [vmem:[%s8] sm:$0xff]
        %v1478 = vld [vmem:[%s8 + $0x8] sm:$0xff]
        %v1479 = vld [vmem:[%s8 + $0x10] sm:$0xff]
        %v1480 = vld [vmem:[%s8 + $0x18] sm:$0xff]
        %v1481 = vld [vmem:[%s8 + $0x20] sm:$0xff]
        %v1482 = vld [vmem:[%s8 + $0x28] sm:$0xff]
        %v1483 = vld [vmem:[%s8 + $0x30] sm:$0xff]
        %v1484 = vld [vmem:[%s8 + $0x38] sm:$0xff]
        %v1485 = vld [vmem:[%s8 + $0x40] sm:$0xff]
        %v1486 = vld [vmem:[%s8 + $0x48] sm:$0xff]
        %v1487 = vld [vmem:[%s8 + $0x50] sm:$0xff]
        %v1488 = vld [vmem:[%s8 + $0x58] sm:$0xff]
        %v1489 = vld [vmem:[%s8 + $0x60] sm:$0xff]
        %v1490 = vld [vmem:[%s8 + $0x68] sm:$0xff]
        %v1491 = vld [vmem:[%s8 + $0x70] sm:$0xff]
        %v1492 = vld [vmem:[%s8 + $0x78] sm:$0xff]
        %1494 = vset.pattern.permute.xlu0 0
        %1495 = vperm.xlu0 %1494, %v1477
        %v1496 = vpop.permute.xlu0 %1495
        %1499 = vset.pattern.permute.xlu0 0
        %1500 = vperm.xlu0 %1499, %v1478
        %v1501 = vpop.permute.xlu0 %1500
        %1504 = vset.pattern.permute.xlu0 0
        %1505 = vperm.xlu0 %1504, %v1479
        %v1506 = vpop.permute.xlu0 %1505
        %1509 = vset.pattern.permute.xlu0 0
        %1510 = vperm.xlu0 %1509, %v1480
        %v1511 = vpop.permute.xlu0 %1510
        %1514 = vset.pattern.permute.xlu0 0
        %1515 = vperm.xlu0 %1514, %v1481
        %v1516 = vpop.permute.xlu0 %1515
        %1519 = vset.pattern.permute.xlu0 0
        %1520 = vperm.xlu0 %1519, %v1482
        %v1521 = vpop.permute.xlu0 %1520
        %1524 = vset.pattern.permute.xlu0 0
        %1525 = vperm.xlu0 %1524, %v1483
        %v1526 = vpop.permute.xlu0 %1525
        %1529 = vset.pattern.permute.xlu0 0
        %1530 = vperm.xlu0 %1529, %v1484
        %v1531 = vpop.permute.xlu0 %1530
        %1534 = vset.pattern.permute.xlu0 0
        %1535 = vperm.xlu0 %1534, %v1485
        %v1536 = vpop.permute.xlu0 %1535
        %1539 = vset.pattern.permute.xlu0 0
        %1540 = vperm.xlu0 %1539, %v1486
        %v1541 = vpop.permute.xlu0 %1540
        %1544 = vset.pattern.permute.xlu0 0
        %1545 = vperm.xlu0 %1544, %v1487
        %v1546 = vpop.permute.xlu0 %1545
        %1549 = vset.pattern.permute.xlu0 0
        %1550 = vperm.xlu0 %1549, %v1488
        %v1551 = vpop.permute.xlu0 %1550
        %1554 = vset.pattern.permute.xlu0 0
        %1555 = vperm.xlu0 %1554, %v1489
        %v1556 = vpop.permute.xlu0 %1555
        %1559 = vset.pattern.permute.xlu0 0
        %1560 = vperm.xlu0 %1559, %v1490
        %v1561 = vpop.permute.xlu0 %1560
        %1564 = vset.pattern.permute.xlu0 0
        %1565 = vperm.xlu0 %1564, %v1491
        %v1566 = vpop.permute.xlu0 %1565
        %1569 = vset.pattern.permute.xlu0 0
        %1570 = vperm.xlu0 %1569, %v1492
        %v1571 = vpop.permute.xlu0 %1570
        %v1589 = vunpack.c.l.b16 %v1453
        %v1590 = vunpack.c.l.b16 %v1454
        %v1591 = vunpack.c.l.b16 %v1455
        %v1592 = vunpack.c.l.b16 %v1456
        %v1593 = vunpack.c.l.b16 %v1457
        %v1594 = vunpack.c.l.b16 %v1458
        %v1595 = vunpack.c.l.b16 %v1459
        %v1596 = vunpack.c.l.b16 %v1460
        %v1597 = vunpack.c.l.b16 %v1461
        %v1598 = vunpack.c.l.b16 %v1462
        %v1599 = vunpack.c.l.b16 %v1463
        %v1600 = vunpack.c.l.b16 %v1464
        %v1601 = vunpack.c.l.b16 %v1465
        %v1602 = vunpack.c.l.b16 %v1466
        %v1603 = vunpack.c.l.b16 %v1467
        %v1604 = vunpack.c.l.b16 %v1468
        %v1605 = vpack.c.b16 %v1590, %v1589
        %v1606 = vpack.c.b16 %v1592, %v1591
        %v1607 = vpack.c.b16 %v1594, %v1593
        %v1608 = vpack.c.b16 %v1596, %v1595
        %v1609 = vpack.c.b16 %v1598, %v1597
        %v1610 = vpack.c.b16 %v1600, %v1599
        %v1611 = vpack.c.b16 %v1602, %v1601
        %v1612 = vpack.c.b16 %v1604, %v1603
        %1621 = vmatprep.subr.bf16.mxu0 0
        %1622 = vmatpush1.bf16.msra.mxu0 %v1469
        %1623 = vmatprep.subr.bf16.mxu0 0
        %1624 = vmatpush1.bf16.msra.mxu0 %v1470
        %1625 = vmatprep.subr.bf16.mxu0 0
        %1626 = vmatpush1.bf16.msra.mxu0 %v1471
        %1627 = vmatprep.subr.bf16.mxu0 0
        %1628 = vmatpush1.bf16.msra.mxu0 %v1472
        %1629 = vmatprep.subr.bf16.mxu0 0
        %1630 = vmatpush1.bf16.msra.mxu0 %v1473
        %1631 = vmatprep.subr.bf16.mxu0 0
        %1632 = vmatpush1.bf16.msra.mxu0 %v1474
        %1633 = vmatprep.subr.bf16.mxu0 0
        %1634 = vmatpush1.bf16.msra.mxu0 %v1475
        %1635 = vmatprep.subr.bf16.mxu0 0
        %1636 = vmatpush1.bf16.msra.mxu0 %v1476
        %1637 = vmatprep.subr.bf16.mxu0 0
        %1638 = vmatpush1.bf16.msra.mxu0 0
        %1639 = vmatprep.subr.bf16.mxu0 0
        %1640 = vmatpush1.bf16.msra.mxu0 0
        %1641 = vmatprep.subr.bf16.mxu0 0
        %1642 = vmatpush1.bf16.msra.mxu0 0
        %1643 = vmatprep.subr.bf16.mxu0 0
        %1644 = vmatpush1.bf16.msra.mxu0 0
        %1645 = vmatprep.subr.bf16.mxu0 0
        %1646 = vmatpush1.bf16.msra.mxu0 0
        %1647 = vmatprep.subr.bf16.mxu0 0
        %1648 = vmatpush1.bf16.msra.mxu0 0
        %1649 = vmatprep.subr.bf16.mxu0 0
        %1650 = vmatpush1.bf16.msra.mxu0 0
        %1651 = vmatprep.subr.bf16.mxu0 0
        %1652 = vmatpush1.bf16.msra.mxu0 0
        %1653 = vmatprep.mubr.bf16.mxu0 0
        %1654 = vmatmul.mubr.bf16.gmra.mrb[0].mxu0 %v1605
        %v1655 = vpop.f32.mrb[0].mxu0
        %v1656 = vadd.f32 %v1496, %v1655
        %v1657 = vpop.f32.mrb[0].mxu0
        %v1658 = vpop.f32.mrb[0].mxu0
        %v1659 = vadd.f32 %v1501, %v1658
        %v1660 = vpop.f32.mrb[0].mxu0
        %1661 = vmatprep.mubr.bf16.mxu0 0
        %1662 = vmatmul.mubr.bf16.gmra.mrb[0].mxu0 %v1606
        %v1663 = vpop.f32.mrb[0].mxu0
        %v1664 = vadd.f32 %v1506, %v1663
        %v1665 = vpop.f32.mrb[0].mxu0
        %v1666 = vpop.f32.mrb[0].mxu0
        %v1667 = vadd.f32 %v1511, %v1666
        %v1668 = vpop.f32.mrb[0].mxu0
        %1669 = vmatprep.mubr.bf16.mxu0 0
        %1670 = vmatmul.mubr.bf16.gmra.mrb[0].mxu0 %v1607
        %v1671 = vpop.f32.mrb[0].mxu0
        %v1672 = vadd.f32 %v1516, %v1671
        %v1673 = vpop.f32.mrb[0].mxu0
        %v1674 = vpop.f32.mrb[0].mxu0
        %v1675 = vadd.f32 %v1521, %v1674
        %v1676 = vpop.f32.mrb[0].mxu0
        %1677 = vmatprep.mubr.bf16.mxu0 0
        %1678 = vmatmul.mubr.bf16.gmra.mrb[0].mxu0 %v1608
        %v1679 = vpop.f32.mrb[0].mxu0
        %v1680 = vadd.f32 %v1526, %v1679
        %v1681 = vpop.f32.mrb[0].mxu0
        %v1682 = vpop.f32.mrb[0].mxu0
        %v1683 = vadd.f32 %v1531, %v1682
        %v1684 = vpop.f32.mrb[0].mxu0
        %1685 = vmatprep.mubr.bf16.mxu0 0
        %1686 = vmatmul.mubr.bf16.gmra.mrb[0].mxu0 %v1609
        %v1687 = vpop.f32.mrb[0].mxu0
        %v1688 = vadd.f32 %v1536, %v1687
        %v1689 = vpop.f32.mrb[0].mxu0
        %v1690 = vpop.f32.mrb[0].mxu0
        %v1691 = vadd.f32 %v1541, %v1690
        %v1692 = vpop.f32.mrb[0].mxu0
        %1693 = vmatprep.mubr.bf16.mxu0 0
        %1694 = vmatmul.mubr.bf16.gmra.mrb[0].mxu0 %v1610
        %v1695 = vpop.f32.mrb[0].mxu0
        %v1696 = vadd.f32 %v1546, %v1695
        %v1697 = vpop.f32.mrb[0].mxu0
        %v1698 = vpop.f32.mrb[0].mxu0
        %v1699 = vadd.f32 %v1551, %v1698
        %v1700 = vpop.f32.mrb[0].mxu0
        %1701 = vmatprep.mubr.bf16.mxu0 0
        %1702 = vmatmul.mubr.bf16.gmra.mrb[0].mxu0 %v1611
        %v1703 = vpop.f32.mrb[0].mxu0
        %v1704 = vadd.f32 %v1556, %v1703
        %v1705 = vpop.f32.mrb[0].mxu0
        %v1706 = vpop.f32.mrb[0].mxu0
        %v1707 = vadd.f32 %v1561, %v1706
        %v1708 = vpop.f32.mrb[0].mxu0
        %1709 = vmatprep.mubr.bf16.mxu0 0
        %1710 = vmatmul.mubr.bf16.gmra.mrb[0].mxu0 %v1612
        %v1711 = vpop.f32.mrb[0].mxu0
        %v1712 = vadd.f32 %v1566, %v1711
        %v1713 = vpop.f32.mrb[0].mxu0
        %v1714 = vpop.f32.mrb[0].mxu0
        %v1715 = vadd.f32 %v1571, %v1714
        %v1716 = vpop.f32.mrb[0].mxu0
        %1717 = vdwg.mxu0
        %v1718 = vadd.f32 %v1656, %v1659
        %v1719 = vadd.f32 %v1718, %v1664
        %v1720 = vadd.f32 %v1719, %v1667
        %v1721 = vadd.f32 %v1720, %v1672
        %v1722 = vadd.f32 %v1721, %v1675
        %v1723 = vadd.f32 %v1722, %v1680
        %v1724 = vadd.f32 %v1723, %v1683
        %v1725 = vadd.f32 %v1724, %v1688
        %v1726 = vadd.f32 %v1725, %v1691
        %v1727 = vadd.f32 %v1726, %v1696
        %v1728 = vadd.f32 %v1727, %v1699
        %v1729 = vadd.f32 %v1728, %v1704
        %v1730 = vadd.f32 %v1729, %v1707
        %v1731 = vadd.f32 %v1730, %v1712
        %v1732 = vadd.f32 %v1731, %v1715
        %v1733 = vrot.slane %v1732, 4
        %v1734 = vadd.f32 %v1732, %v1733
        %v1735 = vrot.slane %v1734, 2
        %v1736 = vadd.f32 %v1734, %v1735
        %v1737 = vrot.slane %v1736, 1
        %v1738 = vadd.f32 %v1736, %v1737
        %v1739 = vrcp.pop 128.0
        %v1740 = vmul.f32 %v1738, %v1739
        %v1741 = vsub.f32 %v1656, %v1740
        %v1742 = vsub.f32 %v1659, %v1740
        %v1743 = vsub.f32 %v1664, %v1740
        %v1744 = vsub.f32 %v1667, %v1740
        %v1745 = vsub.f32 %v1672, %v1740
        %v1746 = vsub.f32 %v1675, %v1740
        %v1747 = vsub.f32 %v1680, %v1740
        %v1748 = vsub.f32 %v1683, %v1740
        %v1749 = vsub.f32 %v1688, %v1740
        %v1750 = vsub.f32 %v1691, %v1740
        %v1751 = vsub.f32 %v1696, %v1740
        %v1752 = vsub.f32 %v1699, %v1740
        %v1753 = vsub.f32 %v1704, %v1740
        %v1754 = vsub.f32 %v1707, %v1740
        %v1755 = vsub.f32 %v1712, %v1740
        %v1756 = vsub.f32 %v1715, %v1740
        %v1757 = vmul.f32 %v1741, %v1741
        %v1758 = vmul.f32 %v1742, %v1742
        %v1759 = vmul.f32 %v1743, %v1743
        %v1760 = vmul.f32 %v1744, %v1744
        %v1761 = vmul.f32 %v1745, %v1745
        %v1762 = vmul.f32 %v1746, %v1746
        %v1763 = vmul.f32 %v1747, %v1747
        %v1764 = vmul.f32 %v1748, %v1748
        %v1765 = vmul.f32 %v1749, %v1749
        %v1766 = vmul.f32 %v1750, %v1750
        %v1767 = vmul.f32 %v1751, %v1751
        %v1768 = vmul.f32 %v1752, %v1752
        %v1769 = vmul.f32 %v1753, %v1753
        %v1770 = vmul.f32 %v1754, %v1754
        %v1771 = vmul.f32 %v1755, %v1755
        %v1772 = vmul.f32 %v1756, %v1756
        %v1773 = vadd.f32 %v1757, %v1758
        %v1774 = vadd.f32 %v1773, %v1759
        %v1775 = vadd.f32 %v1774, %v1760
        %v1776 = vadd.f32 %v1775, %v1761
        %v1777 = vadd.f32 %v1776, %v1762
        %v1778 = vadd.f32 %v1777, %v1763
        %v1779 = vadd.f32 %v1778, %v1764
        %v1780 = vadd.f32 %v1779, %v1765
        %v1781 = vadd.f32 %v1780, %v1766
        %v1782 = vadd.f32 %v1781, %v1767
        %v1783 = vadd.f32 %v1782, %v1768
        %v1784 = vadd.f32 %v1783, %v1769
        %v1785 = vadd.f32 %v1784, %v1770
        %v1786 = vadd.f32 %v1785, %v1771
        %v1787 = vadd.f32 %v1786, %v1772
        %v1788 = vrot.slane %v1787, 4
        %v1789 = vadd.f32 %v1787, %v1788
        %v1790 = vrot.slane %v1789, 2
        %v1791 = vadd.f32 %v1789, %v1790
        %v1792 = vrot.slane %v1791, 1
        %v1793 = vadd.f32 %v1791, %v1792
        %v1794 = vmul.f32 %v1793, %v1739
        %v1795 = vadd.f32 %v1794, 1e-05
        %v1796 = vrsqrt.pop %v1795
        %v1797 = vmul.f32 %v1741, %v1796
        %v1798 = vmul.f32 %v1742, %v1796
        %v1799 = vmul.f32 %v1743, %v1796
        %v1800 = vmul.f32 %v1744, %v1796
        %v1801 = vmul.f32 %v1745, %v1796
        %v1802 = vmul.f32 %v1746, %v1796
        %v1803 = vmul.f32 %v1747, %v1796
        %v1804 = vmul.f32 %v1748, %v1796
        %v1805 = vmul.f32 %v1749, %v1796
        %v1806 = vmul.f32 %v1750, %v1796
        %v1807 = vmul.f32 %v1751, %v1796
        %v1808 = vmul.f32 %v1752, %v1796
        %v1809 = vmul.f32 %v1753, %v1796
        %v1810 = vmul.f32 %v1754, %v1796
        %v1811 = vmul.f32 %v1755, %v1796
        %v1812 = vmul.f32 %v1756, %v1796
        %v1813 = vld [vmem:[%s9] sm:$0xff]
        %v1814 = vld [vmem:[%s9 + $0x8] sm:$0xff]
        %v1815 = vld [vmem:[%s9 + $0x10] sm:$0xff]
        %v1816 = vld [vmem:[%s9 + $0x18] sm:$0xff]
        %v1817 = vld [vmem:[%s9 + $0x20] sm:$0xff]
        %v1818 = vld [vmem:[%s9 + $0x28] sm:$0xff]
        %v1819 = vld [vmem:[%s9 + $0x30] sm:$0xff]
        %v1820 = vld [vmem:[%s9 + $0x38] sm:$0xff]
        %v1821 = vld [vmem:[%s9 + $0x40] sm:$0xff]
        %v1822 = vld [vmem:[%s9 + $0x48] sm:$0xff]
        %v1823 = vld [vmem:[%s9 + $0x50] sm:$0xff]
        %v1824 = vld [vmem:[%s9 + $0x58] sm:$0xff]
        %v1825 = vld [vmem:[%s9 + $0x60] sm:$0xff]
        %v1826 = vld [vmem:[%s9 + $0x68] sm:$0xff]
        %v1827 = vld [vmem:[%s9 + $0x70] sm:$0xff]
        %v1828 = vld [vmem:[%s9 + $0x78] sm:$0xff]
        %1830 = vset.pattern.permute.xlu0 0
        %1831 = vperm.xlu0 %1830, %v1813
        %v1832 = vpop.permute.xlu0 %1831
        %1835 = vset.pattern.permute.xlu0 0
        %1836 = vperm.xlu0 %1835, %v1814
        %v1837 = vpop.permute.xlu0 %1836
        %1840 = vset.pattern.permute.xlu0 0
        %1841 = vperm.xlu0 %1840, %v1815
        %v1842 = vpop.permute.xlu0 %1841
        %1845 = vset.pattern.permute.xlu0 0
        %1846 = vperm.xlu0 %1845, %v1816
        %v1847 = vpop.permute.xlu0 %1846
        %1850 = vset.pattern.permute.xlu0 0
        %1851 = vperm.xlu0 %1850, %v1817
        %v1852 = vpop.permute.xlu0 %1851
        %1855 = vset.pattern.permute.xlu0 0
        %1856 = vperm.xlu0 %1855, %v1818
        %v1857 = vpop.permute.xlu0 %1856
        %1860 = vset.pattern.permute.xlu0 0
        %1861 = vperm.xlu0 %1860, %v1819
        %v1862 = vpop.permute.xlu0 %1861
        %1865 = vset.pattern.permute.xlu0 0
        %1866 = vperm.xlu0 %1865, %v1820
        %v1867 = vpop.permute.xlu0 %1866
        %1870 = vset.pattern.permute.xlu0 0
        %1871 = vperm.xlu0 %1870, %v1821
        %v1872 = vpop.permute.xlu0 %1871
        %1875 = vset.pattern.permute.xlu0 0
        %1876 = vperm.xlu0 %1875, %v1822
        %v1877 = vpop.permute.xlu0 %1876
        %1880 = vset.pattern.permute.xlu0 0
        %1881 = vperm.xlu0 %1880, %v1823
        %v1882 = vpop.permute.xlu0 %1881
        %1885 = vset.pattern.permute.xlu0 0
        %1886 = vperm.xlu0 %1885, %v1824
        %v1887 = vpop.permute.xlu0 %1886
        %1890 = vset.pattern.permute.xlu0 0
        %1891 = vperm.xlu0 %1890, %v1825
        %v1892 = vpop.permute.xlu0 %1891
        %1895 = vset.pattern.permute.xlu0 0
        %1896 = vperm.xlu0 %1895, %v1826
        %v1897 = vpop.permute.xlu0 %1896
        %1900 = vset.pattern.permute.xlu0 0
        %1901 = vperm.xlu0 %1900, %v1827
        %v1902 = vpop.permute.xlu0 %1901
        %1905 = vset.pattern.permute.xlu0 0
        %1906 = vperm.xlu0 %1905, %v1828
        %v1907 = vpop.permute.xlu0 %1906
        %v1909 = vmul.f32 %v1797, %v1832
        %v1910 = vmul.f32 %v1798, %v1837
        %v1911 = vmul.f32 %v1799, %v1842
        %v1912 = vmul.f32 %v1800, %v1847
        %v1913 = vmul.f32 %v1801, %v1852
        %v1914 = vmul.f32 %v1802, %v1857
        %v1915 = vmul.f32 %v1803, %v1862
        %v1916 = vmul.f32 %v1804, %v1867
        %v1917 = vmul.f32 %v1805, %v1872
        %v1918 = vmul.f32 %v1806, %v1877
        %v1919 = vmul.f32 %v1807, %v1882
        %v1920 = vmul.f32 %v1808, %v1887
        %v1921 = vmul.f32 %v1809, %v1892
        %v1922 = vmul.f32 %v1810, %v1897
        %v1923 = vmul.f32 %v1811, %v1902
        %v1924 = vmul.f32 %v1812, %v1907
        %v1925 = vld [vmem:[%s10] sm:$0xff]
        %v1926 = vld [vmem:[%s10 + $0x8] sm:$0xff]
        %v1927 = vld [vmem:[%s10 + $0x10] sm:$0xff]
        %v1928 = vld [vmem:[%s10 + $0x18] sm:$0xff]
        %v1929 = vld [vmem:[%s10 + $0x20] sm:$0xff]
        %v1930 = vld [vmem:[%s10 + $0x28] sm:$0xff]
        %v1931 = vld [vmem:[%s10 + $0x30] sm:$0xff]
        %v1932 = vld [vmem:[%s10 + $0x38] sm:$0xff]
        %v1933 = vld [vmem:[%s10 + $0x40] sm:$0xff]
        %v1934 = vld [vmem:[%s10 + $0x48] sm:$0xff]
        %v1935 = vld [vmem:[%s10 + $0x50] sm:$0xff]
        %v1936 = vld [vmem:[%s10 + $0x58] sm:$0xff]
        %v1937 = vld [vmem:[%s10 + $0x60] sm:$0xff]
        %v1938 = vld [vmem:[%s10 + $0x68] sm:$0xff]
        %v1939 = vld [vmem:[%s10 + $0x70] sm:$0xff]
        %v1940 = vld [vmem:[%s10 + $0x78] sm:$0xff]
        %1942 = vset.pattern.permute.xlu0 0
        %1943 = vperm.xlu0 %1942, %v1925
        %v1944 = vpop.permute.xlu0 %1943
        %1947 = vset.pattern.permute.xlu0 0
        %1948 = vperm.xlu0 %1947, %v1926
        %v1949 = vpop.permute.xlu0 %1948
        %1952 = vset.pattern.permute.xlu0 0
        %1953 = vperm.xlu0 %1952, %v1927
        %v1954 = vpop.permute.xlu0 %1953
        %1957 = vset.pattern.permute.xlu0 0
        %1958 = vperm.xlu0 %1957, %v1928
        %v1959 = vpop.permute.xlu0 %1958
        %1962 = vset.pattern.permute.xlu0 0
        %1963 = vperm.xlu0 %1962, %v1929
        %v1964 = vpop.permute.xlu0 %1963
        %1967 = vset.pattern.permute.xlu0 0
        %1968 = vperm.xlu0 %1967, %v1930
        %v1969 = vpop.permute.xlu0 %1968
        %1972 = vset.pattern.permute.xlu0 0
        %1973 = vperm.xlu0 %1972, %v1931
        %v1974 = vpop.permute.xlu0 %1973
        %1977 = vset.pattern.permute.xlu0 0
        %1978 = vperm.xlu0 %1977, %v1932
        %v1979 = vpop.permute.xlu0 %1978
        %1982 = vset.pattern.permute.xlu0 0
        %1983 = vperm.xlu0 %1982, %v1933
        %v1984 = vpop.permute.xlu0 %1983
        %1987 = vset.pattern.permute.xlu0 0
        %1988 = vperm.xlu0 %1987, %v1934
        %v1989 = vpop.permute.xlu0 %1988
        %1992 = vset.pattern.permute.xlu0 0
        %1993 = vperm.xlu0 %1992, %v1935
        %v1994 = vpop.permute.xlu0 %1993
        %1997 = vset.pattern.permute.xlu0 0
        %1998 = vperm.xlu0 %1997, %v1936
        %v1999 = vpop.permute.xlu0 %1998
        %2002 = vset.pattern.permute.xlu0 0
        %2003 = vperm.xlu0 %2002, %v1937
        %v2004 = vpop.permute.xlu0 %2003
        %2007 = vset.pattern.permute.xlu0 0
        %2008 = vperm.xlu0 %2007, %v1938
        %v2009 = vpop.permute.xlu0 %2008
        %2012 = vset.pattern.permute.xlu0 0
        %2013 = vperm.xlu0 %2012, %v1939
        %v2014 = vpop.permute.xlu0 %2013
        %2017 = vset.pattern.permute.xlu0 0
        %2018 = vperm.xlu0 %2017, %v1940
        %v2019 = vpop.permute.xlu0 %2018
        %v2021 = vadd.f32 %v1909, %v1944
        %v2022 = vadd.f32 %v1910, %v1949
        %v2023 = vadd.f32 %v1911, %v1954
        %v2024 = vadd.f32 %v1912, %v1959
        %v2025 = vadd.f32 %v1913, %v1964
        %v2026 = vadd.f32 %v1914, %v1969
        %v2027 = vadd.f32 %v1915, %v1974
        %v2028 = vadd.f32 %v1916, %v1979
        %v2029 = vadd.f32 %v1917, %v1984
        %v2030 = vadd.f32 %v1918, %v1989
        %v2031 = vadd.f32 %v1919, %v1994
        %v2032 = vadd.f32 %v1920, %v1999
        %v2033 = vadd.f32 %v1921, %v2004
        %v2034 = vadd.f32 %v1922, %v2009
        %v2035 = vadd.f32 %v1923, %v2014
        %v2036 = vadd.f32 %v1924, %v2019
        %v2037 = vld [vmem:[#allocation9] sm:$0xf]
        %v2038 = vld [vmem:[#allocation9 + $0x4] sm:$0xf]
        %v2039 = vld [vmem:[#allocation9 + $0x8] sm:$0xf]
        %v2040 = vld [vmem:[#allocation9 + $0xc] sm:$0xf]
        %v2041 = vpack.c.bf16 %v2022, %v2021
        %v2042 = vpack.c.bf16 %v2024, %v2023
        %v2043 = vpack.c.bf16 %v2026, %v2025
        %v2044 = vpack.c.bf16 %v2028, %v2027
        %v2045 = vpack.c.bf16 %v2030, %v2029
        %v2046 = vpack.c.bf16 %v2032, %v2031
        %v2047 = vpack.c.bf16 %v2034, %v2033
        %v2048 = vpack.c.bf16 %v2036, %v2035
        %v2049 = vld [vmem:[%s12] sm:$0xff]
        %v2050 = vld [vmem:[%s12 + $0x8] sm:$0xff]
        %v2051 = vld [vmem:[%s12 + $0x10] sm:$0xff]
        %v2052 = vld [vmem:[%s12 + $0x18] sm:$0xff]
        %2054 = vset.pattern.permute.xlu0 0
        %2055 = vperm.xlu0 %2054, %v2049
        %v2056 = vpop.permute.xlu0 %2055
        %2059 = vset.pattern.permute.xlu0 0
        %2060 = vperm.xlu0 %2059, %v2050
        %v2061 = vpop.permute.xlu0 %2060
        %2064 = vset.pattern.permute.xlu0 0
        %2065 = vperm.xlu0 %2064, %v2051
        %v2066 = vpop.permute.xlu0 %2065
        %2069 = vset.pattern.permute.xlu0 0
        %2070 = vperm.xlu0 %2069, %v2052
        %v2071 = vpop.permute.xlu0 %2070
        %v2077 = vunpack.c.l.b16 %v2037
        %v2078 = vunpack.c.l.b16 %v2038
        %v2079 = vunpack.c.l.b16 %v2039
        %v2080 = vunpack.c.l.b16 %v2040
        %v2081 = vpack.c.b16 %v2078, %v2077
        %v2082 = vpack.c.b16 %v2080, %v2079
        %2085 = vmatprep.subr.bf16.mxu0 0
        %2086 = vmatpush1.bf16.msra.mxu0 %v2041
        %2087 = vmatprep.subr.bf16.mxu0 0
        %2088 = vmatpush1.bf16.msra.mxu0 %v2042
        %2089 = vmatprep.subr.bf16.mxu0 0
        %2090 = vmatpush1.bf16.msra.mxu0 %v2043
        %2091 = vmatprep.subr.bf16.mxu0 0
        %2092 = vmatpush1.bf16.msra.mxu0 %v2044
        %2093 = vmatprep.subr.bf16.mxu0 0
        %2094 = vmatpush1.bf16.msra.mxu0 %v2045
        %2095 = vmatprep.subr.bf16.mxu0 0
        %2096 = vmatpush1.bf16.msra.mxu0 %v2046
        %2097 = vmatprep.subr.bf16.mxu0 0
        %2098 = vmatpush1.bf16.msra.mxu0 %v2047
        %2099 = vmatprep.subr.bf16.mxu0 0
        %2100 = vmatpush1.bf16.msra.mxu0 %v2048
        %2101 = vmatprep.subr.bf16.mxu0 0
        %2102 = vmatpush1.bf16.msra.mxu0 0
        %2103 = vmatprep.subr.bf16.mxu0 0
        %2104 = vmatpush1.bf16.msra.mxu0 0
        %2105 = vmatprep.subr.bf16.mxu0 0
        %2106 = vmatpush1.bf16.msra.mxu0 0
        %2107 = vmatprep.subr.bf16.mxu0 0
        %2108 = vmatpush1.bf16.msra.mxu0 0
        %2109 = vmatprep.subr.bf16.mxu0 0
        %2110 = vmatpush1.bf16.msra.mxu0 0
        %2111 = vmatprep.subr.bf16.mxu0 0
        %2112 = vmatpush1.bf16.msra.mxu0 0
        %2113 = vmatprep.subr.bf16.mxu0 0
        %2114 = vmatpush1.bf16.msra.mxu0 0
        %2115 = vmatprep.subr.bf16.mxu0 0
        %2116 = vmatpush1.bf16.msra.mxu0 0
        %2117 = vmatprep.mubr.bf16.mxu0 0
        %2118 = vmatmul.mubr.bf16.gmra.mrb[0].mxu0 %v2081
        %v2119 = vpop.f32.mrb[0].mxu0
        %v2120 = vadd.f32 %v2056, %v2119
        %v2121 = vpop.f32.mrb[0].mxu0
        %v2122 = vpop.f32.mrb[0].mxu0
        %v2123 = vadd.f32 %v2061, %v2122
        %v2124 = vpop.f32.mrb[0].mxu0
        %2125 = vmatprep.mubr.bf16.mxu0 0
        %2126 = vmatmul.mubr.bf16.gmra.mrb[0].mxu0 %v2082
        %v2127 = vpop.f32.mrb[0].mxu0
        %v2128 = vadd.f32 %v2066, %v2127
        %v2129 = vpop.f32.mrb[0].mxu0
        %v2130 = vpop.f32.mrb[0].mxu0
        %v2131 = vadd.f32 %v2071, %v2130
        %v2132 = vpop.f32.mrb[0].mxu0
        %2133 = vdwg.mxu0
        %v2134 = vmul.f32 %v2120, 0.5
        %v2135 = vmul.f32 %v2123, 0.5
        %v2136 = vmul.f32 %v2128, 0.5
        %v2137 = vmul.f32 %v2131, 0.5
        %v2138 = vrcp.pop 1.4142135
        %v2139 = vmul.f32 %v2120, %v2138
        %v2140 = vmul.f32 %v2123, %v2138
        %v2141 = vmul.f32 %v2128, %v2138
        %v2142 = vmul.f32 %v2131, %v2138
        %v2143 = verf.f32.pop %v2139
        %v2144 = verf.f32.pop %v2140
        %v2145 = verf.f32.pop %v2141
        %v2146 = verf.f32.pop %v2142
        %v2147 = vadd.f32 %v2143, 1.0
        %v2148 = vadd.f32 %v2144, 1.0
        %v2149 = vadd.f32 %v2145, 1.0
        %v2150 = vadd.f32 %v2146, 1.0
        %v2151 = vmul.f32 %v2134, %v2147
        %v2152 = vmul.f32 %v2135, %v2148
        %v2153 = vmul.f32 %v2136, %v2149
        %v2154 = vmul.f32 %v2137, %v2150
        %v2155 = vld [vmem:[#allocation10] sm:$0xf]
        %v2156 = vld [vmem:[#allocation10 + $0x4] sm:$0xf]
        %v2157 = vld [vmem:[#allocation10 + $0x8] sm:$0xf]
        %v2158 = vld [vmem:[#allocation10 + $0xc] sm:$0xf]
        %v2159 = vpack.c.bf16 %v2152, %v2151
        %v2160 = vpack.c.bf16 %v2154, %v2153
        %v2161 = vld [vmem:[%s14] sm:$0xff]
        %v2162 = vld [vmem:[%s14 + $0x8] sm:$0xff]
        %v2163 = vld [vmem:[%s14 + $0x10] sm:$0xff]
        %v2164 = vld [vmem:[%s14 + $0x18] sm:$0xff]
        %2166 = vset.pattern.permute.xlu0 0
        %2167 = vperm.xlu0 %2166, %v2161
        %v2168 = vpop.permute.xlu0 %2167
        %2171 = vset.pattern.permute.xlu0 0
        %2172 = vperm.xlu0 %2171, %v2162
        %v2173 = vpop.permute.xlu0 %2172
        %2176 = vset.pattern.permute.xlu0 0
        %2177 = vperm.xlu0 %2176, %v2163
        %v2178 = vpop.permute.xlu0 %2177
        %2181 = vset.pattern.permute.xlu0 0
        %2182 = vperm.xlu0 %2181, %v2164
        %v2183 = vpop.permute.xlu0 %2182
        %v2189 = vunpack.c.l.b16 %v2155
        %v2190 = vunpack.c.l.b16 %v2156
        %v2191 = vunpack.c.l.b16 %v2157
        %v2192 = vunpack.c.l.b16 %v2158
        %v2193 = vpack.c.b16 %v2190, %v2189
        %v2194 = vpack.c.b16 %v2192, %v2191
        %vm2195 = vcmask 261120
        %v2197 = vsel %vm2195, %v2193, 0
        %v2200 = vsel %vm2195, %v2194, 0
        %2202 = vmatprep.subr.bf16.mxu0 0
        %2203 = vmatpush1.bf16.msra.mxu0 %v2159
        %2204 = vmatprep.subr.bf16.mxu0 0
        %2205 = vmatpush1.bf16.msra.mxu0 %v2160
        %2206 = vmatprep.subr.bf16.mxu0 0
        %2207 = vmatpush1.bf16.msra.mxu0 0
        %2208 = vmatprep.subr.bf16.mxu0 0
        %2209 = vmatpush1.bf16.msra.mxu0 0
        %2210 = vmatprep.subr.bf16.mxu0 0
        %2211 = vmatpush1.bf16.msra.mxu0 0
        %2212 = vmatprep.subr.bf16.mxu0 0
        %2213 = vmatpush1.bf16.msra.mxu0 0
        %2214 = vmatprep.subr.bf16.mxu0 0
        %2215 = vmatpush1.bf16.msra.mxu0 0
        %2216 = vmatprep.subr.bf16.mxu0 0
        %2217 = vmatpush1.bf16.msra.mxu0 0
        %2218 = vmatprep.subr.bf16.mxu0 0
        %2219 = vmatpush1.bf16.msra.mxu0 0
        %2220 = vmatprep.subr.bf16.mxu0 0
        %2221 = vmatpush1.bf16.msra.mxu0 0
        %2222 = vmatprep.subr.bf16.mxu0 0
        %2223 = vmatpush1.bf16.msra.mxu0 0
        %2224 = vmatprep.subr.bf16.mxu0 0
        %2225 = vmatpush1.bf16.msra.mxu0 0
        %2226 = vmatprep.subr.bf16.mxu0 0
        %2227 = vmatpush1.bf16.msra.mxu0 0
        %2228 = vmatprep.subr.bf16.mxu0 0
        %2229 = vmatpush1.bf16.msra.mxu0 0
        %2230 = vmatprep.subr.bf16.mxu0 0
        %2231 = vmatpush1.bf16.msra.mxu0 0
        %2232 = vmatprep.subr.bf16.mxu0 0
        %2233 = vmatpush1.bf16.msra.mxu0 0
        %2234 = vmatprep.mubr.bf16.mxu0 0
        %2235 = vmatmul.mubr.bf16.gmra.mrb[0].mxu0 %v2197
        %v2236 = vpop.f32.mrb[0].mxu0
        %v2237 = vadd.f32 %v2168, %v2236
        %v2238 = vpop.f32.mrb[0].mxu0
        %v2239 = vpop.f32.mrb[0].mxu0
        %v2240 = vadd.f32 %v2173, %v2239
        %v2241 = vpop.f32.mrb[0].mxu0
        %2242 = vmatprep.mubr.bf16.mxu0 0
        %2243 = vmatmul.mubr.bf16.gmra.mrb[0].mxu0 %v2200
        %v2244 = vpop.f32.mrb[0].mxu0
        %v2245 = vadd.f32 %v2178, %v2244
        %v2246 = vpop.f32.mrb[0].mxu0
        %v2247 = vpop.f32.mrb[0].mxu0
        %v2248 = vadd.f32 %v2183, %v2247
        %v2249 = vpop.f32.mrb[0].mxu0
        %2250 = vdwg.mxu0
        %2251 = vst [vmem:[%s599] sm:$0xff] %v2237
        %2252 = vst [vmem:[%s599 + $0x8] sm:$0xff] %v2240
        %2253 = vst [vmem:[%s599 + $0x10] sm:$0xff] %v2245
        %2254 = vst [vmem:[%s599 + $0x18] sm:$0xff] %v2248
        %s2255 = sand.u32 %s367, 1
        %s2256 = sand.u32 %s367, 1
        %s2257 = smul.addr %s2256, 32
        %s2258 = scalar_lea.vmem [#allocation12], %s2257
        // Predicated region
        $region105: #{physics_engine_forward.2} parent=79 // pred_check
          %p2259 = pneg %p377
        $region106: #{physics_engine_forward.2} parent=79 // pred_check_branch
          %2261 = sbr.rel (%p2259) target = $region108
        $region107: #{physics_engine_forward.2} parent=79 // pred_region
          %s2262 = smul.addr %s34, 8
          %s2263 = scalar_lea.vmem %s15, %s2262
          // Predicated region
          $region109: #{physics_engine_forward.2} parent=107 // pred_check
            _
          $region110: #{physics_engine_forward.2} parent=107 // pred_check_branch
            %2265 = sbr.rel (0) target = $region112
          $region111: #{physics_engine_forward.2} parent=107 // pred_region
            // Predicated region
            $region113: #{physics_engine_forward.2} parent=111 // pred_check
              _
            $region114: #{physics_engine_forward.2} parent=111 // pred_check_branch
              %2267 = sbr.rel (0) target = $region116
            $region115: #{physics_engine_forward.2} parent=111 // pred_region
              // Predicated region
              $region128: #{physics_engine_forward.2} parent=115 // pred_check
                _
              $region129: #{physics_engine_forward.2} parent=115 // pred_check_branch
                %2288 = sbr.rel (0) target = $region131
              $region130: #{physics_engine_forward.2} parent=115 // pred_region
                loop: start=0, step=1, limit=1
                $region132: #{physics_engine_forward.2} parent=130 // loop_pre_header
                  _
                $region133: #{physics_engine_forward.2} parent=130 // loop_header
                  %s2290 = sphi 0, %s2294
                  %p2291 = scmp.ge.s32.totalorder %s2290, 1
                  %s2295 = sphi %s2258, %s2258
                  %s2296 = sphi %s2263, %s2263
                $region134: #{physics_engine_forward.2} parent=130 // loop_header_branch
                  %2293 = sbr.rel (%p2291) target = $region138
                $region135: #{physics_engine_forward.2} parent=130 // loop_body
                  %v2297 = vld [vmem:[%s2295] sm:$0xff]
                  %2298 = vst [vmem:[%s2296] sm:$0xff] %v2297
                  %v2299 = vld [vmem:[%s2295 + $0x8] sm:$0xff]
                  %2300 = vst [vmem:[%s2296 + $0x10] sm:$0xff] %v2299
                  %v2301 = vld [vmem:[%s2295 + $0x10] sm:$0xff]
                  %2302 = vst [vmem:[%s2296 + $0x20] sm:$0xff] %v2301
                  %v2303 = vld [vmem:[%s2295 + $0x18] sm:$0xff]
                  %2304 = vst [vmem:[%s2296 + $0x30] sm:$0xff] %v2303
                $region136: #{physics_engine_forward.2} parent=130 // loop_footer
                  %s2294 = sadd.s32 1, %s2290
                $region137: #{physics_engine_forward.2} parent=130 // loop_footer_branch
                  %2289 = sbr.rel target = $region133
                $region138: #{physics_engine_forward.2} parent=130 // loop_exit
                  _
              $region131: #{physics_engine_forward.2} parent=115 // pred_fallthru
                _
              // Predicated region
              $region139: #{physics_engine_forward.2} parent=115 // pred_check
                _
              $region140: #{physics_engine_forward.2} parent=115 // pred_check_branch
                %2306 = sbr.rel target = $region142
              $region141: #{physics_engine_forward.2} parent=115 // pred_region
                _
              $region142: #{physics_engine_forward.2} parent=115 // pred_fallthru
                _
            $region116: #{physics_engine_forward.2} parent=111 // pred_fallthru
              _
            // Predicated region
            $region117: #{physics_engine_forward.2} parent=111 // pred_check
              _
            $region118: #{physics_engine_forward.2} parent=111 // pred_check_branch
              %2269 = sbr.rel target = $region120
            $region119: #{physics_engine_forward.2} parent=111 // pred_region
              loop: start=0, step=1, limit=1
              $region121: #{physics_engine_forward.2} parent=119 // loop_pre_header
                _
              $region122: #{physics_engine_forward.2} parent=119 // loop_header
                %s2272 = sphi 0, %s2276
                %p2273 = scmp.ge.s32.totalorder %s2272, 1
                %s2277 = sphi %s2258, %s2258
                %s2278 = sphi %s2263, %s2263
              $region123: #{physics_engine_forward.2} parent=119 // loop_header_branch
                %2275 = sbr.rel (%p2273) target = $region127
              $region124: #{physics_engine_forward.2} parent=119 // loop_body
                %v2279 = vld [vmem:[%s2277] sm:$0xff]
                %2280 = vst [vmem:[%s2278] sm:$0xff] %v2279
                %v2281 = vld [vmem:[%s2277 + $0x8] sm:$0xff]
                %2282 = vst [vmem:[%s2278 + $0x10] sm:$0xff] %v2281
                %v2283 = vld [vmem:[%s2277 + $0x10] sm:$0xff]
                %2284 = vst [vmem:[%s2278 + $0x20] sm:$0xff] %v2283
                %v2285 = vld [vmem:[%s2277 + $0x18] sm:$0xff]
                %2286 = vst [vmem:[%s2278 + $0x30] sm:$0xff] %v2285
              $region125: #{physics_engine_forward.2} parent=119 // loop_footer
                %s2276 = sadd.s32 1, %s2272
              $region126: #{physics_engine_forward.2} parent=119 // loop_footer_branch
                %2271 = sbr.rel target = $region122
              $region127: #{physics_engine_forward.2} parent=119 // loop_exit
                _
            $region120: #{physics_engine_forward.2} parent=111 // pred_fallthru
              _
          $region112: #{physics_engine_forward.2} parent=107 // pred_fallthru
            _
          %2307 = vnop
        $region108: #{physics_engine_forward.2} parent=79 // pred_fallthru
          _
      $region80: #{physics_engine_forward.2} parent=5 // pred_fallthru
        _
      %p2308 = scmp.le.s32.totalorder 2, %s29
      // Predicated region
      $region143: #{physics_engine_forward.2} parent=5 // pred_check
        %p2309 = pneg %p2308
      $region144: #{physics_engine_forward.2} parent=5 // pred_check_branch
        %2311 = sbr.rel (%p2309) target = $region146
      $region145: #{physics_engine_forward.2} parent=5 // pred_region
        %s2312 = ssub.s32 %s29, 2
        // Predicated region
        $region147: #{physics_engine_forward.2} parent=145 // pred_check
          %p2313 = pneg %p383
        $region148: #{physics_engine_forward.2} parent=145 // pred_check_branch
          %2315 = sbr.rel (%p2313) target = $region150
        $region149: #{physics_engine_forward.2} parent=145 // pred_region
          %s2316 = sand.u32 %s368, 1
          %s2317 = sand.u32 %s368, 1
          %s2318 = smul.addr %s2317, 32
          %s2319 = scalar_lea.vmem [#allocation12], %s2318
        $region150: #{physics_engine_forward.2} parent=145 // pred_fallthru
          _
      $region146: #{physics_engine_forward.2} parent=5 // pred_fallthru
        _
    $region6: #{physics_engine_forward.2} parent=1 // loop_footer
      %s33 = sadd.s32 1, %s29
    $region7: #{physics_engine_forward.2} parent=1 // loop_footer_branch
      %28 = sbr.rel target = $region3
    $region8: #{physics_engine_forward.2} parent=1 // loop_exit
      _
    %2320 = vsyncpa [#allocation3], 1
    %s2321 = scalar_lea.sflag [#allocation3], 1
    %2322 = vsyncpa %s2321, 1
    %2323 = vsyncpa [#allocation5], 1
    %s2324 = scalar_lea.sflag [#allocation5], 1
    %2325 = vsyncpa %s2324, 1
    %2326 = vsyncpa [#allocation8], 1
    %2327 = vsyncpa [#allocation11], 1

// kernel: physics_engine_forward.3
$region0: #{physics_engine_forward.3}
  #allocation0 [shape = 'u32[]', space=smem, size = 0x4, offset = 0x4, fixed_abs, tag = 'smem constant byte address 0x4 - core index']
  #allocation1 [shape = 'u32[144,128]{1,0:T(1,128)}', space=vmem, size = 0x12000, scoped, tag = 'internal scratch']
  %s0 = inlined_call_operand.vmem [shape: f32[32,256], index: 0, kind: input, shape index: {}]
  %s1 = inlined_call_operand.vmem [shape: f32[256,192], index: 1, kind: input, shape index: {}]
  %s2 = inlined_call_operand.hbm [shape: f32[192,256], index: 2, kind: input, shape index: {}]
  %s3 = inlined_call_operand.hbm [shape: f32[2,32,32,192], index: 3, kind: input, shape index: {}]
  %s4 = inlined_call_operand.hbm [shape: f32[2,32,32], index: 4, kind: input, shape index: {}]
  %s5 = inlined_call_operand.vmem [shape: f32[2,32,1], index: 5, kind: input, shape index: {}]
  %s6 = inlined_call_operand.hbm [shape: bf16[2,16,32], index: 6, kind: input, shape index: {}]
  %s7 = inlined_call_operand.vmem [shape: f32[2,16,1], index: 7, kind: input, shape index: {}]
  %s8 = inlined_call_operand.vmem [shape: bf16[2,32,16], index: 8, kind: input, shape index: {}]
  %s9 = inlined_call_operand.vmem [shape: f32[2,32,1], index: 9, kind: input, shape index: {}]
  %s10 = inlined_call_operand.hbm [shape: bf16[32,32], index: 10, kind: input, shape index: {}]
  %s11 = inlined_call_operand.vmem [shape: f32[32,1], index: 11, kind: input, shape index: {}]
  %s12 = inlined_call_operand.hbm [shape: f32[3,32], index: 12, kind: input, shape index: {}]
  %s13 = inlined_call_operand.vmem [shape: f32[3,1], index: 13, kind: input, shape index: {}]
  %s14 = inlined_call_operand.hbm [shape: f32[3,256], index: 14, kind: output, shape index: {}]
  %s15 = sld [smem:[#allocation0]]
  $region90: #{physics_engine_forward.3} parent=0
    _
  %s17 = ssub.s32 1, %s15
  %s18 = scalar_select 0, %s17, %s15
  $region1: #{physics_engine_forward.3} parent=0
    #allocation2 [shape = 'u8[196608]{0}', space=vmem, size = 0x30000, scoped, tag = 'input window, operand 2, single buffered']
    #allocation3 [shape = 's32[1]{0}', space=sflag, size = 0x4, scoped, tag = 'scoped memory for physics_engine_forward.3']
    #allocation4 [shape = 's32[1]{0}', space=sflag, size = 0x4, scoped, tag = 'scoped memory for physics_engine_forward.3']
    #allocation5 [shape = 'u8[2097152]{0}', space=vmem, size = 0x200000, scoped, tag = 'input window, operand 3, single buffered']
    #allocation6 [shape = 's32[1]{0}', space=sflag, size = 0x4, scoped, tag = 'scoped memory for physics_engine_forward.3']
    #allocation7 [shape = 'u8[32768]{0}', space=vmem, size = 0x8000, scoped, tag = 'input window, operand 4, single buffered']
    #allocation8 [shape = 'u8[8192]{0}', space=vmem, size = 0x2000, scoped, tag = 'input window, operand 6, single buffered']
    #allocation9 [shape = 's32[1]{0}', space=sflag, size = 0x4, scoped, tag = 'scoped memory for physics_engine_forward.3']
    #allocation10 [shape = 'u8[8192]{0}', space=vmem, size = 0x2000, scoped, tag = 'input window, operand 10, single buffered']
    #allocation11 [shape = 'u8[2048]{0}', space=vmem, size = 0x800, scoped, tag = 'input window, operand 12, single buffered']
    #allocation12 [shape = 's32[1]{0}', space=sflag, size = 0x4, scoped, tag = 'scoped memory for physics_engine_forward.3']
    #allocation13 [shape = 'u8[4096]{0}', space=vmem, size = 0x1000, scoped, tag = 'output window, operand 0, single buffered']
    %19 = vsyncpa [#allocation3], 0
    %20 = vsyncpa [#allocation6], 0
    %21 = vsyncpa [#allocation9], 0
    %22 = vsyncpa [#allocation12], 0
    %23 = vsyncpa [#allocation4], 0
    // Predicated region
    $region2: #{physics_engine_forward.3} parent=1 // pred_check
      _
    $region3: #{physics_engine_forward.3} parent=1 // pred_check_branch
      %25 = sbr.rel (0) target = $region5
    $region4: #{physics_engine_forward.3} parent=1 // pred_region
      _
    $region5: #{physics_engine_forward.3} parent=1 // pred_fallthru
      _
    // Predicated region
    $region6: #{physics_engine_forward.3} parent=1 // pred_check
      _
    $region7: #{physics_engine_forward.3} parent=1 // pred_check_branch
      %27 = sbr.rel (0) target = $region9
    $region8: #{physics_engine_forward.3} parent=1 // pred_region
      _
    $region9: #{physics_engine_forward.3} parent=1 // pred_fallthru
      _
    // Predicated region
    $region10: #{physics_engine_forward.3} parent=1 // pred_check
      _
    $region11: #{physics_engine_forward.3} parent=1 // pred_check_branch
      %29 = sbr.rel (0) target = $region13
    $region12: #{physics_engine_forward.3} parent=1 // pred_region
      %s31 = ssub.s32 6144, 6144
      %32 = vsyncadd [#allocation3], %s31
      %s33 = sshll.u32 [#allocation2], 4
      %s34 = int_to_ptr.vmem [resolvable:$true] %s33
      %39 = dma.hbm_to_vmem [thread:$0]  %s2, 6144, %s34, [#allocation3], 256, 256, 16
    $region13: #{physics_engine_forward.3} parent=1 // pred_fallthru
      _
    // Predicated region
    $region14: #{physics_engine_forward.3} parent=1 // pred_check
      _
    $region15: #{physics_engine_forward.3} parent=1 // pred_check_branch
      %41 = sbr.rel (0) target = $region17
    $region16: #{physics_engine_forward.3} parent=1 // pred_region
      %s43 = ssub.s32 65536, 65536
      %44 = vsyncadd [#allocation6], %s43
      %s45 = sshll.u32 [#allocation5], 4
      %s46 = int_to_ptr.vmem [resolvable:$true] %s45
      %51 = dma.hbm_to_vmem [thread:$0]  %s3, 65536, %s46, [#allocation6], 256, 256, 16
    $region17: #{physics_engine_forward.3} parent=1 // pred_fallthru
      _
    // Predicated region
    $region18: #{physics_engine_forward.3} parent=1 // pred_check
      _
    $region19: #{physics_engine_forward.3} parent=1 // pred_check_branch
      %53 = sbr.rel (0) target = $region21
    $region20: #{physics_engine_forward.3} parent=1 // pred_region
      %s55 = ssub.s32 1024, 1024
      %56 = vsyncadd [#allocation6], %s55
      %s57 = sshll.u32 [#allocation7], 4
      %s58 = int_to_ptr.vmem [resolvable:$true] %s57
      %63 = dma.hbm_to_vmem [thread:$0]  %s4, 1024, %s58, [#allocation6], 128, 128, 8
    $region21: #{physics_engine_forward.3} parent=1 // pred_fallthru
      _
    // Predicated region
    $region22: #{physics_engine_forward.3} parent=1 // pred_check
      _
    $region23: #{physics_engine_forward.3} parent=1 // pred_check_branch
      %65 = sbr.rel (0) target = $region25
    $region24: #{physics_engine_forward.3} parent=1 // pred_region
      _
    $region25: #{physics_engine_forward.3} parent=1 // pred_fallthru
      _
    // Predicated region
    $region26: #{physics_engine_forward.3} parent=1 // pred_check
      _
    $region27: #{physics_engine_forward.3} parent=1 // pred_check_branch
      %67 = sbr.rel (0) target = $region29
    $region28: #{physics_engine_forward.3} parent=1 // pred_region
      %s69 = ssub.s32 256, 256
      %70 = vsyncadd [#allocation9], %s69
      %s71 = sshll.u32 [#allocation8], 4
      %s72 = int_to_ptr.vmem [resolvable:$true] %s71
      %77 = dma.hbm_to_vmem [thread:$0]  %s6, 256, %s72, [#allocation9], 64, 64, 4
    $region29: #{physics_engine_forward.3} parent=1 // pred_fallthru
      _
    // Predicated region
    $region30: #{physics_engine_forward.3} parent=1 // pred_check
      _
    $region31: #{physics_engine_forward.3} parent=1 // pred_check_branch
      %79 = sbr.rel (0) target = $region33
    $region32: #{physics_engine_forward.3} parent=1 // pred_region
      _
    $region33: #{physics_engine_forward.3} parent=1 // pred_fallthru
      _
    // Predicated region
    $region34: #{physics_engine_forward.3} parent=1 // pred_check
      _
    $region35: #{physics_engine_forward.3} parent=1 // pred_check_branch
      %81 = sbr.rel (0) target = $region37
    $region36: #{physics_engine_forward.3} parent=1 // pred_region
      _
    $region37: #{physics_engine_forward.3} parent=1 // pred_fallthru
      _
    // Predicated region
    $region38: #{physics_engine_forward.3} parent=1 // pred_check
      _
    $region39: #{physics_engine_forward.3} parent=1 // pred_check_branch
      %83 = sbr.rel (0) target = $region41
    $region40: #{physics_engine_forward.3} parent=1 // pred_region
      _
    $region41: #{physics_engine_forward.3} parent=1 // pred_fallthru
      _
    // Predicated region
    $region42: #{physics_engine_forward.3} parent=1 // pred_check
      _
    $region43: #{physics_engine_forward.3} parent=1 // pred_check_branch
      %85 = sbr.rel (0) target = $region45
    $region44: #{physics_engine_forward.3} parent=1 // pred_region
      %s87 = ssub.s32 256, 256
      %88 = vsyncadd [#allocation9], %s87
      %s89 = sshll.u32 [#allocation10], 4
      %s90 = int_to_ptr.vmem [resolvable:$true] %s89
      %95 = dma.hbm_to_vmem [thread:$0]  %s10, 256, %s90, [#allocation9], 64, 64, 4
    $region45: #{physics_engine_forward.3} parent=1 // pred_fallthru
      _
    // Predicated region
    $region46: #{physics_engine_forward.3} parent=1 // pred_check
      _
    $region47: #{physics_engine_forward.3} parent=1 // pred_check_branch
      %97 = sbr.rel (0) target = $region49
    $region48: #{physics_engine_forward.3} parent=1 // pred_region
      _
    $region49: #{physics_engine_forward.3} parent=1 // pred_fallthru
      _
    // Predicated region
    $region50: #{physics_engine_forward.3} parent=1 // pred_check
      _
    $region51: #{physics_engine_forward.3} parent=1 // pred_check_branch
      %99 = sbr.rel (0) target = $region53
    $region52: #{physics_engine_forward.3} parent=1 // pred_region
      %s101 = ssub.s32 64, 64
      %102 = vsyncadd [#allocation12], %s101
      %s104 = sshll.u32 [#allocation11], 4
      %s105 = int_to_ptr.vmem [resolvable:$true] %s104
      %107 = dma.hbm_to_vmem [thread:$0]  %s12, 64, %s105, [#allocation12]
    $region53: #{physics_engine_forward.3} parent=1 // pred_fallthru
      _
    // Predicated region
    $region54: #{physics_engine_forward.3} parent=1 // pred_check
      _
    $region55: #{physics_engine_forward.3} parent=1 // pred_check_branch
      %109 = sbr.rel (0) target = $region57
    $region56: #{physics_engine_forward.3} parent=1 // pred_region
      _
    $region57: #{physics_engine_forward.3} parent=1 // pred_fallthru
      _
    // Predicated region
    $region58: #{physics_engine_forward.3} parent=1 // pred_check
      _
    $region59: #{physics_engine_forward.3} parent=1 // pred_check_branch
      %111 = sbr.rel (0) target = $region61
    $region60: #{physics_engine_forward.3} parent=1 // pred_region
      %112 = dma.done [#allocation3], 6144
    $region61: #{physics_engine_forward.3} parent=1 // pred_fallthru
      _
    // Predicated region
    $region62: #{physics_engine_forward.3} parent=1 // pred_check
      _
    $region63: #{physics_engine_forward.3} parent=1 // pred_check_branch
      %114 = sbr.rel (0) target = $region65
    $region64: #{physics_engine_forward.3} parent=1 // pred_region
      %115 = dma.done [#allocation6], 65536
    $region65: #{physics_engine_forward.3} parent=1 // pred_fallthru
      _
    // Predicated region
    $region66: #{physics_engine_forward.3} parent=1 // pred_check
      _
    $region67: #{physics_engine_forward.3} parent=1 // pred_check_branch
      %117 = sbr.rel (0) target = $region69
    $region68: #{physics_engine_forward.3} parent=1 // pred_region
      %118 = dma.done [#allocation6], 1024
    $region69: #{physics_engine_forward.3} parent=1 // pred_fallthru
      _
    // Predicated region
    $region70: #{physics_engine_forward.3} parent=1 // pred_check
      _
    $region71: #{physics_engine_forward.3} parent=1 // pred_check_branch
      %120 = sbr.rel (0) target = $region73
    $region72: #{physics_engine_forward.3} parent=1 // pred_region
      %121 = dma.done [#allocation9], 256
    $region73: #{physics_engine_forward.3} parent=1 // pred_fallthru
      _
    // Predicated region
    $region74: #{physics_engine_forward.3} parent=1 // pred_check
      _
    $region75: #{physics_engine_forward.3} parent=1 // pred_check_branch
      %123 = sbr.rel (0) target = $region77
    $region76: #{physics_engine_forward.3} parent=1 // pred_region
      %124 = dma.done [#allocation9], 256
    $region77: #{physics_engine_forward.3} parent=1 // pred_fallthru
      _
    // Predicated region
    $region78: #{physics_engine_forward.3} parent=1 // pred_check
      _
    $region79: #{physics_engine_forward.3} parent=1 // pred_check_branch
      %126 = sbr.rel (0) target = $region81
    $region80: #{physics_engine_forward.3} parent=1 // pred_region
      %127 = dma.done [#allocation12], 64
    $region81: #{physics_engine_forward.3} parent=1 // pred_fallthru
      _
    %v129 = vld [vmem:[%s0] sm:$0xff]
    %v130 = vld [vmem:[%s0 + $0x8] sm:$0xff]
    %v131 = vld [vmem:[%s0 + $0x10] sm:$0xff]
    %v132 = vld [vmem:[%s0 + $0x18] sm:$0xff]
    %v133 = vld [vmem:[%s0 + $0x20] sm:$0xff]
    %v134 = vld [vmem:[%s0 + $0x28] sm:$0xff]
    %v135 = vld [vmem:[%s0 + $0x30] sm:$0xff]
    %v136 = vld [vmem:[%s0 + $0x38] sm:$0xff]
    %v137 = vld [vmem:[%s1] sm:$0xff]
    %v138 = vld [vmem:[%s1 + $0x8] sm:$0xff]
    %v139 = vld [vmem:[%s1 + $0x10] sm:$0xff]
    %v140 = vld [vmem:[%s1 + $0x18] sm:$0xff]
    %v141 = vld [vmem:[%s1 + $0x20] sm:$0xff]
    %v142 = vld [vmem:[%s1 + $0x28] sm:$0xff]
    %v143 = vld [vmem:[%s1 + $0x30] sm:$0xff]
    %v144 = vld [vmem:[%s1 + $0x38] sm:$0xff]
    %v145 = vld [vmem:[%s1 + $0x40] sm:$0xff]
    %v146 = vld [vmem:[%s1 + $0x48] sm:$0xff]
    %v147 = vld [vmem:[%s1 + $0x50] sm:$0xff]
    %v148 = vld [vmem:[%s1 + $0x58] sm:$0xff]
    %v149 = vld [vmem:[%s1 + $0x60] sm:$0xff]
    %v150 = vld [vmem:[%s1 + $0x68] sm:$0xff]
    %v151 = vld [vmem:[%s1 + $0x70] sm:$0xff]
    %v152 = vld [vmem:[%s1 + $0x78] sm:$0xff]
    %v153 = vld [vmem:[%s1 + $0x80] sm:$0xff]
    %v154 = vld [vmem:[%s1 + $0x88] sm:$0xff]
    %v155 = vld [vmem:[%s1 + $0x90] sm:$0xff]
    %v156 = vld [vmem:[%s1 + $0x98] sm:$0xff]
    %v157 = vld [vmem:[%s1 + $0xa0] sm:$0xff]
    %v158 = vld [vmem:[%s1 + $0xa8] sm:$0xff]
    %v159 = vld [vmem:[%s1 + $0xb0] sm:$0xff]
    %v160 = vld [vmem:[%s1 + $0xb8] sm:$0xff]
    %v161 = vld [vmem:[%s1 + $0xc0] sm:$0xff]
    %v162 = vld [vmem:[%s1 + $0xc8] sm:$0xff]
    %v163 = vld [vmem:[%s1 + $0xd0] sm:$0xff]
    %v164 = vld [vmem:[%s1 + $0xd8] sm:$0xff]
    %v165 = vld [vmem:[%s1 + $0xe0] sm:$0xff]
    %v166 = vld [vmem:[%s1 + $0xe8] sm:$0xff]
    %v167 = vld [vmem:[%s1 + $0xf0] sm:$0xff]
    %v168 = vld [vmem:[%s1 + $0xf8] sm:$0xff]
    %v169 = vld [vmem:[%s1 + $0x100] sm:$0xff]
    %v170 = vld [vmem:[%s1 + $0x108] sm:$0xff]
    %v171 = vld [vmem:[%s1 + $0x110] sm:$0xff]
    %v172 = vld [vmem:[%s1 + $0x118] sm:$0xff]
    %v173 = vld [vmem:[%s1 + $0x120] sm:$0xff]
    %v174 = vld [vmem:[%s1 + $0x128] sm:$0xff]
    %v175 = vld [vmem:[%s1 + $0x130] sm:$0xff]
    %v176 = vld [vmem:[%s1 + $0x138] sm:$0xff]
    %v177 = vld [vmem:[%s1 + $0x140] sm:$0xff]
    %v178 = vld [vmem:[%s1 + $0x148] sm:$0xff]
    %v179 = vld [vmem:[%s1 + $0x150] sm:$0xff]
    %v180 = vld [vmem:[%s1 + $0x158] sm:$0xff]
    %v181 = vld [vmem:[%s1 + $0x160] sm:$0xff]
    %v182 = vld [vmem:[%s1 + $0x168] sm:$0xff]
    %v183 = vld [vmem:[%s1 + $0x170] sm:$0xff]
    %v184 = vld [vmem:[%s1 + $0x178] sm:$0xff]
    %v185 = vld [vmem:[%s1 + $0x180] sm:$0xff]
    %v186 = vld [vmem:[%s1 + $0x188] sm:$0xff]
    %v187 = vld [vmem:[%s1 + $0x190] sm:$0xff]
    %v188 = vld [vmem:[%s1 + $0x198] sm:$0xff]
    %v189 = vld [vmem:[%s1 + $0x1a0] sm:$0xff]
    %v190 = vld [vmem:[%s1 + $0x1a8] sm:$0xff]
    %v191 = vld [vmem:[%s1 + $0x1b0] sm:$0xff]
    %v192 = vld [vmem:[%s1 + $0x1b8] sm:$0xff]
    %v193 = vld [vmem:[%s1 + $0x1c0] sm:$0xff]
    %v194 = vld [vmem:[%s1 + $0x1c8] sm:$0xff]
    %v195 = vld [vmem:[%s1 + $0x1d0] sm:$0xff]
    %v196 = vld [vmem:[%s1 + $0x1d8] sm:$0xff]
    %v197 = vld [vmem:[%s1 + $0x1e0] sm:$0xff]
    %v198 = vld [vmem:[%s1 + $0x1e8] sm:$0xff]
    %v199 = vld [vmem:[%s1 + $0x1f0] sm:$0xff]
    %v200 = vld [vmem:[%s1 + $0x1f8] sm:$0xff]
    %v201 = vld [vmem:[#allocation2] sm:$0xff]
    %v202 = vld [vmem:[#allocation2 + $0x8] sm:$0xff]
    %v203 = vld [vmem:[#allocation2 + $0x10] sm:$0xff]
    %v204 = vld [vmem:[#allocation2 + $0x18] sm:$0xff]
    %v205 = vld [vmem:[#allocation2 + $0x20] sm:$0xff]
    %v206 = vld [vmem:[#allocation2 + $0x28] sm:$0xff]
    %v207 = vld [vmem:[#allocation2 + $0x30] sm:$0xff]
    %v208 = vld [vmem:[#allocation2 + $0x38] sm:$0xff]
    %v209 = vld [vmem:[#allocation2 + $0x40] sm:$0xff]
    %v210 = vld [vmem:[#allocation2 + $0x48] sm:$0xff]
    %v211 = vld [vmem:[#allocation2 + $0x50] sm:$0xff]
    %v212 = vld [vmem:[#allocation2 + $0x58] sm:$0xff]
    %v213 = vld [vmem:[#allocation2 + $0x60] sm:$0xff]
    %v214 = vld [vmem:[#allocation2 + $0x68] sm:$0xff]
    %v215 = vld [vmem:[#allocation2 + $0x70] sm:$0xff]
    %v216 = vld [vmem:[#allocation2 + $0x78] sm:$0xff]
    %v217 = vld [vmem:[#allocation2 + $0x80] sm:$0xff]
    %v218 = vld [vmem:[#allocation2 + $0x88] sm:$0xff]
    %v219 = vld [vmem:[#allocation2 + $0x90] sm:$0xff]
    %v220 = vld [vmem:[#allocation2 + $0x98] sm:$0xff]
    %v221 = vld [vmem:[#allocation2 + $0xa0] sm:$0xff]
    %v222 = vld [vmem:[#allocation2 + $0xa8] sm:$0xff]
    %v223 = vld [vmem:[#allocation2 + $0xb0] sm:$0xff]
    %v224 = vld [vmem:[#allocation2 + $0xb8] sm:$0xff]
    %v225 = vld [vmem:[#allocation2 + $0xc0] sm:$0xff]
    %v226 = vld [vmem:[#allocation2 + $0xc8] sm:$0xff]
    %v227 = vld [vmem:[#allocation2 + $0xd0] sm:$0xff]
    %v228 = vld [vmem:[#allocation2 + $0xd8] sm:$0xff]
    %v229 = vld [vmem:[#allocation2 + $0xe0] sm:$0xff]
    %v230 = vld [vmem:[#allocation2 + $0xe8] sm:$0xff]
    %v231 = vld [vmem:[#allocation2 + $0xf0] sm:$0xff]
    %v232 = vld [vmem:[#allocation2 + $0xf8] sm:$0xff]
    %v233 = vld [vmem:[#allocation2 + $0x100] sm:$0xff]
    %v234 = vld [vmem:[#allocation2 + $0x108] sm:$0xff]
    %v235 = vld [vmem:[#allocation2 + $0x110] sm:$0xff]
    %v236 = vld [vmem:[#allocation2 + $0x118] sm:$0xff]
    %v237 = vld [vmem:[#allocation2 + $0x120] sm:$0xff]
    %v238 = vld [vmem:[#allocation2 + $0x128] sm:$0xff]
    %v239 = vld [vmem:[#allocation2 + $0x130] sm:$0xff]
    %v240 = vld [vmem:[#allocation2 + $0x138] sm:$0xff]
    %v241 = vld [vmem:[#allocation2 + $0x140] sm:$0xff]
    %v242 = vld [vmem:[#allocation2 + $0x148] sm:$0xff]
    %v243 = vld [vmem:[#allocation2 + $0x150] sm:$0xff]
    %v244 = vld [vmem:[#allocation2 + $0x158] sm:$0xff]
    %v245 = vld [vmem:[#allocation2 + $0x160] sm:$0xff]
    %v246 = vld [vmem:[#allocation2 + $0x168] sm:$0xff]
    %v247 = vld [vmem:[#allocation2 + $0x170] sm:$0xff]
    %v248 = vld [vmem:[#allocation2 + $0x178] sm:$0xff]
    %v249 = vmul.f32 %v129, 0.5
    %v250 = vmul.f32 %v130, 0.5
    %v251 = vmul.f32 %v131, 0.5
    %v252 = vmul.f32 %v132, 0.5
    %v253 = vmul.f32 %v133, 0.5
    %v254 = vmul.f32 %v134, 0.5
    %v255 = vmul.f32 %v135, 0.5
    %v256 = vmul.f32 %v136, 0.5
    %v257 = vrcp.pop 1.4142135
    %v258 = vmul.f32 %v129, %v257
    %v259 = vmul.f32 %v130, %v257
    %v260 = vmul.f32 %v131, %v257
    %v261 = vmul.f32 %v132, %v257
    %v262 = vmul.f32 %v133, %v257
    %v263 = vmul.f32 %v134, %v257
    %v264 = vmul.f32 %v135, %v257
    %v265 = vmul.f32 %v136, %v257
    %v266 = verf.f32.pop %v258
    %v267 = verf.f32.pop %v259
    %v268 = verf.f32.pop %v260
    %v269 = verf.f32.pop %v261
    %v270 = verf.f32.pop %v262
    %v271 = verf.f32.pop %v263
    %v272 = verf.f32.pop %v264
    %v273 = verf.f32.pop %v265
    %v274 = vadd.f32 %v266, 1.0
    %v275 = vadd.f32 %v267, 1.0
    %v276 = vadd.f32 %v268, 1.0
    %v277 = vadd.f32 %v269, 1.0
    %v278 = vadd.f32 %v270, 1.0
    %v279 = vadd.f32 %v271, 1.0
    %v280 = vadd.f32 %v272, 1.0
    %v281 = vadd.f32 %v273, 1.0
    %v282 = vmul.f32 %v249, %v274
    %v283 = vmul.f32 %v250, %v275
    %v284 = vmul.f32 %v251, %v276
    %v285 = vmul.f32 %v252, %v277
    %v286 = vmul.f32 %v253, %v278
    %v287 = vmul.f32 %v254, %v279
    %v288 = vmul.f32 %v255, %v280
    %v289 = vmul.f32 %v256, %v281
    %v290 = vld [vmem:[%s5] sm:$0xff]
    %v291 = vld [vmem:[%s5 + $0x8] sm:$0xff]
    %v292 = vld [vmem:[%s5 + $0x10] sm:$0xff]
    %v293 = vld [vmem:[%s5 + $0x18] sm:$0xff]
    %295 = vset.pattern.permute.xlu0 0
    %296 = vperm.xlu0 %295, %v290
    %v297 = vpop.permute.xlu0 %296
    %300 = vset.pattern.permute.xlu0 0
    %301 = vperm.xlu0 %300, %v291
    %v302 = vpop.permute.xlu0 %301
    %305 = vset.pattern.permute.xlu0 0
    %306 = vperm.xlu0 %305, %v292
    %v307 = vpop.permute.xlu0 %306
    %310 = vset.pattern.permute.xlu0 0
    %311 = vperm.xlu0 %310, %v293
    %v312 = vpop.permute.xlu0 %311
    %v314 = vmul.f32 %v297, %v282
    %v315 = vmul.f32 %v297, %v283
    %v316 = vmul.f32 %v302, %v284
    %v317 = vmul.f32 %v302, %v285
    %v318 = vmul.f32 %v307, %v286
    %v319 = vmul.f32 %v307, %v287
    %v320 = vmul.f32 %v312, %v288
    %v321 = vmul.f32 %v312, %v289
    %v322 = vtanh.pop %v282
    %v323 = vtanh.pop %v283
    %v324 = vtanh.pop %v284
    %v325 = vtanh.pop %v285
    %v326 = vtanh.pop %v286
    %v327 = vtanh.pop %v287
    %v328 = vtanh.pop %v288
    %v329 = vtanh.pop %v289
    %330 = vmatprep.subr.mxu0 %v138
    %331 = vmatpush1.msra.mxu0 %v137
    %332 = vmatprep.subr.mxu0 %v140
    %333 = vmatpush1.msra.mxu0 %v139
    %334 = vmatprep.subr.mxu0 %v142
    %335 = vmatpush1.msra.mxu0 %v141
    %336 = vmatprep.subr.mxu0 %v144
    %337 = vmatpush1.msra.mxu0 %v143
    %338 = vmatprep.subr.mxu0 %v146
    %339 = vmatpush1.msra.mxu0 %v145
    %340 = vmatprep.subr.mxu0 %v148
    %341 = vmatpush1.msra.mxu0 %v147
    %342 = vmatprep.subr.mxu0 %v150
    %343 = vmatpush1.msra.mxu0 %v149
    %344 = vmatprep.subr.mxu0 %v152
    %345 = vmatpush1.msra.mxu0 %v151
    %346 = vmatprep.subr.mxu0 %v154
    %347 = vmatpush1.msra.mxu0 %v153
    %348 = vmatprep.subr.mxu0 %v156
    %349 = vmatpush1.msra.mxu0 %v155
    %350 = vmatprep.subr.mxu0 %v158
    %351 = vmatpush1.msra.mxu0 %v157
    %352 = vmatprep.subr.mxu0 %v160
    %353 = vmatpush1.msra.mxu0 %v159
    %354 = vmatprep.subr.mxu0 %v162
    %355 = vmatpush1.msra.mxu0 %v161
    %356 = vmatprep.subr.mxu0 %v164
    %357 = vmatpush1.msra.mxu0 %v163
    %358 = vmatprep.subr.mxu0 %v166
    %359 = vmatpush1.msra.mxu0 %v165
    %360 = vmatprep.subr.mxu0 %v168
    %361 = vmatpush1.msra.mxu0 %v167
    %362 = vmatprep.subr.mxu0 %v170
    %363 = vmatpush1.msra.mxu0 %v169
    %364 = vmatprep.subr.mxu0 %v172
    %365 = vmatpush1.msra.mxu0 %v171
    %366 = vmatprep.subr.mxu0 %v174
    %367 = vmatpush1.msra.mxu0 %v173
    %368 = vmatprep.subr.mxu0 %v176
    %369 = vmatpush1.msra.mxu0 %v175
    %370 = vmatprep.subr.mxu0 %v178
    %371 = vmatpush1.msra.mxu0 %v177
    %372 = vmatprep.subr.mxu0 %v180
    %373 = vmatpush1.msra.mxu0 %v179
    %374 = vmatprep.subr.mxu0 %v182
    %375 = vmatpush1.msra.mxu0 %v181
    %376 = vmatprep.subr.mxu0 %v184
    %377 = vmatpush1.msra.mxu0 %v183
    %378 = vmatprep.subr.mxu0 %v186
    %379 = vmatpush1.msra.mxu0 %v185
    %380 = vmatprep.subr.mxu0 %v188
    %381 = vmatpush1.msra.mxu0 %v187
    %382 = vmatprep.subr.mxu0 %v190
    %383 = vmatpush1.msra.mxu0 %v189
    %384 = vmatprep.subr.mxu0 %v192
    %385 = vmatpush1.msra.mxu0 %v191
    %386 = vmatprep.subr.mxu0 %v194
    %387 = vmatpush1.msra.mxu0 %v193
    %388 = vmatprep.subr.mxu0 %v196
    %389 = vmatpush1.msra.mxu0 %v195
    %390 = vmatprep.subr.mxu0 %v198
    %391 = vmatpush1.msra.mxu0 %v197
    %392 = vmatprep.subr.mxu0 %v200
    %393 = vmatpush1.msra.mxu0 %v199
    %394 = vmatprep.mubr.f32.mxu0 %v323
    %395 = vmatmul.mubr.f32.gmra.mrb[0].mxu0 %v322
    %v396 = vpop.f32.mrb[0].mxu0
    %v397 = vadd.f32 0.0, %v396
    %v398 = vpop.f32.mrb[0].mxu0
    %v399 = vadd.f32 0.0, %v398
    %400 = vmatprep.mubr.f32.mxu0 %v325
    %401 = vmatmul.mubr.f32.gmra.mrb[0].mxu0 %v324
    %v402 = vpop.f32.mrb[0].mxu0
    %v403 = vadd.f32 0.0, %v402
    %v404 = vpop.f32.mrb[0].mxu0
    %v405 = vadd.f32 0.0, %v404
    %406 = vmatprep.mubr.f32.mxu0 %v327
    %407 = vmatmul.mubr.f32.gmra.mrb[0].mxu0 %v326
    %v408 = vpop.f32.mrb[0].mxu0
    %v409 = vadd.f32 0.0, %v408
    %v410 = vpop.f32.mrb[0].mxu0
    %v411 = vadd.f32 0.0, %v410
    %412 = vmatprep.mubr.f32.mxu0 %v329
    %413 = vmatmul.mubr.f32.gmra.mrb[0].mxu0 %v328
    %v414 = vpop.f32.mrb[0].mxu0
    %v415 = vadd.f32 0.0, %v414
    %v416 = vpop.f32.mrb[0].mxu0
    %v417 = vadd.f32 0.0, %v416
    %418 = vdwg.mxu0
    %v419 = vld [vmem:[#allocation5] sm:$0xff]
    %v420 = vld [vmem:[#allocation5 + $0x8] sm:$0xff]
    %v421 = vld [vmem:[#allocation5 + $0x10] sm:$0xff]
    %v422 = vld [vmem:[#allocation5 + $0x18] sm:$0xff]
    %v423 = vld [vmem:[#allocation5 + $0x20] sm:$0xff]
    %v424 = vld [vmem:[#allocation5 + $0x28] sm:$0xff]
    %v425 = vld [vmem:[#allocation5 + $0x30] sm:$0xff]
    %v426 = vld [vmem:[#allocation5 + $0x38] sm:$0xff]
    %v427 = vld [vmem:[#allocation5 + $0x40] sm:$0xff]
    %v428 = vld [vmem:[#allocation5 + $0x48] sm:$0xff]
    %v429 = vld [vmem:[#allocation5 + $0x50] sm:$0xff]
    %v430 = vld [vmem:[#allocation5 + $0x58] sm:$0xff]
    %v431 = vld [vmem:[#allocation5 + $0x60] sm:$0xff]
    %v432 = vld [vmem:[#allocation5 + $0x68] sm:$0xff]
    %v433 = vld [vmem:[#allocation5 + $0x70] sm:$0xff]
    %v434 = vld [vmem:[#allocation5 + $0x78] sm:$0xff]
    %v435 = vld [vmem:[#allocation5 + $0x80] sm:$0xff]
    %v436 = vld [vmem:[#allocation5 + $0x88] sm:$0xff]
    %v437 = vld [vmem:[#allocation5 + $0x90] sm:$0xff]
    %v438 = vld [vmem:[#allocation5 + $0x98] sm:$0xff]
    %v439 = vld [vmem:[#allocation5 + $0xa0] sm:$0xff]
    %v440 = vld [vmem:[#allocation5 + $0xa8] sm:$0xff]
    %v441 = vld [vmem:[#allocation5 + $0xb0] sm:$0xff]
    %v442 = vld [vmem:[#allocation5 + $0xb8] sm:$0xff]
    %v443 = vld [vmem:[#allocation5 + $0xc0] sm:$0xff]
    %v444 = vld [vmem:[#allocation5 + $0xc8] sm:$0xff]
    %v445 = vld [vmem:[#allocation5 + $0xd0] sm:$0xff]
    %v446 = vld [vmem:[#allocation5 + $0xd8] sm:$0xff]
    %v447 = vld [vmem:[#allocation5 + $0xe0] sm:$0xff]
    %v448 = vld [vmem:[#allocation5 + $0xe8] sm:$0xff]
    %v449 = vld [vmem:[#allocation5 + $0xf0] sm:$0xff]
    %v450 = vld [vmem:[#allocation5 + $0xf8] sm:$0xff]
    %v451 = vld [vmem:[#allocation5 + $0x100] sm:$0xff]
    %v452 = vld [vmem:[#allocation5 + $0x108] sm:$0xff]
    %v453 = vld [vmem:[#allocation5 + $0x110] sm:$0xff]
    %v454 = vld [vmem:[#allocation5 + $0x118] sm:$0xff]
    %v455 = vld [vmem:[#allocation5 + $0x120] sm:$0xff]
    %v456 = vld [vmem:[#allocation5 + $0x128] sm:$0xff]
    %v457 = vld [vmem:[#allocation5 + $0x130] sm:$0xff]
    %v458 = vld [vmem:[#allocation5 + $0x138] sm:$0xff]
    %v459 = vld [vmem:[#allocation5 + $0x140] sm:$0xff]
    %v460 = vld [vmem:[#allocation5 + $0x148] sm:$0xff]
    %v461 = vld [vmem:[#allocation5 + $0x150] sm:$0xff]
    %v462 = vld [vmem:[#allocation5 + $0x158] sm:$0xff]
    %v463 = vld [vmem:[#allocation5 + $0x160] sm:$0xff]
    %v464 = vld [vmem:[#allocation5 + $0x168] sm:$0xff]
    %v465 = vld [vmem:[#allocation5 + $0x170] sm:$0xff]
    %v466 = vld [vmem:[#allocation5 + $0x178] sm:$0xff]
    %v467 = vld [vmem:[#allocation5 + $0x180] sm:$0xff]
    %v468 = vld [vmem:[#allocation5 + $0x188] sm:$0xff]
    %v469 = vld [vmem:[#allocation5 + $0x190] sm:$0xff]
    %v470 = vld [vmem:[#allocation5 + $0x198] sm:$0xff]
    %v471 = vld [vmem:[#allocation5 + $0x1a0] sm:$0xff]
    %v472 = vld [vmem:[#allocation5 + $0x1a8] sm:$0xff]
    %v473 = vld [vmem:[#allocation5 + $0x1b0] sm:$0xff]
    %v474 = vld [vmem:[#allocation5 + $0x1b8] sm:$0xff]
    %v475 = vld [vmem:[#allocation5 + $0x1c0] sm:$0xff]
    %v476 = vld [vmem:[#allocation5 + $0x1c8] sm:$0xff]
    %v477 = vld [vmem:[#allocation5 + $0x1d0] sm:$0xff]
    %v478 = vld [vmem:[#allocation5 + $0x1d8] sm:$0xff]
    %v479 = vld [vmem:[#allocation5 + $0x1e0] sm:$0xff]
    %v480 = vld [vmem:[#allocation5 + $0x1e8] sm:$0xff]
    %v481 = vld [vmem:[#allocation5 + $0x1f0] sm:$0xff]
    %v482 = vld [vmem:[#allocation5 + $0x1f8] sm:$0xff]
    %v483 = vld [vmem:[#allocation5 + $0x200] sm:$0xff]
    %v484 = vld [vmem:[#allocation5 + $0x208] sm:$0xff]
    %v485 = vld [vmem:[#allocation5 + $0x210] sm:$0xff]
    %v486 = vld [vmem:[#allocation5 + $0x218] sm:$0xff]
    %v487 = vld [vmem:[#allocation5 + $0x220] sm:$0xff]
    %v488 = vld [vmem:[#allocation5 + $0x228] sm:$0xff]
    %v489 = vld [vmem:[#allocation5 + $0x230] sm:$0xff]
    %v490 = vld [vmem:[#allocation5 + $0x238] sm:$0xff]
    %v491 = vld [vmem:[#allocation5 + $0x240] sm:$0xff]
    %v492 = vld [vmem:[#allocation5 + $0x248] sm:$0xff]
    %v493 = vld [vmem:[#allocation5 + $0x250] sm:$0xff]
    %v494 = vld [vmem:[#allocation5 + $0x258] sm:$0xff]
    %v495 = vld [vmem:[#allocation5 + $0x260] sm:$0xff]
    %v496 = vld [vmem:[#allocation5 + $0x268] sm:$0xff]
    %v497 = vld [vmem:[#allocation5 + $0x270] sm:$0xff]
    %v498 = vld [vmem:[#allocation5 + $0x278] sm:$0xff]
    %v499 = vld [vmem:[#allocation5 + $0x280] sm:$0xff]
    %v500 = vld [vmem:[#allocation5 + $0x288] sm:$0xff]
    %v501 = vld [vmem:[#allocation5 + $0x290] sm:$0xff]
    %v502 = vld [vmem:[#allocation5 + $0x298] sm:$0xff]
    %v503 = vld [vmem:[#allocation5 + $0x2a0] sm:$0xff]
    %v504 = vld [vmem:[#allocation5 + $0x2a8] sm:$0xff]
    %v505 = vld [vmem:[#allocation5 + $0x2b0] sm:$0xff]
    %v506 = vld [vmem:[#allocation5 + $0x2b8] sm:$0xff]
    %v507 = vld [vmem:[#allocation5 + $0x2c0] sm:$0xff]
    %v508 = vld [vmem:[#allocation5 + $0x2c8] sm:$0xff]
    %v509 = vld [vmem:[#allocation5 + $0x2d0] sm:$0xff]
    %v510 = vld [vmem:[#allocation5 + $0x2d8] sm:$0xff]
    %v511 = vld [vmem:[#allocation5 + $0x2e0] sm:$0xff]
    %v512 = vld [vmem:[#allocation5 + $0x2e8] sm:$0xff]
    %v513 = vld [vmem:[#allocation5 + $0x2f0] sm:$0xff]
    %v514 = vld [vmem:[#allocation5 + $0x2f8] sm:$0xff]
    %v515 = vld [vmem:[#allocation5 + $0x300] sm:$0xff]
    %v516 = vld [vmem:[#allocation5 + $0x308] sm:$0xff]
    %v517 = vld [vmem:[#allocation5 + $0x310] sm:$0xff]
    %v518 = vld [vmem:[#allocation5 + $0x318] sm:$0xff]
    %v519 = vld [vmem:[#allocation5 + $0x320] sm:$0xff]
    %v520 = vld [vmem:[#allocation5 + $0x328] sm:$0xff]
    %v521 = vld [vmem:[#allocation5 + $0x330] sm:$0xff]
    %v522 = vld [vmem:[#allocation5 + $0x338] sm:$0xff]
    %v523 = vld [vmem:[#allocation5 + $0x340] sm:$0xff]
    %v524 = vld [vmem:[#allocation5 + $0x348] sm:$0xff]
    %v525 = vld [vmem:[#allocation5 + $0x350] sm:$0xff]
    %v526 = vld [vmem:[#allocation5 + $0x358] sm:$0xff]
    %v527 = vld [vmem:[#allocation5 + $0x360] sm:$0xff]
    %v528 = vld [vmem:[#allocation5 + $0x368] sm:$0xff]
    %v529 = vld [vmem:[#allocation5 + $0x370] sm:$0xff]
    %v530 = vld [vmem:[#allocation5 + $0x378] sm:$0xff]
    %v531 = vld [vmem:[#allocation5 + $0x380] sm:$0xff]
    %v532 = vld [vmem:[#allocation5 + $0x388] sm:$0xff]
    %v533 = vld [vmem:[#allocation5 + $0x390] sm:$0xff]
    %v534 = vld [vmem:[#allocation5 + $0x398] sm:$0xff]
    %v535 = vld [vmem:[#allocation5 + $0x3a0] sm:$0xff]
    %v536 = vld [vmem:[#allocation5 + $0x3a8] sm:$0xff]
    %v537 = vld [vmem:[#allocation5 + $0x3b0] sm:$0xff]
    %v538 = vld [vmem:[#allocation5 + $0x3b8] sm:$0xff]
    %v539 = vld [vmem:[#allocation5 + $0x3c0] sm:$0xff]
    %v540 = vld [vmem:[#allocation5 + $0x3c8] sm:$0xff]
    %v541 = vld [vmem:[#allocation5 + $0x3d0] sm:$0xff]
    %v542 = vld [vmem:[#allocation5 + $0x3d8] sm:$0xff]
    %v543 = vld [vmem:[#allocation5 + $0x3e0] sm:$0xff]
    %v544 = vld [vmem:[#allocation5 + $0x3e8] sm:$0xff]
    %v545 = vld [vmem:[#allocation5 + $0x3f0] sm:$0xff]
    %v546 = vld [vmem:[#allocation5 + $0x3f8] sm:$0xff]
    %v547 = vld [vmem:[#allocation5 + $0x400] sm:$0xff]
    %v548 = vld [vmem:[#allocation5 + $0x408] sm:$0xff]
    %v549 = vld [vmem:[#allocation5 + $0x410] sm:$0xff]
    %v550 = vld [vmem:[#allocation5 + $0x418] sm:$0xff]
    %v551 = vld [vmem:[#allocation5 + $0x420] sm:$0xff]
    %v552 = vld [vmem:[#allocation5 + $0x428] sm:$0xff]
    %v553 = vld [vmem:[#allocation5 + $0x430] sm:$0xff]
    %v554 = vld [vmem:[#allocation5 + $0x438] sm:$0xff]
    %v555 = vld [vmem:[#allocation5 + $0x440] sm:$0xff]
    %v556 = vld [vmem:[#allocation5 + $0x448] sm:$0xff]
    %v557 = vld [vmem:[#allocation5 + $0x450] sm:$0xff]
    %v558 = vld [vmem:[#allocation5 + $0x458] sm:$0xff]
    %v559 = vld [vmem:[#allocation5 + $0x460] sm:$0xff]
    %v560 = vld [vmem:[#allocation5 + $0x468] sm:$0xff]
    %v561 = vld [vmem:[#allocation5 + $0x470] sm:$0xff]
    %v562 = vld [vmem:[#allocation5 + $0x478] sm:$0xff]
    %v563 = vld [vmem:[#allocation5 + $0x480] sm:$0xff]
    %v564 = vld [vmem:[#allocation5 + $0x488] sm:$0xff]
    %v565 = vld [vmem:[#allocation5 + $0x490] sm:$0xff]
    %v566 = vld [vmem:[#allocation5 + $0x498] sm:$0xff]
    %v567 = vld [vmem:[#allocation5 + $0x4a0] sm:$0xff]
    %v568 = vld [vmem:[#allocation5 + $0x4a8] sm:$0xff]
    %v569 = vld [vmem:[#allocation5 + $0x4b0] sm:$0xff]
    %v570 = vld [vmem:[#allocation5 + $0x4b8] sm:$0xff]
    %v571 = vld [vmem:[#allocation5 + $0x4c0] sm:$0xff]
    %v572 = vld [vmem:[#allocation5 + $0x4c8] sm:$0xff]
    %v573 = vld [vmem:[#allocation5 + $0x4d0] sm:$0xff]
    %v574 = vld [vmem:[#allocation5 + $0x4d8] sm:$0xff]
    %v575 = vld [vmem:[#allocation5 + $0x4e0] sm:$0xff]
    %v576 = vld [vmem:[#allocation5 + $0x4e8] sm:$0xff]
    %v577 = vld [vmem:[#allocation5 + $0x4f0] sm:$0xff]
    %v578 = vld [vmem:[#allocation5 + $0x4f8] sm:$0xff]
    %v579 = vld [vmem:[#allocation5 + $0x500] sm:$0xff]
    %v580 = vld [vmem:[#allocation5 + $0x508] sm:$0xff]
    %v581 = vld [vmem:[#allocation5 + $0x510] sm:$0xff]
    %v582 = vld [vmem:[#allocation5 + $0x518] sm:$0xff]
    %v583 = vld [vmem:[#allocation5 + $0x520] sm:$0xff]
    %v584 = vld [vmem:[#allocation5 + $0x528] sm:$0xff]
    %v585 = vld [vmem:[#allocation5 + $0x530] sm:$0xff]
    %v586 = vld [vmem:[#allocation5 + $0x538] sm:$0xff]
    %v587 = vld [vmem:[#allocation5 + $0x540] sm:$0xff]
    %v588 = vld [vmem:[#allocation5 + $0x548] sm:$0xff]
    %v589 = vld [vmem:[#allocation5 + $0x550] sm:$0xff]
    %v590 = vld [vmem:[#allocation5 + $0x558] sm:$0xff]
    %v591 = vld [vmem:[#allocation5 + $0x560] sm:$0xff]
    %v592 = vld [vmem:[#allocation5 + $0x568] sm:$0xff]
    %v593 = vld [vmem:[#allocation5 + $0x570] sm:$0xff]
    %v594 = vld [vmem:[#allocation5 + $0x578] sm:$0xff]
    %v595 = vld [vmem:[#allocation5 + $0x580] sm:$0xff]
    %v596 = vld [vmem:[#allocation5 + $0x588] sm:$0xff]
    %v597 = vld [vmem:[#allocation5 + $0x590] sm:$0xff]
    %v598 = vld [vmem:[#allocation5 + $0x598] sm:$0xff]
    %v599 = vld [vmem:[#allocation5 + $0x5a0] sm:$0xff]
    %v600 = vld [vmem:[#allocation5 + $0x5a8] sm:$0xff]
    %v601 = vld [vmem:[#allocation5 + $0x5b0] sm:$0xff]
    %v602 = vld [vmem:[#allocation5 + $0x5b8] sm:$0xff]
    %v603 = vld [vmem:[#allocation5 + $0x5c0] sm:$0xff]
    %v604 = vld [vmem:[#allocation5 + $0x5c8] sm:$0xff]
    %v605 = vld [vmem:[#allocation5 + $0x5d0] sm:$0xff]
    %v606 = vld [vmem:[#allocation5 + $0x5d8] sm:$0xff]
    %v607 = vld [vmem:[#allocation5 + $0x5e0] sm:$0xff]
    %v608 = vld [vmem:[#allocation5 + $0x5e8] sm:$0xff]
    %v609 = vld [vmem:[#allocation5 + $0x5f0] sm:$0xff]
    %v610 = vld [vmem:[#allocation5 + $0x5f8] sm:$0xff]
    %v611 = vld [vmem:[#allocation5 + $0x600] sm:$0xff]
    %v612 = vld [vmem:[#allocation5 + $0x608] sm:$0xff]
    %v613 = vld [vmem:[#allocation5 + $0x610] sm:$0xff]
    %v614 = vld [vmem:[#allocation5 + $0x618] sm:$0xff]
    %v615 = vld [vmem:[#allocation5 + $0x620] sm:$0xff]
    %v616 = vld [vmem:[#allocation5 + $0x628] sm:$0xff]
    %v617 = vld [vmem:[#allocation5 + $0x630] sm:$0xff]
    %v618 = vld [vmem:[#allocation5 + $0x638] sm:$0xff]
    %v619 = vld [vmem:[#allocation5 + $0x640] sm:$0xff]
    %v620 = vld [vmem:[#allocation5 + $0x648] sm:$0xff]
    %v621 = vld [vmem:[#allocation5 + $0x650] sm:$0xff]
    %v622 = vld [vmem:[#allocation5 + $0x658] sm:$0xff]
    %v623 = vld [vmem:[#allocation5 + $0x660] sm:$0xff]
    %v624 = vld [vmem:[#allocation5 + $0x668] sm:$0xff]
    %v625 = vld [vmem:[#allocation5 + $0x670] sm:$0xff]
    %v626 = vld [vmem:[#allocation5 + $0x678] sm:$0xff]
    %v627 = vld [vmem:[#allocation5 + $0x680] sm:$0xff]
    %v628 = vld [vmem:[#allocation5 + $0x688] sm:$0xff]
    %v629 = vld [vmem:[#allocation5 + $0x690] sm:$0xff]
    %v630 = vld [vmem:[#allocation5 + $0x698] sm:$0xff]
    %v631 = vld [vmem:[#allocation5 + $0x6a0] sm:$0xff]
    %v632 = vld [vmem:[#allocation5 + $0x6a8] sm:$0xff]
    %v633 = vld [vmem:[#allocation5 + $0x6b0] sm:$0xff]
    %v634 = vld [vmem:[#allocation5 + $0x6b8] sm:$0xff]
    %v635 = vld [vmem:[#allocation5 + $0x6c0] sm:$0xff]
    %v636 = vld [vmem:[#allocation5 + $0x6c8] sm:$0xff]
    %v637 = vld [vmem:[#allocation5 + $0x6d0] sm:$0xff]
    %v638 = vld [vmem:[#allocation5 + $0x6d8] sm:$0xff]
    %v639 = vld [vmem:[#allocation5 + $0x6e0] sm:$0xff]
    %v640 = vld [vmem:[#allocation5 + $0x6e8] sm:$0xff]
    %v641 = vld [vmem:[#allocation5 + $0x6f0] sm:$0xff]
    %v642 = vld [vmem:[#allocation5 + $0x6f8] sm:$0xff]
    %v643 = vld [vmem:[#allocation5 + $0x700] sm:$0xff]
    %v644 = vld [vmem:[#allocation5 + $0x708] sm:$0xff]
    %v645 = vld [vmem:[#allocation5 + $0x710] sm:$0xff]
    %v646 = vld [vmem:[#allocation5 + $0x718] sm:$0xff]
    %v647 = vld [vmem:[#allocation5 + $0x720] sm:$0xff]
    %v648 = vld [vmem:[#allocation5 + $0x728] sm:$0xff]
    %v649 = vld [vmem:[#allocation5 + $0x730] sm:$0xff]
    %v650 = vld [vmem:[#allocation5 + $0x738] sm:$0xff]
    %v651 = vld [vmem:[#allocation5 + $0x740] sm:$0xff]
    %v652 = vld [vmem:[#allocation5 + $0x748] sm:$0xff]
    %v653 = vld [vmem:[#allocation5 + $0x750] sm:$0xff]
    %v654 = vld [vmem:[#allocation5 + $0x758] sm:$0xff]
    %v655 = vld [vmem:[#allocation5 + $0x760] sm:$0xff]
    %v656 = vld [vmem:[#allocation5 + $0x768] sm:$0xff]
    %v657 = vld [vmem:[#allocation5 + $0x770] sm:$0xff]
    %v658 = vld [vmem:[#allocation5 + $0x778] sm:$0xff]
    %v659 = vld [vmem:[#allocation5 + $0x780] sm:$0xff]
    %v660 = vld [vmem:[#allocation5 + $0x788] sm:$0xff]
    %v661 = vld [vmem:[#allocation5 + $0x790] sm:$0xff]
    %v662 = vld [vmem:[#allocation5 + $0x798] sm:$0xff]
    %v663 = vld [vmem:[#allocation5 + $0x7a0] sm:$0xff]
    %v664 = vld [vmem:[#allocation5 + $0x7a8] sm:$0xff]
    %v665 = vld [vmem:[#allocation5 + $0x7b0] sm:$0xff]
    %v666 = vld [vmem:[#allocation5 + $0x7b8] sm:$0xff]
    %v667 = vld [vmem:[#allocation5 + $0x7c0] sm:$0xff]
    %v668 = vld [vmem:[#allocation5 + $0x7c8] sm:$0xff]
    %v669 = vld [vmem:[#allocation5 + $0x7d0] sm:$0xff]
    %v670 = vld [vmem:[#allocation5 + $0x7d8] sm:$0xff]
    %v671 = vld [vmem:[#allocation5 + $0x7e0] sm:$0xff]
    %v672 = vld [vmem:[#allocation5 + $0x7e8] sm:$0xff]
    %v673 = vld [vmem:[#allocation5 + $0x7f0] sm:$0xff]
    %v674 = vld [vmem:[#allocation5 + $0x7f8] sm:$0xff]
    %v675 = vmul.f32 %v397, %v419
    %v676 = vmul.f32 %v399, %v420
    %v677 = vmul.f32 %v403, %v421
    %v678 = vmul.f32 %v405, %v422
    %v679 = vmul.f32 %v409, %v423
    %v680 = vmul.f32 %v411, %v424
    %v681 = vmul.f32 %v415, %v425
    %v682 = vmul.f32 %v417, %v426
    %v683 = vmul.f32 %v397, %v427
    %v684 = vmul.f32 %v399, %v428
    %v685 = vmul.f32 %v403, %v429
    %v686 = vmul.f32 %v405, %v430
    %v687 = vmul.f32 %v409, %v431
    %v688 = vmul.f32 %v411, %v432
    %v689 = vmul.f32 %v415, %v433
    %v690 = vmul.f32 %v417, %v434
    %v691 = vmul.f32 %v397, %v435
    %v692 = vmul.f32 %v399, %v436
    %v693 = vmul.f32 %v403, %v437
    %v694 = vmul.f32 %v405, %v438
    %v695 = vmul.f32 %v409, %v439
    %v696 = vmul.f32 %v411, %v440
    %v697 = vmul.f32 %v415, %v441
    %v698 = vmul.f32 %v417, %v442
    %v699 = vmul.f32 %v397, %v443
    %v700 = vmul.f32 %v399, %v444
    %v701 = vmul.f32 %v403, %v445
    %v702 = vmul.f32 %v405, %v446
    %v703 = vmul.f32 %v409, %v447
    %v704 = vmul.f32 %v411, %v448
    %v705 = vmul.f32 %v415, %v449
    %v706 = vmul.f32 %v417, %v450
    %v707 = vmul.f32 %v397, %v451
    %v708 = vmul.f32 %v399, %v452
    %v709 = vmul.f32 %v403, %v453
    %v710 = vmul.f32 %v405, %v454
    %v711 = vmul.f32 %v409, %v455
    %v712 = vmul.f32 %v411, %v456
    %v713 = vmul.f32 %v415, %v457
    %v714 = vmul.f32 %v417, %v458
    %v715 = vmul.f32 %v397, %v459
    %v716 = vmul.f32 %v399, %v460
    %v717 = vmul.f32 %v403, %v461
    %v718 = vmul.f32 %v405, %v462
    %v719 = vmul.f32 %v409, %v463
    %v720 = vmul.f32 %v411, %v464
    %v721 = vmul.f32 %v415, %v465
    %v722 = vmul.f32 %v417, %v466
    %v723 = vmul.f32 %v397, %v467
    %v724 = vmul.f32 %v399, %v468
    %v725 = vmul.f32 %v403, %v469
    %v726 = vmul.f32 %v405, %v470
    %v727 = vmul.f32 %v409, %v471
    %v728 = vmul.f32 %v411, %v472
    %v729 = vmul.f32 %v415, %v473
    %v730 = vmul.f32 %v417, %v474
    %v731 = vmul.f32 %v397, %v475
    %v732 = vmul.f32 %v399, %v476
    %v733 = vmul.f32 %v403, %v477
    %v734 = vmul.f32 %v405, %v478
    %v735 = vmul.f32 %v409, %v479
    %v736 = vmul.f32 %v411, %v480
    %v737 = vmul.f32 %v415, %v481
    %v738 = vmul.f32 %v417, %v482
    %v739 = vmul.f32 %v397, %v483
    %v740 = vmul.f32 %v399, %v484
    %v741 = vmul.f32 %v403, %v485
    %v742 = vmul.f32 %v405, %v486
    %v743 = vmul.f32 %v409, %v487
    %v744 = vmul.f32 %v411, %v488
    %v745 = vmul.f32 %v415, %v489
    %v746 = vmul.f32 %v417, %v490
    %v747 = vmul.f32 %v397, %v491
    %v748 = vmul.f32 %v399, %v492
    %v749 = vmul.f32 %v403, %v493
    %v750 = vmul.f32 %v405, %v494
    %v751 = vmul.f32 %v409, %v495
    %v752 = vmul.f32 %v411, %v496
    %v753 = vmul.f32 %v415, %v497
    %v754 = vmul.f32 %v417, %v498
    %v755 = vmul.f32 %v397, %v499
    %v756 = vmul.f32 %v399, %v500
    %v757 = vmul.f32 %v403, %v501
    %v758 = vmul.f32 %v405, %v502
    %v759 = vmul.f32 %v409, %v503
    %v760 = vmul.f32 %v411, %v504
    %v761 = vmul.f32 %v415, %v505
    %v762 = vmul.f32 %v417, %v506
    %v763 = vmul.f32 %v397, %v507
    %v764 = vmul.f32 %v399, %v508
    %v765 = vmul.f32 %v403, %v509
    %v766 = vmul.f32 %v405, %v510
    %v767 = vmul.f32 %v409, %v511
    %v768 = vmul.f32 %v411, %v512
    %v769 = vmul.f32 %v415, %v513
    %v770 = vmul.f32 %v417, %v514
    %v771 = vmul.f32 %v397, %v515
    %v772 = vmul.f32 %v399, %v516
    %v773 = vmul.f32 %v403, %v517
    %v774 = vmul.f32 %v405, %v518
    %v775 = vmul.f32 %v409, %v519
    %v776 = vmul.f32 %v411, %v520
    %v777 = vmul.f32 %v415, %v521
    %v778 = vmul.f32 %v417, %v522
    %v779 = vmul.f32 %v397, %v523
    %v780 = vmul.f32 %v399, %v524
    %v781 = vmul.f32 %v403, %v525
    %v782 = vmul.f32 %v405, %v526
    %v783 = vmul.f32 %v409, %v527
    %v784 = vmul.f32 %v411, %v528
    %v785 = vmul.f32 %v415, %v529
    %v786 = vmul.f32 %v417, %v530
    %v787 = vmul.f32 %v397, %v531
    %v788 = vmul.f32 %v399, %v532
    %v789 = vmul.f32 %v403, %v533
    %v790 = vmul.f32 %v405, %v534
    %v791 = vmul.f32 %v409, %v535
    %v792 = vmul.f32 %v411, %v536
    %v793 = vmul.f32 %v415, %v537
    %v794 = vmul.f32 %v417, %v538
    %v795 = vmul.f32 %v397, %v539
    %v796 = vmul.f32 %v399, %v540
    %v797 = vmul.f32 %v403, %v541
    %v798 = vmul.f32 %v405, %v542
    %v799 = vmul.f32 %v409, %v543
    %v800 = vmul.f32 %v411, %v544
    %v801 = vmul.f32 %v415, %v545
    %v802 = vmul.f32 %v417, %v546
    %v803 = vmul.f32 %v397, %v547
    %v804 = vmul.f32 %v399, %v548
    %v805 = vmul.f32 %v403, %v549
    %v806 = vmul.f32 %v405, %v550
    %v807 = vmul.f32 %v409, %v551
    %v808 = vmul.f32 %v411, %v552
    %v809 = vmul.f32 %v415, %v553
    %v810 = vmul.f32 %v417, %v554
    %v811 = vmul.f32 %v397, %v555
    %v812 = vmul.f32 %v399, %v556
    %v813 = vmul.f32 %v403, %v557
    %v814 = vmul.f32 %v405, %v558
    %v815 = vmul.f32 %v409, %v559
    %v816 = vmul.f32 %v411, %v560
    %v817 = vmul.f32 %v415, %v561
    %v818 = vmul.f32 %v417, %v562
    %v819 = vmul.f32 %v397, %v563
    %v820 = vmul.f32 %v399, %v564
    %v821 = vmul.f32 %v403, %v565
    %v822 = vmul.f32 %v405, %v566
    %v823 = vmul.f32 %v409, %v567
    %v824 = vmul.f32 %v411, %v568
    %v825 = vmul.f32 %v415, %v569
    %v826 = vmul.f32 %v417, %v570
    %v827 = vmul.f32 %v397, %v571
    %v828 = vmul.f32 %v399, %v572
    %v829 = vmul.f32 %v403, %v573
    %v830 = vmul.f32 %v405, %v574
    %v831 = vmul.f32 %v409, %v575
    %v832 = vmul.f32 %v411, %v576
    %v833 = vmul.f32 %v415, %v577
    %v834 = vmul.f32 %v417, %v578
    %v835 = vmul.f32 %v397, %v579
    %v836 = vmul.f32 %v399, %v580
    %v837 = vmul.f32 %v403, %v581
    %v838 = vmul.f32 %v405, %v582
    %v839 = vmul.f32 %v409, %v583
    %v840 = vmul.f32 %v411, %v584
    %v841 = vmul.f32 %v415, %v585
    %v842 = vmul.f32 %v417, %v586
    %v843 = vmul.f32 %v397, %v587
    %v844 = vmul.f32 %v399, %v588
    %v845 = vmul.f32 %v403, %v589
    %v846 = vmul.f32 %v405, %v590
    %v847 = vmul.f32 %v409, %v591
    %v848 = vmul.f32 %v411, %v592
    %v849 = vmul.f32 %v415, %v593
    %v850 = vmul.f32 %v417, %v594
    %v851 = vmul.f32 %v397, %v595
    %v852 = vmul.f32 %v399, %v596
    %v853 = vmul.f32 %v403, %v597
    %v854 = vmul.f32 %v405, %v598
    %v855 = vmul.f32 %v409, %v599
    %v856 = vmul.f32 %v411, %v600
    %v857 = vmul.f32 %v415, %v601
    %v858 = vmul.f32 %v417, %v602
    %v859 = vmul.f32 %v397, %v603
    %v860 = vmul.f32 %v399, %v604
    %v861 = vmul.f32 %v403, %v605
    %v862 = vmul.f32 %v405, %v606
    %v863 = vmul.f32 %v409, %v607
    %v864 = vmul.f32 %v411, %v608
    %v865 = vmul.f32 %v415, %v609
    %v866 = vmul.f32 %v417, %v610
    %v867 = vmul.f32 %v397, %v611
    %v868 = vmul.f32 %v399, %v612
    %v869 = vmul.f32 %v403, %v613
    %v870 = vmul.f32 %v405, %v614
    %v871 = vmul.f32 %v409, %v615
    %v872 = vmul.f32 %v411, %v616
    %v873 = vmul.f32 %v415, %v617
    %v874 = vmul.f32 %v417, %v618
    %v875 = vmul.f32 %v397, %v619
    %v876 = vmul.f32 %v399, %v620
    %v877 = vmul.f32 %v403, %v621
    %v878 = vmul.f32 %v405, %v622
    %v879 = vmul.f32 %v409, %v623
    %v880 = vmul.f32 %v411, %v624
    %v881 = vmul.f32 %v415, %v625
    %v882 = vmul.f32 %v417, %v626
    %v883 = vmul.f32 %v397, %v627
    %v884 = vmul.f32 %v399, %v628
    %v885 = vmul.f32 %v403, %v629
    %v886 = vmul.f32 %v405, %v630
    %v887 = vmul.f32 %v409, %v631
    %v888 = vmul.f32 %v411, %v632
    %v889 = vmul.f32 %v415, %v633
    %v890 = vmul.f32 %v417, %v634
    %v891 = vmul.f32 %v397, %v635
    %v892 = vmul.f32 %v399, %v636
    %v893 = vmul.f32 %v403, %v637
    %v894 = vmul.f32 %v405, %v638
    %v895 = vmul.f32 %v409, %v639
    %v896 = vmul.f32 %v411, %v640
    %v897 = vmul.f32 %v415, %v641
    %v898 = vmul.f32 %v417, %v642
    %v899 = vmul.f32 %v397, %v643
    %v900 = vmul.f32 %v399, %v644
    %v901 = vmul.f32 %v403, %v645
    %v902 = vmul.f32 %v405, %v646
    %v903 = vmul.f32 %v409, %v647
    %v904 = vmul.f32 %v411, %v648
    %v905 = vmul.f32 %v415, %v649
    %v906 = vmul.f32 %v417, %v650
    %v907 = vmul.f32 %v397, %v651
    %v908 = vmul.f32 %v399, %v652
    %v909 = vmul.f32 %v403, %v653
    %v910 = vmul.f32 %v405, %v654
    %v911 = vmul.f32 %v409, %v655
    %v912 = vmul.f32 %v411, %v656
    %v913 = vmul.f32 %v415, %v657
    %v914 = vmul.f32 %v417, %v658
    %v915 = vmul.f32 %v397, %v659
    %v916 = vmul.f32 %v399, %v660
    %v917 = vmul.f32 %v403, %v661
    %v918 = vmul.f32 %v405, %v662
    %v919 = vmul.f32 %v409, %v663
    %v920 = vmul.f32 %v411, %v664
    %v921 = vmul.f32 %v415, %v665
    %v922 = vmul.f32 %v417, %v666
    %v923 = vmul.f32 %v397, %v667
    %v924 = vmul.f32 %v399, %v668
    %v925 = vmul.f32 %v403, %v669
    %v926 = vmul.f32 %v405, %v670
    %v927 = vmul.f32 %v409, %v671
    %v928 = vmul.f32 %v411, %v672
    %v929 = vmul.f32 %v415, %v673
    %v930 = vmul.f32 %v417, %v674
    %v931 = vadd.f32 %v675, %v677
    %v932 = vadd.f32 %v931, %v679
    %v933 = vadd.f32 %v932, %v681
    %v934 = vrot.slane %v933, 4
    %v935 = vadd.f32 %v933, %v934
    %v936 = vrot.slane %v935, 2
    %v937 = vadd.f32 %v935, %v936
    %v938 = vrot.slane %v937, 1
    %v939 = vadd.f32 %v937, %v938
    %vm940 = vcmask 523264
    %v941 = vsel %vm940, %v676, 0.0
    %v942 = vsel %vm940, %v678, 0.0
    %v943 = vadd.f32 %v941, %v942
    %v944 = vsel %vm940, %v680, 0.0
    %v945 = vadd.f32 %v943, %v944
    %v946 = vsel %vm940, %v682, 0.0
    %v947 = vadd.f32 %v945, %v946
    %v948 = vrot.slane %v947, 4
    %v949 = vadd.f32 %v947, %v948
    %v950 = vrot.slane %v949, 2
    %v951 = vadd.f32 %v949, %v950
    %v952 = vrot.slane %v951, 1
    %v953 = vadd.f32 %v951, %v952
    %v954 = vadd.f32 %v683, %v685
    %v955 = vadd.f32 %v954, %v687
    %v956 = vadd.f32 %v955, %v689
    %v957 = vrot.slane %v956, 4
    %v958 = vadd.f32 %v956, %v957
    %v959 = vrot.slane %v958, 2
    %v960 = vadd.f32 %v958, %v959
    %v961 = vrot.slane %v960, 1
    %v962 = vadd.f32 %v960, %v961
    %v963 = vsel %vm940, %v684, 0.0
    %v964 = vsel %vm940, %v686, 0.0
    %v965 = vadd.f32 %v963, %v964
    %v966 = vsel %vm940, %v688, 0.0
    %v967 = vadd.f32 %v965, %v966
    %v968 = vsel %vm940, %v690, 0.0
    %v969 = vadd.f32 %v967, %v968
    %v970 = vrot.slane %v969, 4
    %v971 = vadd.f32 %v969, %v970
    %v972 = vrot.slane %v971, 2
    %v973 = vadd.f32 %v971, %v972
    %v974 = vrot.slane %v973, 1
    %v975 = vadd.f32 %v973, %v974
    %v976 = vadd.f32 %v691, %v693
    %v977 = vadd.f32 %v976, %v695
    %v978 = vadd.f32 %v977, %v697
    %v979 = vrot.slane %v978, 4
    %v980 = vadd.f32 %v978, %v979
    %v981 = vrot.slane %v980, 2
    %v982 = vadd.f32 %v980, %v981
    %v983 = vrot.slane %v982, 1
    %v984 = vadd.f32 %v982, %v983
    %v985 = vsel %vm940, %v692, 0.0
    %v986 = vsel %vm940, %v694, 0.0
    %v987 = vadd.f32 %v985, %v986
    %v988 = vsel %vm940, %v696, 0.0
    %v989 = vadd.f32 %v987, %v988
    %v990 = vsel %vm940, %v698, 0.0
    %v991 = vadd.f32 %v989, %v990
    %v992 = vrot.slane %v991, 4
    %v993 = vadd.f32 %v991, %v992
    %v994 = vrot.slane %v993, 2
    %v995 = vadd.f32 %v993, %v994
    %v996 = vrot.slane %v995, 1
    %v997 = vadd.f32 %v995, %v996
    %v998 = vadd.f32 %v699, %v701
    %v999 = vadd.f32 %v998, %v703
    %v1000 = vadd.f32 %v999, %v705
    %v1001 = vrot.slane %v1000, 4
    %v1002 = vadd.f32 %v1000, %v1001
    %v1003 = vrot.slane %v1002, 2
    %v1004 = vadd.f32 %v1002, %v1003
    %v1005 = vrot.slane %v1004, 1
    %v1006 = vadd.f32 %v1004, %v1005
    %v1007 = vsel %vm940, %v700, 0.0
    %v1008 = vsel %vm940, %v702, 0.0
    %v1009 = vadd.f32 %v1007, %v1008
    %v1010 = vsel %vm940, %v704, 0.0
    %v1011 = vadd.f32 %v1009, %v1010
    %v1012 = vsel %vm940, %v706, 0.0
    %v1013 = vadd.f32 %v1011, %v1012
    %v1014 = vrot.slane %v1013, 4
    %v1015 = vadd.f32 %v1013, %v1014
    %v1016 = vrot.slane %v1015, 2
    %v1017 = vadd.f32 %v1015, %v1016
    %v1018 = vrot.slane %v1017, 1
    %v1019 = vadd.f32 %v1017, %v1018
    %v1020 = vadd.f32 %v707, %v709
    %v1021 = vadd.f32 %v1020, %v711
    %v1022 = vadd.f32 %v1021, %v713
    %v1023 = vrot.slane %v1022, 4
    %v1024 = vadd.f32 %v1022, %v1023
    %v1025 = vrot.slane %v1024, 2
    %v1026 = vadd.f32 %v1024, %v1025
    %v1027 = vrot.slane %v1026, 1
    %v1028 = vadd.f32 %v1026, %v1027
    %v1029 = vsel %vm940, %v708, 0.0
    %v1030 = vsel %vm940, %v710, 0.0
    %v1031 = vadd.f32 %v1029, %v1030
    %v1032 = vsel %vm940, %v712, 0.0
    %v1033 = vadd.f32 %v1031, %v1032
    %v1034 = vsel %vm940, %v714, 0.0
    %v1035 = vadd.f32 %v1033, %v1034
    %v1036 = vrot.slane %v1035, 4
    %v1037 = vadd.f32 %v1035, %v1036
    %v1038 = vrot.slane %v1037, 2
    %v1039 = vadd.f32 %v1037, %v1038
    %v1040 = vrot.slane %v1039, 1
    %v1041 = vadd.f32 %v1039, %v1040
    %v1042 = vadd.f32 %v715, %v717
    %v1043 = vadd.f32 %v1042, %v719
    %v1044 = vadd.f32 %v1043, %v721
    %v1045 = vrot.slane %v1044, 4
    %v1046 = vadd.f32 %v1044, %v1045
    %v1047 = vrot.slane %v1046, 2
    %v1048 = vadd.f32 %v1046, %v1047
    %v1049 = vrot.slane %v1048, 1
    %v1050 = vadd.f32 %v1048, %v1049
    %v1051 = vsel %vm940, %v716, 0.0
    %v1052 = vsel %vm940, %v718, 0.0
    %v1053 = vadd.f32 %v1051, %v1052
    %v1054 = vsel %vm940, %v720, 0.0
    %v1055 = vadd.f32 %v1053, %v1054
    %v1056 = vsel %vm940, %v722, 0.0
    %v1057 = vadd.f32 %v1055, %v1056
    %v1058 = vrot.slane %v1057, 4
    %v1059 = vadd.f32 %v1057, %v1058
    %v1060 = vrot.slane %v1059, 2
    %v1061 = vadd.f32 %v1059, %v1060
    %v1062 = vrot.slane %v1061, 1
    %v1063 = vadd.f32 %v1061, %v1062
    %v1064 = vadd.f32 %v723, %v725
    %v1065 = vadd.f32 %v1064, %v727
    %v1066 = vadd.f32 %v1065, %v729
    %v1067 = vrot.slane %v1066, 4
    %v1068 = vadd.f32 %v1066, %v1067
    %v1069 = vrot.slane %v1068, 2
    %v1070 = vadd.f32 %v1068, %v1069
    %v1071 = vrot.slane %v1070, 1
    %v1072 = vadd.f32 %v1070, %v1071
    %v1073 = vsel %vm940, %v724, 0.0
    %v1074 = vsel %vm940, %v726, 0.0
    %v1075 = vadd.f32 %v1073, %v1074
    %v1076 = vsel %vm940, %v728, 0.0
    %v1077 = vadd.f32 %v1075, %v1076
    %v1078 = vsel %vm940, %v730, 0.0
    %v1079 = vadd.f32 %v1077, %v1078
    %v1080 = vrot.slane %v1079, 4
    %v1081 = vadd.f32 %v1079, %v1080
    %v1082 = vrot.slane %v1081, 2
    %v1083 = vadd.f32 %v1081, %v1082
    %v1084 = vrot.slane %v1083, 1
    %v1085 = vadd.f32 %v1083, %v1084
    %v1086 = vadd.f32 %v731, %v733
    %v1087 = vadd.f32 %v1086, %v735
    %v1088 = vadd.f32 %v1087, %v737
    %v1089 = vrot.slane %v1088, 4
    %v1090 = vadd.f32 %v1088, %v1089
    %v1091 = vrot.slane %v1090, 2
    %v1092 = vadd.f32 %v1090, %v1091
    %v1093 = vrot.slane %v1092, 1
    %v1094 = vadd.f32 %v1092, %v1093
    %v1095 = vsel %vm940, %v732, 0.0
    %v1096 = vsel %vm940, %v734, 0.0
    %v1097 = vadd.f32 %v1095, %v1096
    %v1098 = vsel %vm940, %v736, 0.0
    %v1099 = vadd.f32 %v1097, %v1098
    %v1100 = vsel %vm940, %v738, 0.0
    %v1101 = vadd.f32 %v1099, %v1100
    %v1102 = vrot.slane %v1101, 4
    %v1103 = vadd.f32 %v1101, %v1102
    %v1104 = vrot.slane %v1103, 2
    %v1105 = vadd.f32 %v1103, %v1104
    %v1106 = vrot.slane %v1105, 1
    %v1107 = vadd.f32 %v1105, %v1106
    %v1108 = vadd.f32 %v739, %v741
    %v1109 = vadd.f32 %v1108, %v743
    %v1110 = vadd.f32 %v1109, %v745
    %v1111 = vrot.slane %v1110, 4
    %v1112 = vadd.f32 %v1110, %v1111
    %v1113 = vrot.slane %v1112, 2
    %v1114 = vadd.f32 %v1112, %v1113
    %v1115 = vrot.slane %v1114, 1
    %v1116 = vadd.f32 %v1114, %v1115
    %v1117 = vsel %vm940, %v740, 0.0
    %v1118 = vsel %vm940, %v742, 0.0
    %v1119 = vadd.f32 %v1117, %v1118
    %v1120 = vsel %vm940, %v744, 0.0
    %v1121 = vadd.f32 %v1119, %v1120
    %v1122 = vsel %vm940, %v746, 0.0
    %v1123 = vadd.f32 %v1121, %v1122
    %v1124 = vrot.slane %v1123, 4
    %v1125 = vadd.f32 %v1123, %v1124
    %v1126 = vrot.slane %v1125, 2
    %v1127 = vadd.f32 %v1125, %v1126
    %v1128 = vrot.slane %v1127, 1
    %v1129 = vadd.f32 %v1127, %v1128
    %v1130 = vadd.f32 %v747, %v749
    %v1131 = vadd.f32 %v1130, %v751
    %v1132 = vadd.f32 %v1131, %v753
    %v1133 = vrot.slane %v1132, 4
    %v1134 = vadd.f32 %v1132, %v1133
    %v1135 = vrot.slane %v1134, 2
    %v1136 = vadd.f32 %v1134, %v1135
    %v1137 = vrot.slane %v1136, 1
    %v1138 = vadd.f32 %v1136, %v1137
    %v1139 = vsel %vm940, %v748, 0.0
    %v1140 = vsel %vm940, %v750, 0.0
    %v1141 = vadd.f32 %v1139, %v1140
    %v1142 = vsel %vm940, %v752, 0.0
    %v1143 = vadd.f32 %v1141, %v1142
    %v1144 = vsel %vm940, %v754, 0.0
    %v1145 = vadd.f32 %v1143, %v1144
    %v1146 = vrot.slane %v1145, 4
    %v1147 = vadd.f32 %v1145, %v1146
    %v1148 = vrot.slane %v1147, 2
    %v1149 = vadd.f32 %v1147, %v1148
    %v1150 = vrot.slane %v1149, 1
    %v1151 = vadd.f32 %v1149, %v1150
    %v1152 = vadd.f32 %v755, %v757
    %v1153 = vadd.f32 %v1152, %v759
    %v1154 = vadd.f32 %v1153, %v761
    %v1155 = vrot.slane %v1154, 4
    %v1156 = vadd.f32 %v1154, %v1155
    %v1157 = vrot.slane %v1156, 2
    %v1158 = vadd.f32 %v1156, %v1157
    %v1159 = vrot.slane %v1158, 1
    %v1160 = vadd.f32 %v1158, %v1159
    %v1161 = vsel %vm940, %v756, 0.0
    %v1162 = vsel %vm940, %v758, 0.0
    %v1163 = vadd.f32 %v1161, %v1162
    %v1164 = vsel %vm940, %v760, 0.0
    %v1165 = vadd.f32 %v1163, %v1164
    %v1166 = vsel %vm940, %v762, 0.0
    %v1167 = vadd.f32 %v1165, %v1166
    %v1168 = vrot.slane %v1167, 4
    %v1169 = vadd.f32 %v1167, %v1168
    %v1170 = vrot.slane %v1169, 2
    %v1171 = vadd.f32 %v1169, %v1170
    %v1172 = vrot.slane %v1171, 1
    %v1173 = vadd.f32 %v1171, %v1172
    %v1174 = vadd.f32 %v763, %v765
    %v1175 = vadd.f32 %v1174, %v767
    %v1176 = vadd.f32 %v1175, %v769
    %v1177 = vrot.slane %v1176, 4
    %v1178 = vadd.f32 %v1176, %v1177
    %v1179 = vrot.slane %v1178, 2
    %v1180 = vadd.f32 %v1178, %v1179
    %v1181 = vrot.slane %v1180, 1
    %v1182 = vadd.f32 %v1180, %v1181
    %v1183 = vsel %vm940, %v764, 0.0
    %v1184 = vsel %vm940, %v766, 0.0
    %v1185 = vadd.f32 %v1183, %v1184
    %v1186 = vsel %vm940, %v768, 0.0
    %v1187 = vadd.f32 %v1185, %v1186
    %v1188 = vsel %vm940, %v770, 0.0
    %v1189 = vadd.f32 %v1187, %v1188
    %v1190 = vrot.slane %v1189, 4
    %v1191 = vadd.f32 %v1189, %v1190
    %v1192 = vrot.slane %v1191, 2
    %v1193 = vadd.f32 %v1191, %v1192
    %v1194 = vrot.slane %v1193, 1
    %v1195 = vadd.f32 %v1193, %v1194
    %v1196 = vadd.f32 %v771, %v773
    %v1197 = vadd.f32 %v1196, %v775
    %v1198 = vadd.f32 %v1197, %v777
    %v1199 = vrot.slane %v1198, 4
    %v1200 = vadd.f32 %v1198, %v1199
    %v1201 = vrot.slane %v1200, 2
    %v1202 = vadd.f32 %v1200, %v1201
    %v1203 = vrot.slane %v1202, 1
    %v1204 = vadd.f32 %v1202, %v1203
    %v1205 = vsel %vm940, %v772, 0.0
    %v1206 = vsel %vm940, %v774, 0.0
    %v1207 = vadd.f32 %v1205, %v1206
    %v1208 = vsel %vm940, %v776, 0.0
    %v1209 = vadd.f32 %v1207, %v1208
    %v1210 = vsel %vm940, %v778, 0.0
    %v1211 = vadd.f32 %v1209, %v1210
    %v1212 = vrot.slane %v1211, 4
    %v1213 = vadd.f32 %v1211, %v1212
    %v1214 = vrot.slane %v1213, 2
    %v1215 = vadd.f32 %v1213, %v1214
    %v1216 = vrot.slane %v1215, 1
    %v1217 = vadd.f32 %v1215, %v1216
    %v1218 = vadd.f32 %v779, %v781
    %v1219 = vadd.f32 %v1218, %v783
    %v1220 = vadd.f32 %v1219, %v785
    %v1221 = vrot.slane %v1220, 4
    %v1222 = vadd.f32 %v1220, %v1221
    %v1223 = vrot.slane %v1222, 2
    %v1224 = vadd.f32 %v1222, %v1223
    %v1225 = vrot.slane %v1224, 1
    %v1226 = vadd.f32 %v1224, %v1225
    %v1227 = vsel %vm940, %v780, 0.0
    %v1228 = vsel %vm940, %v782, 0.0
    %v1229 = vadd.f32 %v1227, %v1228
    %v1230 = vsel %vm940, %v784, 0.0
    %v1231 = vadd.f32 %v1229, %v1230
    %v1232 = vsel %vm940, %v786, 0.0
    %v1233 = vadd.f32 %v1231, %v1232
    %v1234 = vrot.slane %v1233, 4
    %v1235 = vadd.f32 %v1233, %v1234
    %v1236 = vrot.slane %v1235, 2
    %v1237 = vadd.f32 %v1235, %v1236
    %v1238 = vrot.slane %v1237, 1
    %v1239 = vadd.f32 %v1237, %v1238
    %v1240 = vadd.f32 %v787, %v789
    %v1241 = vadd.f32 %v1240, %v791
    %v1242 = vadd.f32 %v1241, %v793
    %v1243 = vrot.slane %v1242, 4
    %v1244 = vadd.f32 %v1242, %v1243
    %v1245 = vrot.slane %v1244, 2
    %v1246 = vadd.f32 %v1244, %v1245
    %v1247 = vrot.slane %v1246, 1
    %v1248 = vadd.f32 %v1246, %v1247
    %v1249 = vsel %vm940, %v788, 0.0
    %v1250 = vsel %vm940, %v790, 0.0
    %v1251 = vadd.f32 %v1249, %v1250
    %v1252 = vsel %vm940, %v792, 0.0
    %v1253 = vadd.f32 %v1251, %v1252
    %v1254 = vsel %vm940, %v794, 0.0
    %v1255 = vadd.f32 %v1253, %v1254
    %v1256 = vrot.slane %v1255, 4
    %v1257 = vadd.f32 %v1255, %v1256
    %v1258 = vrot.slane %v1257, 2
    %v1259 = vadd.f32 %v1257, %v1258
    %v1260 = vrot.slane %v1259, 1
    %v1261 = vadd.f32 %v1259, %v1260
    %v1262 = vadd.f32 %v795, %v797
    %v1263 = vadd.f32 %v1262, %v799
    %v1264 = vadd.f32 %v1263, %v801
    %v1265 = vrot.slane %v1264, 4
    %v1266 = vadd.f32 %v1264, %v1265
    %v1267 = vrot.slane %v1266, 2
    %v1268 = vadd.f32 %v1266, %v1267
    %v1269 = vrot.slane %v1268, 1
    %v1270 = vadd.f32 %v1268, %v1269
    %v1271 = vsel %vm940, %v796, 0.0
    %v1272 = vsel %vm940, %v798, 0.0
    %v1273 = vadd.f32 %v1271, %v1272
    %v1274 = vsel %vm940, %v800, 0.0
    %v1275 = vadd.f32 %v1273, %v1274
    %v1276 = vsel %vm940, %v802, 0.0
    %v1277 = vadd.f32 %v1275, %v1276
    %v1278 = vrot.slane %v1277, 4
    %v1279 = vadd.f32 %v1277, %v1278
    %v1280 = vrot.slane %v1279, 2
    %v1281 = vadd.f32 %v1279, %v1280
    %v1282 = vrot.slane %v1281, 1
    %v1283 = vadd.f32 %v1281, %v1282
    %v1284 = vadd.f32 %v803, %v805
    %v1285 = vadd.f32 %v1284, %v807
    %v1286 = vadd.f32 %v1285, %v809
    %v1287 = vrot.slane %v1286, 4
    %v1288 = vadd.f32 %v1286, %v1287
    %v1289 = vrot.slane %v1288, 2
    %v1290 = vadd.f32 %v1288, %v1289
    %v1291 = vrot.slane %v1290, 1
    %v1292 = vadd.f32 %v1290, %v1291
    %v1293 = vsel %vm940, %v804, 0.0
    %v1294 = vsel %vm940, %v806, 0.0
    %v1295 = vadd.f32 %v1293, %v1294
    %v1296 = vsel %vm940, %v808, 0.0
    %v1297 = vadd.f32 %v1295, %v1296
    %v1298 = vsel %vm940, %v810, 0.0
    %v1299 = vadd.f32 %v1297, %v1298
    %v1300 = vrot.slane %v1299, 4
    %v1301 = vadd.f32 %v1299, %v1300
    %v1302 = vrot.slane %v1301, 2
    %v1303 = vadd.f32 %v1301, %v1302
    %v1304 = vrot.slane %v1303, 1
    %v1305 = vadd.f32 %v1303, %v1304
    %v1306 = vadd.f32 %v811, %v813
    %v1307 = vadd.f32 %v1306, %v815
    %v1308 = vadd.f32 %v1307, %v817
    %v1309 = vrot.slane %v1308, 4
    %v1310 = vadd.f32 %v1308, %v1309
    %v1311 = vrot.slane %v1310, 2
    %v1312 = vadd.f32 %v1310, %v1311
    %v1313 = vrot.slane %v1312, 1
    %v1314 = vadd.f32 %v1312, %v1313
    %v1315 = vsel %vm940, %v812, 0.0
    %v1316 = vsel %vm940, %v814, 0.0
    %v1317 = vadd.f32 %v1315, %v1316
    %v1318 = vsel %vm940, %v816, 0.0
    %v1319 = vadd.f32 %v1317, %v1318
    %v1320 = vsel %vm940, %v818, 0.0
    %v1321 = vadd.f32 %v1319, %v1320
    %v1322 = vrot.slane %v1321, 4
    %v1323 = vadd.f32 %v1321, %v1322
    %v1324 = vrot.slane %v1323, 2
    %v1325 = vadd.f32 %v1323, %v1324
    %v1326 = vrot.slane %v1325, 1
    %v1327 = vadd.f32 %v1325, %v1326
    %v1328 = vadd.f32 %v819, %v821
    %v1329 = vadd.f32 %v1328, %v823
    %v1330 = vadd.f32 %v1329, %v825
    %v1331 = vrot.slane %v1330, 4
    %v1332 = vadd.f32 %v1330, %v1331
    %v1333 = vrot.slane %v1332, 2
    %v1334 = vadd.f32 %v1332, %v1333
    %v1335 = vrot.slane %v1334, 1
    %v1336 = vadd.f32 %v1334, %v1335
    %v1337 = vsel %vm940, %v820, 0.0
    %v1338 = vsel %vm940, %v822, 0.0
    %v1339 = vadd.f32 %v1337, %v1338
    %v1340 = vsel %vm940, %v824, 0.0
    %v1341 = vadd.f32 %v1339, %v1340
    %v1342 = vsel %vm940, %v826, 0.0
    %v1343 = vadd.f32 %v1341, %v1342
    %v1344 = vrot.slane %v1343, 4
    %v1345 = vadd.f32 %v1343, %v1344
    %v1346 = vrot.slane %v1345, 2
    %v1347 = vadd.f32 %v1345, %v1346
    %v1348 = vrot.slane %v1347, 1
    %v1349 = vadd.f32 %v1347, %v1348
    %v1350 = vadd.f32 %v827, %v829
    %v1351 = vadd.f32 %v1350, %v831
    %v1352 = vadd.f32 %v1351, %v833
    %v1353 = vrot.slane %v1352, 4
    %v1354 = vadd.f32 %v1352, %v1353
    %v1355 = vrot.slane %v1354, 2
    %v1356 = vadd.f32 %v1354, %v1355
    %v1357 = vrot.slane %v1356, 1
    %v1358 = vadd.f32 %v1356, %v1357
    %v1359 = vsel %vm940, %v828, 0.0
    %v1360 = vsel %vm940, %v830, 0.0
    %v1361 = vadd.f32 %v1359, %v1360
    %v1362 = vsel %vm940, %v832, 0.0
    %v1363 = vadd.f32 %v1361, %v1362
    %v1364 = vsel %vm940, %v834, 0.0
    %v1365 = vadd.f32 %v1363, %v1364
    %v1366 = vrot.slane %v1365, 4
    %v1367 = vadd.f32 %v1365, %v1366
    %v1368 = vrot.slane %v1367, 2
    %v1369 = vadd.f32 %v1367, %v1368
    %v1370 = vrot.slane %v1369, 1
    %v1371 = vadd.f32 %v1369, %v1370
    %v1372 = vadd.f32 %v835, %v837
    %v1373 = vadd.f32 %v1372, %v839
    %v1374 = vadd.f32 %v1373, %v841
    %v1375 = vrot.slane %v1374, 4
    %v1376 = vadd.f32 %v1374, %v1375
    %v1377 = vrot.slane %v1376, 2
    %v1378 = vadd.f32 %v1376, %v1377
    %v1379 = vrot.slane %v1378, 1
    %v1380 = vadd.f32 %v1378, %v1379
    %v1381 = vsel %vm940, %v836, 0.0
    %v1382 = vsel %vm940, %v838, 0.0
    %v1383 = vadd.f32 %v1381, %v1382
    %v1384 = vsel %vm940, %v840, 0.0
    %v1385 = vadd.f32 %v1383, %v1384
    %v1386 = vsel %vm940, %v842, 0.0
    %v1387 = vadd.f32 %v1385, %v1386
    %v1388 = vrot.slane %v1387, 4
    %v1389 = vadd.f32 %v1387, %v1388
    %v1390 = vrot.slane %v1389, 2
    %v1391 = vadd.f32 %v1389, %v1390
    %v1392 = vrot.slane %v1391, 1
    %v1393 = vadd.f32 %v1391, %v1392
    %v1394 = vadd.f32 %v843, %v845
    %v1395 = vadd.f32 %v1394, %v847
    %v1396 = vadd.f32 %v1395, %v849
    %v1397 = vrot.slane %v1396, 4
    %v1398 = vadd.f32 %v1396, %v1397
    %v1399 = vrot.slane %v1398, 2
    %v1400 = vadd.f32 %v1398, %v1399
    %v1401 = vrot.slane %v1400, 1
    %v1402 = vadd.f32 %v1400, %v1401
    %v1403 = vsel %vm940, %v844, 0.0
    %v1404 = vsel %vm940, %v846, 0.0
    %v1405 = vadd.f32 %v1403, %v1404
    %v1406 = vsel %vm940, %v848, 0.0
    %v1407 = vadd.f32 %v1405, %v1406
    %v1408 = vsel %vm940, %v850, 0.0
    %v1409 = vadd.f32 %v1407, %v1408
    %v1410 = vrot.slane %v1409, 4
    %v1411 = vadd.f32 %v1409, %v1410
    %v1412 = vrot.slane %v1411, 2
    %v1413 = vadd.f32 %v1411, %v1412
    %v1414 = vrot.slane %v1413, 1
    %v1415 = vadd.f32 %v1413, %v1414
    %v1416 = vadd.f32 %v851, %v853
    %v1417 = vadd.f32 %v1416, %v855
    %v1418 = vadd.f32 %v1417, %v857
    %v1419 = vrot.slane %v1418, 4
    %v1420 = vadd.f32 %v1418, %v1419
    %v1421 = vrot.slane %v1420, 2
    %v1422 = vadd.f32 %v1420, %v1421
    %v1423 = vrot.slane %v1422, 1
    %v1424 = vadd.f32 %v1422, %v1423
    %v1425 = vsel %vm940, %v852, 0.0
    %v1426 = vsel %vm940, %v854, 0.0
    %v1427 = vadd.f32 %v1425, %v1426
    %v1428 = vsel %vm940, %v856, 0.0
    %v1429 = vadd.f32 %v1427, %v1428
    %v1430 = vsel %vm940, %v858, 0.0
    %v1431 = vadd.f32 %v1429, %v1430
    %v1432 = vrot.slane %v1431, 4
    %v1433 = vadd.f32 %v1431, %v1432
    %v1434 = vrot.slane %v1433, 2
    %v1435 = vadd.f32 %v1433, %v1434
    %v1436 = vrot.slane %v1435, 1
    %v1437 = vadd.f32 %v1435, %v1436
    %v1438 = vadd.f32 %v859, %v861
    %v1439 = vadd.f32 %v1438, %v863
    %v1440 = vadd.f32 %v1439, %v865
    %v1441 = vrot.slane %v1440, 4
    %v1442 = vadd.f32 %v1440, %v1441
    %v1443 = vrot.slane %v1442, 2
    %v1444 = vadd.f32 %v1442, %v1443
    %v1445 = vrot.slane %v1444, 1
    %v1446 = vadd.f32 %v1444, %v1445
    %v1447 = vsel %vm940, %v860, 0.0
    %v1448 = vsel %vm940, %v862, 0.0
    %v1449 = vadd.f32 %v1447, %v1448
    %v1450 = vsel %vm940, %v864, 0.0
    %v1451 = vadd.f32 %v1449, %v1450
    %v1452 = vsel %vm940, %v866, 0.0
    %v1453 = vadd.f32 %v1451, %v1452
    %v1454 = vrot.slane %v1453, 4
    %v1455 = vadd.f32 %v1453, %v1454
    %v1456 = vrot.slane %v1455, 2
    %v1457 = vadd.f32 %v1455, %v1456
    %v1458 = vrot.slane %v1457, 1
    %v1459 = vadd.f32 %v1457, %v1458
    %v1460 = vadd.f32 %v867, %v869
    %v1461 = vadd.f32 %v1460, %v871
    %v1462 = vadd.f32 %v1461, %v873
    %v1463 = vrot.slane %v1462, 4
    %v1464 = vadd.f32 %v1462, %v1463
    %v1465 = vrot.slane %v1464, 2
    %v1466 = vadd.f32 %v1464, %v1465
    %v1467 = vrot.slane %v1466, 1
    %v1468 = vadd.f32 %v1466, %v1467
    %v1469 = vsel %vm940, %v868, 0.0
    %v1470 = vsel %vm940, %v870, 0.0
    %v1471 = vadd.f32 %v1469, %v1470
    %v1472 = vsel %vm940, %v872, 0.0
    %v1473 = vadd.f32 %v1471, %v1472
    %v1474 = vsel %vm940, %v874, 0.0
    %v1475 = vadd.f32 %v1473, %v1474
    %v1476 = vrot.slane %v1475, 4
    %v1477 = vadd.f32 %v1475, %v1476
    %v1478 = vrot.slane %v1477, 2
    %v1479 = vadd.f32 %v1477, %v1478
    %v1480 = vrot.slane %v1479, 1
    %v1481 = vadd.f32 %v1479, %v1480
    %v1482 = vadd.f32 %v875, %v877
    %v1483 = vadd.f32 %v1482, %v879
    %v1484 = vadd.f32 %v1483, %v881
    %v1485 = vrot.slane %v1484, 4
    %v1486 = vadd.f32 %v1484, %v1485
    %v1487 = vrot.slane %v1486, 2
    %v1488 = vadd.f32 %v1486, %v1487
    %v1489 = vrot.slane %v1488, 1
    %v1490 = vadd.f32 %v1488, %v1489
    %v1491 = vsel %vm940, %v876, 0.0
    %v1492 = vsel %vm940, %v878, 0.0
    %v1493 = vadd.f32 %v1491, %v1492
    %v1494 = vsel %vm940, %v880, 0.0
    %v1495 = vadd.f32 %v1493, %v1494
    %v1496 = vsel %vm940, %v882, 0.0
    %v1497 = vadd.f32 %v1495, %v1496
    %v1498 = vrot.slane %v1497, 4
    %v1499 = vadd.f32 %v1497, %v1498
    %v1500 = vrot.slane %v1499, 2
    %v1501 = vadd.f32 %v1499, %v1500
    %v1502 = vrot.slane %v1501, 1
    %v1503 = vadd.f32 %v1501, %v1502
    %v1504 = vadd.f32 %v883, %v885
    %v1505 = vadd.f32 %v1504, %v887
    %v1506 = vadd.f32 %v1505, %v889
    %v1507 = vrot.slane %v1506, 4
    %v1508 = vadd.f32 %v1506, %v1507
    %v1509 = vrot.slane %v1508, 2
    %v1510 = vadd.f32 %v1508, %v1509
    %v1511 = vrot.slane %v1510, 1
    %v1512 = vadd.f32 %v1510, %v1511
    %v1513 = vsel %vm940, %v884, 0.0
    %v1514 = vsel %vm940, %v886, 0.0
    %v1515 = vadd.f32 %v1513, %v1514
    %v1516 = vsel %vm940, %v888, 0.0
    %v1517 = vadd.f32 %v1515, %v1516
    %v1518 = vsel %vm940, %v890, 0.0
    %v1519 = vadd.f32 %v1517, %v1518
    %v1520 = vrot.slane %v1519, 4
    %v1521 = vadd.f32 %v1519, %v1520
    %v1522 = vrot.slane %v1521, 2
    %v1523 = vadd.f32 %v1521, %v1522
    %v1524 = vrot.slane %v1523, 1
    %v1525 = vadd.f32 %v1523, %v1524
    %v1526 = vadd.f32 %v891, %v893
    %v1527 = vadd.f32 %v1526, %v895
    %v1528 = vadd.f32 %v1527, %v897
    %v1529 = vrot.slane %v1528, 4
    %v1530 = vadd.f32 %v1528, %v1529
    %v1531 = vrot.slane %v1530, 2
    %v1532 = vadd.f32 %v1530, %v1531
    %v1533 = vrot.slane %v1532, 1
    %v1534 = vadd.f32 %v1532, %v1533
    %v1535 = vsel %vm940, %v892, 0.0
    %v1536 = vsel %vm940, %v894, 0.0
    %v1537 = vadd.f32 %v1535, %v1536
    %v1538 = vsel %vm940, %v896, 0.0
    %v1539 = vadd.f32 %v1537, %v1538
    %v1540 = vsel %vm940, %v898, 0.0
    %v1541 = vadd.f32 %v1539, %v1540
    %v1542 = vrot.slane %v1541, 4
    %v1543 = vadd.f32 %v1541, %v1542
    %v1544 = vrot.slane %v1543, 2
    %v1545 = vadd.f32 %v1543, %v1544
    %v1546 = vrot.slane %v1545, 1
    %v1547 = vadd.f32 %v1545, %v1546
    %v1548 = vadd.f32 %v899, %v901
    %v1549 = vadd.f32 %v1548, %v903
    %v1550 = vadd.f32 %v1549, %v905
    %v1551 = vrot.slane %v1550, 4
    %v1552 = vadd.f32 %v1550, %v1551
    %v1553 = vrot.slane %v1552, 2
    %v1554 = vadd.f32 %v1552, %v1553
    %v1555 = vrot.slane %v1554, 1
    %v1556 = vadd.f32 %v1554, %v1555
    %v1557 = vsel %vm940, %v900, 0.0
    %v1558 = vsel %vm940, %v902, 0.0
    %v1559 = vadd.f32 %v1557, %v1558
    %v1560 = vsel %vm940, %v904, 0.0
    %v1561 = vadd.f32 %v1559, %v1560
    %v1562 = vsel %vm940, %v906, 0.0
    %v1563 = vadd.f32 %v1561, %v1562
    %v1564 = vrot.slane %v1563, 4
    %v1565 = vadd.f32 %v1563, %v1564
    %v1566 = vrot.slane %v1565, 2
    %v1567 = vadd.f32 %v1565, %v1566
    %v1568 = vrot.slane %v1567, 1
    %v1569 = vadd.f32 %v1567, %v1568
    %v1570 = vadd.f32 %v907, %v909
    %v1571 = vadd.f32 %v1570, %v911
    %v1572 = vadd.f32 %v1571, %v913
    %v1573 = vrot.slane %v1572, 4
    %v1574 = vadd.f32 %v1572, %v1573
    %v1575 = vrot.slane %v1574, 2
    %v1576 = vadd.f32 %v1574, %v1575
    %v1577 = vrot.slane %v1576, 1
    %v1578 = vadd.f32 %v1576, %v1577
    %v1579 = vsel %vm940, %v908, 0.0
    %v1580 = vsel %vm940, %v910, 0.0
    %v1581 = vadd.f32 %v1579, %v1580
    %v1582 = vsel %vm940, %v912, 0.0
    %v1583 = vadd.f32 %v1581, %v1582
    %v1584 = vsel %vm940, %v914, 0.0
    %v1585 = vadd.f32 %v1583, %v1584
    %v1586 = vrot.slane %v1585, 4
    %v1587 = vadd.f32 %v1585, %v1586
    %v1588 = vrot.slane %v1587, 2
    %v1589 = vadd.f32 %v1587, %v1588
    %v1590 = vrot.slane %v1589, 1
    %v1591 = vadd.f32 %v1589, %v1590
    %v1592 = vadd.f32 %v915, %v917
    %v1593 = vadd.f32 %v1592, %v919
    %v1594 = vadd.f32 %v1593, %v921
    %v1595 = vrot.slane %v1594, 4
    %v1596 = vadd.f32 %v1594, %v1595
    %v1597 = vrot.slane %v1596, 2
    %v1598 = vadd.f32 %v1596, %v1597
    %v1599 = vrot.slane %v1598, 1
    %v1600 = vadd.f32 %v1598, %v1599
    %v1601 = vsel %vm940, %v916, 0.0
    %v1602 = vsel %vm940, %v918, 0.0
    %v1603 = vadd.f32 %v1601, %v1602
    %v1604 = vsel %vm940, %v920, 0.0
    %v1605 = vadd.f32 %v1603, %v1604
    %v1606 = vsel %vm940, %v922, 0.0
    %v1607 = vadd.f32 %v1605, %v1606
    %v1608 = vrot.slane %v1607, 4
    %v1609 = vadd.f32 %v1607, %v1608
    %v1610 = vrot.slane %v1609, 2
    %v1611 = vadd.f32 %v1609, %v1610
    %v1612 = vrot.slane %v1611, 1
    %v1613 = vadd.f32 %v1611, %v1612
    %v1614 = vadd.f32 %v923, %v925
    %v1615 = vadd.f32 %v1614, %v927
    %v1616 = vadd.f32 %v1615, %v929
    %v1617 = vrot.slane %v1616, 4
    %v1618 = vadd.f32 %v1616, %v1617
    %v1619 = vrot.slane %v1618, 2
    %v1620 = vadd.f32 %v1618, %v1619
    %v1621 = vrot.slane %v1620, 1
    %v1622 = vadd.f32 %v1620, %v1621
    %v1623 = vsel %vm940, %v924, 0.0
    %v1624 = vsel %vm940, %v926, 0.0
    %v1625 = vadd.f32 %v1623, %v1624
    %v1626 = vsel %vm940, %v928, 0.0
    %v1627 = vadd.f32 %v1625, %v1626
    %v1628 = vsel %vm940, %v930, 0.0
    %v1629 = vadd.f32 %v1627, %v1628
    %v1630 = vrot.slane %v1629, 4
    %v1631 = vadd.f32 %v1629, %v1630
    %v1632 = vrot.slane %v1631, 2
    %v1633 = vadd.f32 %v1631, %v1632
    %v1634 = vrot.slane %v1633, 1
    %v1635 = vadd.f32 %v1633, %v1634
    %v1636 = vld [vmem:[#allocation7] sm:$0xff]
    %v1637 = vld [vmem:[#allocation7 + $0x8] sm:$0xff]
    %v1638 = vld [vmem:[#allocation7 + $0x10] sm:$0xff]
    %v1639 = vld [vmem:[#allocation7 + $0x18] sm:$0xff]
    %vm1704 = vcmask 1041409
    %v1705 = vsel %vm1704, %v962, %v939
    %vm1706 = vcmask 1042434
    %v1707 = vsel %vm1706, %v984, %v1705
    %vm1708 = vcmask 1043459
    %v1709 = vsel %vm1708, %v1006, %v1707
    %vm1710 = vcmask 1044484
    %v1711 = vsel %vm1710, %v1028, %v1709
    %vm1712 = vcmask 1045509
    %v1713 = vsel %vm1712, %v1050, %v1711
    %vm1714 = vcmask 1046534
    %v1715 = vsel %vm1714, %v1072, %v1713
    %vm1716 = vcmask 1047559
    %v1717 = vsel %vm1716, %v1094, %v1715
    %v1718 = vsel %vm1704, %v975, %v953
    %v1719 = vsel %vm1706, %v997, %v1718
    %v1720 = vsel %vm1708, %v1019, %v1719
    %v1721 = vsel %vm1710, %v1041, %v1720
    %v1722 = vsel %vm1712, %v1063, %v1721
    %v1723 = vsel %vm1714, %v1085, %v1722
    %v1724 = vsel %vm1716, %v1107, %v1723
    %v1725 = vsel %vm1704, %v1138, %v1116
    %v1726 = vsel %vm1706, %v1160, %v1725
    %v1727 = vsel %vm1708, %v1182, %v1726
    %v1728 = vsel %vm1710, %v1204, %v1727
    %v1729 = vsel %vm1712, %v1226, %v1728
    %v1730 = vsel %vm1714, %v1248, %v1729
    %v1731 = vsel %vm1716, %v1270, %v1730
    %v1732 = vsel %vm1704, %v1151, %v1129
    %v1733 = vsel %vm1706, %v1173, %v1732
    %v1734 = vsel %vm1708, %v1195, %v1733
    %v1735 = vsel %vm1710, %v1217, %v1734
    %v1736 = vsel %vm1712, %v1239, %v1735
    %v1737 = vsel %vm1714, %v1261, %v1736
    %v1738 = vsel %vm1716, %v1283, %v1737
    %v1739 = vsel %vm1704, %v1314, %v1292
    %v1740 = vsel %vm1706, %v1336, %v1739
    %v1741 = vsel %vm1708, %v1358, %v1740
    %v1742 = vsel %vm1710, %v1380, %v1741
    %v1743 = vsel %vm1712, %v1402, %v1742
    %v1744 = vsel %vm1714, %v1424, %v1743
    %v1745 = vsel %vm1716, %v1446, %v1744
    %v1746 = vsel %vm1704, %v1327, %v1305
    %v1747 = vsel %vm1706, %v1349, %v1746
    %v1748 = vsel %vm1708, %v1371, %v1747
    %v1749 = vsel %vm1710, %v1393, %v1748
    %v1750 = vsel %vm1712, %v1415, %v1749
    %v1751 = vsel %vm1714, %v1437, %v1750
    %v1752 = vsel %vm1716, %v1459, %v1751
    %v1753 = vsel %vm1704, %v1490, %v1468
    %v1754 = vsel %vm1706, %v1512, %v1753
    %v1755 = vsel %vm1708, %v1534, %v1754
    %v1756 = vsel %vm1710, %v1556, %v1755
    %v1757 = vsel %vm1712, %v1578, %v1756
    %v1758 = vsel %vm1714, %v1600, %v1757
    %v1759 = vsel %vm1716, %v1622, %v1758
    %v1760 = vsel %vm1704, %v1503, %v1481
    %v1761 = vsel %vm1706, %v1525, %v1760
    %v1762 = vsel %vm1708, %v1547, %v1761
    %v1763 = vsel %vm1710, %v1569, %v1762
    %v1764 = vsel %vm1712, %v1591, %v1763
    %v1765 = vsel %vm1714, %v1613, %v1764
    %v1766 = vsel %vm1716, %v1635, %v1765
    %1779 = vrot.lane.b32.xlu0 %v1636, 64
    %v1780 = vpop.permute.xlu0 %1779
    %1781 = vrot.lane.b32.xlu0 %v1637, 64
    %v1782 = vpop.permute.xlu0 %1781
    %1783 = vrot.lane.b32.xlu0 %v1638, 64
    %v1784 = vpop.permute.xlu0 %1783
    %1785 = vrot.lane.b32.xlu0 %v1639, 64
    %v1786 = vpop.permute.xlu0 %1785
    %v1791 = vsel %vm940, %v1724, %v1780
    %v1792 = vsel %vm940, %v1738, %v1782
    %v1793 = vsel %vm940, %v1752, %v1784
    %v1794 = vsel %vm940, %v1766, %v1786
    %vm1795 = vcmask 785408
    %v1797 = vsel %vm1795, %v1791, 0
    %v1800 = vsel %vm1795, %v1792, 0
    %v1803 = vsel %vm1795, %v1793, 0
    %v1806 = vsel %vm1795, %v1794, 0
    %1808 = vmatprep.subr.mxu0 %v202
    %1809 = vmatpush1.msra.mxu0 %v201
    %1810 = vmatprep.subr.mxu0 %v204
    %1811 = vmatpush1.msra.mxu0 %v203
    %1812 = vmatprep.subr.mxu0 %v206
    %1813 = vmatpush1.msra.mxu0 %v205
    %1814 = vmatprep.subr.mxu0 %v208
    %1815 = vmatpush1.msra.mxu0 %v207
    %1816 = vmatprep.subr.mxu0 %v210
    %1817 = vmatpush1.msra.mxu0 %v209
    %1818 = vmatprep.subr.mxu0 %v212
    %1819 = vmatpush1.msra.mxu0 %v211
    %1820 = vmatprep.subr.mxu0 %v214
    %1821 = vmatpush1.msra.mxu0 %v213
    %1822 = vmatprep.subr.mxu0 %v216
    %1823 = vmatpush1.msra.mxu0 %v215
    %1824 = vmatprep.subr.mxu0 %v218
    %1825 = vmatpush1.msra.mxu0 %v217
    %1826 = vmatprep.subr.mxu0 %v220
    %1827 = vmatpush1.msra.mxu0 %v219
    %1828 = vmatprep.subr.mxu0 %v222
    %1829 = vmatpush1.msra.mxu0 %v221
    %1830 = vmatprep.subr.mxu0 %v224
    %1831 = vmatpush1.msra.mxu0 %v223
    %1832 = vmatprep.subr.mxu0 %v226
    %1833 = vmatpush1.msra.mxu0 %v225
    %1834 = vmatprep.subr.mxu0 %v228
    %1835 = vmatpush1.msra.mxu0 %v227
    %1836 = vmatprep.subr.mxu0 %v230
    %1837 = vmatpush1.msra.mxu0 %v229
    %1838 = vmatprep.subr.mxu0 %v232
    %1839 = vmatpush1.msra.mxu0 %v231
    %1840 = vmatprep.subr.mxu0 %v234
    %1841 = vmatpush1.msra.mxu0 %v233
    %1842 = vmatprep.subr.mxu0 %v236
    %1843 = vmatpush1.msra.mxu0 %v235
    %1844 = vmatprep.subr.mxu0 %v238
    %1845 = vmatpush1.msra.mxu0 %v237
    %1846 = vmatprep.subr.mxu0 %v240
    %1847 = vmatpush1.msra.mxu0 %v239
    %1848 = vmatprep.subr.mxu0 %v242
    %1849 = vmatpush1.msra.mxu0 %v241
    %1850 = vmatprep.subr.mxu0 %v244
    %1851 = vmatpush1.msra.mxu0 %v243
    %1852 = vmatprep.subr.mxu0 %v246
    %1853 = vmatpush1.msra.mxu0 %v245
    %1854 = vmatprep.subr.mxu0 %v248
    %1855 = vmatpush1.msra.mxu0 %v247
    %1856 = vmatprep.subr.mxu0 %v283
    %1857 = vmatpush1.msra.mxu0 %v282
    %1858 = vmatprep.subr.mxu0 %v285
    %1859 = vmatpush1.msra.mxu0 %v284
    %1860 = vmatprep.subr.mxu0 %v287
    %1861 = vmatpush1.msra.mxu0 %v286
    %1862 = vmatprep.subr.mxu0 %v289
    %1863 = vmatpush1.msra.mxu0 %v288
    %1864 = vmatprep.subr.mxu0 0.0
    %1865 = vmatpush1.msra.mxu0 0.0
    %1866 = vmatprep.subr.mxu0 0.0
    %1867 = vmatpush1.msra.mxu0 0.0
    %1868 = vmatprep.subr.mxu0 0.0
    %1869 = vmatpush1.msra.mxu0 0.0
    %1870 = vmatprep.subr.mxu0 0.0
    %1871 = vmatpush1.msra.mxu0 0.0
    %1872 = vmatprep.mubr.f32.mxu0 %v1797
    %1873 = vmatmul.mubr.f32.gmra.mrb[0].mxu0 %v1717
    %v1874 = vpop.f32.mrb[0].mxu0
    %v1875 = vadd.f32 0.0, %v1874
    %v1876 = vpop.f32.mrb[0].mxu0
    %v1877 = vadd.f32 0.0, %v1876
    %1878 = vmatprep.mubr.f32.mxu0 %v1800
    %1879 = vmatmul.mubr.f32.gmra.mrb[0].mxu0 %v1731
    %v1880 = vpop.f32.mrb[0].mxu0
    %v1881 = vadd.f32 0.0, %v1880
    %v1882 = vpop.f32.mrb[0].mxu0
    %v1883 = vadd.f32 0.0, %v1882
    %1884 = vmatprep.mubr.f32.mxu0 %v1803
    %1885 = vmatmul.mubr.f32.gmra.mrb[0].mxu0 %v1745
    %v1886 = vpop.f32.mrb[0].mxu0
    %v1887 = vadd.f32 0.0, %v1886
    %v1888 = vpop.f32.mrb[0].mxu0
    %v1889 = vadd.f32 0.0, %v1888
    %1890 = vmatprep.mubr.f32.mxu0 %v1806
    %1891 = vmatmul.mubr.f32.gmra.mrb[0].mxu0 %v1759
    %v1892 = vpop.f32.mrb[0].mxu0
    %v1893 = vadd.f32 0.0, %v1892
    %v1894 = vpop.f32.mrb[0].mxu0
    %v1895 = vadd.f32 0.0, %v1894
    %1896 = vdwg.mxu0
    %v1897 = vmul.f32 %v1875, 0.5
    %v1898 = vmul.f32 %v1877, 0.5
    %v1899 = vmul.f32 %v1881, 0.5
    %v1900 = vmul.f32 %v1883, 0.5
    %v1901 = vmul.f32 %v1887, 0.5
    %v1902 = vmul.f32 %v1889, 0.5
    %v1903 = vmul.f32 %v1893, 0.5
    %v1904 = vmul.f32 %v1895, 0.5
    %v1905 = vmul.f32 %v1875, %v257
    %v1906 = vmul.f32 %v1877, %v257
    %v1907 = vmul.f32 %v1881, %v257
    %v1908 = vmul.f32 %v1883, %v257
    %v1909 = vmul.f32 %v1887, %v257
    %v1910 = vmul.f32 %v1889, %v257
    %v1911 = vmul.f32 %v1893, %v257
    %v1912 = vmul.f32 %v1895, %v257
    %v1913 = verf.f32.pop %v1905
    %v1914 = verf.f32.pop %v1906
    %v1915 = verf.f32.pop %v1907
    %v1916 = verf.f32.pop %v1908
    %v1917 = verf.f32.pop %v1909
    %v1918 = verf.f32.pop %v1910
    %v1919 = verf.f32.pop %v1911
    %v1920 = verf.f32.pop %v1912
    %v1921 = vadd.f32 %v1913, 1.0
    %v1922 = vadd.f32 %v1914, 1.0
    %v1923 = vadd.f32 %v1915, 1.0
    %v1924 = vadd.f32 %v1916, 1.0
    %v1925 = vadd.f32 %v1917, 1.0
    %v1926 = vadd.f32 %v1918, 1.0
    %v1927 = vadd.f32 %v1919, 1.0
    %v1928 = vadd.f32 %v1920, 1.0
    %v1929 = vmul.f32 %v1897, %v1921
    %v1930 = vmul.f32 %v1898, %v1922
    %v1931 = vmul.f32 %v1899, %v1923
    %v1932 = vmul.f32 %v1900, %v1924
    %v1933 = vmul.f32 %v1901, %v1925
    %v1934 = vmul.f32 %v1902, %v1926
    %v1935 = vmul.f32 %v1903, %v1927
    %v1936 = vmul.f32 %v1904, %v1928
    %v1937 = vld [vmem:[#allocation8] sm:$0xf]
    %v1938 = vld [vmem:[#allocation8 + $0x4] sm:$0xf]
    %v1939 = vpack.c.bf16 %v1931, %v1929
    %v1940 = vpack.c.bf16 %v1932, %v1930
    %v1941 = vpack.c.bf16 %v1935, %v1933
    %v1942 = vpack.c.bf16 %v1936, %v1934
    %v1943 = vld [vmem:[%s7] sm:$0xff]
    %v1944 = vld [vmem:[%s7 + $0x8] sm:$0xff]
    %1946 = vset.pattern.permute.xlu0 0
    %1947 = vperm.xlu0 %1946, %v1943
    %v1948 = vpop.permute.xlu0 %1947
    %1951 = vset.pattern.permute.xlu0 0
    %1952 = vperm.xlu0 %1951, %v1944
    %v1953 = vpop.permute.xlu0 %1952
    %v1957 = vunpack.c.l.b16 %v1937
    %v1958 = vunpack.c.l.b16 %v1938
    %v1959 = vpack.c.b16 %v1958, %v1957
    %vm1960 = vcmask 261120
    %v1962 = vsel %vm1960, %v1959, 0
    %1964 = vmatprep.subr.bf16.mxu0 %v1940
    %1965 = vmatpush1.bf16.msra.mxu0 %v1939
    %1966 = vmatprep.subr.bf16.mxu0 %v1942
    %1967 = vmatpush1.bf16.msra.mxu0 %v1941
    %1968 = vmatprep.subr.bf16.mxu0 0
    %1969 = vmatpush1.bf16.msra.mxu0 0
    %1970 = vmatprep.subr.bf16.mxu0 0
    %1971 = vmatpush1.bf16.msra.mxu0 0
    %1972 = vmatprep.subr.bf16.mxu0 0
    %1973 = vmatpush1.bf16.msra.mxu0 0
    %1974 = vmatprep.subr.bf16.mxu0 0
    %1975 = vmatpush1.bf16.msra.mxu0 0
    %1976 = vmatprep.subr.bf16.mxu0 0
    %1977 = vmatpush1.bf16.msra.mxu0 0
    %1978 = vmatprep.subr.bf16.mxu0 0
    %1979 = vmatpush1.bf16.msra.mxu0 0
    %1980 = vmatprep.subr.bf16.mxu0 0
    %1981 = vmatpush1.bf16.msra.mxu0 0
    %1982 = vmatprep.subr.bf16.mxu0 0
    %1983 = vmatpush1.bf16.msra.mxu0 0
    %1984 = vmatprep.subr.bf16.mxu0 0
    %1985 = vmatpush1.bf16.msra.mxu0 0
    %1986 = vmatprep.subr.bf16.mxu0 0
    %1987 = vmatpush1.bf16.msra.mxu0 0
    %1988 = vmatprep.subr.bf16.mxu0 0
    %1989 = vmatpush1.bf16.msra.mxu0 0
    %1990 = vmatprep.subr.bf16.mxu0 0
    %1991 = vmatpush1.bf16.msra.mxu0 0
    %1992 = vmatprep.subr.bf16.mxu0 0
    %1993 = vmatpush1.bf16.msra.mxu0 0
    %1994 = vmatprep.subr.bf16.mxu0 0
    %1995 = vmatpush1.bf16.msra.mxu0 0
    %1996 = vmatprep.mubr.bf16.mxu0 0
    %1997 = vmatmul.mubr.bf16.gmra.mrb[0].mxu0 %v1962
    %v1998 = vpop.f32.mrb[0].mxu0
    %v1999 = vadd.f32 %v1948, %v1998
    %v2000 = vpop.f32.mrb[0].mxu0
    %v2001 = vadd.f32 %v1948, %v2000
    %v2002 = vpop.f32.mrb[0].mxu0
    %v2003 = vadd.f32 %v1953, %v2002
    %v2004 = vpop.f32.mrb[0].mxu0
    %v2005 = vadd.f32 %v1953, %v2004
    %2006 = vdwg.mxu0
    %v2007 = vmul.f32 %v1999, 0.5
    %v2008 = vmul.f32 %v2001, 0.5
    %v2009 = vmul.f32 %v2003, 0.5
    %v2010 = vmul.f32 %v2005, 0.5
    %v2011 = vmul.f32 %v1999, %v257
    %v2012 = vmul.f32 %v2001, %v257
    %v2013 = vmul.f32 %v2003, %v257
    %v2014 = vmul.f32 %v2005, %v257
    %v2015 = verf.f32.pop %v2011
    %v2016 = verf.f32.pop %v2012
    %v2017 = verf.f32.pop %v2013
    %v2018 = verf.f32.pop %v2014
    %v2019 = vadd.f32 %v2015, 1.0
    %v2020 = vadd.f32 %v2016, 1.0
    %v2021 = vadd.f32 %v2017, 1.0
    %v2022 = vadd.f32 %v2018, 1.0
    %v2023 = vmul.f32 %v2007, %v2019
    %v2024 = vmul.f32 %v2008, %v2020
    %v2025 = vmul.f32 %v2009, %v2021
    %v2026 = vmul.f32 %v2010, %v2022
    %v2027 = vld [vmem:[%s8] sm:$0xf]
    %v2028 = vld [vmem:[%s8 + $0x4] sm:$0xf]
    %v2029 = vld [vmem:[%s8 + $0x8] sm:$0xf]
    %v2030 = vld [vmem:[%s8 + $0xc] sm:$0xf]
    %v2031 = vpack.c.bf16 %v2025, %v2023
    %v2032 = vpack.c.bf16 %v2026, %v2024
    %v2033 = vld [vmem:[%s9] sm:$0xff]
    %v2034 = vld [vmem:[%s9 + $0x8] sm:$0xff]
    %v2035 = vld [vmem:[%s9 + $0x10] sm:$0xff]
    %v2036 = vld [vmem:[%s9 + $0x18] sm:$0xff]
    %2038 = vset.pattern.permute.xlu0 0
    %2039 = vperm.xlu0 %2038, %v2033
    %v2040 = vpop.permute.xlu0 %2039
    %2043 = vset.pattern.permute.xlu0 0
    %2044 = vperm.xlu0 %2043, %v2034
    %v2045 = vpop.permute.xlu0 %2044
    %2048 = vset.pattern.permute.xlu0 0
    %2049 = vperm.xlu0 %2048, %v2035
    %v2050 = vpop.permute.xlu0 %2049
    %2053 = vset.pattern.permute.xlu0 0
    %2054 = vperm.xlu0 %2053, %v2036
    %v2055 = vpop.permute.xlu0 %2054
    %v2061 = vunpack.c.l.b16 %v2027
    %v2062 = vunpack.c.l.b16 %v2028
    %v2063 = vunpack.c.l.b16 %v2029
    %v2064 = vunpack.c.l.b16 %v2030
    %v2065 = vpack.c.b16 %v2062, %v2061
    %v2066 = vpack.c.b16 %v2064, %v2063
    %vm2067 = vcmask 130048
    %v2069 = vsel %vm2067, %v2065, 0
    %v2072 = vsel %vm2067, %v2066, 0
    %2074 = vmatprep.subr.bf16.mxu0 %v2032
    %2075 = vmatpush1.bf16.msra.mxu0 %v2031
    %2076 = vmatprep.subr.bf16.mxu0 0
    %2077 = vmatpush1.bf16.msra.mxu0 0
    %2078 = vmatprep.subr.bf16.mxu0 0
    %2079 = vmatpush1.bf16.msra.mxu0 0
    %2080 = vmatprep.subr.bf16.mxu0 0
    %2081 = vmatpush1.bf16.msra.mxu0 0
    %2082 = vmatprep.subr.bf16.mxu0 0
    %2083 = vmatpush1.bf16.msra.mxu0 0
    %2084 = vmatprep.subr.bf16.mxu0 0
    %2085 = vmatpush1.bf16.msra.mxu0 0
    %2086 = vmatprep.subr.bf16.mxu0 0
    %2087 = vmatpush1.bf16.msra.mxu0 0
    %2088 = vmatprep.subr.bf16.mxu0 0
    %2089 = vmatpush1.bf16.msra.mxu0 0
    %2090 = vmatprep.subr.bf16.mxu0 0
    %2091 = vmatpush1.bf16.msra.mxu0 0
    %2092 = vmatprep.subr.bf16.mxu0 0
    %2093 = vmatpush1.bf16.msra.mxu0 0
    %2094 = vmatprep.subr.bf16.mxu0 0
    %2095 = vmatpush1.bf16.msra.mxu0 0
    %2096 = vmatprep.subr.bf16.mxu0 0
    %2097 = vmatpush1.bf16.msra.mxu0 0
    %2098 = vmatprep.subr.bf16.mxu0 0
    %2099 = vmatpush1.bf16.msra.mxu0 0
    %2100 = vmatprep.subr.bf16.mxu0 0
    %2101 = vmatpush1.bf16.msra.mxu0 0
    %2102 = vmatprep.subr.bf16.mxu0 0
    %2103 = vmatpush1.bf16.msra.mxu0 0
    %2104 = vmatprep.subr.bf16.mxu0 0
    %2105 = vmatpush1.bf16.msra.mxu0 0
    %2106 = vmatprep.mubr.bf16.mxu0 0
    %2107 = vmatmul.mubr.bf16.gmra.mrb[0].mxu0 %v2069
    %v2108 = vpop.f32.mrb[0].mxu0
    %v2109 = vadd.f32 %v2040, %v2108
    %v2110 = vpop.f32.mrb[0].mxu0
    %v2111 = vadd.f32 %v2040, %v2110
    %v2112 = vpop.f32.mrb[0].mxu0
    %v2113 = vadd.f32 %v2045, %v2112
    %v2114 = vpop.f32.mrb[0].mxu0
    %v2115 = vadd.f32 %v2045, %v2114
    %2116 = vmatprep.mubr.bf16.mxu0 0
    %2117 = vmatmul.mubr.bf16.gmra.mrb[0].mxu0 %v2072
    %v2118 = vpop.f32.mrb[0].mxu0
    %v2119 = vadd.f32 %v2050, %v2118
    %v2120 = vpop.f32.mrb[0].mxu0
    %v2121 = vadd.f32 %v2050, %v2120
    %v2122 = vpop.f32.mrb[0].mxu0
    %v2123 = vadd.f32 %v2055, %v2122
    %v2124 = vpop.f32.mrb[0].mxu0
    %v2125 = vadd.f32 %v2055, %v2124
    %2126 = vdwg.mxu0
    %v2127 = vadd.f32 %v2109, %v314
    %v2128 = vadd.f32 %v2111, %v315
    %v2129 = vadd.f32 %v2113, %v316
    %v2130 = vadd.f32 %v2115, %v317
    %v2131 = vadd.f32 %v2119, %v318
    %v2132 = vadd.f32 %v2121, %v319
    %v2133 = vadd.f32 %v2123, %v320
    %v2134 = vadd.f32 %v2125, %v321
    %v2135 = vmul.f32 %v2127, 0.5
    %v2136 = vmul.f32 %v2128, 0.5
    %v2137 = vmul.f32 %v2129, 0.5
    %v2138 = vmul.f32 %v2130, 0.5
    %v2139 = vmul.f32 %v2131, 0.5
    %v2140 = vmul.f32 %v2132, 0.5
    %v2141 = vmul.f32 %v2133, 0.5
    %v2142 = vmul.f32 %v2134, 0.5
    %v2143 = vmul.f32 %v2127, %v257
    %v2144 = vmul.f32 %v2128, %v257
    %v2145 = vmul.f32 %v2129, %v257
    %v2146 = vmul.f32 %v2130, %v257
    %v2147 = vmul.f32 %v2131, %v257
    %v2148 = vmul.f32 %v2132, %v257
    %v2149 = vmul.f32 %v2133, %v257
    %v2150 = vmul.f32 %v2134, %v257
    %v2151 = verf.f32.pop %v2143
    %v2152 = verf.f32.pop %v2144
    %v2153 = verf.f32.pop %v2145
    %v2154 = verf.f32.pop %v2146
    %v2155 = verf.f32.pop %v2147
    %v2156 = verf.f32.pop %v2148
    %v2157 = verf.f32.pop %v2149
    %v2158 = verf.f32.pop %v2150
    %v2159 = vadd.f32 %v2151, 1.0
    %v2160 = vadd.f32 %v2152, 1.0
    %v2161 = vadd.f32 %v2153, 1.0
    %v2162 = vadd.f32 %v2154, 1.0
    %v2163 = vadd.f32 %v2155, 1.0
    %v2164 = vadd.f32 %v2156, 1.0
    %v2165 = vadd.f32 %v2157, 1.0
    %v2166 = vadd.f32 %v2158, 1.0
    %v2167 = vmul.f32 %v2135, %v2159
    %v2168 = vmul.f32 %v2136, %v2160
    %v2169 = vmul.f32 %v2137, %v2161
    %v2170 = vmul.f32 %v2138, %v2162
    %v2171 = vmul.f32 %v2139, %v2163
    %v2172 = vmul.f32 %v2140, %v2164
    %v2173 = vmul.f32 %v2141, %v2165
    %v2174 = vmul.f32 %v2142, %v2166
    %s2175 = scalar_lea.vmem %s5, 32
    %v2176 = vld [vmem:[%s2175] sm:$0xff]
    %v2177 = vld [vmem:[%s2175 + $0x8] sm:$0xff]
    %v2178 = vld [vmem:[%s2175 + $0x10] sm:$0xff]
    %v2179 = vld [vmem:[%s2175 + $0x18] sm:$0xff]
    %2181 = vset.pattern.permute.xlu0 0
    %2182 = vperm.xlu0 %2181, %v2176
    %v2183 = vpop.permute.xlu0 %2182
    %2186 = vset.pattern.permute.xlu0 0
    %2187 = vperm.xlu0 %2186, %v2177
    %v2188 = vpop.permute.xlu0 %2187
    %2191 = vset.pattern.permute.xlu0 0
    %2192 = vperm.xlu0 %2191, %v2178
    %v2193 = vpop.permute.xlu0 %2192
    %2196 = vset.pattern.permute.xlu0 0
    %2197 = vperm.xlu0 %2196, %v2179
    %v2198 = vpop.permute.xlu0 %2197
    %v2200 = vmul.f32 %v2183, %v2167
    %v2201 = vmul.f32 %v2183, %v2168
    %v2202 = vmul.f32 %v2188, %v2169
    %v2203 = vmul.f32 %v2188, %v2170
    %v2204 = vmul.f32 %v2193, %v2171
    %v2205 = vmul.f32 %v2193, %v2172
    %v2206 = vmul.f32 %v2198, %v2173
    %v2207 = vmul.f32 %v2198, %v2174
    %v2208 = vtanh.pop %v2167
    %v2209 = vtanh.pop %v2168
    %v2210 = vtanh.pop %v2169
    %v2211 = vtanh.pop %v2170
    %v2212 = vtanh.pop %v2171
    %v2213 = vtanh.pop %v2172
    %v2214 = vtanh.pop %v2173
    %v2215 = vtanh.pop %v2174
    %2216 = vmatprep.subr.mxu0 %v138
    %2217 = vmatpush1.msra.mxu0 %v137
    %2218 = vmatprep.subr.mxu0 %v140
    %2219 = vmatpush1.msra.mxu0 %v139
    %2220 = vmatprep.subr.mxu0 %v142
    %2221 = vmatpush1.msra.mxu0 %v141
    %2222 = vmatprep.subr.mxu0 %v144
    %2223 = vmatpush1.msra.mxu0 %v143
    %2224 = vmatprep.subr.mxu0 %v146
    %2225 = vmatpush1.msra.mxu0 %v145
    %2226 = vmatprep.subr.mxu0 %v148
    %2227 = vmatpush1.msra.mxu0 %v147
    %2228 = vmatprep.subr.mxu0 %v150
    %2229 = vmatpush1.msra.mxu0 %v149
    %2230 = vmatprep.subr.mxu0 %v152
    %2231 = vmatpush1.msra.mxu0 %v151
    %2232 = vmatprep.subr.mxu0 %v154
    %2233 = vmatpush1.msra.mxu0 %v153
    %2234 = vmatprep.subr.mxu0 %v156
    %2235 = vmatpush1.msra.mxu0 %v155
    %2236 = vmatprep.subr.mxu0 %v158
    %2237 = vmatpush1.msra.mxu0 %v157
    %2238 = vmatprep.subr.mxu0 %v160
    %2239 = vmatpush1.msra.mxu0 %v159
    %2240 = vmatprep.subr.mxu0 %v162
    %2241 = vmatpush1.msra.mxu0 %v161
    %2242 = vmatprep.subr.mxu0 %v164
    %2243 = vmatpush1.msra.mxu0 %v163
    %2244 = vmatprep.subr.mxu0 %v166
    %2245 = vmatpush1.msra.mxu0 %v165
    %2246 = vmatprep.subr.mxu0 %v168
    %2247 = vmatpush1.msra.mxu0 %v167
    %2248 = vmatprep.subr.mxu0 %v170
    %2249 = vmatpush1.msra.mxu0 %v169
    %2250 = vmatprep.subr.mxu0 %v172
    %2251 = vmatpush1.msra.mxu0 %v171
    %2252 = vmatprep.subr.mxu0 %v174
    %2253 = vmatpush1.msra.mxu0 %v173
    %2254 = vmatprep.subr.mxu0 %v176
    %2255 = vmatpush1.msra.mxu0 %v175
    %2256 = vmatprep.subr.mxu0 %v178
    %2257 = vmatpush1.msra.mxu0 %v177
    %2258 = vmatprep.subr.mxu0 %v180
    %2259 = vmatpush1.msra.mxu0 %v179
    %2260 = vmatprep.subr.mxu0 %v182
    %2261 = vmatpush1.msra.mxu0 %v181
    %2262 = vmatprep.subr.mxu0 %v184
    %2263 = vmatpush1.msra.mxu0 %v183
    %2264 = vmatprep.subr.mxu0 %v186
    %2265 = vmatpush1.msra.mxu0 %v185
    %2266 = vmatprep.subr.mxu0 %v188
    %2267 = vmatpush1.msra.mxu0 %v187
    %2268 = vmatprep.subr.mxu0 %v190
    %2269 = vmatpush1.msra.mxu0 %v189
    %2270 = vmatprep.subr.mxu0 %v192
    %2271 = vmatpush1.msra.mxu0 %v191
    %2272 = vmatprep.subr.mxu0 %v194
    %2273 = vmatpush1.msra.mxu0 %v193
    %2274 = vmatprep.subr.mxu0 %v196
    %2275 = vmatpush1.msra.mxu0 %v195
    %2276 = vmatprep.subr.mxu0 %v198
    %2277 = vmatpush1.msra.mxu0 %v197
    %2278 = vmatprep.subr.mxu0 %v200
    %2279 = vmatpush1.msra.mxu0 %v199
    %2280 = vmatprep.mubr.f32.mxu0 %v2209
    %2281 = vmatmul.mubr.f32.gmra.mrb[0].mxu0 %v2208
    %v2282 = vpop.f32.mrb[0].mxu0
    %v2283 = vadd.f32 0.0, %v2282
    %v2284 = vpop.f32.mrb[0].mxu0
    %v2285 = vadd.f32 0.0, %v2284
    %2286 = vmatprep.mubr.f32.mxu0 %v2211
    %2287 = vmatmul.mubr.f32.gmra.mrb[0].mxu0 %v2210
    %v2288 = vpop.f32.mrb[0].mxu0
    %v2289 = vadd.f32 0.0, %v2288
    %v2290 = vpop.f32.mrb[0].mxu0
    %v2291 = vadd.f32 0.0, %v2290
    %2292 = vmatprep.mubr.f32.mxu0 %v2213
    %2293 = vmatmul.mubr.f32.gmra.mrb[0].mxu0 %v2212
    %v2294 = vpop.f32.mrb[0].mxu0
    %v2295 = vadd.f32 0.0, %v2294
    %v2296 = vpop.f32.mrb[0].mxu0
    %v2297 = vadd.f32 0.0, %v2296
    %2298 = vmatprep.mubr.f32.mxu0 %v2215
    %2299 = vmatmul.mubr.f32.gmra.mrb[0].mxu0 %v2214
    %v2300 = vpop.f32.mrb[0].mxu0
    %v2301 = vadd.f32 0.0, %v2300
    %v2302 = vpop.f32.mrb[0].mxu0
    %v2303 = vadd.f32 0.0, %v2302
    %2304 = vdwg.mxu0
    %s2305 = scalar_lea.vmem [#allocation5], 2048
    %v2306 = vld [vmem:[%s2305] sm:$0xff]
    %v2307 = vld [vmem:[%s2305 + $0x8] sm:$0xff]
    %v2308 = vld [vmem:[%s2305 + $0x10] sm:$0xff]
    %v2309 = vld [vmem:[%s2305 + $0x18] sm:$0xff]
    %v2310 = vld [vmem:[%s2305 + $0x20] sm:$0xff]
    %v2311 = vld [vmem:[%s2305 + $0x28] sm:$0xff]
    %v2312 = vld [vmem:[%s2305 + $0x30] sm:$0xff]
    %v2313 = vld [vmem:[%s2305 + $0x38] sm:$0xff]
    %v2314 = vld [vmem:[%s2305 + $0x40] sm:$0xff]
    %v2315 = vld [vmem:[%s2305 + $0x48] sm:$0xff]
    %v2316 = vld [vmem:[%s2305 + $0x50] sm:$0xff]
    %v2317 = vld [vmem:[%s2305 + $0x58] sm:$0xff]
    %v2318 = vld [vmem:[%s2305 + $0x60] sm:$0xff]
    %v2319 = vld [vmem:[%s2305 + $0x68] sm:$0xff]
    %v2320 = vld [vmem:[%s2305 + $0x70] sm:$0xff]
    %v2321 = vld [vmem:[%s2305 + $0x78] sm:$0xff]
    %v2322 = vld [vmem:[%s2305 + $0x80] sm:$0xff]
    %v2323 = vld [vmem:[%s2305 + $0x88] sm:$0xff]
    %v2324 = vld [vmem:[%s2305 + $0x90] sm:$0xff]
    %v2325 = vld [vmem:[%s2305 + $0x98] sm:$0xff]
    %v2326 = vld [vmem:[%s2305 + $0xa0] sm:$0xff]
    %v2327 = vld [vmem:[%s2305 + $0xa8] sm:$0xff]
    %v2328 = vld [vmem:[%s2305 + $0xb0] sm:$0xff]
    %v2329 = vld [vmem:[%s2305 + $0xb8] sm:$0xff]
    %v2330 = vld [vmem:[%s2305 + $0xc0] sm:$0xff]
    %v2331 = vld [vmem:[%s2305 + $0xc8] sm:$0xff]
    %v2332 = vld [vmem:[%s2305 + $0xd0] sm:$0xff]
    %v2333 = vld [vmem:[%s2305 + $0xd8] sm:$0xff]
    %v2334 = vld [vmem:[%s2305 + $0xe0] sm:$0xff]
    %v2335 = vld [vmem:[%s2305 + $0xe8] sm:$0xff]
    %v2336 = vld [vmem:[%s2305 + $0xf0] sm:$0xff]
    %v2337 = vld [vmem:[%s2305 + $0xf8] sm:$0xff]
    %v2338 = vld [vmem:[%s2305 + $0x100] sm:$0xff]
    %v2339 = vld [vmem:[%s2305 + $0x108] sm:$0xff]
    %v2340 = vld [vmem:[%s2305 + $0x110] sm:$0xff]
    %v2341 = vld [vmem:[%s2305 + $0x118] sm:$0xff]
    %v2342 = vld [vmem:[%s2305 + $0x120] sm:$0xff]
    %v2343 = vld [vmem:[%s2305 + $0x128] sm:$0xff]
    %v2344 = vld [vmem:[%s2305 + $0x130] sm:$0xff]
    %v2345 = vld [vmem:[%s2305 + $0x138] sm:$0xff]
    %v2346 = vld [vmem:[%s2305 + $0x140] sm:$0xff]
    %v2347 = vld [vmem:[%s2305 + $0x148] sm:$0xff]
    %v2348 = vld [vmem:[%s2305 + $0x150] sm:$0xff]
    %v2349 = vld [vmem:[%s2305 + $0x158] sm:$0xff]
    %v2350 = vld [vmem:[%s2305 + $0x160] sm:$0xff]
    %v2351 = vld [vmem:[%s2305 + $0x168] sm:$0xff]
    %v2352 = vld [vmem:[%s2305 + $0x170] sm:$0xff]
    %v2353 = vld [vmem:[%s2305 + $0x178] sm:$0xff]
    %v2354 = vld [vmem:[%s2305 + $0x180] sm:$0xff]
    %v2355 = vld [vmem:[%s2305 + $0x188] sm:$0xff]
    %v2356 = vld [vmem:[%s2305 + $0x190] sm:$0xff]
    %v2357 = vld [vmem:[%s2305 + $0x198] sm:$0xff]
    %v2358 = vld [vmem:[%s2305 + $0x1a0] sm:$0xff]
    %v2359 = vld [vmem:[%s2305 + $0x1a8] sm:$0xff]
    %v2360 = vld [vmem:[%s2305 + $0x1b0] sm:$0xff]
    %v2361 = vld [vmem:[%s2305 + $0x1b8] sm:$0xff]
    %v2362 = vld [vmem:[%s2305 + $0x1c0] sm:$0xff]
    %v2363 = vld [vmem:[%s2305 + $0x1c8] sm:$0xff]
    %v2364 = vld [vmem:[%s2305 + $0x1d0] sm:$0xff]
    %v2365 = vld [vmem:[%s2305 + $0x1d8] sm:$0xff]
    %v2366 = vld [vmem:[%s2305 + $0x1e0] sm:$0xff]
    %v2367 = vld [vmem:[%s2305 + $0x1e8] sm:$0xff]
    %v2368 = vld [vmem:[%s2305 + $0x1f0] sm:$0xff]
    %v2369 = vld [vmem:[%s2305 + $0x1f8] sm:$0xff]
    %v2370 = vld [vmem:[%s2305 + $0x200] sm:$0xff]
    %v2371 = vld [vmem:[%s2305 + $0x208] sm:$0xff]
    %v2372 = vld [vmem:[%s2305 + $0x210] sm:$0xff]
    %v2373 = vld [vmem:[%s2305 + $0x218] sm:$0xff]
    %v2374 = vld [vmem:[%s2305 + $0x220] sm:$0xff]
    %v2375 = vld [vmem:[%s2305 + $0x228] sm:$0xff]
    %v2376 = vld [vmem:[%s2305 + $0x230] sm:$0xff]
    %v2377 = vld [vmem:[%s2305 + $0x238] sm:$0xff]
    %v2378 = vld [vmem:[%s2305 + $0x240] sm:$0xff]
    %v2379 = vld [vmem:[%s2305 + $0x248] sm:$0xff]
    %v2380 = vld [vmem:[%s2305 + $0x250] sm:$0xff]
    %v2381 = vld [vmem:[%s2305 + $0x258] sm:$0xff]
    %v2382 = vld [vmem:[%s2305 + $0x260] sm:$0xff]
    %v2383 = vld [vmem:[%s2305 + $0x268] sm:$0xff]
    %v2384 = vld [vmem:[%s2305 + $0x270] sm:$0xff]
    %v2385 = vld [vmem:[%s2305 + $0x278] sm:$0xff]
    %v2386 = vld [vmem:[%s2305 + $0x280] sm:$0xff]
    %v2387 = vld [vmem:[%s2305 + $0x288] sm:$0xff]
    %v2388 = vld [vmem:[%s2305 + $0x290] sm:$0xff]
    %v2389 = vld [vmem:[%s2305 + $0x298] sm:$0xff]
    %v2390 = vld [vmem:[%s2305 + $0x2a0] sm:$0xff]
    %v2391 = vld [vmem:[%s2305 + $0x2a8] sm:$0xff]
    %v2392 = vld [vmem:[%s2305 + $0x2b0] sm:$0xff]
    %v2393 = vld [vmem:[%s2305 + $0x2b8] sm:$0xff]
    %v2394 = vld [vmem:[%s2305 + $0x2c0] sm:$0xff]
    %v2395 = vld [vmem:[%s2305 + $0x2c8] sm:$0xff]
    %v2396 = vld [vmem:[%s2305 + $0x2d0] sm:$0xff]
    %v2397 = vld [vmem:[%s2305 + $0x2d8] sm:$0xff]
    %v2398 = vld [vmem:[%s2305 + $0x2e0] sm:$0xff]
    %v2399 = vld [vmem:[%s2305 + $0x2e8] sm:$0xff]
    %v2400 = vld [vmem:[%s2305 + $0x2f0] sm:$0xff]
    %v2401 = vld [vmem:[%s2305 + $0x2f8] sm:$0xff]
    %v2402 = vld [vmem:[%s2305 + $0x300] sm:$0xff]
    %v2403 = vld [vmem:[%s2305 + $0x308] sm:$0xff]
    %v2404 = vld [vmem:[%s2305 + $0x310] sm:$0xff]
    %v2405 = vld [vmem:[%s2305 + $0x318] sm:$0xff]
    %v2406 = vld [vmem:[%s2305 + $0x320] sm:$0xff]
    %v2407 = vld [vmem:[%s2305 + $0x328] sm:$0xff]
    %v2408 = vld [vmem:[%s2305 + $0x330] sm:$0xff]
    %v2409 = vld [vmem:[%s2305 + $0x338] sm:$0xff]
    %v2410 = vld [vmem:[%s2305 + $0x340] sm:$0xff]
    %v2411 = vld [vmem:[%s2305 + $0x348] sm:$0xff]
    %v2412 = vld [vmem:[%s2305 + $0x350] sm:$0xff]
    %v2413 = vld [vmem:[%s2305 + $0x358] sm:$0xff]
    %v2414 = vld [vmem:[%s2305 + $0x360] sm:$0xff]
    %v2415 = vld [vmem:[%s2305 + $0x368] sm:$0xff]
    %v2416 = vld [vmem:[%s2305 + $0x370] sm:$0xff]
    %v2417 = vld [vmem:[%s2305 + $0x378] sm:$0xff]
    %v2418 = vld [vmem:[%s2305 + $0x380] sm:$0xff]
    %v2419 = vld [vmem:[%s2305 + $0x388] sm:$0xff]
    %v2420 = vld [vmem:[%s2305 + $0x390] sm:$0xff]
    %v2421 = vld [vmem:[%s2305 + $0x398] sm:$0xff]
    %v2422 = vld [vmem:[%s2305 + $0x3a0] sm:$0xff]
    %v2423 = vld [vmem:[%s2305 + $0x3a8] sm:$0xff]
    %v2424 = vld [vmem:[%s2305 + $0x3b0] sm:$0xff]
    %v2425 = vld [vmem:[%s2305 + $0x3b8] sm:$0xff]
    %v2426 = vld [vmem:[%s2305 + $0x3c0] sm:$0xff]
    %v2427 = vld [vmem:[%s2305 + $0x3c8] sm:$0xff]
    %v2428 = vld [vmem:[%s2305 + $0x3d0] sm:$0xff]
    %v2429 = vld [vmem:[%s2305 + $0x3d8] sm:$0xff]
    %v2430 = vld [vmem:[%s2305 + $0x3e0] sm:$0xff]
    %v2431 = vld [vmem:[%s2305 + $0x3e8] sm:$0xff]
    %v2432 = vld [vmem:[%s2305 + $0x3f0] sm:$0xff]
    %v2433 = vld [vmem:[%s2305 + $0x3f8] sm:$0xff]
    %v2434 = vld [vmem:[%s2305 + $0x400] sm:$0xff]
    %v2435 = vld [vmem:[%s2305 + $0x408] sm:$0xff]
    %v2436 = vld [vmem:[%s2305 + $0x410] sm:$0xff]
    %v2437 = vld [vmem:[%s2305 + $0x418] sm:$0xff]
    %v2438 = vld [vmem:[%s2305 + $0x420] sm:$0xff]
    %v2439 = vld [vmem:[%s2305 + $0x428] sm:$0xff]
    %v2440 = vld [vmem:[%s2305 + $0x430] sm:$0xff]
    %v2441 = vld [vmem:[%s2305 + $0x438] sm:$0xff]
    %v2442 = vld [vmem:[%s2305 + $0x440] sm:$0xff]
    %v2443 = vld [vmem:[%s2305 + $0x448] sm:$0xff]
    %v2444 = vld [vmem:[%s2305 + $0x450] sm:$0xff]
    %v2445 = vld [vmem:[%s2305 + $0x458] sm:$0xff]
    %v2446 = vld [vmem:[%s2305 + $0x460] sm:$0xff]
    %v2447 = vld [vmem:[%s2305 + $0x468] sm:$0xff]
    %v2448 = vld [vmem:[%s2305 + $0x470] sm:$0xff]
    %v2449 = vld [vmem:[%s2305 + $0x478] sm:$0xff]
    %v2450 = vld [vmem:[%s2305 + $0x480] sm:$0xff]
    %v2451 = vld [vmem:[%s2305 + $0x488] sm:$0xff]
    %v2452 = vld [vmem:[%s2305 + $0x490] sm:$0xff]
    %v2453 = vld [vmem:[%s2305 + $0x498] sm:$0xff]
    %v2454 = vld [vmem:[%s2305 + $0x4a0] sm:$0xff]
    %v2455 = vld [vmem:[%s2305 + $0x4a8] sm:$0xff]
    %v2456 = vld [vmem:[%s2305 + $0x4b0] sm:$0xff]
    %v2457 = vld [vmem:[%s2305 + $0x4b8] sm:$0xff]
    %v2458 = vld [vmem:[%s2305 + $0x4c0] sm:$0xff]
    %v2459 = vld [vmem:[%s2305 + $0x4c8] sm:$0xff]
    %v2460 = vld [vmem:[%s2305 + $0x4d0] sm:$0xff]
    %v2461 = vld [vmem:[%s2305 + $0x4d8] sm:$0xff]
    %v2462 = vld [vmem:[%s2305 + $0x4e0] sm:$0xff]
    %v2463 = vld [vmem:[%s2305 + $0x4e8] sm:$0xff]
    %v2464 = vld [vmem:[%s2305 + $0x4f0] sm:$0xff]
    %v2465 = vld [vmem:[%s2305 + $0x4f8] sm:$0xff]
    %v2466 = vld [vmem:[%s2305 + $0x500] sm:$0xff]
    %v2467 = vld [vmem:[%s2305 + $0x508] sm:$0xff]
    %v2468 = vld [vmem:[%s2305 + $0x510] sm:$0xff]
    %v2469 = vld [vmem:[%s2305 + $0x518] sm:$0xff]
    %v2470 = vld [vmem:[%s2305 + $0x520] sm:$0xff]
    %v2471 = vld [vmem:[%s2305 + $0x528] sm:$0xff]
    %v2472 = vld [vmem:[%s2305 + $0x530] sm:$0xff]
    %v2473 = vld [vmem:[%s2305 + $0x538] sm:$0xff]
    %v2474 = vld [vmem:[%s2305 + $0x540] sm:$0xff]
    %v2475 = vld [vmem:[%s2305 + $0x548] sm:$0xff]
    %v2476 = vld [vmem:[%s2305 + $0x550] sm:$0xff]
    %v2477 = vld [vmem:[%s2305 + $0x558] sm:$0xff]
    %v2478 = vld [vmem:[%s2305 + $0x560] sm:$0xff]
    %v2479 = vld [vmem:[%s2305 + $0x568] sm:$0xff]
    %v2480 = vld [vmem:[%s2305 + $0x570] sm:$0xff]
    %v2481 = vld [vmem:[%s2305 + $0x578] sm:$0xff]
    %v2482 = vld [vmem:[%s2305 + $0x580] sm:$0xff]
    %v2483 = vld [vmem:[%s2305 + $0x588] sm:$0xff]
    %v2484 = vld [vmem:[%s2305 + $0x590] sm:$0xff]
    %v2485 = vld [vmem:[%s2305 + $0x598] sm:$0xff]
    %v2486 = vld [vmem:[%s2305 + $0x5a0] sm:$0xff]
    %v2487 = vld [vmem:[%s2305 + $0x5a8] sm:$0xff]
    %v2488 = vld [vmem:[%s2305 + $0x5b0] sm:$0xff]
    %v2489 = vld [vmem:[%s2305 + $0x5b8] sm:$0xff]
    %v2490 = vld [vmem:[%s2305 + $0x5c0] sm:$0xff]
    %v2491 = vld [vmem:[%s2305 + $0x5c8] sm:$0xff]
    %v2492 = vld [vmem:[%s2305 + $0x5d0] sm:$0xff]
    %v2493 = vld [vmem:[%s2305 + $0x5d8] sm:$0xff]
    %v2494 = vld [vmem:[%s2305 + $0x5e0] sm:$0xff]
    %v2495 = vld [vmem:[%s2305 + $0x5e8] sm:$0xff]
    %v2496 = vld [vmem:[%s2305 + $0x5f0] sm:$0xff]
    %v2497 = vld [vmem:[%s2305 + $0x5f8] sm:$0xff]
    %v2498 = vld [vmem:[%s2305 + $0x600] sm:$0xff]
    %v2499 = vld [vmem:[%s2305 + $0x608] sm:$0xff]
    %v2500 = vld [vmem:[%s2305 + $0x610] sm:$0xff]
    %v2501 = vld [vmem:[%s2305 + $0x618] sm:$0xff]
    %v2502 = vld [vmem:[%s2305 + $0x620] sm:$0xff]
    %v2503 = vld [vmem:[%s2305 + $0x628] sm:$0xff]
    %v2504 = vld [vmem:[%s2305 + $0x630] sm:$0xff]
    %v2505 = vld [vmem:[%s2305 + $0x638] sm:$0xff]
    %v2506 = vld [vmem:[%s2305 + $0x640] sm:$0xff]
    %v2507 = vld [vmem:[%s2305 + $0x648] sm:$0xff]
    %v2508 = vld [vmem:[%s2305 + $0x650] sm:$0xff]
    %v2509 = vld [vmem:[%s2305 + $0x658] sm:$0xff]
    %v2510 = vld [vmem:[%s2305 + $0x660] sm:$0xff]
    %v2511 = vld [vmem:[%s2305 + $0x668] sm:$0xff]
    %v2512 = vld [vmem:[%s2305 + $0x670] sm:$0xff]
    %v2513 = vld [vmem:[%s2305 + $0x678] sm:$0xff]
    %v2514 = vld [vmem:[%s2305 + $0x680] sm:$0xff]
    %v2515 = vld [vmem:[%s2305 + $0x688] sm:$0xff]
    %v2516 = vld [vmem:[%s2305 + $0x690] sm:$0xff]
    %v2517 = vld [vmem:[%s2305 + $0x698] sm:$0xff]
    %v2518 = vld [vmem:[%s2305 + $0x6a0] sm:$0xff]
    %v2519 = vld [vmem:[%s2305 + $0x6a8] sm:$0xff]
    %v2520 = vld [vmem:[%s2305 + $0x6b0] sm:$0xff]
    %v2521 = vld [vmem:[%s2305 + $0x6b8] sm:$0xff]
    %v2522 = vld [vmem:[%s2305 + $0x6c0] sm:$0xff]
    %v2523 = vld [vmem:[%s2305 + $0x6c8] sm:$0xff]
    %v2524 = vld [vmem:[%s2305 + $0x6d0] sm:$0xff]
    %v2525 = vld [vmem:[%s2305 + $0x6d8] sm:$0xff]
    %v2526 = vld [vmem:[%s2305 + $0x6e0] sm:$0xff]
    %v2527 = vld [vmem:[%s2305 + $0x6e8] sm:$0xff]
    %v2528 = vld [vmem:[%s2305 + $0x6f0] sm:$0xff]
    %v2529 = vld [vmem:[%s2305 + $0x6f8] sm:$0xff]
    %v2530 = vld [vmem:[%s2305 + $0x700] sm:$0xff]
    %v2531 = vld [vmem:[%s2305 + $0x708] sm:$0xff]
    %v2532 = vld [vmem:[%s2305 + $0x710] sm:$0xff]
    %v2533 = vld [vmem:[%s2305 + $0x718] sm:$0xff]
    %v2534 = vld [vmem:[%s2305 + $0x720] sm:$0xff]
    %v2535 = vld [vmem:[%s2305 + $0x728] sm:$0xff]
    %v2536 = vld [vmem:[%s2305 + $0x730] sm:$0xff]
    %v2537 = vld [vmem:[%s2305 + $0x738] sm:$0xff]
    %v2538 = vld [vmem:[%s2305 + $0x740] sm:$0xff]
    %v2539 = vld [vmem:[%s2305 + $0x748] sm:$0xff]
    %v2540 = vld [vmem:[%s2305 + $0x750] sm:$0xff]
    %v2541 = vld [vmem:[%s2305 + $0x758] sm:$0xff]
    %v2542 = vld [vmem:[%s2305 + $0x760] sm:$0xff]
    %v2543 = vld [vmem:[%s2305 + $0x768] sm:$0xff]
    %v2544 = vld [vmem:[%s2305 + $0x770] sm:$0xff]
    %v2545 = vld [vmem:[%s2305 + $0x778] sm:$0xff]
    %v2546 = vld [vmem:[%s2305 + $0x780] sm:$0xff]
    %v2547 = vld [vmem:[%s2305 + $0x788] sm:$0xff]
    %v2548 = vld [vmem:[%s2305 + $0x790] sm:$0xff]
    %v2549 = vld [vmem:[%s2305 + $0x798] sm:$0xff]
    %v2550 = vld [vmem:[%s2305 + $0x7a0] sm:$0xff]
    %v2551 = vld [vmem:[%s2305 + $0x7a8] sm:$0xff]
    %v2552 = vld [vmem:[%s2305 + $0x7b0] sm:$0xff]
    %v2553 = vld [vmem:[%s2305 + $0x7b8] sm:$0xff]
    %v2554 = vld [vmem:[%s2305 + $0x7c0] sm:$0xff]
    %v2555 = vld [vmem:[%s2305 + $0x7c8] sm:$0xff]
    %v2556 = vld [vmem:[%s2305 + $0x7d0] sm:$0xff]
    %v2557 = vld [vmem:[%s2305 + $0x7d8] sm:$0xff]
    %v2558 = vld [vmem:[%s2305 + $0x7e0] sm:$0xff]
    %v2559 = vld [vmem:[%s2305 + $0x7e8] sm:$0xff]
    %v2560 = vld [vmem:[%s2305 + $0x7f0] sm:$0xff]
    %v2561 = vld [vmem:[%s2305 + $0x7f8] sm:$0xff]
    %v2562 = vmul.f32 %v2283, %v2306
    %v2563 = vmul.f32 %v2285, %v2307
    %v2564 = vmul.f32 %v2289, %v2308
    %v2565 = vmul.f32 %v2291, %v2309
    %v2566 = vmul.f32 %v2295, %v2310
    %v2567 = vmul.f32 %v2297, %v2311
    %v2568 = vmul.f32 %v2301, %v2312
    %v2569 = vmul.f32 %v2303, %v2313
    %v2570 = vmul.f32 %v2283, %v2314
    %v2571 = vmul.f32 %v2285, %v2315
    %v2572 = vmul.f32 %v2289, %v2316
    %v2573 = vmul.f32 %v2291, %v2317
    %v2574 = vmul.f32 %v2295, %v2318
    %v2575 = vmul.f32 %v2297, %v2319
    %v2576 = vmul.f32 %v2301, %v2320
    %v2577 = vmul.f32 %v2303, %v2321
    %v2578 = vmul.f32 %v2283, %v2322
    %v2579 = vmul.f32 %v2285, %v2323
    %v2580 = vmul.f32 %v2289, %v2324
    %v2581 = vmul.f32 %v2291, %v2325
    %v2582 = vmul.f32 %v2295, %v2326
    %v2583 = vmul.f32 %v2297, %v2327
    %v2584 = vmul.f32 %v2301, %v2328
    %v2585 = vmul.f32 %v2303, %v2329
    %v2586 = vmul.f32 %v2283, %v2330
    %v2587 = vmul.f32 %v2285, %v2331
    %v2588 = vmul.f32 %v2289, %v2332
    %v2589 = vmul.f32 %v2291, %v2333
    %v2590 = vmul.f32 %v2295, %v2334
    %v2591 = vmul.f32 %v2297, %v2335
    %v2592 = vmul.f32 %v2301, %v2336
    %v2593 = vmul.f32 %v2303, %v2337
    %v2594 = vmul.f32 %v2283, %v2338
    %v2595 = vmul.f32 %v2285, %v2339
    %v2596 = vmul.f32 %v2289, %v2340
    %v2597 = vmul.f32 %v2291, %v2341
    %v2598 = vmul.f32 %v2295, %v2342
    %v2599 = vmul.f32 %v2297, %v2343
    %v2600 = vmul.f32 %v2301, %v2344
    %v2601 = vmul.f32 %v2303, %v2345
    %v2602 = vmul.f32 %v2283, %v2346
    %v2603 = vmul.f32 %v2285, %v2347
    %v2604 = vmul.f32 %v2289, %v2348
    %v2605 = vmul.f32 %v2291, %v2349
    %v2606 = vmul.f32 %v2295, %v2350
    %v2607 = vmul.f32 %v2297, %v2351
    %v2608 = vmul.f32 %v2301, %v2352
    %v2609 = vmul.f32 %v2303, %v2353
    %v2610 = vmul.f32 %v2283, %v2354
    %v2611 = vmul.f32 %v2285, %v2355
    %v2612 = vmul.f32 %v2289, %v2356
    %v2613 = vmul.f32 %v2291, %v2357
    %v2614 = vmul.f32 %v2295, %v2358
    %v2615 = vmul.f32 %v2297, %v2359
    %v2616 = vmul.f32 %v2301, %v2360
    %v2617 = vmul.f32 %v2303, %v2361
    %v2618 = vmul.f32 %v2283, %v2362
    %v2619 = vmul.f32 %v2285, %v2363
    %v2620 = vmul.f32 %v2289, %v2364
    %v2621 = vmul.f32 %v2291, %v2365
    %v2622 = vmul.f32 %v2295, %v2366
    %v2623 = vmul.f32 %v2297, %v2367
    %v2624 = vmul.f32 %v2301, %v2368
    %v2625 = vmul.f32 %v2303, %v2369
    %v2626 = vmul.f32 %v2283, %v2370
    %v2627 = vmul.f32 %v2285, %v2371
    %v2628 = vmul.f32 %v2289, %v2372
    %v2629 = vmul.f32 %v2291, %v2373
    %v2630 = vmul.f32 %v2295, %v2374
    %v2631 = vmul.f32 %v2297, %v2375
    %v2632 = vmul.f32 %v2301, %v2376
    %v2633 = vmul.f32 %v2303, %v2377
    %v2634 = vmul.f32 %v2283, %v2378
    %v2635 = vmul.f32 %v2285, %v2379
    %v2636 = vmul.f32 %v2289, %v2380
    %v2637 = vmul.f32 %v2291, %v2381
    %v2638 = vmul.f32 %v2295, %v2382
    %v2639 = vmul.f32 %v2297, %v2383
    %v2640 = vmul.f32 %v2301, %v2384
    %v2641 = vmul.f32 %v2303, %v2385
    %v2642 = vmul.f32 %v2283, %v2386
    %v2643 = vmul.f32 %v2285, %v2387
    %v2644 = vmul.f32 %v2289, %v2388
    %v2645 = vmul.f32 %v2291, %v2389
    %v2646 = vmul.f32 %v2295, %v2390
    %v2647 = vmul.f32 %v2297, %v2391
    %v2648 = vmul.f32 %v2301, %v2392
    %v2649 = vmul.f32 %v2303, %v2393
    %v2650 = vmul.f32 %v2283, %v2394
    %v2651 = vmul.f32 %v2285, %v2395
    %v2652 = vmul.f32 %v2289, %v2396
    %v2653 = vmul.f32 %v2291, %v2397
    %v2654 = vmul.f32 %v2295, %v2398
    %v2655 = vmul.f32 %v2297, %v2399
    %v2656 = vmul.f32 %v2301, %v2400
    %v2657 = vmul.f32 %v2303, %v2401
    %v2658 = vmul.f32 %v2283, %v2402
    %v2659 = vmul.f32 %v2285, %v2403
    %v2660 = vmul.f32 %v2289, %v2404
    %v2661 = vmul.f32 %v2291, %v2405
    %v2662 = vmul.f32 %v2295, %v2406
    %v2663 = vmul.f32 %v2297, %v2407
    %v2664 = vmul.f32 %v2301, %v2408
    %v2665 = vmul.f32 %v2303, %v2409
    %v2666 = vmul.f32 %v2283, %v2410
    %v2667 = vmul.f32 %v2285, %v2411
    %v2668 = vmul.f32 %v2289, %v2412
    %v2669 = vmul.f32 %v2291, %v2413
    %v2670 = vmul.f32 %v2295, %v2414
    %v2671 = vmul.f32 %v2297, %v2415
    %v2672 = vmul.f32 %v2301, %v2416
    %v2673 = vmul.f32 %v2303, %v2417
    %v2674 = vmul.f32 %v2283, %v2418
    %v2675 = vmul.f32 %v2285, %v2419
    %v2676 = vmul.f32 %v2289, %v2420
    %v2677 = vmul.f32 %v2291, %v2421
    %v2678 = vmul.f32 %v2295, %v2422
    %v2679 = vmul.f32 %v2297, %v2423
    %v2680 = vmul.f32 %v2301, %v2424
    %v2681 = vmul.f32 %v2303, %v2425
    %v2682 = vmul.f32 %v2283, %v2426
    %v2683 = vmul.f32 %v2285, %v2427
    %v2684 = vmul.f32 %v2289, %v2428
    %v2685 = vmul.f32 %v2291, %v2429
    %v2686 = vmul.f32 %v2295, %v2430
    %v2687 = vmul.f32 %v2297, %v2431
    %v2688 = vmul.f32 %v2301, %v2432
    %v2689 = vmul.f32 %v2303, %v2433
    %v2690 = vmul.f32 %v2283, %v2434
    %v2691 = vmul.f32 %v2285, %v2435
    %v2692 = vmul.f32 %v2289, %v2436
    %v2693 = vmul.f32 %v2291, %v2437
    %v2694 = vmul.f32 %v2295, %v2438
    %v2695 = vmul.f32 %v2297, %v2439
    %v2696 = vmul.f32 %v2301, %v2440
    %v2697 = vmul.f32 %v2303, %v2441
    %v2698 = vmul.f32 %v2283, %v2442
    %v2699 = vmul.f32 %v2285, %v2443
    %v2700 = vmul.f32 %v2289, %v2444
    %v2701 = vmul.f32 %v2291, %v2445
    %v2702 = vmul.f32 %v2295, %v2446
    %v2703 = vmul.f32 %v2297, %v2447
    %v2704 = vmul.f32 %v2301, %v2448
    %v2705 = vmul.f32 %v2303, %v2449
    %v2706 = vmul.f32 %v2283, %v2450
    %v2707 = vmul.f32 %v2285, %v2451
    %v2708 = vmul.f32 %v2289, %v2452
    %v2709 = vmul.f32 %v2291, %v2453
    %v2710 = vmul.f32 %v2295, %v2454
    %v2711 = vmul.f32 %v2297, %v2455
    %v2712 = vmul.f32 %v2301, %v2456
    %v2713 = vmul.f32 %v2303, %v2457
    %v2714 = vmul.f32 %v2283, %v2458
    %v2715 = vmul.f32 %v2285, %v2459
    %v2716 = vmul.f32 %v2289, %v2460
    %v2717 = vmul.f32 %v2291, %v2461
    %v2718 = vmul.f32 %v2295, %v2462
    %v2719 = vmul.f32 %v2297, %v2463
    %v2720 = vmul.f32 %v2301, %v2464
    %v2721 = vmul.f32 %v2303, %v2465
    %v2722 = vmul.f32 %v2283, %v2466
    %v2723 = vmul.f32 %v2285, %v2467
    %v2724 = vmul.f32 %v2289, %v2468
    %v2725 = vmul.f32 %v2291, %v2469
    %v2726 = vmul.f32 %v2295, %v2470
    %v2727 = vmul.f32 %v2297, %v2471
    %v2728 = vmul.f32 %v2301, %v2472
    %v2729 = vmul.f32 %v2303, %v2473
    %v2730 = vmul.f32 %v2283, %v2474
    %v2731 = vmul.f32 %v2285, %v2475
    %v2732 = vmul.f32 %v2289, %v2476
    %v2733 = vmul.f32 %v2291, %v2477
    %v2734 = vmul.f32 %v2295, %v2478
    %v2735 = vmul.f32 %v2297, %v2479
    %v2736 = vmul.f32 %v2301, %v2480
    %v2737 = vmul.f32 %v2303, %v2481
    %v2738 = vmul.f32 %v2283, %v2482
    %v2739 = vmul.f32 %v2285, %v2483
    %v2740 = vmul.f32 %v2289, %v2484
    %v2741 = vmul.f32 %v2291, %v2485
    %v2742 = vmul.f32 %v2295, %v2486
    %v2743 = vmul.f32 %v2297, %v2487
    %v2744 = vmul.f32 %v2301, %v2488
    %v2745 = vmul.f32 %v2303, %v2489
    %v2746 = vmul.f32 %v2283, %v2490
    %v2747 = vmul.f32 %v2285, %v2491
    %v2748 = vmul.f32 %v2289, %v2492
    %v2749 = vmul.f32 %v2291, %v2493
    %v2750 = vmul.f32 %v2295, %v2494
    %v2751 = vmul.f32 %v2297, %v2495
    %v2752 = vmul.f32 %v2301, %v2496
    %v2753 = vmul.f32 %v2303, %v2497
    %v2754 = vmul.f32 %v2283, %v2498
    %v2755 = vmul.f32 %v2285, %v2499
    %v2756 = vmul.f32 %v2289, %v2500
    %v2757 = vmul.f32 %v2291, %v2501
    %v2758 = vmul.f32 %v2295, %v2502
    %v2759 = vmul.f32 %v2297, %v2503
    %v2760 = vmul.f32 %v2301, %v2504
    %v2761 = vmul.f32 %v2303, %v2505
    %v2762 = vmul.f32 %v2283, %v2506
    %v2763 = vmul.f32 %v2285, %v2507
    %v2764 = vmul.f32 %v2289, %v2508
    %v2765 = vmul.f32 %v2291, %v2509
    %v2766 = vmul.f32 %v2295, %v2510
    %v2767 = vmul.f32 %v2297, %v2511
    %v2768 = vmul.f32 %v2301, %v2512
    %v2769 = vmul.f32 %v2303, %v2513
    %v2770 = vmul.f32 %v2283, %v2514
    %v2771 = vmul.f32 %v2285, %v2515
    %v2772 = vmul.f32 %v2289, %v2516
    %v2773 = vmul.f32 %v2291, %v2517
    %v2774 = vmul.f32 %v2295, %v2518
    %v2775 = vmul.f32 %v2297, %v2519
    %v2776 = vmul.f32 %v2301, %v2520
    %v2777 = vmul.f32 %v2303, %v2521
    %v2778 = vmul.f32 %v2283, %v2522
    %v2779 = vmul.f32 %v2285, %v2523
    %v2780 = vmul.f32 %v2289, %v2524
    %v2781 = vmul.f32 %v2291, %v2525
    %v2782 = vmul.f32 %v2295, %v2526
    %v2783 = vmul.f32 %v2297, %v2527
    %v2784 = vmul.f32 %v2301, %v2528
    %v2785 = vmul.f32 %v2303, %v2529
    %v2786 = vmul.f32 %v2283, %v2530
    %v2787 = vmul.f32 %v2285, %v2531
    %v2788 = vmul.f32 %v2289, %v2532
    %v2789 = vmul.f32 %v2291, %v2533
    %v2790 = vmul.f32 %v2295, %v2534
    %v2791 = vmul.f32 %v2297, %v2535
    %v2792 = vmul.f32 %v2301, %v2536
    %v2793 = vmul.f32 %v2303, %v2537
    %v2794 = vmul.f32 %v2283, %v2538
    %v2795 = vmul.f32 %v2285, %v2539
    %v2796 = vmul.f32 %v2289, %v2540
    %v2797 = vmul.f32 %v2291, %v2541
    %v2798 = vmul.f32 %v2295, %v2542
    %v2799 = vmul.f32 %v2297, %v2543
    %v2800 = vmul.f32 %v2301, %v2544
    %v2801 = vmul.f32 %v2303, %v2545
    %v2802 = vmul.f32 %v2283, %v2546
    %v2803 = vmul.f32 %v2285, %v2547
    %v2804 = vmul.f32 %v2289, %v2548
    %v2805 = vmul.f32 %v2291, %v2549
    %v2806 = vmul.f32 %v2295, %v2550
    %v2807 = vmul.f32 %v2297, %v2551
    %v2808 = vmul.f32 %v2301, %v2552
    %v2809 = vmul.f32 %v2303, %v2553
    %v2810 = vmul.f32 %v2283, %v2554
    %v2811 = vmul.f32 %v2285, %v2555
    %v2812 = vmul.f32 %v2289, %v2556
    %v2813 = vmul.f32 %v2291, %v2557
    %v2814 = vmul.f32 %v2295, %v2558
    %v2815 = vmul.f32 %v2297, %v2559
    %v2816 = vmul.f32 %v2301, %v2560
    %v2817 = vmul.f32 %v2303, %v2561
    %v2818 = vadd.f32 %v2562, %v2564
    %v2819 = vadd.f32 %v2818, %v2566
    %v2820 = vadd.f32 %v2819, %v2568
    %v2821 = vrot.slane %v2820, 4
    %v2822 = vadd.f32 %v2820, %v2821
    %v2823 = vrot.slane %v2822, 2
    %v2824 = vadd.f32 %v2822, %v2823
    %v2825 = vrot.slane %v2824, 1
    %v2826 = vadd.f32 %v2824, %v2825
    %v2827 = vsel %vm940, %v2563, 0.0
    %v2828 = vsel %vm940, %v2565, 0.0
    %v2829 = vadd.f32 %v2827, %v2828
    %v2830 = vsel %vm940, %v2567, 0.0
    %v2831 = vadd.f32 %v2829, %v2830
    %v2832 = vsel %vm940, %v2569, 0.0
    %v2833 = vadd.f32 %v2831, %v2832
    %v2834 = vrot.slane %v2833, 4
    %v2835 = vadd.f32 %v2833, %v2834
    %v2836 = vrot.slane %v2835, 2
    %v2837 = vadd.f32 %v2835, %v2836
    %v2838 = vrot.slane %v2837, 1
    %v2839 = vadd.f32 %v2837, %v2838
    %v2840 = vadd.f32 %v2570, %v2572
    %v2841 = vadd.f32 %v2840, %v2574
    %v2842 = vadd.f32 %v2841, %v2576
    %v2843 = vrot.slane %v2842, 4
    %v2844 = vadd.f32 %v2842, %v2843
    %v2845 = vrot.slane %v2844, 2
    %v2846 = vadd.f32 %v2844, %v2845
    %v2847 = vrot.slane %v2846, 1
    %v2848 = vadd.f32 %v2846, %v2847
    %v2849 = vsel %vm940, %v2571, 0.0
    %v2850 = vsel %vm940, %v2573, 0.0
    %v2851 = vadd.f32 %v2849, %v2850
    %v2852 = vsel %vm940, %v2575, 0.0
    %v2853 = vadd.f32 %v2851, %v2852
    %v2854 = vsel %vm940, %v2577, 0.0
    %v2855 = vadd.f32 %v2853, %v2854
    %v2856 = vrot.slane %v2855, 4
    %v2857 = vadd.f32 %v2855, %v2856
    %v2858 = vrot.slane %v2857, 2
    %v2859 = vadd.f32 %v2857, %v2858
    %v2860 = vrot.slane %v2859, 1
    %v2861 = vadd.f32 %v2859, %v2860
    %v2862 = vadd.f32 %v2578, %v2580
    %v2863 = vadd.f32 %v2862, %v2582
    %v2864 = vadd.f32 %v2863, %v2584
    %v2865 = vrot.slane %v2864, 4
    %v2866 = vadd.f32 %v2864, %v2865
    %v2867 = vrot.slane %v2866, 2
    %v2868 = vadd.f32 %v2866, %v2867
    %v2869 = vrot.slane %v2868, 1
    %v2870 = vadd.f32 %v2868, %v2869
    %v2871 = vsel %vm940, %v2579, 0.0
    %v2872 = vsel %vm940, %v2581, 0.0
    %v2873 = vadd.f32 %v2871, %v2872
    %v2874 = vsel %vm940, %v2583, 0.0
    %v2875 = vadd.f32 %v2873, %v2874
    %v2876 = vsel %vm940, %v2585, 0.0
    %v2877 = vadd.f32 %v2875, %v2876
    %v2878 = vrot.slane %v2877, 4
    %v2879 = vadd.f32 %v2877, %v2878
    %v2880 = vrot.slane %v2879, 2
    %v2881 = vadd.f32 %v2879, %v2880
    %v2882 = vrot.slane %v2881, 1
    %v2883 = vadd.f32 %v2881, %v2882
    %v2884 = vadd.f32 %v2586, %v2588
    %v2885 = vadd.f32 %v2884, %v2590
    %v2886 = vadd.f32 %v2885, %v2592
    %v2887 = vrot.slane %v2886, 4
    %v2888 = vadd.f32 %v2886, %v2887
    %v2889 = vrot.slane %v2888, 2
    %v2890 = vadd.f32 %v2888, %v2889
    %v2891 = vrot.slane %v2890, 1
    %v2892 = vadd.f32 %v2890, %v2891
    %v2893 = vsel %vm940, %v2587, 0.0
    %v2894 = vsel %vm940, %v2589, 0.0
    %v2895 = vadd.f32 %v2893, %v2894
    %v2896 = vsel %vm940, %v2591, 0.0
    %v2897 = vadd.f32 %v2895, %v2896
    %v2898 = vsel %vm940, %v2593, 0.0
    %v2899 = vadd.f32 %v2897, %v2898
    %v2900 = vrot.slane %v2899, 4
    %v2901 = vadd.f32 %v2899, %v2900
    %v2902 = vrot.slane %v2901, 2
    %v2903 = vadd.f32 %v2901, %v2902
    %v2904 = vrot.slane %v2903, 1
    %v2905 = vadd.f32 %v2903, %v2904
    %v2906 = vadd.f32 %v2594, %v2596
    %v2907 = vadd.f32 %v2906, %v2598
    %v2908 = vadd.f32 %v2907, %v2600
    %v2909 = vrot.slane %v2908, 4
    %v2910 = vadd.f32 %v2908, %v2909
    %v2911 = vrot.slane %v2910, 2
    %v2912 = vadd.f32 %v2910, %v2911
    %v2913 = vrot.slane %v2912, 1
    %v2914 = vadd.f32 %v2912, %v2913
    %v2915 = vsel %vm940, %v2595, 0.0
    %v2916 = vsel %vm940, %v2597, 0.0
    %v2917 = vadd.f32 %v2915, %v2916
    %v2918 = vsel %vm940, %v2599, 0.0
    %v2919 = vadd.f32 %v2917, %v2918
    %v2920 = vsel %vm940, %v2601, 0.0
    %v2921 = vadd.f32 %v2919, %v2920
    %v2922 = vrot.slane %v2921, 4
    %v2923 = vadd.f32 %v2921, %v2922
    %v2924 = vrot.slane %v2923, 2
    %v2925 = vadd.f32 %v2923, %v2924
    %v2926 = vrot.slane %v2925, 1
    %v2927 = vadd.f32 %v2925, %v2926
    %v2928 = vadd.f32 %v2602, %v2604
    %v2929 = vadd.f32 %v2928, %v2606
    %v2930 = vadd.f32 %v2929, %v2608
    %v2931 = vrot.slane %v2930, 4
    %v2932 = vadd.f32 %v2930, %v2931
    %v2933 = vrot.slane %v2932, 2
    %v2934 = vadd.f32 %v2932, %v2933
    %v2935 = vrot.slane %v2934, 1
    %v2936 = vadd.f32 %v2934, %v2935
    %v2937 = vsel %vm940, %v2603, 0.0
    %v2938 = vsel %vm940, %v2605, 0.0
    %v2939 = vadd.f32 %v2937, %v2938
    %v2940 = vsel %vm940, %v2607, 0.0
    %v2941 = vadd.f32 %v2939, %v2940
    %v2942 = vsel %vm940, %v2609, 0.0
    %v2943 = vadd.f32 %v2941, %v2942
    %v2944 = vrot.slane %v2943, 4
    %v2945 = vadd.f32 %v2943, %v2944
    %v2946 = vrot.slane %v2945, 2
    %v2947 = vadd.f32 %v2945, %v2946
    %v2948 = vrot.slane %v2947, 1
    %v2949 = vadd.f32 %v2947, %v2948
    %v2950 = vadd.f32 %v2610, %v2612
    %v2951 = vadd.f32 %v2950, %v2614
    %v2952 = vadd.f32 %v2951, %v2616
    %v2953 = vrot.slane %v2952, 4
    %v2954 = vadd.f32 %v2952, %v2953
    %v2955 = vrot.slane %v2954, 2
    %v2956 = vadd.f32 %v2954, %v2955
    %v2957 = vrot.slane %v2956, 1
    %v2958 = vadd.f32 %v2956, %v2957
    %v2959 = vsel %vm940, %v2611, 0.0
    %v2960 = vsel %vm940, %v2613, 0.0
    %v2961 = vadd.f32 %v2959, %v2960
    %v2962 = vsel %vm940, %v2615, 0.0
    %v2963 = vadd.f32 %v2961, %v2962
    %v2964 = vsel %vm940, %v2617, 0.0
    %v2965 = vadd.f32 %v2963, %v2964
    %v2966 = vrot.slane %v2965, 4
    %v2967 = vadd.f32 %v2965, %v2966
    %v2968 = vrot.slane %v2967, 2
    %v2969 = vadd.f32 %v2967, %v2968
    %v2970 = vrot.slane %v2969, 1
    %v2971 = vadd.f32 %v2969, %v2970
    %v2972 = vadd.f32 %v2618, %v2620
    %v2973 = vadd.f32 %v2972, %v2622
    %v2974 = vadd.f32 %v2973, %v2624
    %v2975 = vrot.slane %v2974, 4
    %v2976 = vadd.f32 %v2974, %v2975
    %v2977 = vrot.slane %v2976, 2
    %v2978 = vadd.f32 %v2976, %v2977
    %v2979 = vrot.slane %v2978, 1
    %v2980 = vadd.f32 %v2978, %v2979
    %v2981 = vsel %vm940, %v2619, 0.0
    %v2982 = vsel %vm940, %v2621, 0.0
    %v2983 = vadd.f32 %v2981, %v2982
    %v2984 = vsel %vm940, %v2623, 0.0
    %v2985 = vadd.f32 %v2983, %v2984
    %v2986 = vsel %vm940, %v2625, 0.0
    %v2987 = vadd.f32 %v2985, %v2986
    %v2988 = vrot.slane %v2987, 4
    %v2989 = vadd.f32 %v2987, %v2988
    %v2990 = vrot.slane %v2989, 2
    %v2991 = vadd.f32 %v2989, %v2990
    %v2992 = vrot.slane %v2991, 1
    %v2993 = vadd.f32 %v2991, %v2992
    %v2994 = vadd.f32 %v2626, %v2628
    %v2995 = vadd.f32 %v2994, %v2630
    %v2996 = vadd.f32 %v2995, %v2632
    %v2997 = vrot.slane %v2996, 4
    %v2998 = vadd.f32 %v2996, %v2997
    %v2999 = vrot.slane %v2998, 2
    %v3000 = vadd.f32 %v2998, %v2999
    %v3001 = vrot.slane %v3000, 1
    %v3002 = vadd.f32 %v3000, %v3001
    %v3003 = vsel %vm940, %v2627, 0.0
    %v3004 = vsel %vm940, %v2629, 0.0
    %v3005 = vadd.f32 %v3003, %v3004
    %v3006 = vsel %vm940, %v2631, 0.0
    %v3007 = vadd.f32 %v3005, %v3006
    %v3008 = vsel %vm940, %v2633, 0.0
    %v3009 = vadd.f32 %v3007, %v3008
    %v3010 = vrot.slane %v3009, 4
    %v3011 = vadd.f32 %v3009, %v3010
    %v3012 = vrot.slane %v3011, 2
    %v3013 = vadd.f32 %v3011, %v3012
    %v3014 = vrot.slane %v3013, 1
    %v3015 = vadd.f32 %v3013, %v3014
    %v3016 = vadd.f32 %v2634, %v2636
    %v3017 = vadd.f32 %v3016, %v2638
    %v3018 = vadd.f32 %v3017, %v2640
    %v3019 = vrot.slane %v3018, 4
    %v3020 = vadd.f32 %v3018, %v3019
    %v3021 = vrot.slane %v3020, 2
    %v3022 = vadd.f32 %v3020, %v3021
    %v3023 = vrot.slane %v3022, 1
    %v3024 = vadd.f32 %v3022, %v3023
    %v3025 = vsel %vm940, %v2635, 0.0
    %v3026 = vsel %vm940, %v2637, 0.0
    %v3027 = vadd.f32 %v3025, %v3026
    %v3028 = vsel %vm940, %v2639, 0.0
    %v3029 = vadd.f32 %v3027, %v3028
    %v3030 = vsel %vm940, %v2641, 0.0
    %v3031 = vadd.f32 %v3029, %v3030
    %v3032 = vrot.slane %v3031, 4
    %v3033 = vadd.f32 %v3031, %v3032
    %v3034 = vrot.slane %v3033, 2
    %v3035 = vadd.f32 %v3033, %v3034
    %v3036 = vrot.slane %v3035, 1
    %v3037 = vadd.f32 %v3035, %v3036
    %v3038 = vadd.f32 %v2642, %v2644
    %v3039 = vadd.f32 %v3038, %v2646
    %v3040 = vadd.f32 %v3039, %v2648
    %v3041 = vrot.slane %v3040, 4
    %v3042 = vadd.f32 %v3040, %v3041
    %v3043 = vrot.slane %v3042, 2
    %v3044 = vadd.f32 %v3042, %v3043
    %v3045 = vrot.slane %v3044, 1
    %v3046 = vadd.f32 %v3044, %v3045
    %v3047 = vsel %vm940, %v2643, 0.0
    %v3048 = vsel %vm940, %v2645, 0.0
    %v3049 = vadd.f32 %v3047, %v3048
    %v3050 = vsel %vm940, %v2647, 0.0
    %v3051 = vadd.f32 %v3049, %v3050
    %v3052 = vsel %vm940, %v2649, 0.0
    %v3053 = vadd.f32 %v3051, %v3052
    %v3054 = vrot.slane %v3053, 4
    %v3055 = vadd.f32 %v3053, %v3054
    %v3056 = vrot.slane %v3055, 2
    %v3057 = vadd.f32 %v3055, %v3056
    %v3058 = vrot.slane %v3057, 1
    %v3059 = vadd.f32 %v3057, %v3058
    %v3060 = vadd.f32 %v2650, %v2652
    %v3061 = vadd.f32 %v3060, %v2654
    %v3062 = vadd.f32 %v3061, %v2656
    %v3063 = vrot.slane %v3062, 4
    %v3064 = vadd.f32 %v3062, %v3063
    %v3065 = vrot.slane %v3064, 2
    %v3066 = vadd.f32 %v3064, %v3065
    %v3067 = vrot.slane %v3066, 1
    %v3068 = vadd.f32 %v3066, %v3067
    %v3069 = vsel %vm940, %v2651, 0.0
    %v3070 = vsel %vm940, %v2653, 0.0
    %v3071 = vadd.f32 %v3069, %v3070
    %v3072 = vsel %vm940, %v2655, 0.0
    %v3073 = vadd.f32 %v3071, %v3072
    %v3074 = vsel %vm940, %v2657, 0.0
    %v3075 = vadd.f32 %v3073, %v3074
    %v3076 = vrot.slane %v3075, 4
    %v3077 = vadd.f32 %v3075, %v3076
    %v3078 = vrot.slane %v3077, 2
    %v3079 = vadd.f32 %v3077, %v3078
    %v3080 = vrot.slane %v3079, 1
    %v3081 = vadd.f32 %v3079, %v3080
    %v3082 = vadd.f32 %v2658, %v2660
    %v3083 = vadd.f32 %v3082, %v2662
    %v3084 = vadd.f32 %v3083, %v2664
    %v3085 = vrot.slane %v3084, 4
    %v3086 = vadd.f32 %v3084, %v3085
    %v3087 = vrot.slane %v3086, 2
    %v3088 = vadd.f32 %v3086, %v3087
    %v3089 = vrot.slane %v3088, 1
    %v3090 = vadd.f32 %v3088, %v3089
    %v3091 = vsel %vm940, %v2659, 0.0
    %v3092 = vsel %vm940, %v2661, 0.0
    %v3093 = vadd.f32 %v3091, %v3092
    %v3094 = vsel %vm940, %v2663, 0.0
    %v3095 = vadd.f32 %v3093, %v3094
    %v3096 = vsel %vm940, %v2665, 0.0
    %v3097 = vadd.f32 %v3095, %v3096
    %v3098 = vrot.slane %v3097, 4
    %v3099 = vadd.f32 %v3097, %v3098
    %v3100 = vrot.slane %v3099, 2
    %v3101 = vadd.f32 %v3099, %v3100
    %v3102 = vrot.slane %v3101, 1
    %v3103 = vadd.f32 %v3101, %v3102
    %v3104 = vadd.f32 %v2666, %v2668
    %v3105 = vadd.f32 %v3104, %v2670
    %v3106 = vadd.f32 %v3105, %v2672
    %v3107 = vrot.slane %v3106, 4
    %v3108 = vadd.f32 %v3106, %v3107
    %v3109 = vrot.slane %v3108, 2
    %v3110 = vadd.f32 %v3108, %v3109
    %v3111 = vrot.slane %v3110, 1
    %v3112 = vadd.f32 %v3110, %v3111
    %v3113 = vsel %vm940, %v2667, 0.0
    %v3114 = vsel %vm940, %v2669, 0.0
    %v3115 = vadd.f32 %v3113, %v3114
    %v3116 = vsel %vm940, %v2671, 0.0
    %v3117 = vadd.f32 %v3115, %v3116
    %v3118 = vsel %vm940, %v2673, 0.0
    %v3119 = vadd.f32 %v3117, %v3118
    %v3120 = vrot.slane %v3119, 4
    %v3121 = vadd.f32 %v3119, %v3120
    %v3122 = vrot.slane %v3121, 2
    %v3123 = vadd.f32 %v3121, %v3122
    %v3124 = vrot.slane %v3123, 1
    %v3125 = vadd.f32 %v3123, %v3124
    %v3126 = vadd.f32 %v2674, %v2676
    %v3127 = vadd.f32 %v3126, %v2678
    %v3128 = vadd.f32 %v3127, %v2680
    %v3129 = vrot.slane %v3128, 4
    %v3130 = vadd.f32 %v3128, %v3129
    %v3131 = vrot.slane %v3130, 2
    %v3132 = vadd.f32 %v3130, %v3131
    %v3133 = vrot.slane %v3132, 1
    %v3134 = vadd.f32 %v3132, %v3133
    %v3135 = vsel %vm940, %v2675, 0.0
    %v3136 = vsel %vm940, %v2677, 0.0
    %v3137 = vadd.f32 %v3135, %v3136
    %v3138 = vsel %vm940, %v2679, 0.0
    %v3139 = vadd.f32 %v3137, %v3138
    %v3140 = vsel %vm940, %v2681, 0.0
    %v3141 = vadd.f32 %v3139, %v3140
    %v3142 = vrot.slane %v3141, 4
    %v3143 = vadd.f32 %v3141, %v3142
    %v3144 = vrot.slane %v3143, 2
    %v3145 = vadd.f32 %v3143, %v3144
    %v3146 = vrot.slane %v3145, 1
    %v3147 = vadd.f32 %v3145, %v3146
    %v3148 = vadd.f32 %v2682, %v2684
    %v3149 = vadd.f32 %v3148, %v2686
    %v3150 = vadd.f32 %v3149, %v2688
    %v3151 = vrot.slane %v3150, 4
    %v3152 = vadd.f32 %v3150, %v3151
    %v3153 = vrot.slane %v3152, 2
    %v3154 = vadd.f32 %v3152, %v3153
    %v3155 = vrot.slane %v3154, 1
    %v3156 = vadd.f32 %v3154, %v3155
    %v3157 = vsel %vm940, %v2683, 0.0
    %v3158 = vsel %vm940, %v2685, 0.0
    %v3159 = vadd.f32 %v3157, %v3158
    %v3160 = vsel %vm940, %v2687, 0.0
    %v3161 = vadd.f32 %v3159, %v3160
    %v3162 = vsel %vm940, %v2689, 0.0
    %v3163 = vadd.f32 %v3161, %v3162
    %v3164 = vrot.slane %v3163, 4
    %v3165 = vadd.f32 %v3163, %v3164
    %v3166 = vrot.slane %v3165, 2
    %v3167 = vadd.f32 %v3165, %v3166
    %v3168 = vrot.slane %v3167, 1
    %v3169 = vadd.f32 %v3167, %v3168
    %v3170 = vadd.f32 %v2690, %v2692
    %v3171 = vadd.f32 %v3170, %v2694
    %v3172 = vadd.f32 %v3171, %v2696
    %v3173 = vrot.slane %v3172, 4
    %v3174 = vadd.f32 %v3172, %v3173
    %v3175 = vrot.slane %v3174, 2
    %v3176 = vadd.f32 %v3174, %v3175
    %v3177 = vrot.slane %v3176, 1
    %v3178 = vadd.f32 %v3176, %v3177
    %v3179 = vsel %vm940, %v2691, 0.0
    %v3180 = vsel %vm940, %v2693, 0.0
    %v3181 = vadd.f32 %v3179, %v3180
    %v3182 = vsel %vm940, %v2695, 0.0
    %v3183 = vadd.f32 %v3181, %v3182
    %v3184 = vsel %vm940, %v2697, 0.0
    %v3185 = vadd.f32 %v3183, %v3184
    %v3186 = vrot.slane %v3185, 4
    %v3187 = vadd.f32 %v3185, %v3186
    %v3188 = vrot.slane %v3187, 2
    %v3189 = vadd.f32 %v3187, %v3188
    %v3190 = vrot.slane %v3189, 1
    %v3191 = vadd.f32 %v3189, %v3190
    %v3192 = vadd.f32 %v2698, %v2700
    %v3193 = vadd.f32 %v3192, %v2702
    %v3194 = vadd.f32 %v3193, %v2704
    %v3195 = vrot.slane %v3194, 4
    %v3196 = vadd.f32 %v3194, %v3195
    %v3197 = vrot.slane %v3196, 2
    %v3198 = vadd.f32 %v3196, %v3197
    %v3199 = vrot.slane %v3198, 1
    %v3200 = vadd.f32 %v3198, %v3199
    %v3201 = vsel %vm940, %v2699, 0.0
    %v3202 = vsel %vm940, %v2701, 0.0
    %v3203 = vadd.f32 %v3201, %v3202
    %v3204 = vsel %vm940, %v2703, 0.0
    %v3205 = vadd.f32 %v3203, %v3204
    %v3206 = vsel %vm940, %v2705, 0.0
    %v3207 = vadd.f32 %v3205, %v3206
    %v3208 = vrot.slane %v3207, 4
    %v3209 = vadd.f32 %v3207, %v3208
    %v3210 = vrot.slane %v3209, 2
    %v3211 = vadd.f32 %v3209, %v3210
    %v3212 = vrot.slane %v3211, 1
    %v3213 = vadd.f32 %v3211, %v3212
    %v3214 = vadd.f32 %v2706, %v2708
    %v3215 = vadd.f32 %v3214, %v2710
    %v3216 = vadd.f32 %v3215, %v2712
    %v3217 = vrot.slane %v3216, 4
    %v3218 = vadd.f32 %v3216, %v3217
    %v3219 = vrot.slane %v3218, 2
    %v3220 = vadd.f32 %v3218, %v3219
    %v3221 = vrot.slane %v3220, 1
    %v3222 = vadd.f32 %v3220, %v3221
    %v3223 = vsel %vm940, %v2707, 0.0
    %v3224 = vsel %vm940, %v2709, 0.0
    %v3225 = vadd.f32 %v3223, %v3224
    %v3226 = vsel %vm940, %v2711, 0.0
    %v3227 = vadd.f32 %v3225, %v3226
    %v3228 = vsel %vm940, %v2713, 0.0
    %v3229 = vadd.f32 %v3227, %v3228
    %v3230 = vrot.slane %v3229, 4
    %v3231 = vadd.f32 %v3229, %v3230
    %v3232 = vrot.slane %v3231, 2
    %v3233 = vadd.f32 %v3231, %v3232
    %v3234 = vrot.slane %v3233, 1
    %v3235 = vadd.f32 %v3233, %v3234
    %v3236 = vadd.f32 %v2714, %v2716
    %v3237 = vadd.f32 %v3236, %v2718
    %v3238 = vadd.f32 %v3237, %v2720
    %v3239 = vrot.slane %v3238, 4
    %v3240 = vadd.f32 %v3238, %v3239
    %v3241 = vrot.slane %v3240, 2
    %v3242 = vadd.f32 %v3240, %v3241
    %v3243 = vrot.slane %v3242, 1
    %v3244 = vadd.f32 %v3242, %v3243
    %v3245 = vsel %vm940, %v2715, 0.0
    %v3246 = vsel %vm940, %v2717, 0.0
    %v3247 = vadd.f32 %v3245, %v3246
    %v3248 = vsel %vm940, %v2719, 0.0
    %v3249 = vadd.f32 %v3247, %v3248
    %v3250 = vsel %vm940, %v2721, 0.0
    %v3251 = vadd.f32 %v3249, %v3250
    %v3252 = vrot.slane %v3251, 4
    %v3253 = vadd.f32 %v3251, %v3252
    %v3254 = vrot.slane %v3253, 2
    %v3255 = vadd.f32 %v3253, %v3254
    %v3256 = vrot.slane %v3255, 1
    %v3257 = vadd.f32 %v3255, %v3256
    %v3258 = vadd.f32 %v2722, %v2724
    %v3259 = vadd.f32 %v3258, %v2726
    %v3260 = vadd.f32 %v3259, %v2728
    %v3261 = vrot.slane %v3260, 4
    %v3262 = vadd.f32 %v3260, %v3261
    %v3263 = vrot.slane %v3262, 2
    %v3264 = vadd.f32 %v3262, %v3263
    %v3265 = vrot.slane %v3264, 1
    %v3266 = vadd.f32 %v3264, %v3265
    %v3267 = vsel %vm940, %v2723, 0.0
    %v3268 = vsel %vm940, %v2725, 0.0
    %v3269 = vadd.f32 %v3267, %v3268
    %v3270 = vsel %vm940, %v2727, 0.0
    %v3271 = vadd.f32 %v3269, %v3270
    %v3272 = vsel %vm940, %v2729, 0.0
    %v3273 = vadd.f32 %v3271, %v3272
    %v3274 = vrot.slane %v3273, 4
    %v3275 = vadd.f32 %v3273, %v3274
    %v3276 = vrot.slane %v3275, 2
    %v3277 = vadd.f32 %v3275, %v3276
    %v3278 = vrot.slane %v3277, 1
    %v3279 = vadd.f32 %v3277, %v3278
    %v3280 = vadd.f32 %v2730, %v2732
    %v3281 = vadd.f32 %v3280, %v2734
    %v3282 = vadd.f32 %v3281, %v2736
    %v3283 = vrot.slane %v3282, 4
    %v3284 = vadd.f32 %v3282, %v3283
    %v3285 = vrot.slane %v3284, 2
    %v3286 = vadd.f32 %v3284, %v3285
    %v3287 = vrot.slane %v3286, 1
    %v3288 = vadd.f32 %v3286, %v3287
    %v3289 = vsel %vm940, %v2731, 0.0
    %v3290 = vsel %vm940, %v2733, 0.0
    %v3291 = vadd.f32 %v3289, %v3290
    %v3292 = vsel %vm940, %v2735, 0.0
    %v3293 = vadd.f32 %v3291, %v3292
    %v3294 = vsel %vm940, %v2737, 0.0
    %v3295 = vadd.f32 %v3293, %v3294
    %v3296 = vrot.slane %v3295, 4
    %v3297 = vadd.f32 %v3295, %v3296
    %v3298 = vrot.slane %v3297, 2
    %v3299 = vadd.f32 %v3297, %v3298
    %v3300 = vrot.slane %v3299, 1
    %v3301 = vadd.f32 %v3299, %v3300
    %v3302 = vadd.f32 %v2738, %v2740
    %v3303 = vadd.f32 %v3302, %v2742
    %v3304 = vadd.f32 %v3303, %v2744
    %v3305 = vrot.slane %v3304, 4
    %v3306 = vadd.f32 %v3304, %v3305
    %v3307 = vrot.slane %v3306, 2
    %v3308 = vadd.f32 %v3306, %v3307
    %v3309 = vrot.slane %v3308, 1
    %v3310 = vadd.f32 %v3308, %v3309
    %v3311 = vsel %vm940, %v2739, 0.0
    %v3312 = vsel %vm940, %v2741, 0.0
    %v3313 = vadd.f32 %v3311, %v3312
    %v3314 = vsel %vm940, %v2743, 0.0
    %v3315 = vadd.f32 %v3313, %v3314
    %v3316 = vsel %vm940, %v2745, 0.0
    %v3317 = vadd.f32 %v3315, %v3316
    %v3318 = vrot.slane %v3317, 4
    %v3319 = vadd.f32 %v3317, %v3318
    %v3320 = vrot.slane %v3319, 2
    %v3321 = vadd.f32 %v3319, %v3320
    %v3322 = vrot.slane %v3321, 1
    %v3323 = vadd.f32 %v3321, %v3322
    %v3324 = vadd.f32 %v2746, %v2748
    %v3325 = vadd.f32 %v3324, %v2750
    %v3326 = vadd.f32 %v3325, %v2752
    %v3327 = vrot.slane %v3326, 4
    %v3328 = vadd.f32 %v3326, %v3327
    %v3329 = vrot.slane %v3328, 2
    %v3330 = vadd.f32 %v3328, %v3329
    %v3331 = vrot.slane %v3330, 1
    %v3332 = vadd.f32 %v3330, %v3331
    %v3333 = vsel %vm940, %v2747, 0.0
    %v3334 = vsel %vm940, %v2749, 0.0
    %v3335 = vadd.f32 %v3333, %v3334
    %v3336 = vsel %vm940, %v2751, 0.0
    %v3337 = vadd.f32 %v3335, %v3336
    %v3338 = vsel %vm940, %v2753, 0.0
    %v3339 = vadd.f32 %v3337, %v3338
    %v3340 = vrot.slane %v3339, 4
    %v3341 = vadd.f32 %v3339, %v3340
    %v3342 = vrot.slane %v3341, 2
    %v3343 = vadd.f32 %v3341, %v3342
    %v3344 = vrot.slane %v3343, 1
    %v3345 = vadd.f32 %v3343, %v3344
    %v3346 = vadd.f32 %v2754, %v2756
    %v3347 = vadd.f32 %v3346, %v2758
    %v3348 = vadd.f32 %v3347, %v2760
    %v3349 = vrot.slane %v3348, 4
    %v3350 = vadd.f32 %v3348, %v3349
    %v3351 = vrot.slane %v3350, 2
    %v3352 = vadd.f32 %v3350, %v3351
    %v3353 = vrot.slane %v3352, 1
    %v3354 = vadd.f32 %v3352, %v3353
    %v3355 = vsel %vm940, %v2755, 0.0
    %v3356 = vsel %vm940, %v2757, 0.0
    %v3357 = vadd.f32 %v3355, %v3356
    %v3358 = vsel %vm940, %v2759, 0.0
    %v3359 = vadd.f32 %v3357, %v3358
    %v3360 = vsel %vm940, %v2761, 0.0
    %v3361 = vadd.f32 %v3359, %v3360
    %v3362 = vrot.slane %v3361, 4
    %v3363 = vadd.f32 %v3361, %v3362
    %v3364 = vrot.slane %v3363, 2
    %v3365 = vadd.f32 %v3363, %v3364
    %v3366 = vrot.slane %v3365, 1
    %v3367 = vadd.f32 %v3365, %v3366
    %v3368 = vadd.f32 %v2762, %v2764
    %v3369 = vadd.f32 %v3368, %v2766
    %v3370 = vadd.f32 %v3369, %v2768
    %v3371 = vrot.slane %v3370, 4
    %v3372 = vadd.f32 %v3370, %v3371
    %v3373 = vrot.slane %v3372, 2
    %v3374 = vadd.f32 %v3372, %v3373
    %v3375 = vrot.slane %v3374, 1
    %v3376 = vadd.f32 %v3374, %v3375
    %v3377 = vsel %vm940, %v2763, 0.0
    %v3378 = vsel %vm940, %v2765, 0.0
    %v3379 = vadd.f32 %v3377, %v3378
    %v3380 = vsel %vm940, %v2767, 0.0
    %v3381 = vadd.f32 %v3379, %v3380
    %v3382 = vsel %vm940, %v2769, 0.0
    %v3383 = vadd.f32 %v3381, %v3382
    %v3384 = vrot.slane %v3383, 4
    %v3385 = vadd.f32 %v3383, %v3384
    %v3386 = vrot.slane %v3385, 2
    %v3387 = vadd.f32 %v3385, %v3386
    %v3388 = vrot.slane %v3387, 1
    %v3389 = vadd.f32 %v3387, %v3388
    %v3390 = vadd.f32 %v2770, %v2772
    %v3391 = vadd.f32 %v3390, %v2774
    %v3392 = vadd.f32 %v3391, %v2776
    %v3393 = vrot.slane %v3392, 4
    %v3394 = vadd.f32 %v3392, %v3393
    %v3395 = vrot.slane %v3394, 2
    %v3396 = vadd.f32 %v3394, %v3395
    %v3397 = vrot.slane %v3396, 1
    %v3398 = vadd.f32 %v3396, %v3397
    %v3399 = vsel %vm940, %v2771, 0.0
    %v3400 = vsel %vm940, %v2773, 0.0
    %v3401 = vadd.f32 %v3399, %v3400
    %v3402 = vsel %vm940, %v2775, 0.0
    %v3403 = vadd.f32 %v3401, %v3402
    %v3404 = vsel %vm940, %v2777, 0.0
    %v3405 = vadd.f32 %v3403, %v3404
    %v3406 = vrot.slane %v3405, 4
    %v3407 = vadd.f32 %v3405, %v3406
    %v3408 = vrot.slane %v3407, 2
    %v3409 = vadd.f32 %v3407, %v3408
    %v3410 = vrot.slane %v3409, 1
    %v3411 = vadd.f32 %v3409, %v3410
    %v3412 = vadd.f32 %v2778, %v2780
    %v3413 = vadd.f32 %v3412, %v2782
    %v3414 = vadd.f32 %v3413, %v2784
    %v3415 = vrot.slane %v3414, 4
    %v3416 = vadd.f32 %v3414, %v3415
    %v3417 = vrot.slane %v3416, 2
    %v3418 = vadd.f32 %v3416, %v3417
    %v3419 = vrot.slane %v3418, 1
    %v3420 = vadd.f32 %v3418, %v3419
    %v3421 = vsel %vm940, %v2779, 0.0
    %v3422 = vsel %vm940, %v2781, 0.0
    %v3423 = vadd.f32 %v3421, %v3422
    %v3424 = vsel %vm940, %v2783, 0.0
    %v3425 = vadd.f32 %v3423, %v3424
    %v3426 = vsel %vm940, %v2785, 0.0
    %v3427 = vadd.f32 %v3425, %v3426
    %v3428 = vrot.slane %v3427, 4
    %v3429 = vadd.f32 %v3427, %v3428
    %v3430 = vrot.slane %v3429, 2
    %v3431 = vadd.f32 %v3429, %v3430
    %v3432 = vrot.slane %v3431, 1
    %v3433 = vadd.f32 %v3431, %v3432
    %v3434 = vadd.f32 %v2786, %v2788
    %v3435 = vadd.f32 %v3434, %v2790
    %v3436 = vadd.f32 %v3435, %v2792
    %v3437 = vrot.slane %v3436, 4
    %v3438 = vadd.f32 %v3436, %v3437
    %v3439 = vrot.slane %v3438, 2
    %v3440 = vadd.f32 %v3438, %v3439
    %v3441 = vrot.slane %v3440, 1
    %v3442 = vadd.f32 %v3440, %v3441
    %v3443 = vsel %vm940, %v2787, 0.0
    %v3444 = vsel %vm940, %v2789, 0.0
    %v3445 = vadd.f32 %v3443, %v3444
    %v3446 = vsel %vm940, %v2791, 0.0
    %v3447 = vadd.f32 %v3445, %v3446
    %v3448 = vsel %vm940, %v2793, 0.0
    %v3449 = vadd.f32 %v3447, %v3448
    %v3450 = vrot.slane %v3449, 4
    %v3451 = vadd.f32 %v3449, %v3450
    %v3452 = vrot.slane %v3451, 2
    %v3453 = vadd.f32 %v3451, %v3452
    %v3454 = vrot.slane %v3453, 1
    %v3455 = vadd.f32 %v3453, %v3454
    %v3456 = vadd.f32 %v2794, %v2796
    %v3457 = vadd.f32 %v3456, %v2798
    %v3458 = vadd.f32 %v3457, %v2800
    %v3459 = vrot.slane %v3458, 4
    %v3460 = vadd.f32 %v3458, %v3459
    %v3461 = vrot.slane %v3460, 2
    %v3462 = vadd.f32 %v3460, %v3461
    %v3463 = vrot.slane %v3462, 1
    %v3464 = vadd.f32 %v3462, %v3463
    %v3465 = vsel %vm940, %v2795, 0.0
    %v3466 = vsel %vm940, %v2797, 0.0
    %v3467 = vadd.f32 %v3465, %v3466
    %v3468 = vsel %vm940, %v2799, 0.0
    %v3469 = vadd.f32 %v3467, %v3468
    %v3470 = vsel %vm940, %v2801, 0.0
    %v3471 = vadd.f32 %v3469, %v3470
    %v3472 = vrot.slane %v3471, 4
    %v3473 = vadd.f32 %v3471, %v3472
    %v3474 = vrot.slane %v3473, 2
    %v3475 = vadd.f32 %v3473, %v3474
    %v3476 = vrot.slane %v3475, 1
    %v3477 = vadd.f32 %v3475, %v3476
    %v3478 = vadd.f32 %v2802, %v2804
    %v3479 = vadd.f32 %v3478, %v2806
    %v3480 = vadd.f32 %v3479, %v2808
    %v3481 = vrot.slane %v3480, 4
    %v3482 = vadd.f32 %v3480, %v3481
    %v3483 = vrot.slane %v3482, 2
    %v3484 = vadd.f32 %v3482, %v3483
    %v3485 = vrot.slane %v3484, 1
    %v3486 = vadd.f32 %v3484, %v3485
    %v3487 = vsel %vm940, %v2803, 0.0
    %v3488 = vsel %vm940, %v2805, 0.0
    %v3489 = vadd.f32 %v3487, %v3488
    %v3490 = vsel %vm940, %v2807, 0.0
    %v3491 = vadd.f32 %v3489, %v3490
    %v3492 = vsel %vm940, %v2809, 0.0
    %v3493 = vadd.f32 %v3491, %v3492
    %v3494 = vrot.slane %v3493, 4
    %v3495 = vadd.f32 %v3493, %v3494
    %v3496 = vrot.slane %v3495, 2
    %v3497 = vadd.f32 %v3495, %v3496
    %v3498 = vrot.slane %v3497, 1
    %v3499 = vadd.f32 %v3497, %v3498
    %v3500 = vadd.f32 %v2810, %v2812
    %v3501 = vadd.f32 %v3500, %v2814
    %v3502 = vadd.f32 %v3501, %v2816
    %v3503 = vrot.slane %v3502, 4
    %v3504 = vadd.f32 %v3502, %v3503
    %v3505 = vrot.slane %v3504, 2
    %v3506 = vadd.f32 %v3504, %v3505
    %v3507 = vrot.slane %v3506, 1
    %v3508 = vadd.f32 %v3506, %v3507
    %v3509 = vsel %vm940, %v2811, 0.0
    %v3510 = vsel %vm940, %v2813, 0.0
    %v3511 = vadd.f32 %v3509, %v3510
    %v3512 = vsel %vm940, %v2815, 0.0
    %v3513 = vadd.f32 %v3511, %v3512
    %v3514 = vsel %vm940, %v2817, 0.0
    %v3515 = vadd.f32 %v3513, %v3514
    %v3516 = vrot.slane %v3515, 4
    %v3517 = vadd.f32 %v3515, %v3516
    %v3518 = vrot.slane %v3517, 2
    %v3519 = vadd.f32 %v3517, %v3518
    %v3520 = vrot.slane %v3519, 1
    %v3521 = vadd.f32 %v3519, %v3520
    %s3522 = scalar_lea.vmem [#allocation7], 32
    %v3523 = vld [vmem:[%s3522] sm:$0xff]
    %v3524 = vld [vmem:[%s3522 + $0x8] sm:$0xff]
    %v3525 = vld [vmem:[%s3522 + $0x10] sm:$0xff]
    %v3526 = vld [vmem:[%s3522 + $0x18] sm:$0xff]
    %v3591 = vsel %vm1704, %v2848, %v2826
    %v3592 = vsel %vm1706, %v2870, %v3591
    %v3593 = vsel %vm1708, %v2892, %v3592
    %v3594 = vsel %vm1710, %v2914, %v3593
    %v3595 = vsel %vm1712, %v2936, %v3594
    %v3596 = vsel %vm1714, %v2958, %v3595
    %v3597 = vsel %vm1716, %v2980, %v3596
    %v3598 = vsel %vm1704, %v2861, %v2839
    %v3599 = vsel %vm1706, %v2883, %v3598
    %v3600 = vsel %vm1708, %v2905, %v3599
    %v3601 = vsel %vm1710, %v2927, %v3600
    %v3602 = vsel %vm1712, %v2949, %v3601
    %v3603 = vsel %vm1714, %v2971, %v3602
    %v3604 = vsel %vm1716, %v2993, %v3603
    %v3605 = vsel %vm1704, %v3024, %v3002
    %v3606 = vsel %vm1706, %v3046, %v3605
    %v3607 = vsel %vm1708, %v3068, %v3606
    %v3608 = vsel %vm1710, %v3090, %v3607
    %v3609 = vsel %vm1712, %v3112, %v3608
    %v3610 = vsel %vm1714, %v3134, %v3609
    %v3611 = vsel %vm1716, %v3156, %v3610
    %v3612 = vsel %vm1704, %v3037, %v3015
    %v3613 = vsel %vm1706, %v3059, %v3612
    %v3614 = vsel %vm1708, %v3081, %v3613
    %v3615 = vsel %vm1710, %v3103, %v3614
    %v3616 = vsel %vm1712, %v3125, %v3615
    %v3617 = vsel %vm1714, %v3147, %v3616
    %v3618 = vsel %vm1716, %v3169, %v3617
    %v3619 = vsel %vm1704, %v3200, %v3178
    %v3620 = vsel %vm1706, %v3222, %v3619
    %v3621 = vsel %vm1708, %v3244, %v3620
    %v3622 = vsel %vm1710, %v3266, %v3621
    %v3623 = vsel %vm1712, %v3288, %v3622
    %v3624 = vsel %vm1714, %v3310, %v3623
    %v3625 = vsel %vm1716, %v3332, %v3624
    %v3626 = vsel %vm1704, %v3213, %v3191
    %v3627 = vsel %vm1706, %v3235, %v3626
    %v3628 = vsel %vm1708, %v3257, %v3627
    %v3629 = vsel %vm1710, %v3279, %v3628
    %v3630 = vsel %vm1712, %v3301, %v3629
    %v3631 = vsel %vm1714, %v3323, %v3630
    %v3632 = vsel %vm1716, %v3345, %v3631
    %v3633 = vsel %vm1704, %v3376, %v3354
    %v3634 = vsel %vm1706, %v3398, %v3633
    %v3635 = vsel %vm1708, %v3420, %v3634
    %v3636 = vsel %vm1710, %v3442, %v3635
    %v3637 = vsel %vm1712, %v3464, %v3636
    %v3638 = vsel %vm1714, %v3486, %v3637
    %v3639 = vsel %vm1716, %v3508, %v3638
    %v3640 = vsel %vm1704, %v3389, %v3367
    %v3641 = vsel %vm1706, %v3411, %v3640
    %v3642 = vsel %vm1708, %v3433, %v3641
    %v3643 = vsel %vm1710, %v3455, %v3642
    %v3644 = vsel %vm1712, %v3477, %v3643
    %v3645 = vsel %vm1714, %v3499, %v3644
    %v3646 = vsel %vm1716, %v3521, %v3645
    %3659 = vrot.lane.b32.xlu0 %v3523, 64
    %v3660 = vpop.permute.xlu0 %3659
    %3661 = vrot.lane.b32.xlu0 %v3524, 64
    %v3662 = vpop.permute.xlu0 %3661
    %3663 = vrot.lane.b32.xlu0 %v3525, 64
    %v3664 = vpop.permute.xlu0 %3663
    %3665 = vrot.lane.b32.xlu0 %v3526, 64
    %v3666 = vpop.permute.xlu0 %3665
    %v3671 = vsel %vm940, %v3604, %v3660
    %v3672 = vsel %vm940, %v3618, %v3662
    %v3673 = vsel %vm940, %v3632, %v3664
    %v3674 = vsel %vm940, %v3646, %v3666
    %v3676 = vsel %vm1795, %v3671, 0
    %v3679 = vsel %vm1795, %v3672, 0
    %v3682 = vsel %vm1795, %v3673, 0
    %v3685 = vsel %vm1795, %v3674, 0
    %3687 = vmatprep.subr.mxu0 %v202
    %3688 = vmatpush1.msra.mxu0 %v201
    %3689 = vmatprep.subr.mxu0 %v204
    %3690 = vmatpush1.msra.mxu0 %v203
    %3691 = vmatprep.subr.mxu0 %v206
    %3692 = vmatpush1.msra.mxu0 %v205
    %3693 = vmatprep.subr.mxu0 %v208
    %3694 = vmatpush1.msra.mxu0 %v207
    %3695 = vmatprep.subr.mxu0 %v210
    %3696 = vmatpush1.msra.mxu0 %v209
    %3697 = vmatprep.subr.mxu0 %v212
    %3698 = vmatpush1.msra.mxu0 %v211
    %3699 = vmatprep.subr.mxu0 %v214
    %3700 = vmatpush1.msra.mxu0 %v213
    %3701 = vmatprep.subr.mxu0 %v216
    %3702 = vmatpush1.msra.mxu0 %v215
    %3703 = vmatprep.subr.mxu0 %v218
    %3704 = vmatpush1.msra.mxu0 %v217
    %3705 = vmatprep.subr.mxu0 %v220
    %3706 = vmatpush1.msra.mxu0 %v219
    %3707 = vmatprep.subr.mxu0 %v222
    %3708 = vmatpush1.msra.mxu0 %v221
    %3709 = vmatprep.subr.mxu0 %v224
    %3710 = vmatpush1.msra.mxu0 %v223
    %3711 = vmatprep.subr.mxu0 %v226
    %3712 = vmatpush1.msra.mxu0 %v225
    %3713 = vmatprep.subr.mxu0 %v228
    %3714 = vmatpush1.msra.mxu0 %v227
    %3715 = vmatprep.subr.mxu0 %v230
    %3716 = vmatpush1.msra.mxu0 %v229
    %3717 = vmatprep.subr.mxu0 %v232
    %3718 = vmatpush1.msra.mxu0 %v231
    %3719 = vmatprep.subr.mxu0 %v234
    %3720 = vmatpush1.msra.mxu0 %v233
    %3721 = vmatprep.subr.mxu0 %v236
    %3722 = vmatpush1.msra.mxu0 %v235
    %3723 = vmatprep.subr.mxu0 %v238
    %3724 = vmatpush1.msra.mxu0 %v237
    %3725 = vmatprep.subr.mxu0 %v240
    %3726 = vmatpush1.msra.mxu0 %v239
    %3727 = vmatprep.subr.mxu0 %v242
    %3728 = vmatpush1.msra.mxu0 %v241
    %3729 = vmatprep.subr.mxu0 %v244
    %3730 = vmatpush1.msra.mxu0 %v243
    %3731 = vmatprep.subr.mxu0 %v246
    %3732 = vmatpush1.msra.mxu0 %v245
    %3733 = vmatprep.subr.mxu0 %v248
    %3734 = vmatpush1.msra.mxu0 %v247
    %3735 = vmatprep.subr.mxu0 %v2168
    %3736 = vmatpush1.msra.mxu0 %v2167
    %3737 = vmatprep.subr.mxu0 %v2170
    %3738 = vmatpush1.msra.mxu0 %v2169
    %3739 = vmatprep.subr.mxu0 %v2172
    %3740 = vmatpush1.msra.mxu0 %v2171
    %3741 = vmatprep.subr.mxu0 %v2174
    %3742 = vmatpush1.msra.mxu0 %v2173
    %3743 = vmatprep.subr.mxu0 0.0
    %3744 = vmatpush1.msra.mxu0 0.0
    %3745 = vmatprep.subr.mxu0 0.0
    %3746 = vmatpush1.msra.mxu0 0.0
    %3747 = vmatprep.subr.mxu0 0.0
    %3748 = vmatpush1.msra.mxu0 0.0
    %3749 = vmatprep.subr.mxu0 0.0
    %3750 = vmatpush1.msra.mxu0 0.0
    %3751 = vmatprep.mubr.f32.mxu0 %v3676
    %3752 = vmatmul.mubr.f32.gmra.mrb[0].mxu0 %v3597
    %v3753 = vpop.f32.mrb[0].mxu0
    %v3754 = vadd.f32 0.0, %v3753
    %v3755 = vpop.f32.mrb[0].mxu0
    %v3756 = vadd.f32 0.0, %v3755
    %3757 = vmatprep.mubr.f32.mxu0 %v3679
    %3758 = vmatmul.mubr.f32.gmra.mrb[0].mxu0 %v3611
    %v3759 = vpop.f32.mrb[0].mxu0
    %v3760 = vadd.f32 0.0, %v3759
    %v3761 = vpop.f32.mrb[0].mxu0
    %v3762 = vadd.f32 0.0, %v3761
    %3763 = vmatprep.mubr.f32.mxu0 %v3682
    %3764 = vmatmul.mubr.f32.gmra.mrb[0].mxu0 %v3625
    %v3765 = vpop.f32.mrb[0].mxu0
    %v3766 = vadd.f32 0.0, %v3765
    %v3767 = vpop.f32.mrb[0].mxu0
    %v3768 = vadd.f32 0.0, %v3767
    %3769 = vmatprep.mubr.f32.mxu0 %v3685
    %3770 = vmatmul.mubr.f32.gmra.mrb[0].mxu0 %v3639
    %v3771 = vpop.f32.mrb[0].mxu0
    %v3772 = vadd.f32 0.0, %v3771
    %v3773 = vpop.f32.mrb[0].mxu0
    %v3774 = vadd.f32 0.0, %v3773
    %3775 = vdwg.mxu0
    %s3776 = scalar_lea.vmem [#allocation8], 8
    %v3777 = vld [vmem:[%s3776] sm:$0xf]
    %v3778 = vld [vmem:[%s3776 + $0x4] sm:$0xf]
    %v3779 = vpack.c.bf16 %v3760, %v3754
    %v3780 = vpack.c.bf16 %v3762, %v3756
    %v3781 = vpack.c.bf16 %v3772, %v3766
    %v3782 = vpack.c.bf16 %v3774, %v3768
    %s3783 = scalar_lea.vmem %s7, 16
    %v3784 = vld [vmem:[%s3783] sm:$0xff]
    %v3785 = vld [vmem:[%s3783 + $0x8] sm:$0xff]
    %3787 = vset.pattern.permute.xlu0 0
    %3788 = vperm.xlu0 %3787, %v3784
    %v3789 = vpop.permute.xlu0 %3788
    %3792 = vset.pattern.permute.xlu0 0
    %3793 = vperm.xlu0 %3792, %v3785
    %v3794 = vpop.permute.xlu0 %3793
    %v3798 = vunpack.c.l.b16 %v3777
    %v3799 = vunpack.c.l.b16 %v3778
    %v3800 = vpack.c.b16 %v3799, %v3798
    %v3802 = vsel %vm1960, %v3800, 0
    %3804 = vmatprep.subr.bf16.mxu0 %v3780
    %3805 = vmatpush1.bf16.msra.mxu0 %v3779
    %3806 = vmatprep.subr.bf16.mxu0 %v3782
    %3807 = vmatpush1.bf16.msra.mxu0 %v3781
    %3808 = vmatprep.subr.bf16.mxu0 0
    %3809 = vmatpush1.bf16.msra.mxu0 0
    %3810 = vmatprep.subr.bf16.mxu0 0
    %3811 = vmatpush1.bf16.msra.mxu0 0
    %3812 = vmatprep.subr.bf16.mxu0 0
    %3813 = vmatpush1.bf16.msra.mxu0 0
    %3814 = vmatprep.subr.bf16.mxu0 0
    %3815 = vmatpush1.bf16.msra.mxu0 0
    %3816 = vmatprep.subr.bf16.mxu0 0
    %3817 = vmatpush1.bf16.msra.mxu0 0
    %3818 = vmatprep.subr.bf16.mxu0 0
    %3819 = vmatpush1.bf16.msra.mxu0 0
    %3820 = vmatprep.subr.bf16.mxu0 0
    %3821 = vmatpush1.bf16.msra.mxu0 0
    %3822 = vmatprep.subr.bf16.mxu0 0
    %3823 = vmatpush1.bf16.msra.mxu0 0
    %3824 = vmatprep.subr.bf16.mxu0 0
    %3825 = vmatpush1.bf16.msra.mxu0 0
    %3826 = vmatprep.subr.bf16.mxu0 0
    %3827 = vmatpush1.bf16.msra.mxu0 0
    %3828 = vmatprep.subr.bf16.mxu0 0
    %3829 = vmatpush1.bf16.msra.mxu0 0
    %3830 = vmatprep.subr.bf16.mxu0 0
    %3831 = vmatpush1.bf16.msra.mxu0 0
    %3832 = vmatprep.subr.bf16.mxu0 0
    %3833 = vmatpush1.bf16.msra.mxu0 0
    %3834 = vmatprep.subr.bf16.mxu0 0
    %3835 = vmatpush1.bf16.msra.mxu0 0
    %3836 = vmatprep.mubr.bf16.mxu0 0
    %3837 = vmatmul.mubr.bf16.gmra.mrb[0].mxu0 %v3802
    %v3838 = vpop.f32.mrb[0].mxu0
    %v3839 = vadd.f32 %v3789, %v3838
    %v3840 = vpop.f32.mrb[0].mxu0
    %v3841 = vadd.f32 %v3789, %v3840
    %v3842 = vpop.f32.mrb[0].mxu0
    %v3843 = vadd.f32 %v3794, %v3842
    %v3844 = vpop.f32.mrb[0].mxu0
    %v3845 = vadd.f32 %v3794, %v3844
    %3846 = vdwg.mxu0
    %v3847 = vmul.f32 %v3839, 0.5
    %v3848 = vmul.f32 %v3841, 0.5
    %v3849 = vmul.f32 %v3843, 0.5
    %v3850 = vmul.f32 %v3845, 0.5
    %v3851 = vmul.f32 %v3839, %v257
    %v3852 = vmul.f32 %v3841, %v257
    %v3853 = vmul.f32 %v3843, %v257
    %v3854 = vmul.f32 %v3845, %v257
    %v3855 = verf.f32.pop %v3851
    %v3856 = verf.f32.pop %v3852
    %v3857 = verf.f32.pop %v3853
    %v3858 = verf.f32.pop %v3854
    %v3859 = vadd.f32 %v3855, 1.0
    %v3860 = vadd.f32 %v3856, 1.0
    %v3861 = vadd.f32 %v3857, 1.0
    %v3862 = vadd.f32 %v3858, 1.0
    %v3863 = vmul.f32 %v3847, %v3859
    %v3864 = vmul.f32 %v3848, %v3860
    %v3865 = vmul.f32 %v3849, %v3861
    %v3866 = vmul.f32 %v3850, %v3862
    %s3867 = scalar_lea.vmem %s8, 16
    %v3868 = vld [vmem:[%s3867] sm:$0xf]
    %v3869 = vld [vmem:[%s3867 + $0x4] sm:$0xf]
    %v3870 = vld [vmem:[%s3867 + $0x8] sm:$0xf]
    %v3871 = vld [vmem:[%s3867 + $0xc] sm:$0xf]
    %v3872 = vpack.c.bf16 %v3865, %v3863
    %v3873 = vpack.c.bf16 %v3866, %v3864
    %s3874 = scalar_lea.vmem %s9, 32
    %v3875 = vld [vmem:[%s3874] sm:$0xff]
    %v3876 = vld [vmem:[%s3874 + $0x8] sm:$0xff]
    %v3877 = vld [vmem:[%s3874 + $0x10] sm:$0xff]
    %v3878 = vld [vmem:[%s3874 + $0x18] sm:$0xff]
    %3880 = vset.pattern.permute.xlu0 0
    %3881 = vperm.xlu0 %3880, %v3875
    %v3882 = vpop.permute.xlu0 %3881
    %3885 = vset.pattern.permute.xlu0 0
    %3886 = vperm.xlu0 %3885, %v3876
    %v3887 = vpop.permute.xlu0 %3886
    %3890 = vset.pattern.permute.xlu0 0
    %3891 = vperm.xlu0 %3890, %v3877
    %v3892 = vpop.permute.xlu0 %3891
    %3895 = vset.pattern.permute.xlu0 0
    %3896 = vperm.xlu0 %3895, %v3878
    %v3897 = vpop.permute.xlu0 %3896
    %v3903 = vunpack.c.l.b16 %v3868
    %v3904 = vunpack.c.l.b16 %v3869
    %v3905 = vunpack.c.l.b16 %v3870
    %v3906 = vunpack.c.l.b16 %v3871
    %v3907 = vpack.c.b16 %v3904, %v3903
    %v3908 = vpack.c.b16 %v3906, %v3905
    %v3910 = vsel %vm2067, %v3907, 0
    %v3913 = vsel %vm2067, %v3908, 0
    %3915 = vmatprep.subr.bf16.mxu0 %v3873
    %3916 = vmatpush1.bf16.msra.mxu0 %v3872
    %3917 = vmatprep.subr.bf16.mxu0 0
    %3918 = vmatpush1.bf16.msra.mxu0 0
    %3919 = vmatprep.subr.bf16.mxu0 0
    %3920 = vmatpush1.bf16.msra.mxu0 0
    %3921 = vmatprep.subr.bf16.mxu0 0
    %3922 = vmatpush1.bf16.msra.mxu0 0
    %3923 = vmatprep.subr.bf16.mxu0 0
    %3924 = vmatpush1.bf16.msra.mxu0 0
    %3925 = vmatprep.subr.bf16.mxu0 0
    %3926 = vmatpush1.bf16.msra.mxu0 0
    %3927 = vmatprep.subr.bf16.mxu0 0
    %3928 = vmatpush1.bf16.msra.mxu0 0
    %3929 = vmatprep.subr.bf16.mxu0 0
    %3930 = vmatpush1.bf16.msra.mxu0 0
    %3931 = vmatprep.subr.bf16.mxu0 0
    %3932 = vmatpush1.bf16.msra.mxu0 0
    %3933 = vmatprep.subr.bf16.mxu0 0
    %3934 = vmatpush1.bf16.msra.mxu0 0
    %3935 = vmatprep.subr.bf16.mxu0 0
    %3936 = vmatpush1.bf16.msra.mxu0 0
    %3937 = vmatprep.subr.bf16.mxu0 0
    %3938 = vmatpush1.bf16.msra.mxu0 0
    %3939 = vmatprep.subr.bf16.mxu0 0
    %3940 = vmatpush1.bf16.msra.mxu0 0
    %3941 = vmatprep.subr.bf16.mxu0 0
    %3942 = vmatpush1.bf16.msra.mxu0 0
    %3943 = vmatprep.subr.bf16.mxu0 0
    %3944 = vmatpush1.bf16.msra.mxu0 0
    %3945 = vmatprep.subr.bf16.mxu0 0
    %3946 = vmatpush1.bf16.msra.mxu0 0
    %3947 = vmatprep.mubr.bf16.mxu0 0
    %3948 = vmatmul.mubr.bf16.gmra.mrb[0].mxu0 %v3910
    %v3949 = vpop.f32.mrb[0].mxu0
    %v3950 = vadd.f32 %v3882, %v3949
    %v3951 = vpop.f32.mrb[0].mxu0
    %v3952 = vadd.f32 %v3882, %v3951
    %v3953 = vpop.f32.mrb[0].mxu0
    %v3954 = vadd.f32 %v3887, %v3953
    %v3955 = vpop.f32.mrb[0].mxu0
    %v3956 = vadd.f32 %v3887, %v3955
    %3957 = vmatprep.mubr.bf16.mxu0 0
    %3958 = vmatmul.mubr.bf16.gmra.mrb[0].mxu0 %v3913
    %v3959 = vpop.f32.mrb[0].mxu0
    %v3960 = vadd.f32 %v3892, %v3959
    %v3961 = vpop.f32.mrb[0].mxu0
    %v3962 = vadd.f32 %v3892, %v3961
    %v3963 = vpop.f32.mrb[0].mxu0
    %v3964 = vadd.f32 %v3897, %v3963
    %v3965 = vpop.f32.mrb[0].mxu0
    %v3966 = vadd.f32 %v3897, %v3965
    %3967 = vdwg.mxu0
    %v3968 = vadd.f32 %v3950, %v2200
    %v3969 = vadd.f32 %v3952, %v2201
    %v3970 = vadd.f32 %v3954, %v2202
    %v3971 = vadd.f32 %v3956, %v2203
    %v3972 = vadd.f32 %v3960, %v2204
    %v3973 = vadd.f32 %v3962, %v2205
    %v3974 = vadd.f32 %v3964, %v2206
    %v3975 = vadd.f32 %v3966, %v2207
    %v3976 = vld [vmem:[#allocation10] sm:$0xf]
    %v3977 = vld [vmem:[#allocation10 + $0x4] sm:$0xf]
    %v3978 = vld [vmem:[#allocation10 + $0x8] sm:$0xf]
    %v3979 = vld [vmem:[#allocation10 + $0xc] sm:$0xf]
    %v3980 = vpack.c.bf16 %v3970, %v3968
    %v3981 = vpack.c.bf16 %v3971, %v3969
    %v3982 = vpack.c.bf16 %v3974, %v3972
    %v3983 = vpack.c.bf16 %v3975, %v3973
    %v3984 = vld [vmem:[%s11] sm:$0xff]
    %v3985 = vld [vmem:[%s11 + $0x8] sm:$0xff]
    %v3986 = vld [vmem:[%s11 + $0x10] sm:$0xff]
    %v3987 = vld [vmem:[%s11 + $0x18] sm:$0xff]
    %3989 = vset.pattern.permute.xlu0 0
    %3990 = vperm.xlu0 %3989, %v3984
    %v3991 = vpop.permute.xlu0 %3990
    %3994 = vset.pattern.permute.xlu0 0
    %3995 = vperm.xlu0 %3994, %v3985
    %v3996 = vpop.permute.xlu0 %3995
    %3999 = vset.pattern.permute.xlu0 0
    %4000 = vperm.xlu0 %3999, %v3986
    %v4001 = vpop.permute.xlu0 %4000
    %4004 = vset.pattern.permute.xlu0 0
    %4005 = vperm.xlu0 %4004, %v3987
    %v4006 = vpop.permute.xlu0 %4005
    %v4012 = vunpack.c.l.b16 %v3976
    %v4013 = vunpack.c.l.b16 %v3977
    %v4014 = vunpack.c.l.b16 %v3978
    %v4015 = vunpack.c.l.b16 %v3979
    %v4016 = vpack.c.b16 %v4013, %v4012
    %v4017 = vpack.c.b16 %v4015, %v4014
    %v4019 = vsel %vm1960, %v4016, 0
    %v4022 = vsel %vm1960, %v4017, 0
    %4024 = vmatprep.subr.bf16.mxu0 %v3981
    %4025 = vmatpush1.bf16.msra.mxu0 %v3980
    %4026 = vmatprep.subr.bf16.mxu0 %v3983
    %4027 = vmatpush1.bf16.msra.mxu0 %v3982
    %4028 = vmatprep.subr.bf16.mxu0 0
    %4029 = vmatpush1.bf16.msra.mxu0 0
    %4030 = vmatprep.subr.bf16.mxu0 0
    %4031 = vmatpush1.bf16.msra.mxu0 0
    %4032 = vmatprep.subr.bf16.mxu0 0
    %4033 = vmatpush1.bf16.msra.mxu0 0
    %4034 = vmatprep.subr.bf16.mxu0 0
    %4035 = vmatpush1.bf16.msra.mxu0 0
    %4036 = vmatprep.subr.bf16.mxu0 0
    %4037 = vmatpush1.bf16.msra.mxu0 0
    %4038 = vmatprep.subr.bf16.mxu0 0
    %4039 = vmatpush1.bf16.msra.mxu0 0
    %4040 = vmatprep.subr.bf16.mxu0 0
    %4041 = vmatpush1.bf16.msra.mxu0 0
    %4042 = vmatprep.subr.bf16.mxu0 0
    %4043 = vmatpush1.bf16.msra.mxu0 0
    %4044 = vmatprep.subr.bf16.mxu0 0
    %4045 = vmatpush1.bf16.msra.mxu0 0
    %4046 = vmatprep.subr.bf16.mxu0 0
    %4047 = vmatpush1.bf16.msra.mxu0 0
    %4048 = vmatprep.subr.bf16.mxu0 0
    %4049 = vmatpush1.bf16.msra.mxu0 0
    %4050 = vmatprep.subr.bf16.mxu0 0
    %4051 = vmatpush1.bf16.msra.mxu0 0
    %4052 = vmatprep.subr.bf16.mxu0 0
    %4053 = vmatpush1.bf16.msra.mxu0 0
    %4054 = vmatprep.subr.bf16.mxu0 0
    %4055 = vmatpush1.bf16.msra.mxu0 0
    %4056 = vmatprep.mubr.bf16.mxu0 0
    %4057 = vmatmul.mubr.bf16.gmra.mrb[0].mxu0 %v4019
    %v4058 = vpop.f32.mrb[0].mxu0
    %v4059 = vadd.f32 %v3991, %v4058
    %v4060 = vpop.f32.mrb[0].mxu0
    %v4061 = vadd.f32 %v3991, %v4060
    %v4062 = vpop.f32.mrb[0].mxu0
    %v4063 = vadd.f32 %v3996, %v4062
    %v4064 = vpop.f32.mrb[0].mxu0
    %v4065 = vadd.f32 %v3996, %v4064
    %4066 = vmatprep.mubr.bf16.mxu0 0
    %4067 = vmatmul.mubr.bf16.gmra.mrb[0].mxu0 %v4022
    %v4068 = vpop.f32.mrb[0].mxu0
    %v4069 = vadd.f32 %v4001, %v4068
    %v4070 = vpop.f32.mrb[0].mxu0
    %v4071 = vadd.f32 %v4001, %v4070
    %v4072 = vpop.f32.mrb[0].mxu0
    %v4073 = vadd.f32 %v4006, %v4072
    %v4074 = vpop.f32.mrb[0].mxu0
    %v4075 = vadd.f32 %v4006, %v4074
    %4076 = vdwg.mxu0
    %v4077 = vmul.f32 %v4059, 0.5
    %v4078 = vmul.f32 %v4061, 0.5
    %v4079 = vmul.f32 %v4063, 0.5
    %v4080 = vmul.f32 %v4065, 0.5
    %v4081 = vmul.f32 %v4069, 0.5
    %v4082 = vmul.f32 %v4071, 0.5
    %v4083 = vmul.f32 %v4073, 0.5
    %v4084 = vmul.f32 %v4075, 0.5
    %v4085 = vmul.f32 %v4059, %v257
    %v4086 = vmul.f32 %v4061, %v257
    %v4087 = vmul.f32 %v4063, %v257
    %v4088 = vmul.f32 %v4065, %v257
    %v4089 = vmul.f32 %v4069, %v257
    %v4090 = vmul.f32 %v4071, %v257
    %v4091 = vmul.f32 %v4073, %v257
    %v4092 = vmul.f32 %v4075, %v257
    %v4093 = verf.f32.pop %v4085
    %v4094 = verf.f32.pop %v4086
    %v4095 = verf.f32.pop %v4087
    %v4096 = verf.f32.pop %v4088
    %v4097 = verf.f32.pop %v4089
    %v4098 = verf.f32.pop %v4090
    %v4099 = verf.f32.pop %v4091
    %v4100 = verf.f32.pop %v4092
    %v4101 = vadd.f32 %v4093, 1.0
    %v4102 = vadd.f32 %v4094, 1.0
    %v4103 = vadd.f32 %v4095, 1.0
    %v4104 = vadd.f32 %v4096, 1.0
    %v4105 = vadd.f32 %v4097, 1.0
    %v4106 = vadd.f32 %v4098, 1.0
    %v4107 = vadd.f32 %v4099, 1.0
    %v4108 = vadd.f32 %v4100, 1.0
    %v4109 = vmul.f32 %v4077, %v4101
    %v4110 = vmul.f32 %v4078, %v4102
    %v4111 = vmul.f32 %v4079, %v4103
    %v4112 = vmul.f32 %v4080, %v4104
    %v4113 = vmul.f32 %v4081, %v4105
    %v4114 = vmul.f32 %v4082, %v4106
    %v4115 = vmul.f32 %v4083, %v4107
    %v4116 = vmul.f32 %v4084, %v4108
    %v4117 = vld [vmem:[#allocation11] sm:$0x7]
    %v4118 = vld [vmem:[%s13] sm:$0x7]
    %4120 = vset.pattern.permute.xlu0 0
    %4121 = vperm.xlu0 %4120, %v4118
    %v4122 = vpop.permute.xlu0 %4121
    %v4125 = vsel %vm1960, %v4117, 0
    %4127 = vmatprep.subr.mxu0 %v4110
    %4128 = vmatpush1.msra.mxu0 %v4109
    %4129 = vmatprep.subr.mxu0 %v4112
    %4130 = vmatpush1.msra.mxu0 %v4111
    %4131 = vmatprep.subr.mxu0 %v4114
    %4132 = vmatpush1.msra.mxu0 %v4113
    %4133 = vmatprep.subr.mxu0 %v4116
    %4134 = vmatpush1.msra.mxu0 %v4115
    %4135 = vmatprep.subr.mxu0 0.0
    %4136 = vmatpush1.msra.mxu0 0.0
    %4137 = vmatprep.subr.mxu0 0.0
    %4138 = vmatpush1.msra.mxu0 0.0
    %4139 = vmatprep.subr.mxu0 0.0
    %4140 = vmatpush1.msra.mxu0 0.0
    %4141 = vmatprep.subr.mxu0 0.0
    %4142 = vmatpush1.msra.mxu0 0.0
    %4143 = vmatprep.subr.mxu0 0.0
    %4144 = vmatpush1.msra.mxu0 0.0
    %4145 = vmatprep.subr.mxu0 0.0
    %4146 = vmatpush1.msra.mxu0 0.0
    %4147 = vmatprep.subr.mxu0 0.0
    %4148 = vmatpush1.msra.mxu0 0.0
    %4149 = vmatprep.subr.mxu0 0.0
    %4150 = vmatpush1.msra.mxu0 0.0
    %4151 = vmatprep.subr.mxu0 0.0
    %4152 = vmatpush1.msra.mxu0 0.0
    %4153 = vmatprep.subr.mxu0 0.0
    %4154 = vmatpush1.msra.mxu0 0.0
    %4155 = vmatprep.subr.mxu0 0.0
    %4156 = vmatpush1.msra.mxu0 0.0
    %4157 = vmatprep.subr.mxu0 0.0
    %4158 = vmatpush1.msra.mxu0 0.0
    %4159 = vmatprep.subr.mxu0 0.0
    %4160 = vmatpush1.msra.mxu0 0.0
    %4161 = vmatprep.subr.mxu0 0.0
    %4162 = vmatpush1.msra.mxu0 0.0
    %4163 = vmatprep.subr.mxu0 0.0
    %4164 = vmatpush1.msra.mxu0 0.0
    %4165 = vmatprep.subr.mxu0 0.0
    %4166 = vmatpush1.msra.mxu0 0.0
    %4167 = vmatprep.subr.mxu0 0.0
    %4168 = vmatpush1.msra.mxu0 0.0
    %4169 = vmatprep.subr.mxu0 0.0
    %4170 = vmatpush1.msra.mxu0 0.0
    %4171 = vmatprep.subr.mxu0 0.0
    %4172 = vmatpush1.msra.mxu0 0.0
    %4173 = vmatprep.subr.mxu0 0.0
    %4174 = vmatpush1.msra.mxu0 0.0
    %4175 = vmatprep.subr.mxu0 0.0
    %4176 = vmatpush1.msra.mxu0 0.0
    %4177 = vmatprep.subr.mxu0 0.0
    %4178 = vmatpush1.msra.mxu0 0.0
    %4179 = vmatprep.subr.mxu0 0.0
    %4180 = vmatpush1.msra.mxu0 0.0
    %4181 = vmatprep.subr.mxu0 0.0
    %4182 = vmatpush1.msra.mxu0 0.0
    %4183 = vmatprep.subr.mxu0 0.0
    %4184 = vmatpush1.msra.mxu0 0.0
    %4185 = vmatprep.subr.mxu0 0.0
    %4186 = vmatpush1.msra.mxu0 0.0
    %4187 = vmatprep.subr.mxu0 0.0
    %4188 = vmatpush1.msra.mxu0 0.0
    %4189 = vmatprep.subr.mxu0 0.0
    %4190 = vmatpush1.msra.mxu0 0.0
    %4191 = vmatprep.mubr.f32.mxu0 0.0
    %4192 = vmatmul.mubr.f32.gmra.mrb[0].mxu0 %v4125
    %v4193 = vpop.f32.mrb[0].mxu0
    %v4194 = vadd.f32 %v4122, %v4193
    %v4195 = vpop.f32.mrb[0].mxu0
    %v4196 = vadd.f32 %v4122, %v4195
    %4197 = vdwg.mxu0
    %v4200 = vcombine.low %v4194, %v4196
    %4202 = vst [vmem:[#allocation13] sm:$0x77] %v4200
    // Predicated region
    $region82: #{physics_engine_forward.3} parent=1 // pred_check
      _
    $region83: #{physics_engine_forward.3} parent=1 // pred_check_branch
      %4204 = sbr.rel (0) target = $region85
    $region84: #{physics_engine_forward.3} parent=1 // pred_region
      %s4206 = ssub.s32 128, 128
      %4207 = vsyncadd [#allocation4], %s4206
      %s4209 = sshll.u32 [#allocation13], 4
      %s4210 = int_to_ptr.vmem [resolvable:$true] %s4209
      %4212 = dma.vmem_to_hbm [thread:$0]  %s4210, 128, %s14, [#allocation4]
    $region85: #{physics_engine_forward.3} parent=1 // pred_fallthru
      _
    // Predicated region
    $region86: #{physics_engine_forward.3} parent=1 // pred_check
      _
    $region87: #{physics_engine_forward.3} parent=1 // pred_check_branch
      %4214 = sbr.rel (0) target = $region89
    $region88: #{physics_engine_forward.3} parent=1 // pred_region
      %4215 = dma.done [#allocation4], 128
    $region89: #{physics_engine_forward.3} parent=1 // pred_fallthru
      _
    %4216 = vsyncpa [#allocation3], 1
    %4217 = vsyncpa [#allocation6], 1
    %4218 = vsyncpa [#allocation9], 1
    %4219 = vsyncpa [#allocation12], 1
    %4220 = vsyncpa [#allocation4], 1

</llo_original>
